<compile_context>
chip_gen: v5e
topology: v5e:2x2
jax: 0.10.0
libtpu: 0.0.40
codegen_flags: <defaults>
</compile_context>

<pallas_src>
import functools

import jax
import jax.numpy as jnp
from jax.experimental import pallas as pl
from jax.experimental.pallas import tpu as pltpu

EPS = 1e-5  # PyTorch InstanceNorm2d default


# ----------------------------- Pallas kernels ------------------------------
def _conv_stats_kernel(x_ref, w_ref, y_ref, st_ref, sum_ref, sq_ref, *, ke, npix):
    """Shifted-matmul conv for one (image, row-tile) + streamed IN statistics.

    x_ref : (1, Hp, Wp, Ce)   bf16, padded input, resident per image
    w_ref : (ke*ke, Ce, Coutp) bf16, resident
    y_ref : (1, Th, Wo, Coutp) f32 conv output tile
    st_ref: (1, 2, Coutp)      f32 [mean; rsqrt(var+eps)], written on last tile
    """
    t = pl.program_id(1)
    th, wo, _ = y_ref.shape[1], y_ref.shape[2], y_ref.shape[3]
    coutp = y_ref.shape[3]

    @pl.when(t == 0)
    def _():
        sum_ref[...] = jnp.zeros_like(sum_ref)
        sq_ref[...] = jnp.zeros_like(sq_ref)

    row0 = t * th

    @pl.loop(0, th)
    def _(r):
        acc = jnp.zeros((wo, coutp), jnp.float32)
        for p in range(ke):
            for q in range(ke):
                xs = x_ref[0, row0 + r + p, pl.ds(q, wo), :]      # (Wo, Ce) bf16
                acc = acc + jnp.dot(xs, w_ref[p * ke + q],
                                    preferred_element_type=jnp.float32)
        y_ref[0, r] = acc
        sum_ref[...] += jnp.sum(acc, axis=0, keepdims=True)
        sq_ref[...] += jnp.sum(acc * acc, axis=0, keepdims=True)

    @pl.when(t == pl.num_programs(1) - 1)
    def _():
        inv_n = 1.0 / float(npix)
        mean = sum_ref[...] * inv_n                               # (1, Coutp)
        var = jnp.maximum(sq_ref[...] * inv_n - mean * mean, 0.0)  # biased var
        inv_std = jax.lax.rsqrt(var + EPS)
        st_ref[0] = jnp.concatenate([mean, inv_std], axis=0)


def _apply_instance_norm(y_ref, st_ref, g_ref, b_ref):
    y = y_ref[0].astype(jnp.float32)      # (Th, Wo, Coutp)
    st = st_ref[0]                        # (2, Coutp)
    mean = st[0:1]
    inv_std = st[1:2]
    return (y - mean) * (inv_std * g_ref[...]) + b_ref[...]


def _norm_affine_kernel(y_ref, st_ref, g_ref, b_ref, o_ref, *, relu):
    out = _apply_instance_norm(y_ref, st_ref, g_ref, b_ref)
    if relu:
        out = jnp.maximum(out, 0.0)
    o_ref[0] = out.astype(o_ref.dtype)


def _norm_affine_res_kernel(y_ref, st_ref, g_ref, b_ref, r_ref, o_ref):
    out = _apply_instance_norm(y_ref, st_ref, g_ref, b_ref)
    out = out + r_ref[0].astype(jnp.float32)
    o_ref[0] = out.astype(o_ref.dtype)


# ------------------------------ tiling helpers ------------------------------
def _round_up(x, m):
    return (x + m - 1) // m * m


def _vmem_limit_bytes():
    cap = None
    try:
        cap = getattr(pltpu.get_tpu_info(), "vmem_capacity_bytes", None)
    except Exception:
        cap = None
    if not cap:
        cap = 64 * 1024 * 1024            # conservative: v7x physical VMEM
    return int(min(cap * 3 // 4, 100 * 1024 * 1024))


def _pick_row_tile(ho, wo, coutp, vmem_limit):
    """Largest divisor of `ho` whose f32 conv-output tile fits a slice of the
    VMEM budget, preferring >= 2 row tiles so the stats axis streams and
    kernel 2 keeps a multi-step parallel axis even at N=1."""
    target = max(wo * coutp * 4, min(vmem_limit // 8, 4 * 1024 * 1024))
    fits = [d for d in range(1, ho + 1)
            if ho % d == 0 and d * wo * coutp * 4 <= target]
    if not fits:
        return 1
    multi = [d for d in fits if ho // d >= 2]
    return max(multi) if multi else max(fits)


# ------------------------------- JAX glue -----------------------------------
def conv_in_layer(x, layer_params, *, k, stride, pad, relu, residual=None):
    """Conv2d(bias=False) + InstanceNorm2d(affine=True) [+ ReLU] [+ residual].

    x: (N, H, W, C>=Cin) activation; only the first Cin = w.shape[1] channels
       are used (allows channel-padded activations from previous layers).
    Returns a bf16 activation (N, Ho, Wo, Coutp) with Coutp = round_up(Cout,128);
    padded channels are exactly zero.
    """
    w = layer_params["w"]
    gamma = layer_params["gamma"]
    beta = layer_params["beta"]
    cout, cin = w.shape[0], w.shape[1]
    assert w.shape[2] == k and w.shape[3] == k

    n = x.shape[0]
    x = x[..., :cin].astype(jnp.bfloat16)
    xp = jnp.pad(x, ((0, 0), (pad, pad), (pad, pad), (0, 0)))

    if stride > 1:
        s = stride
        hp, wp = xp.shape[1], xp.shape[2]
        assert k % s == 0 and hp % s == 0 and wp % s == 0, (k, s, hp, wp)
        ke = k // s
        ce = s * s * cin
        # space-to-depth: new channel order is (row off a, col off b, cin c)
        xp = xp.reshape(n, hp // s, s, wp // s, s, cin)
        xp = xp.transpose(0, 1, 3, 2, 4, 5).reshape(n, hp // s, wp // s, ce)
        # weights: original tap (di, dj) = (p*s + a, q*s + b) -> new tap (p, q)
        wk = w.reshape(cout, cin, ke, s, ke, s)       # (co, c, p, a, q, b)
        wk = wk.transpose(0, 3, 5, 1, 2, 4)           # (co, a, b, c, p, q)
        wk = wk.reshape(cout, ce, ke, ke)
    else:
        ke, ce = k, cin
        wk = w

    hp, wp = xp.shape[1], xp.shape[2]
    ho, wo = hp - ke + 1, wp - ke + 1
    coutp = _round_up(cout, 128)

    # (Cout, Ce, ke, ke) -> (ke*ke, Ce, Coutp); tap index = p*ke + q
    wk = jnp.transpose(wk, (2, 3, 1, 0)).reshape(ke * ke, ce, cout)
    wk = jnp.pad(wk, ((0, 0), (0, 0), (0, coutp - cout))).astype(jnp.bfloat16)
    g2 = jnp.pad(gamma, (0, coutp - cout), constant_values=1.0)
    g2 = g2.reshape(1, coutp).astype(jnp.float32)
    b2 = jnp.pad(beta, (0, coutp - cout)).reshape(1, coutp).astype(jnp.float32)

    vmem_limit = _vmem_limit_bytes()
    th = _pick_row_tile(ho, wo, coutp, vmem_limit)
    n_tiles = ho // th

    conv_cost = pl.CostEstimate(
        flops=2 * n * ho * wo * ke * ke * ce * coutp,
        transcendentals=0,
        bytes_accessed=xp.size * 2 + wk.size * 2
        + n * ho * wo * coutp * 4 + n * 2 * coutp * 4)

    # ---- kernel 1: conv + streamed InstanceNorm statistics ----
    y_conv, stats = pl.pallas_call(
        functools.partial(_conv_stats_kernel, ke=ke, npix=ho * wo),
        grid=(n, n_tiles),
        in_specs=[
            pl.BlockSpec((1, hp, wp, ce), lambda i, t: (i, 0, 0, 0)),
            pl.BlockSpec((ke * ke, ce, coutp), lambda i, t: (0, 0, 0)),
        ],
        out_specs=[
            pl.BlockSpec((1, th, wo, coutp), lambda i, t: (i, t, 0, 0)),
            pl.BlockSpec((1, 2, coutp), lambda i, t: (i, 0, 0)),
        ],
        out_shape=(
            jax.ShapeDtypeStruct((n, ho, wo, coutp), jnp.float32),
            jax.ShapeDtypeStruct((n, 2, coutp), jnp.float32),
        ),
        scratch_shapes=[pltpu.VMEM((1, coutp), jnp.float32),
                        pltpu.VMEM((1, coutp), jnp.float32)],
        compiler_params=pltpu.CompilerParams(
            dimension_semantics=("parallel", "arbitrary"),
            vmem_limit_bytes=vmem_limit),
        cost_estimate=conv_cost,
    )(xp, wk)

    # ---- kernel 2: normalize + affine (+ ReLU) (+ residual) ----
    norm_in_specs = [
        pl.BlockSpec((1, th, wo, coutp), lambda i, t: (i, t, 0, 0)),
        pl.BlockSpec((1, 2, coutp), lambda i, t: (i, 0, 0)),
        pl.BlockSpec((1, coutp), lambda i, t: (0, 0)),
        pl.BlockSpec((1, coutp), lambda i, t: (0, 0)),
    ]
    norm_args = [y_conv, stats, g2, b2]
    if residual is None:
        kernel = functools.partial(_norm_affine_kernel, relu=relu)
    else:
        assert not relu
        assert residual.shape == (n, ho, wo, coutp), residual.shape
        kernel = _norm_affine_res_kernel
        norm_in_specs.append(
            pl.BlockSpec((1, th, wo, coutp), lambda i, t: (i, t, 0, 0)))
        norm_args.append(residual.astype(jnp.bfloat16))

    out = pl.pallas_call(
        kernel,
        grid=(n, n_tiles),
        in_specs=norm_in_specs,
        out_specs=pl.BlockSpec((1, th, wo, coutp), lambda i, t: (i, t, 0, 0)),
        out_shape=jax.ShapeDtypeStruct((n, ho, wo, coutp), jnp.bfloat16),
        compiler_params=pltpu.CompilerParams(
            dimension_semantics=("parallel", "parallel"),
            vmem_limit_bytes=vmem_limit),
    )(*norm_args)

    return out


# --------------------------- parameter building ----------------------------
def _conv_params(key, cout, cin, k):
    w = jax.random.normal(key, (cout, cin, k, k), jnp.float32)
    w = w * (1.0 / (cin * k * k) ** 0.5)
    return {"w": w,
            "gamma": jnp.ones((cout,), jnp.float32),   # InstanceNorm2d affine init
            "beta": jnp.zeros((cout,), jnp.float32)}


def init_makeup_distillation(key, conv_dim=64, repeat_num=6, input_nc=3):
    keys = jax.random.split(key, 3 + 2 * repeat_num)
    params = {"l1": _conv_params(keys[0], conv_dim, input_nc, 7),
              "l2": _conv_params(keys[1], conv_dim * 2, conv_dim, 4)}
    curr = conv_dim * 2
    params["l3"] = _conv_params(keys[2], curr * 2, curr, 4)
    curr *= 2
    params["res"] = []
    for i in range(repeat_num):
        params["res"].append({
            "c1": _conv_params(keys[3 + 2 * i], curr, curr, 3),
            "c2": _conv_params(keys[4 + 2 * i], curr, curr, 3),
        })
    return params


def makeup_distillation_forward(params, x_nchw):
    """x_nchw: (N, input_nc, H, W) as in PyTorch.  Returns (N, conv_dim*4, H/4, W/4)."""
    x = jnp.transpose(x_nchw, (0, 2, 3, 1))            # -> NHWC

    x = conv_in_layer(x, params["l1"], k=7, stride=1, pad=3, relu=True)
    x = conv_in_layer(x, params["l2"], k=4, stride=2, pad=1, relu=True)
    x = conv_in_layer(x, params["l3"], k=4, stride=2, pad=1, relu=True)

    for blk in params["res"]:
        h = conv_in_layer(x, blk["c1"], k=3, stride=1, pad=1, relu=True)
        x = conv_in_layer(h, blk["c2"], k=3, stride=1, pad=1, relu=False,
                          residual=x)

    c_final = params["l3"]["w"].shape[0]
    out = x[..., :c_final].astype(jnp.float32)          # drop lane padding
    return jnp.transpose(out, (0, 3, 1, 2))             # back to NCHW


# --------------------------------- main -------------------------------------
if __name__ == "__main__":
    key = jax.random.PRNGKey(0)
    k_param, k_x = jax.random.split(key)

    # Small but structurally faithful configuration.
    CONV_DIM, REPEAT_NUM, INPUT_NC = 16, 3, 3
    N, H, W = 2, 16, 16

    params = init_makeup_distillation(k_param, conv_dim=CONV_DIM,
                                      repeat_num=REPEAT_NUM, input_nc=INPUT_NC)
    x = jax.random.normal(k_x, (N, INPUT_NC, H, W), jnp.float32)

    fwd = jax.jit(makeup_distillation_forward)
    out = fwd(params, x)
    jax.block_until_ready(out)

    expected_shape = (N, CONV_DIM * 4, H // 4, W // 4)
    assert out.shape == expected_shape, (out.shape, expected_shape)
    assert bool(jnp.all(jnp.isfinite(out)))
    print("KERNEL_OK")
</pallas_src>

<mosaic_0001>
module attributes {stable_mosaic.version = 11 : i64} {
  func.func @_norm_affine_kernel(%arg0: i32, %arg1: i32, %arg2: memref<1x8x16x128xf32, #tpu.memory_space<vmem>>, %arg3: memref<1x2x128xf32, #tpu.memory_space<vmem>>, %arg4: memref<1x128xf32, #tpu.memory_space<vmem>>, %arg5: memref<1x128xf32, #tpu.memory_space<vmem>>, %arg6: memref<1x8x16x128xbf16, #tpu.memory_space<vmem>>) attributes {dimension_semantics = [#tpu.dimension_semantics<parallel>, #tpu.dimension_semantics<parallel>], iteration_bounds = array<i64: 2, 2>, scalar_prefetch = 0 : i64, scratch_operands = 0 : i64, tpu.core_type = #tpu.core_type<tc>, window_params = [{transform_indices = @transform_0, window_bounds = array<i64: 1, 8, 16, 128>}, {transform_indices = @transform_1, window_bounds = array<i64: 1, 2, 128>}, {pipeline_mode = #tpu.pipeline_mode<synchronous>, transform_indices = @transform_2, window_bounds = array<i64: 1, 128>}, {pipeline_mode = #tpu.pipeline_mode<synchronous>, transform_indices = @transform_3, window_bounds = array<i64: 1, 128>}, {transform_indices = @transform_4, window_bounds = array<i64: 1, 8, 16, 128>}]} {
    %c0 = arith.constant 0 : index
    %c0_0 = arith.constant 0 : index
    %c0_1 = arith.constant 0 : index
    %c0_2 = arith.constant 0 : index
    %0 = vector.load %arg2[%c0, %c0_0, %c0_1, %c0_2] : memref<1x8x16x128xf32, #tpu.memory_space<vmem>>, vector<1x8x16x128xf32>
    %1 = vector.shape_cast %0 : vector<1x8x16x128xf32> to vector<8x16x128xf32>
    %c0_3 = arith.constant 0 : index
    %c0_4 = arith.constant 0 : index
    %c0_5 = arith.constant 0 : index
    %2 = vector.load %arg3[%c0_3, %c0_4, %c0_5] : memref<1x2x128xf32, #tpu.memory_space<vmem>>, vector<1x2x128xf32>
    %3 = vector.shape_cast %2 : vector<1x2x128xf32> to vector<2x128xf32>
    %4 = vector.extract_strided_slice %3 {offsets = [0, 0], sizes = [1, 128], strides = [1, 1]} : vector<2x128xf32> to vector<1x128xf32>
    %5 = vector.extract_strided_slice %3 {offsets = [1, 0], sizes = [1, 128], strides = [1, 1]} : vector<2x128xf32> to vector<1x128xf32>
    %6 = vector.shape_cast %4 : vector<1x128xf32> to vector<1x1x128xf32>
    %7 = vector.broadcast %6 : vector<1x1x128xf32> to vector<8x16x128xf32>
    %8 = arith.subf %1, %7 : vector<8x16x128xf32>
    %c0_6 = arith.constant 0 : index
    %c0_7 = arith.constant 0 : index
    %9 = vector.load %arg4[%c0_6, %c0_7] : memref<1x128xf32, #tpu.memory_space<vmem>>, vector<1x128xf32>
    %10 = arith.mulf %5, %9 : vector<1x128xf32>
    %11 = vector.shape_cast %10 : vector<1x128xf32> to vector<1x1x128xf32>
    %12 = vector.broadcast %11 : vector<1x1x128xf32> to vector<8x16x128xf32>
    %13 = arith.mulf %8, %12 : vector<8x16x128xf32>
    %c0_8 = arith.constant 0 : index
    %c0_9 = arith.constant 0 : index
    %14 = vector.load %arg5[%c0_8, %c0_9] : memref<1x128xf32, #tpu.memory_space<vmem>>, vector<1x128xf32>
    %15 = vector.shape_cast %14 : vector<1x128xf32> to vector<1x1x128xf32>
    %16 = vector.broadcast %15 : vector<1x1x128xf32> to vector<8x16x128xf32>
    %17 = arith.addf %13, %16 : vector<8x16x128xf32>
    %cst = arith.constant 0.000000e+00 : f32
    %18 = vector.broadcast %cst : f32 to vector<8x16x128xf32>
    %19 = arith.maximumf %17, %18 : vector<8x16x128xf32>
    %20 = arith.truncf %19 : vector<8x16x128xf32> to vector<8x16x128xbf16>
    %c0_10 = arith.constant 0 : index
    %c0_11 = arith.constant 0 : index
    %c0_12 = arith.constant 0 : index
    %c0_13 = arith.constant 0 : index
    %21 = vector.load %arg6[%c0_10, %c0_11, %c0_12, %c0_13] : memref<1x8x16x128xbf16, #tpu.memory_space<vmem>>, vector<1x8x16x128xbf16>
    %22 = vector.shape_cast %21 : vector<1x8x16x128xbf16> to vector<8x16x128xbf16>
    %23 = vector.shape_cast %20 : vector<8x16x128xbf16> to vector<1x8x16x128xbf16>
    tpu.vector_store %arg6[%c0_10, %c0_11, %c0_12, %c0_13], %23 {strides = array<i32>} : memref<1x8x16x128xbf16, #tpu.memory_space<vmem>>, vector<1x8x16x128xbf16>,
    return
  }
  func.func @transform_0(%arg0: i32, %arg1: i32) -> (i32, i32, i32, i32) {
    %c0_i32 = arith.constant 0 : i32
    %c0_i32_0 = arith.constant 0 : i32
    %c0_i32_1 = arith.constant 0 : i32
    return %arg0, %arg1, %c0_i32, %c0_i32_0 : i32, i32, i32, i32
  }
  func.func @transform_1(%arg0: i32, %arg1: i32) -> (i32, i32, i32) {
    %c0_i32 = arith.constant 0 : i32
    %c0_i32_0 = arith.constant 0 : i32
    %c0_i32_1 = arith.constant 0 : i32
    return %arg0, %c0_i32, %c0_i32_0 : i32, i32, i32
  }
  func.func @transform_2(%arg0: i32, %arg1: i32) -> (i32, i32) {
    %c0_i32 = arith.constant 0 : i32
    %c0_i32_0 = arith.constant 0 : i32
    %c0_i32_1 = arith.constant 0 : i32
    return %c0_i32, %c0_i32_0 : i32, i32
  }
  func.func @transform_3(%arg0: i32, %arg1: i32) -> (i32, i32) {
    %c0_i32 = arith.constant 0 : i32
    %c0_i32_0 = arith.constant 0 : i32
    %c0_i32_1 = arith.constant 0 : i32
    return %c0_i32, %c0_i32_0 : i32, i32
  }
  func.func @transform_4(%arg0: i32, %arg1: i32) -> (i32, i32, i32, i32) {
    %c0_i32 = arith.constant 0 : i32
    %c0_i32_0 = arith.constant 0 : i32
    %c0_i32_1 = arith.constant 0 : i32
    return %arg0, %arg1, %c0_i32, %c0_i32_0 : i32, i32, i32, i32
  }
}

module attributes {stable_mosaic.version = 11 : i64} {
  func.func @_conv_stats_kernel(%arg0: i32, %arg1: i32, %arg2: memref<1x22x22x3xbf16, #tpu.memory_space<vmem>>, %arg3: memref<49x3x128xbf16, #tpu.memory_space<vmem>>, %arg4: memref<1x8x16x128xf32, #tpu.memory_space<vmem>>, %arg5: memref<1x2x128xf32, #tpu.memory_space<vmem>>, %arg6: memref<1x128xf32, #tpu.memory_space<vmem>>, %arg7: memref<1x128xf32, #tpu.memory_space<vmem>>) attributes {dimension_semantics = [#tpu.dimension_semantics<parallel>, #tpu.dimension_semantics<arbitrary>], iteration_bounds = array<i64: 2, 2>, scalar_prefetch = 0 : i64, scratch_operands = 2 : i64, tpu.core_type = #tpu.core_type<tc>, window_params = [{transform_indices = @transform_0, window_bounds = array<i64: 1, 22, 22, 3>}, {pipeline_mode = #tpu.pipeline_mode<synchronous>, transform_indices = @transform_1, window_bounds = array<i64: 49, 3, 128>}, {transform_indices = @transform_2, window_bounds = array<i64: 1, 8, 16, 128>}, {transform_indices = @transform_3, window_bounds = array<i64: 1, 2, 128>}]} {
    %c0_i32 = arith.constant 0 : i32
    %0 = arith.cmpi eq, %arg1, %c0_i32 : i32
    %1 = arith.extui %0 : i1 to i32
    %c0_i32_0 = arith.constant 0 : i32
    %2 = arith.cmpi ne, %1, %c0_i32_0 : i32
    scf.if %2 {
      %cst = arith.constant 0.000000e+00 : f32
      %8 = vector.broadcast %cst : f32 to vector<1x128xf32>
      %c0 = arith.constant 0 : index
      %c0_6 = arith.constant 0 : index
      %9 = vector.load %arg6[%c0, %c0_6] : memref<1x128xf32, #tpu.memory_space<vmem>>, vector<1x128xf32>
      tpu.vector_store %arg6[%c0, %c0_6], %8 {strides = array<i32>} : memref<1x128xf32, #tpu.memory_space<vmem>>, vector<1x128xf32>,
      %cst_7 = arith.constant 0.000000e+00 : f32
      %10 = vector.broadcast %cst_7 : f32 to vector<1x128xf32>
      %c0_8 = arith.constant 0 : index
      %c0_9 = arith.constant 0 : index
      %11 = vector.load %arg7[%c0_8, %c0_9] : memref<1x128xf32, #tpu.memory_space<vmem>>, vector<1x128xf32>
      tpu.vector_store %arg7[%c0_8, %c0_9], %10 {strides = array<i32>} : memref<1x128xf32, #tpu.memory_space<vmem>>, vector<1x128xf32>,
    } else {
    }
    %c8_i32 = arith.constant 8 : i32
    %3 = arith.muli %arg1, %c8_i32 : i32
    %c0_i32_1 = arith.constant 0 : i32
    %c8_i32_2 = arith.constant 8 : i32
    %4 = arith.addi %c0_i32_1, %c8_i32_2 : i32
    %c1_i32 = arith.constant 1 : i32
    scf.for %arg8 = %c0_i32_1 to %4 step %c1_i32  : i32 {
      %c1_i32_6 = arith.constant 1 : i32
      %8 = arith.muli %arg8, %c1_i32_6 : i32
      %c0_i32_7 = arith.constant 0 : i32
      %9 = arith.addi %c0_i32_7, %8 : i32
      %cst = arith.constant 0.000000e+00 : f32
      %10 = vector.broadcast %cst : f32 to vector<16x128xf32>
      %11 = arith.addi %3, %9 : i32
      %c0_i32_8 = arith.constant 0 : i32
      %12 = arith.addi %11, %c0_i32_8 : i32
      %c0 = arith.constant 0 : index
      %13 = arith.index_cast %12 : i32 to index
      %c0_9 = arith.constant 0 : index
      %c0_10 = arith.constant 0 : index
      %14 = vector.load %arg2[%c0, %13, %c0_9, %c0_10] : memref<1x22x22x3xbf16, #tpu.memory_space<vmem>>, vector<1x1x16x3xbf16>
      %15 = vector.shape_cast %14 : vector<1x1x16x3xbf16> to vector<16x3xbf16>
      %c0_11 = arith.constant 0 : index
      %c0_12 = arith.constant 0 : index
      %c0_13 = arith.constant 0 : index
      %16 = vector.load %arg3[%c0_11, %c0_12, %c0_13] : memref<49x3x128xbf16, #tpu.memory_space<vmem>>, vector<1x3x128xbf16>
      %17 = vector.shape_cast %16 : vector<1x3x128xbf16> to vector<3x128xbf16>
      %cst_14 = arith.constant dense<0.000000e+00> : vector<16x128xf32>
      %18 = tpu.matmul %15, %17, %cst_14 {dimension_numbers = #tpu.dot_dimension_numbers<[1], [0], [0], [1], [0, 0, 1, 1], [], []>} : vector<16x3xbf16>, vector<3x128xbf16>, vector<16x128xf32> -> vector<16x128xf32>
      %19 = arith.addf %10, %18 : vector<16x128xf32>
      %20 = arith.addi %3, %9 : i32
      %c0_i32_15 = arith.constant 0 : i32
      %21 = arith.addi %20, %c0_i32_15 : i32
      %c0_16 = arith.constant 0 : index
      %22 = arith.index_cast %21 : i32 to index
      %c1 = arith.constant 1 : index
      %c0_17 = arith.constant 0 : index
      %23 = vector.load %arg2[%c0_16, %22, %c1, %c0_17] : memref<1x22x22x3xbf16, #tpu.memory_space<vmem>>, vector<1x1x16x3xbf16>
      %24 = vector.shape_cast %23 : vector<1x1x16x3xbf16> to vector<16x3xbf16>
      %c1_18 = arith.constant 1 : index
      %c0_19 = arith.constant 0 : index
      %c0_20 = arith.constant 0 : index
      %25 = vector.load %arg3[%c1_18, %c0_19, %c0_20] : memref<49x3x128xbf16, #tpu.memory_space<vmem>>, vector<1x3x128xbf16>
      %26 = vector.shape_cast %25 : vector<1x3x128xbf16> to vector<3x128xbf16>
      %cst_21 = arith.constant dense<0.000000e+00> : vector<16x128xf32>
      %27 = tpu.matmul %24, %26, %cst_21 {dimension_numbers = #tpu.dot_dimension_numbers<[1], [0], [0], [1], [0, 0, 1, 1], [], []>} : vector<16x3xbf16>, vector<3x128xbf16>, vector<16x128xf32> -> vector<16x128xf32>
      %28 = arith.addf %19, %27 : vector<16x128xf32>
      %29 = arith.addi %3, %9 : i32
      %c0_i32_22 = arith.constant 0 : i32
      %30 = arith.addi %29, %c0_i32_22 : i32
      %c0_23 = arith.constant 0 : index
      %31 = arith.index_cast %30 : i32 to index
      %c2 = arith.constant 2 : index
      %c0_24 = arith.constant 0 : index
      %32 = vector.load %arg2[%c0_23, %31, %c2, %c0_24] : memref<1x22x22x3xbf16, #tpu.memory_space<vmem>>, vector<1x1x16x3xbf16>
      %33 = vector.shape_cast %32 : vector<1x1x16x3xbf16> to vector<16x3xbf16>
      %c2_25 = arith.constant 2 : index
      %c0_26 = arith.constant 0 : index
      %c0_27 = arith.constant 0 : index
      %34 = vector.load %arg3[%c2_25, %c0_26, %c0_27] : memref<49x3x128xbf16, #tpu.memory_space<vmem>>, vector<1x3x128xbf16>
      %35 = vector.shape_cast %34 : vector<1x3x128xbf16> to vector<3x128xbf16>
      %cst_28 = arith.constant dense<0.000000e+00> : vector<16x128xf32>
      %36 = tpu.matmul %33, %35, %cst_28 {dimension_numbers = #tpu.dot_dimension_numbers<[1], [0], [0], [1], [0, 0, 1, 1], [], []>} : vector<16x3xbf16>, vector<3x128xbf16>, vector<16x128xf32> -> vector<16x128xf32>
      %37 = arith.addf %28, %36 : vector<16x128xf32>
      %38 = arith.addi %3, %9 : i32
      %c0_i32_29 = arith.constant 0 : i32
      %39 = arith.addi %38, %c0_i32_29 : i32
      %c0_30 = arith.constant 0 : index
      %40 = arith.index_cast %39 : i32 to index
      %c3 = arith.constant 3 : index
      %c0_31 = arith.constant 0 : index
      %41 = vector.load %arg2[%c0_30, %40, %c3, %c0_31] : memref<1x22x22x3xbf16, #tpu.memory_space<vmem>>, vector<1x1x16x3xbf16>
      %42 = vector.shape_cast %41 : vector<1x1x16x3xbf16> to vector<16x3xbf16>
      %c3_32 = arith.constant 3 : index
      %c0_33 = arith.constant 0 : index
      %c0_34 = arith.constant 0 : index
      %43 = vector.load %arg3[%c3_32, %c0_33, %c0_34] : memref<49x3x128xbf16, #tpu.memory_space<vmem>>, vector<1x3x128xbf16>
      %44 = vector.shape_cast %43 : vector<1x3x128xbf16> to vector<3x128xbf16>
      %cst_35 = arith.constant dense<0.000000e+00> : vector<16x128xf32>
      %45 = tpu.matmul %42, %44, %cst_35 {dimension_numbers = #tpu.dot_dimension_numbers<[1], [0], [0], [1], [0, 0, 1, 1], [], []>} : vector<16x3xbf16>, vector<3x128xbf16>, vector<16x128xf32> -> vector<16x128xf32>
      %46 = arith.addf %37, %45 : vector<16x128xf32>
      %47 = arith.addi %3, %9 : i32
      %c0_i32_36 = arith.constant 0 : i32
      %48 = arith.addi %47, %c0_i32_36 : i32
      %c0_37 = arith.constant 0 : index
      %49 = arith.index_cast %48 : i32 to index
      %c4 = arith.constant 4 : index
      %c0_38 = arith.constant 0 : index
      %50 = vector.load %arg2[%c0_37, %49, %c4, %c0_38] : memref<1x22x22x3xbf16, #tpu.memory_space<vmem>>, vector<1x1x16x3xbf16>
      %51 = vector.shape_cast %50 : vector<1x1x16x3xbf16> to vector<16x3xbf16>
      %c4_39 = arith.constant 4 : index
      %c0_40 = arith.constant 0 : index
      %c0_41 = arith.constant 0 : index
      %52 = vector.load %arg3[%c4_39, %c0_40, %c0_41] : memref<49x3x128xbf16, #tpu.memory_space<vmem>>, vector<1x3x128xbf16>
      %53 = vector.shape_cast %52 : vector<1x3x128xbf16> to vector<3x128xbf16>
      %cst_42 = arith.constant dense<0.000000e+00> : vector<16x128xf32>
      %54 = tpu.matmul %51, %53, %cst_42 {dimension_numbers = #tpu.dot_dimension_numbers<[1], [0], [0], [1], [0, 0, 1, 1], [], []>} : vector<16x3xbf16>, vector<3x128xbf16>, vector<16x128xf32> -> vector<16x128xf32>
      %55 = arith.addf %46, %54 : vector<16x128xf32>
      %56 = arith.addi %3, %9 : i32
      %c0_i32_43 = arith.constant 0 : i32
      %57 = arith.addi %56, %c0_i32_43 : i32
      %c0_44 = arith.constant 0 : index
      %58 = arith.index_cast %57 : i32 to index
      %c5 = arith.constant 5 : index
      %c0_45 = arith.constant 0 : index
      %59 = vector.load %arg2[%c0_44, %58, %c5, %c0_45] : memref<1x22x22x3xbf16, #tpu.memory_space<vmem>>, vector<1x1x16x3xbf16>
      %60 = vector.shape_cast %59 : vector<1x1x16x3xbf16> to vector<16x3xbf16>
      %c5_46 = arith.constant 5 : index
      %c0_47 = arith.constant 0 : index
      %c0_48 = arith.constant 0 : index
      %61 = vector.load %arg3[%c5_46, %c0_47, %c0_48] : memref<49x3x128xbf16, #tpu.memory_space<vmem>>, vector<1x3x128xbf16>
      %62 = vector.shape_cast %61 : vector<1x3x128xbf16> to vector<3x128xbf16>
      %cst_49 = arith.constant dense<0.000000e+00> : vector<16x128xf32>
      %63 = tpu.matmul %60, %62, %cst_49 {dimension_numbers = #tpu.dot_dimension_numbers<[1], [0], [0], [1], [0, 0, 1, 1], [], []>} : vector<16x3xbf16>, vector<3x128xbf16>, vector<16x128xf32> -> vector<16x128xf32>
      %64 = arith.addf %55, %63 : vector<16x128xf32>
      %65 = arith.addi %3, %9 : i32
      %c0_i32_50 = arith.constant 0 : i32
      %66 = arith.addi %65, %c0_i32_50 : i32
      %c0_51 = arith.constant 0 : index
      %67 = arith.index_cast %66 : i32 to index
      %c6 = arith.constant 6 : index
      %c0_52 = arith.constant 0 : index
      %68 = vector.load %arg2[%c0_51, %67, %c6, %c0_52] : memref<1x22x22x3xbf16, #tpu.memory_space<vmem>>, vector<1x1x16x3xbf16>
      %69 = vector.shape_cast %68 : vector<1x1x16x3xbf16> to vector<16x3xbf16>
      %c6_53 = arith.constant 6 : index
      %c0_54 = arith.constant 0 : index
      %c0_55 = arith.constant 0 : index
      %70 = vector.load %arg3[%c6_53, %c0_54, %c0_55] : memref<49x3x128xbf16, #tpu.memory_space<vmem>>, vector<1x3x128xbf16>
      %71 = vector.shape_cast %70 : vector<1x3x128xbf16> to vector<3x128xbf16>
      %cst_56 = arith.constant dense<0.000000e+00> : vector<16x128xf32>
      %72 = tpu.matmul %69, %71, %cst_56 {dimension_numbers = #tpu.dot_dimension_numbers<[1], [0], [0], [1], [0, 0, 1, 1], [], []>} : vector<16x3xbf16>, vector<3x128xbf16>, vector<16x128xf32> -> vector<16x128xf32>
      %73 = arith.addf %64, %72 : vector<16x128xf32>
      %74 = arith.addi %3, %9 : i32
      %c1_i32_57 = arith.constant 1 : i32
      %75 = arith.addi %74, %c1_i32_57 : i32
      %c0_58 = arith.constant 0 : index
      %76 = arith.index_cast %75 : i32 to index
      %c0_59 = arith.constant 0 : index
      %c0_60 = arith.constant 0 : index
      %77 = vector.load %arg2[%c0_58, %76, %c0_59, %c0_60] : memref<1x22x22x3xbf16, #tpu.memory_space<vmem>>, vector<1x1x16x3xbf16>
      %78 = vector.shape_cast %77 : vector<1x1x16x3xbf16> to vector<16x3xbf16>
      %c7 = arith.constant 7 : index
      %c0_61 = arith.constant 0 : index
      %c0_62 = arith.constant 0 : index
      %79 = vector.load %arg3[%c7, %c0_61, %c0_62] : memref<49x3x128xbf16, #tpu.memory_space<vmem>>, vector<1x3x128xbf16>
      %80 = vector.shape_cast %79 : vector<1x3x128xbf16> to vector<3x128xbf16>
      %cst_63 = arith.constant dense<0.000000e+00> : vector<16x128xf32>
      %81 = tpu.matmul %78, %80, %cst_63 {dimension_numbers = #tpu.dot_dimension_numbers<[1], [0], [0], [1], [0, 0, 1, 1], [], []>} : vector<16x3xbf16>, vector<3x128xbf16>, vector<16x128xf32> -> vector<16x128xf32>
      %82 = arith.addf %73, %81 : vector<16x128xf32>
      %83 = arith.addi %3, %9 : i32
      %c1_i32_64 = arith.constant 1 : i32
      %84 = arith.addi %83, %c1_i32_64 : i32
      %c0_65 = arith.constant 0 : index
      %85 = arith.index_cast %84 : i32 to index
      %c1_66 = arith.constant 1 : index
      %c0_67 = arith.constant 0 : index
      %86 = vector.load %arg2[%c0_65, %85, %c1_66, %c0_67] : memref<1x22x22x3xbf16, #tpu.memory_space<vmem>>, vector<1x1x16x3xbf16>
      %87 = vector.shape_cast %86 : vector<1x1x16x3xbf16> to vector<16x3xbf16>
      %c8 = arith.constant 8 : index
      %c0_68 = arith.constant 0 : index
      %c0_69 = arith.constant 0 : index
      %88 = vector.load %arg3[%c8, %c0_68, %c0_69] : memref<49x3x128xbf16, #tpu.memory_space<vmem>>, vector<1x3x128xbf16>
      %89 = vector.shape_cast %88 : vector<1x3x128xbf16> to vector<3x128xbf16>
      %cst_70 = arith.constant dense<0.000000e+00> : vector<16x128xf32>
      %90 = tpu.matmul %87, %89, %cst_70 {dimension_numbers = #tpu.dot_dimension_numbers<[1], [0], [0], [1], [0, 0, 1, 1], [], []>} : vector<16x3xbf16>, vector<3x128xbf16>, vector<16x128xf32> -> vector<16x128xf32>
      %91 = arith.addf %82, %90 : vector<16x128xf32>
      %92 = arith.addi %3, %9 : i32
      %c1_i32_71 = arith.constant 1 : i32
      %93 = arith.addi %92, %c1_i32_71 : i32
      %c0_72 = arith.constant 0 : index
      %94 = arith.index_cast %93 : i32 to index
      %c2_73 = arith.constant 2 : index
      %c0_74 = arith.constant 0 : index
      %95 = vector.load %arg2[%c0_72, %94, %c2_73, %c0_74] : memref<1x22x22x3xbf16, #tpu.memory_space<vmem>>, vector<1x1x16x3xbf16>
      %96 = vector.shape_cast %95 : vector<1x1x16x3xbf16> to vector<16x3xbf16>
      %c9 = arith.constant 9 : index
      %c0_75 = arith.constant 0 : index
      %c0_76 = arith.constant 0 : index
      %97 = vector.load %arg3[%c9, %c0_75, %c0_76] : memref<49x3x128xbf16, #tpu.memory_space<vmem>>, vector<1x3x128xbf16>
      %98 = vector.shape_cast %97 : vector<1x3x128xbf16> to vector<3x128xbf16>
      %cst_77 = arith.constant dense<0.000000e+00> : vector<16x128xf32>
      %99 = tpu.matmul %96, %98, %cst_77 {dimension_numbers = #tpu.dot_dimension_numbers<[1], [0], [0], [1], [0, 0, 1, 1], [], []>} : vector<16x3xbf16>, vector<3x128xbf16>, vector<16x128xf32> -> vector<16x128xf32>
      %100 = arith.addf %91, %99 : vector<16x128xf32>
      %101 = arith.addi %3, %9 : i32
      %c1_i32_78 = arith.constant 1 : i32
      %102 = arith.addi %101, %c1_i32_78 : i32
      %c0_79 = arith.constant 0 : index
      %103 = arith.index_cast %102 : i32 to index
      %c3_80 = arith.constant 3 : index
      %c0_81 = arith.constant 0 : index
      %104 = vector.load %arg2[%c0_79, %103, %c3_80, %c0_81] : memref<1x22x22x3xbf16, #tpu.memory_space<vmem>>, vector<1x1x16x3xbf16>
      %105 = vector.shape_cast %104 : vector<1x1x16x3xbf16> to vector<16x3xbf16>
      %c10 = arith.constant 10 : index
      %c0_82 = arith.constant 0 : index
      %c0_83 = arith.constant 0 : index
      %106 = vector.load %arg3[%c10, %c0_82, %c0_83] : memref<49x3x128xbf16, #tpu.memory_space<vmem>>, vector<1x3x128xbf16>
      %107 = vector.shape_cast %106 : vector<1x3x128xbf16> to vector<3x128xbf16>
      %cst_84 = arith.constant dense<0.000000e+00> : vector<16x128xf32>
      %108 = tpu.matmul %105, %107, %cst_84 {dimension_numbers = #tpu.dot_dimension_numbers<[1], [0], [0], [1], [0, 0, 1, 1], [], []>} : vector<16x3xbf16>, vector<3x128xbf16>, vector<16x128xf32> -> vector<16x128xf32>
      %109 = arith.addf %100, %108 : vector<16x128xf32>
      %110 = arith.addi %3, %9 : i32
      %c1_i32_85 = arith.constant 1 : i32
      %111 = arith.addi %110, %c1_i32_85 : i32
      %c0_86 = arith.constant 0 : index
      %112 = arith.index_cast %111 : i32 to index
      %c4_87 = arith.constant 4 : index
      %c0_88 = arith.constant 0 : index
      %113 = vector.load %arg2[%c0_86, %112, %c4_87, %c0_88] : memref<1x22x22x3xbf16, #tpu.memory_space<vmem>>, vector<1x1x16x3xbf16>
      %114 = vector.shape_cast %113 : vector<1x1x16x3xbf16> to vector<16x3xbf16>
      %c11 = arith.constant 11 : index
      %c0_89 = arith.constant 0 : index
      %c0_90 = arith.constant 0 : index
      %115 = vector.load %arg3[%c11, %c0_89, %c0_90] : memref<49x3x128xbf16, #tpu.memory_space<vmem>>, vector<1x3x128xbf16>
      %116 = vector.shape_cast %115 : vector<1x3x128xbf16> to vector<3x128xbf16>
      %cst_91 = arith.constant dense<0.000000e+00> : vector<16x128xf32>
      %117 = tpu.matmul %114, %116, %cst_91 {dimension_numbers = #tpu.dot_dimension_numbers<[1], [0], [0], [1], [0, 0, 1, 1], [], []>} : vector<16x3xbf16>, vector<3x128xbf16>, vector<16x128xf32> -> vector<16x128xf32>
      %118 = arith.addf %109, %117 : vector<16x128xf32>
      %119 = arith.addi %3, %9 : i32
      %c1_i32_92 = arith.constant 1 : i32
      %120 = arith.addi %119, %c1_i32_92 : i32
      %c0_93 = arith.constant 0 : index
      %121 = arith.index_cast %120 : i32 to index
      %c5_94 = arith.constant 5 : index
      %c0_95 = arith.constant 0 : index
      %122 = vector.load %arg2[%c0_93, %121, %c5_94, %c0_95] : memref<1x22x22x3xbf16, #tpu.memory_space<vmem>>, vector<1x1x16x3xbf16>
      %123 = vector.shape_cast %122 : vector<1x1x16x3xbf16> to vector<16x3xbf16>
      %c12 = arith.constant 12 : index
      %c0_96 = arith.constant 0 : index
      %c0_97 = arith.constant 0 : index
      %124 = vector.load %arg3[%c12, %c0_96, %c0_97] : memref<49x3x128xbf16, #tpu.memory_space<vmem>>, vector<1x3x128xbf16>
      %125 = vector.shape_cast %124 : vector<1x3x128xbf16> to vector<3x128xbf16>
      %cst_98 = arith.constant dense<0.000000e+00> : vector<16x128xf32>
      %126 = tpu.matmul %123, %125, %cst_98 {dimension_numbers = #tpu.dot_dimension_numbers<[1], [0], [0], [1], [0, 0, 1, 1], [], []>} : vector<16x3xbf16>, vector<3x128xbf16>, vector<16x128xf32> -> vector<16x128xf32>
      %127 = arith.addf %118, %126 : vector<16x128xf32>
      %128 = arith.addi %3, %9 : i32
      %c1_i32_99 = arith.constant 1 : i32
      %129 = arith.addi %128, %c1_i32_99 : i32
      %c0_100 = arith.constant 0 : index
      %130 = arith.index_cast %129 : i32 to index
      %c6_101 = arith.constant 6 : index
      %c0_102 = arith.constant 0 : index
      %131 = vector.load %arg2[%c0_100, %130, %c6_101, %c0_102] : memref<1x22x22x3xbf16, #tpu.memory_space<vmem>>, vector<1x1x16x3xbf16>
      %132 = vector.shape_cast %131 : vector<1x1x16x3xbf16> to vector<16x3xbf16>
      %c13 = arith.constant 13 : index
      %c0_103 = arith.constant 0 : index
      %c0_104 = arith.constant 0 : index
      %133 = vector.load %arg3[%c13, %c0_103, %c0_104] : memref<49x3x128xbf16, #tpu.memory_space<vmem>>, vector<1x3x128xbf16>
      %134 = vector.shape_cast %133 : vector<1x3x128xbf16> to vector<3x128xbf16>
      %cst_105 = arith.constant dense<0.000000e+00> : vector<16x128xf32>
      %135 = tpu.matmul %132, %134, %cst_105 {dimension_numbers = #tpu.dot_dimension_numbers<[1], [0], [0], [1], [0, 0, 1, 1], [], []>} : vector<16x3xbf16>, vector<3x128xbf16>, vector<16x128xf32> -> vector<16x128xf32>
      %136 = arith.addf %127, %135 : vector<16x128xf32>
      %137 = arith.addi %3, %9 : i32
      %c2_i32 = arith.constant 2 : i32
      %138 = arith.addi %137, %c2_i32 : i32
      %c0_106 = arith.constant 0 : index
      %139 = arith.index_cast %138 : i32 to index
      %c0_107 = arith.constant 0 : index
      %c0_108 = arith.constant 0 : index
      %140 = vector.load %arg2[%c0_106, %139, %c0_107, %c0_108] : memref<1x22x22x3xbf16, #tpu.memory_space<vmem>>, vector<1x1x16x3xbf16>
      %141 = vector.shape_cast %140 : vector<1x1x16x3xbf16> to vector<16x3xbf16>
      %c14 = arith.constant 14 : index
      %c0_109 = arith.constant 0 : index
      %c0_110 = arith.constant 0 : index
      %142 = vector.load %arg3[%c14, %c0_109, %c0_110] : memref<49x3x128xbf16, #tpu.memory_space<vmem>>, vector<1x3x128xbf16>
      %143 = vector.shape_cast %142 : vector<1x3x128xbf16> to vector<3x128xbf16>
      %cst_111 = arith.constant dense<0.000000e+00> : vector<16x128xf32>
      %144 = tpu.matmul %141, %143, %cst_111 {dimension_numbers = #tpu.dot_dimension_numbers<[1], [0], [0], [1], [0, 0, 1, 1], [], []>} : vector<16x3xbf16>, vector<3x128xbf16>, vector<16x128xf32> -> vector<16x128xf32>
      %145 = arith.addf %136, %144 : vector<16x128xf32>
      %146 = arith.addi %3, %9 : i32
      %c2_i32_112 = arith.constant 2 : i32
      %147 = arith.addi %146, %c2_i32_112 : i32
      %c0_113 = arith.constant 0 : index
      %148 = arith.index_cast %147 : i32 to index
      %c1_114 = arith.constant 1 : index
      %c0_115 = arith.constant 0 : index
      %149 = vector.load %arg2[%c0_113, %148, %c1_114, %c0_115] : memref<1x22x22x3xbf16, #tpu.memory_space<vmem>>, vector<1x1x16x3xbf16>
      %150 = vector.shape_cast %149 : vector<1x1x16x3xbf16> to vector<16x3xbf16>
      %c15 = arith.constant 15 : index
      %c0_116 = arith.constant 0 : index
      %c0_117 = arith.constant 0 : index
      %151 = vector.load %arg3[%c15, %c0_116, %c0_117] : memref<49x3x128xbf16, #tpu.memory_space<vmem>>, vector<1x3x128xbf16>
      %152 = vector.shape_cast %151 : vector<1x3x128xbf16> to vector<3x128xbf16>
      %cst_118 = arith.constant dense<0.000000e+00> : vector<16x128xf32>
      %153 = tpu.matmul %150, %152, %cst_118 {dimension_numbers = #tpu.dot_dimension_numbers<[1], [0], [0], [1], [0, 0, 1, 1], [], []>} : vector<16x3xbf16>, vector<3x128xbf16>, vector<16x128xf32> -> vector<16x128xf32>
      %154 = arith.addf %145, %153 : vector<16x128xf32>
      %155 = arith.addi %3, %9 : i32
      %c2_i32_119 = arith.constant 2 : i32
      %156 = arith.addi %155, %c2_i32_119 : i32
      %c0_120 = arith.constant 0 : index
      %157 = arith.index_cast %156 : i32 to index
      %c2_121 = arith.constant 2 : index
      %c0_122 = arith.constant 0 : index
      %158 = vector.load %arg2[%c0_120, %157, %c2_121, %c0_122] : memref<1x22x22x3xbf16, #tpu.memory_space<vmem>>, vector<1x1x16x3xbf16>
      %159 = vector.shape_cast %158 : vector<1x1x16x3xbf16> to vector<16x3xbf16>
      %c16 = arith.constant 16 : index
      %c0_123 = arith.constant 0 : index
      %c0_124 = arith.constant 0 : index
      %160 = vector.load %arg3[%c16, %c0_123, %c0_124] : memref<49x3x128xbf16, #tpu.memory_space<vmem>>, vector<1x3x128xbf16>
      %161 = vector.shape_cast %160 : vector<1x3x128xbf16> to vector<3x128xbf16>
      %cst_125 = arith.constant dense<0.000000e+00> : vector<16x128xf32>
      %162 = tpu.matmul %159, %161, %cst_125 {dimension_numbers = #tpu.dot_dimension_numbers<[1], [0], [0], [1], [0, 0, 1, 1], [], []>} : vector<16x3xbf16>, vector<3x128xbf16>, vector<16x128xf32> -> vector<16x128xf32>
      %163 = arith.addf %154, %162 : vector<16x128xf32>
      %164 = arith.addi %3, %9 : i32
      %c2_i32_126 = arith.constant 2 : i32
      %165 = arith.addi %164, %c2_i32_126 : i32
      %c0_127 = arith.constant 0 : index
      %166 = arith.index_cast %165 : i32 to index
      %c3_128 = arith.constant 3 : index
      %c0_129 = arith.constant 0 : index
      %167 = vector.load %arg2[%c0_127, %166, %c3_128, %c0_129] : memref<1x22x22x3xbf16, #tpu.memory_space<vmem>>, vector<1x1x16x3xbf16>
      %168 = vector.shape_cast %167 : vector<1x1x16x3xbf16> to vector<16x3xbf16>
      %c17 = arith.constant 17 : index
      %c0_130 = arith.constant 0 : index
      %c0_131 = arith.constant 0 : index
      %169 = vector.load %arg3[%c17, %c0_130, %c0_131] : memref<49x3x128xbf16, #tpu.memory_space<vmem>>, vector<1x3x128xbf16>
      %170 = vector.shape_cast %169 : vector<1x3x128xbf16> to vector<3x128xbf16>
      %cst_132 = arith.constant dense<0.000000e+00> : vector<16x128xf32>
      %171 = tpu.matmul %168, %170, %cst_132 {dimension_numbers = #tpu.dot_dimension_numbers<[1], [0], [0], [1], [0, 0, 1, 1], [], []>} : vector<16x3xbf16>, vector<3x128xbf16>, vector<16x128xf32> -> vector<16x128xf32>
      %172 = arith.addf %163, %171 : vector<16x128xf32>
      %173 = arith.addi %3, %9 : i32
      %c2_i32_133 = arith.constant 2 : i32
      %174 = arith.addi %173, %c2_i32_133 : i32
      %c0_134 = arith.constant 0 : index
      %175 = arith.index_cast %174 : i32 to index
      %c4_135 = arith.constant 4 : index
      %c0_136 = arith.constant 0 : index
      %176 = vector.load %arg2[%c0_134, %175, %c4_135, %c0_136] : memref<1x22x22x3xbf16, #tpu.memory_space<vmem>>, vector<1x1x16x3xbf16>
      %177 = vector.shape_cast %176 : vector<1x1x16x3xbf16> to vector<16x3xbf16>
      %c18 = arith.constant 18 : index
      %c0_137 = arith.constant 0 : index
      %c0_138 = arith.constant 0 : index
      %178 = vector.load %arg3[%c18, %c0_137, %c0_138] : memref<49x3x128xbf16, #tpu.memory_space<vmem>>, vector<1x3x128xbf16>
      %179 = vector.shape_cast %178 : vector<1x3x128xbf16> to vector<3x128xbf16>
      %cst_139 = arith.constant dense<0.000000e+00> : vector<16x128xf32>
      %180 = tpu.matmul %177, %179, %cst_139 {dimension_numbers = #tpu.dot_dimension_numbers<[1], [0], [0], [1], [0, 0, 1, 1], [], []>} : vector<16x3xbf16>, vector<3x128xbf16>, vector<16x128xf32> -> vector<16x128xf32>
      %181 = arith.addf %172, %180 : vector<16x128xf32>
      %182 = arith.addi %3, %9 : i32
      %c2_i32_140 = arith.constant 2 : i32
      %183 = arith.addi %182, %c2_i32_140 : i32
      %c0_141 = arith.constant 0 : index
      %184 = arith.index_cast %183 : i32 to index
      %c5_142 = arith.constant 5 : index
      %c0_143 = arith.constant 0 : index
      %185 = vector.load %arg2[%c0_141, %184, %c5_142, %c0_143] : memref<1x22x22x3xbf16, #tpu.memory_space<vmem>>, vector<1x1x16x3xbf16>
      %186 = vector.shape_cast %185 : vector<1x1x16x3xbf16> to vector<16x3xbf16>
      %c19 = arith.constant 19 : index
      %c0_144 = arith.constant 0 : index
      %c0_145 = arith.constant 0 : index
      %187 = vector.load %arg3[%c19, %c0_144, %c0_145] : memref<49x3x128xbf16, #tpu.memory_space<vmem>>, vector<1x3x128xbf16>
      %188 = vector.shape_cast %187 : vector<1x3x128xbf16> to vector<3x128xbf16>
      %cst_146 = arith.constant dense<0.000000e+00> : vector<16x128xf32>
      %189 = tpu.matmul %186, %188, %cst_146 {dimension_numbers = #tpu.dot_dimension_numbers<[1], [0], [0], [1], [0, 0, 1, 1], [], []>} : vector<16x3xbf16>, vector<3x128xbf16>, vector<16x128xf32> -> vector<16x128xf32>
      %190 = arith.addf %181, %189 : vector<16x128xf32>
      %191 = arith.addi %3, %9 : i32
      %c2_i32_147 = arith.constant 2 : i32
      %192 = arith.addi %191, %c2_i32_147 : i32
      %c0_148 = arith.constant 0 : index
      %193 = arith.index_cast %192 : i32 to index
      %c6_149 = arith.constant 6 : index
      %c0_150 = arith.constant 0 : index
      %194 = vector.load %arg2[%c0_148, %193, %c6_149, %c0_150] : memref<1x22x22x3xbf16, #tpu.memory_space<vmem>>, vector<1x1x16x3xbf16>
      %195 = vector.shape_cast %194 : vector<1x1x16x3xbf16> to vector<16x3xbf16>
      %c20 = arith.constant 20 : index
      %c0_151 = arith.constant 0 : index
      %c0_152 = arith.constant 0 : index
      %196 = vector.load %arg3[%c20, %c0_151, %c0_152] : memref<49x3x128xbf16, #tpu.memory_space<vmem>>, vector<1x3x128xbf16>
      %197 = vector.shape_cast %196 : vector<1x3x128xbf16> to vector<3x128xbf16>
      %cst_153 = arith.constant dense<0.000000e+00> : vector<16x128xf32>
      %198 = tpu.matmul %195, %197, %cst_153 {dimension_numbers = #tpu.dot_dimension_numbers<[1], [0], [0], [1], [0, 0, 1, 1], [], []>} : vector<16x3xbf16>, vector<3x128xbf16>, vector<16x128xf32> -> vector<16x128xf32>
      %199 = arith.addf %190, %198 : vector<16x128xf32>
      %200 = arith.addi %3, %9 : i32
      %c3_i32 = arith.constant 3 : i32
      %201 = arith.addi %200, %c3_i32 : i32
      %c0_154 = arith.constant 0 : index
      %202 = arith.index_cast %201 : i32 to index
      %c0_155 = arith.constant 0 : index
      %c0_156 = arith.constant 0 : index
      %203 = vector.load %arg2[%c0_154, %202, %c0_155, %c0_156] : memref<1x22x22x3xbf16, #tpu.memory_space<vmem>>, vector<1x1x16x3xbf16>
      %204 = vector.shape_cast %203 : vector<1x1x16x3xbf16> to vector<16x3xbf16>
      %c21 = arith.constant 21 : index
      %c0_157 = arith.constant 0 : index
      %c0_158 = arith.constant 0 : index
      %205 = vector.load %arg3[%c21, %c0_157, %c0_158] : memref<49x3x128xbf16, #tpu.memory_space<vmem>>, vector<1x3x128xbf16>
      %206 = vector.shape_cast %205 : vector<1x3x128xbf16> to vector<3x128xbf16>
      %cst_159 = arith.constant dense<0.000000e+00> : vector<16x128xf32>
      %207 = tpu.matmul %204, %206, %cst_159 {dimension_numbers = #tpu.dot_dimension_numbers<[1], [0], [0], [1], [0, 0, 1, 1], [], []>} : vector<16x3xbf16>, vector<3x128xbf16>, vector<16x128xf32> -> vector<16x128xf32>
      %208 = arith.addf %199, %207 : vector<16x128xf32>
      %209 = arith.addi %3, %9 : i32
      %c3_i32_160 = arith.constant 3 : i32
      %210 = arith.addi %209, %c3_i32_160 : i32
      %c0_161 = arith.constant 0 : index
      %211 = arith.index_cast %210 : i32 to index
      %c1_162 = arith.constant 1 : index
      %c0_163 = arith.constant 0 : index
      %212 = vector.load %arg2[%c0_161, %211, %c1_162, %c0_163] : memref<1x22x22x3xbf16, #tpu.memory_space<vmem>>, vector<1x1x16x3xbf16>
      %213 = vector.shape_cast %212 : vector<1x1x16x3xbf16> to vector<16x3xbf16>
      %c22 = arith.constant 22 : index
      %c0_164 = arith.constant 0 : index
      %c0_165 = arith.constant 0 : index
      %214 = vector.load %arg3[%c22, %c0_164, %c0_165] : memref<49x3x128xbf16, #tpu.memory_space<vmem>>, vector<1x3x128xbf16>
      %215 = vector.shape_cast %214 : vector<1x3x128xbf16> to vector<3x128xbf16>
      %cst_166 = arith.constant dense<0.000000e+00> : vector<16x128xf32>
      %216 = tpu.matmul %213, %215, %cst_166 {dimension_numbers = #tpu.dot_dimension_numbers<[1], [0], [0], [1], [0, 0, 1, 1], [], []>} : vector<16x3xbf16>, vector<3x128xbf16>, vector<16x128xf32> -> vector<16x128xf32>
      %217 = arith.addf %208, %216 : vector<16x128xf32>
      %218 = arith.addi %3, %9 : i32
      %c3_i32_167 = arith.constant 3 : i32
      %219 = arith.addi %218, %c3_i32_167 : i32
      %c0_168 = arith.constant 0 : index
      %220 = arith.index_cast %219 : i32 to index
      %c2_169 = arith.constant 2 : index
      %c0_170 = arith.constant 0 : index
      %221 = vector.load %arg2[%c0_168, %220, %c2_169, %c0_170] : memref<1x22x22x3xbf16, #tpu.memory_space<vmem>>, vector<1x1x16x3xbf16>
      %222 = vector.shape_cast %221 : vector<1x1x16x3xbf16> to vector<16x3xbf16>
      %c23 = arith.constant 23 : index
      %c0_171 = arith.constant 0 : index
      %c0_172 = arith.constant 0 : index
      %223 = vector.load %arg3[%c23, %c0_171, %c0_172] : memref<49x3x128xbf16, #tpu.memory_space<vmem>>, vector<1x3x128xbf16>
      %224 = vector.shape_cast %223 : vector<1x3x128xbf16> to vector<3x128xbf16>
      %cst_173 = arith.constant dense<0.000000e+00> : vector<16x128xf32>
      %225 = tpu.matmul %222, %224, %cst_173 {dimension_numbers = #tpu.dot_dimension_numbers<[1], [0], [0], [1], [0, 0, 1, 1], [], []>} : vector<16x3xbf16>, vector<3x128xbf16>, vector<16x128xf32> -> vector<16x128xf32>
      %226 = arith.addf %217, %225 : vector<16x128xf32>
      %227 = arith.addi %3, %9 : i32
      %c3_i32_174 = arith.constant 3 : i32
      %228 = arith.addi %227, %c3_i32_174 : i32
      %c0_175 = arith.constant 0 : index
      %229 = arith.index_cast %228 : i32 to index
      %c3_176 = arith.constant 3 : index
      %c0_177 = arith.constant 0 : index
      %230 = vector.load %arg2[%c0_175, %229, %c3_176, %c0_177] : memref<1x22x22x3xbf16, #tpu.memory_space<vmem>>, vector<1x1x16x3xbf16>
      %231 = vector.shape_cast %230 : vector<1x1x16x3xbf16> to vector<16x3xbf16>
      %c24 = arith.constant 24 : index
      %c0_178 = arith.constant 0 : index
      %c0_179 = arith.constant 0 : index
      %232 = vector.load %arg3[%c24, %c0_178, %c0_179] : memref<49x3x128xbf16, #tpu.memory_space<vmem>>, vector<1x3x128xbf16>
      %233 = vector.shape_cast %232 : vector<1x3x128xbf16> to vector<3x128xbf16>
      %cst_180 = arith.constant dense<0.000000e+00> : vector<16x128xf32>
      %234 = tpu.matmul %231, %233, %cst_180 {dimension_numbers = #tpu.dot_dimension_numbers<[1], [0], [0], [1], [0, 0, 1, 1], [], []>} : vector<16x3xbf16>, vector<3x128xbf16>, vector<16x128xf32> -> vector<16x128xf32>
      %235 = arith.addf %226, %234 : vector<16x128xf32>
      %236 = arith.addi %3, %9 : i32
      %c3_i32_181 = arith.constant 3 : i32
      %237 = arith.addi %236, %c3_i32_181 : i32
      %c0_182 = arith.constant 0 : index
      %238 = arith.index_cast %237 : i32 to index
      %c4_183 = arith.constant 4 : index
      %c0_184 = arith.constant 0 : index
      %239 = vector.load %arg2[%c0_182, %238, %c4_183, %c0_184] : memref<1x22x22x3xbf16, #tpu.memory_space<vmem>>, vector<1x1x16x3xbf16>
      %240 = vector.shape_cast %239 : vector<1x1x16x3xbf16> to vector<16x3xbf16>
      %c25 = arith.constant 25 : index
      %c0_185 = arith.constant 0 : index
      %c0_186 = arith.constant 0 : index
      %241 = vector.load %arg3[%c25, %c0_185, %c0_186] : memref<49x3x128xbf16, #tpu.memory_space<vmem>>, vector<1x3x128xbf16>
      %242 = vector.shape_cast %241 : vector<1x3x128xbf16> to vector<3x128xbf16>
      %cst_187 = arith.constant dense<0.000000e+00> : vector<16x128xf32>
      %243 = tpu.matmul %240, %242, %cst_187 {dimension_numbers = #tpu.dot_dimension_numbers<[1], [0], [0], [1], [0, 0, 1, 1], [], []>} : vector<16x3xbf16>, vector<3x128xbf16>, vector<16x128xf32> -> vector<16x128xf32>
      %244 = arith.addf %235, %243 : vector<16x128xf32>
      %245 = arith.addi %3, %9 : i32
      %c3_i32_188 = arith.constant 3 : i32
      %246 = arith.addi %245, %c3_i32_188 : i32
      %c0_189 = arith.constant 0 : index
      %247 = arith.index_cast %246 : i32 to index
      %c5_190 = arith.constant 5 : index
      %c0_191 = arith.constant 0 : index
      %248 = vector.load %arg2[%c0_189, %247, %c5_190, %c0_191] : memref<1x22x22x3xbf16, #tpu.memory_space<vmem>>, vector<1x1x16x3xbf16>
      %249 = vector.shape_cast %248 : vector<1x1x16x3xbf16> to vector<16x3xbf16>
      %c26 = arith.constant 26 : index
      %c0_192 = arith.constant 0 : index
      %c0_193 = arith.constant 0 : index
      %250 = vector.load %arg3[%c26, %c0_192, %c0_193] : memref<49x3x128xbf16, #tpu.memory_space<vmem>>, vector<1x3x128xbf16>
      %251 = vector.shape_cast %250 : vector<1x3x128xbf16> to vector<3x128xbf16>
      %cst_194 = arith.constant dense<0.000000e+00> : vector<16x128xf32>
      %252 = tpu.matmul %249, %251, %cst_194 {dimension_numbers = #tpu.dot_dimension_numbers<[1], [0], [0], [1], [0, 0, 1, 1], [], []>} : vector<16x3xbf16>, vector<3x128xbf16>, vector<16x128xf32> -> vector<16x128xf32>
      %253 = arith.addf %244, %252 : vector<16x128xf32>
      %254 = arith.addi %3, %9 : i32
      %c3_i32_195 = arith.constant 3 : i32
      %255 = arith.addi %254, %c3_i32_195 : i32
      %c0_196 = arith.constant 0 : index
      %256 = arith.index_cast %255 : i32 to index
      %c6_197 = arith.constant 6 : index
      %c0_198 = arith.constant 0 : index
      %257 = vector.load %arg2[%c0_196, %256, %c6_197, %c0_198] : memref<1x22x22x3xbf16, #tpu.memory_space<vmem>>, vector<1x1x16x3xbf16>
      %258 = vector.shape_cast %257 : vector<1x1x16x3xbf16> to vector<16x3xbf16>
      %c27 = arith.constant 27 : index
      %c0_199 = arith.constant 0 : index
      %c0_200 = arith.constant 0 : index
      %259 = vector.load %arg3[%c27, %c0_199, %c0_200] : memref<49x3x128xbf16, #tpu.memory_space<vmem>>, vector<1x3x128xbf16>
      %260 = vector.shape_cast %259 : vector<1x3x128xbf16> to vector<3x128xbf16>
      %cst_201 = arith.constant dense<0.000000e+00> : vector<16x128xf32>
      %261 = tpu.matmul %258, %260, %cst_201 {dimension_numbers = #tpu.dot_dimension_numbers<[1], [0], [0], [1], [0, 0, 1, 1], [], []>} : vector<16x3xbf16>, vector<3x128xbf16>, vector<16x128xf32> -> vector<16x128xf32>
      %262 = arith.addf %253, %261 : vector<16x128xf32>
      %263 = arith.addi %3, %9 : i32
      %c4_i32 = arith.constant 4 : i32
      %264 = arith.addi %263, %c4_i32 : i32
      %c0_202 = arith.constant 0 : index
      %265 = arith.index_cast %264 : i32 to index
      %c0_203 = arith.constant 0 : index
      %c0_204 = arith.constant 0 : index
      %266 = vector.load %arg2[%c0_202, %265, %c0_203, %c0_204] : memref<1x22x22x3xbf16, #tpu.memory_space<vmem>>, vector<1x1x16x3xbf16>
      %267 = vector.shape_cast %266 : vector<1x1x16x3xbf16> to vector<16x3xbf16>
      %c28 = arith.constant 28 : index
      %c0_205 = arith.constant 0 : index
      %c0_206 = arith.constant 0 : index
      %268 = vector.load %arg3[%c28, %c0_205, %c0_206] : memref<49x3x128xbf16, #tpu.memory_space<vmem>>, vector<1x3x128xbf16>
      %269 = vector.shape_cast %268 : vector<1x3x128xbf16> to vector<3x128xbf16>
      %cst_207 = arith.constant dense<0.000000e+00> : vector<16x128xf32>
      %270 = tpu.matmul %267, %269, %cst_207 {dimension_numbers = #tpu.dot_dimension_numbers<[1], [0], [0], [1], [0, 0, 1, 1], [], []>} : vector<16x3xbf16>, vector<3x128xbf16>, vector<16x128xf32> -> vector<16x128xf32>
      %271 = arith.addf %262, %270 : vector<16x128xf32>
      %272 = arith.addi %3, %9 : i32
      %c4_i32_208 = arith.constant 4 : i32
      %273 = arith.addi %272, %c4_i32_208 : i32
      %c0_209 = arith.constant 0 : index
      %274 = arith.index_cast %273 : i32 to index
      %c1_210 = arith.constant 1 : index
      %c0_211 = arith.constant 0 : index
      %275 = vector.load %arg2[%c0_209, %274, %c1_210, %c0_211] : memref<1x22x22x3xbf16, #tpu.memory_space<vmem>>, vector<1x1x16x3xbf16>
      %276 = vector.shape_cast %275 : vector<1x1x16x3xbf16> to vector<16x3xbf16>
      %c29 = arith.constant 29 : index
      %c0_212 = arith.constant 0 : index
      %c0_213 = arith.constant 0 : index
      %277 = vector.load %arg3[%c29, %c0_212, %c0_213] : memref<49x3x128xbf16, #tpu.memory_space<vmem>>, vector<1x3x128xbf16>
      %278 = vector.shape_cast %277 : vector<1x3x128xbf16> to vector<3x128xbf16>
      %cst_214 = arith.constant dense<0.000000e+00> : vector<16x128xf32>
      %279 = tpu.matmul %276, %278, %cst_214 {dimension_numbers = #tpu.dot_dimension_numbers<[1], [0], [0], [1], [0, 0, 1, 1], [], []>} : vector<16x3xbf16>, vector<3x128xbf16>, vector<16x128xf32> -> vector<16x128xf32>
      %280 = arith.addf %271, %279 : vector<16x128xf32>
      %281 = arith.addi %3, %9 : i32
      %c4_i32_215 = arith.constant 4 : i32
      %282 = arith.addi %281, %c4_i32_215 : i32
      %c0_216 = arith.constant 0 : index
      %283 = arith.index_cast %282 : i32 to index
      %c2_217 = arith.constant 2 : index
      %c0_218 = arith.constant 0 : index
      %284 = vector.load %arg2[%c0_216, %283, %c2_217, %c0_218] : memref<1x22x22x3xbf16, #tpu.memory_space<vmem>>, vector<1x1x16x3xbf16>
      %285 = vector.shape_cast %284 : vector<1x1x16x3xbf16> to vector<16x3xbf16>
      %c30 = arith.constant 30 : index
      %c0_219 = arith.constant 0 : index
      %c0_220 = arith.constant 0 : index
      %286 = vector.load %arg3[%c30, %c0_219, %c0_220] : memref<49x3x128xbf16, #tpu.memory_space<vmem>>, vector<1x3x128xbf16>
      %287 = vector.shape_cast %286 : vector<1x3x128xbf16> to vector<3x128xbf16>
      %cst_221 = arith.constant dense<0.000000e+00> : vector<16x128xf32>
      %288 = tpu.matmul %285, %287, %cst_221 {dimension_numbers = #tpu.dot_dimension_numbers<[1], [0], [0], [1], [0, 0, 1, 1], [], []>} : vector<16x3xbf16>, vector<3x128xbf16>, vector<16x128xf32> -> vector<16x128xf32>
      %289 = arith.addf %280, %288 : vector<16x128xf32>
      %290 = arith.addi %3, %9 : i32
      %c4_i32_222 = arith.constant 4 : i32
      %291 = arith.addi %290, %c4_i32_222 : i32
      %c0_223 = arith.constant 0 : index
      %292 = arith.index_cast %291 : i32 to index
      %c3_224 = arith.constant 3 : index
      %c0_225 = arith.constant 0 : index
      %293 = vector.load %arg2[%c0_223, %292, %c3_224, %c0_225] : memref<1x22x22x3xbf16, #tpu.memory_space<vmem>>, vector<1x1x16x3xbf16>
      %294 = vector.shape_cast %293 : vector<1x1x16x3xbf16> to vector<16x3xbf16>
      %c31 = arith.constant 31 : index
      %c0_226 = arith.constant 0 : index
      %c0_227 = arith.constant 0 : index
      %295 = vector.load %arg3[%c31, %c0_226, %c0_227] : memref<49x3x128xbf16, #tpu.memory_space<vmem>>, vector<1x3x128xbf16>
      %296 = vector.shape_cast %295 : vector<1x3x128xbf16> to vector<3x128xbf16>
      %cst_228 = arith.constant dense<0.000000e+00> : vector<16x128xf32>
      %297 = tpu.matmul %294, %296, %cst_228 {dimension_numbers = #tpu.dot_dimension_numbers<[1], [0], [0], [1], [0, 0, 1, 1], [], []>} : vector<16x3xbf16>, vector<3x128xbf16>, vector<16x128xf32> -> vector<16x128xf32>
      %298 = arith.addf %289, %297 : vector<16x128xf32>
      %299 = arith.addi %3, %9 : i32
      %c4_i32_229 = arith.constant 4 : i32
      %300 = arith.addi %299, %c4_i32_229 : i32
      %c0_230 = arith.constant 0 : index
      %301 = arith.index_cast %300 : i32 to index
      %c4_231 = arith.constant 4 : index
      %c0_232 = arith.constant 0 : index
      %302 = vector.load %arg2[%c0_230, %301, %c4_231, %c0_232] : memref<1x22x22x3xbf16, #tpu.memory_space<vmem>>, vector<1x1x16x3xbf16>
      %303 = vector.shape_cast %302 : vector<1x1x16x3xbf16> to vector<16x3xbf16>
      %c32 = arith.constant 32 : index
      %c0_233 = arith.constant 0 : index
      %c0_234 = arith.constant 0 : index
      %304 = vector.load %arg3[%c32, %c0_233, %c0_234] : memref<49x3x128xbf16, #tpu.memory_space<vmem>>, vector<1x3x128xbf16>
      %305 = vector.shape_cast %304 : vector<1x3x128xbf16> to vector<3x128xbf16>
      %cst_235 = arith.constant dense<0.000000e+00> : vector<16x128xf32>
      %306 = tpu.matmul %303, %305, %cst_235 {dimension_numbers = #tpu.dot_dimension_numbers<[1], [0], [0], [1], [0, 0, 1, 1], [], []>} : vector<16x3xbf16>, vector<3x128xbf16>, vector<16x128xf32> -> vector<16x128xf32>
      %307 = arith.addf %298, %306 : vector<16x128xf32>
      %308 = arith.addi %3, %9 : i32
      %c4_i32_236 = arith.constant 4 : i32
      %309 = arith.addi %308, %c4_i32_236 : i32
      %c0_237 = arith.constant 0 : index
      %310 = arith.index_cast %309 : i32 to index
      %c5_238 = arith.constant 5 : index
      %c0_239 = arith.constant 0 : index
      %311 = vector.load %arg2[%c0_237, %310, %c5_238, %c0_239] : memref<1x22x22x3xbf16, #tpu.memory_space<vmem>>, vector<1x1x16x3xbf16>
      %312 = vector.shape_cast %311 : vector<1x1x16x3xbf16> to vector<16x3xbf16>
      %c33 = arith.constant 33 : index
      %c0_240 = arith.constant 0 : index
      %c0_241 = arith.constant 0 : index
      %313 = vector.load %arg3[%c33, %c0_240, %c0_241] : memref<49x3x128xbf16, #tpu.memory_space<vmem>>, vector<1x3x128xbf16>
      %314 = vector.shape_cast %313 : vector<1x3x128xbf16> to vector<3x128xbf16>
      %cst_242 = arith.constant dense<0.000000e+00> : vector<16x128xf32>
      %315 = tpu.matmul %312, %314, %cst_242 {dimension_numbers = #tpu.dot_dimension_numbers<[1], [0], [0], [1], [0, 0, 1, 1], [], []>} : vector<16x3xbf16>, vector<3x128xbf16>, vector<16x128xf32> -> vector<16x128xf32>
      %316 = arith.addf %307, %315 : vector<16x128xf32>
      %317 = arith.addi %3, %9 : i32
      %c4_i32_243 = arith.constant 4 : i32
      %318 = arith.addi %317, %c4_i32_243 : i32
      %c0_244 = arith.constant 0 : index
      %319 = arith.index_cast %318 : i32 to index
      %c6_245 = arith.constant 6 : index
      %c0_246 = arith.constant 0 : index
      %320 = vector.load %arg2[%c0_244, %319, %c6_245, %c0_246] : memref<1x22x22x3xbf16, #tpu.memory_space<vmem>>, vector<1x1x16x3xbf16>
      %321 = vector.shape_cast %320 : vector<1x1x16x3xbf16> to vector<16x3xbf16>
      %c34 = arith.constant 34 : index
      %c0_247 = arith.constant 0 : index
      %c0_248 = arith.constant 0 : index
      %322 = vector.load %arg3[%c34, %c0_247, %c0_248] : memref<49x3x128xbf16, #tpu.memory_space<vmem>>, vector<1x3x128xbf16>
      %323 = vector.shape_cast %322 : vector<1x3x128xbf16> to vector<3x128xbf16>
      %cst_249 = arith.constant dense<0.000000e+00> : vector<16x128xf32>
      %324 = tpu.matmul %321, %323, %cst_249 {dimension_numbers = #tpu.dot_dimension_numbers<[1], [0], [0], [1], [0, 0, 1, 1], [], []>} : vector<16x3xbf16>, vector<3x128xbf16>, vector<16x128xf32> -> vector<16x128xf32>
      %325 = arith.addf %316, %324 : vector<16x128xf32>
      %326 = arith.addi %3, %9 : i32
      %c5_i32 = arith.constant 5 : i32
      %327 = arith.addi %326, %c5_i32 : i32
      %c0_250 = arith.constant 0 : index
      %328 = arith.index_cast %327 : i32 to index
      %c0_251 = arith.constant 0 : index
      %c0_252 = arith.constant 0 : index
      %329 = vector.load %arg2[%c0_250, %328, %c0_251, %c0_252] : memref<1x22x22x3xbf16, #tpu.memory_space<vmem>>, vector<1x1x16x3xbf16>
      %330 = vector.shape_cast %329 : vector<1x1x16x3xbf16> to vector<16x3xbf16>
      %c35 = arith.constant 35 : index
      %c0_253 = arith.constant 0 : index
      %c0_254 = arith.constant 0 : index
      %331 = vector.load %arg3[%c35, %c0_253, %c0_254] : memref<49x3x128xbf16, #tpu.memory_space<vmem>>, vector<1x3x128xbf16>
      %332 = vector.shape_cast %331 : vector<1x3x128xbf16> to vector<3x128xbf16>
      %cst_255 = arith.constant dense<0.000000e+00> : vector<16x128xf32>
      %333 = tpu.matmul %330, %332, %cst_255 {dimension_numbers = #tpu.dot_dimension_numbers<[1], [0], [0], [1], [0, 0, 1, 1], [], []>} : vector<16x3xbf16>, vector<3x128xbf16>, vector<16x128xf32> -> vector<16x128xf32>
      %334 = arith.addf %325, %333 : vector<16x128xf32>
      %335 = arith.addi %3, %9 : i32
      %c5_i32_256 = arith.constant 5 : i32
      %336 = arith.addi %335, %c5_i32_256 : i32
      %c0_257 = arith.constant 0 : index
      %337 = arith.index_cast %336 : i32 to index
      %c1_258 = arith.constant 1 : index
      %c0_259 = arith.constant 0 : index
      %338 = vector.load %arg2[%c0_257, %337, %c1_258, %c0_259] : memref<1x22x22x3xbf16, #tpu.memory_space<vmem>>, vector<1x1x16x3xbf16>
      %339 = vector.shape_cast %338 : vector<1x1x16x3xbf16> to vector<16x3xbf16>
      %c36 = arith.constant 36 : index
      %c0_260 = arith.constant 0 : index
      %c0_261 = arith.constant 0 : index
      %340 = vector.load %arg3[%c36, %c0_260, %c0_261] : memref<49x3x128xbf16, #tpu.memory_space<vmem>>, vector<1x3x128xbf16>
      %341 = vector.shape_cast %340 : vector<1x3x128xbf16> to vector<3x128xbf16>
      %cst_262 = arith.constant dense<0.000000e+00> : vector<16x128xf32>
      %342 = tpu.matmul %339, %341, %cst_262 {dimension_numbers = #tpu.dot_dimension_numbers<[1], [0], [0], [1], [0, 0, 1, 1], [], []>} : vector<16x3xbf16>, vector<3x128xbf16>, vector<16x128xf32> -> vector<16x128xf32>
      %343 = arith.addf %334, %342 : vector<16x128xf32>
      %344 = arith.addi %3, %9 : i32
      %c5_i32_263 = arith.constant 5 : i32
      %345 = arith.addi %344, %c5_i32_263 : i32
      %c0_264 = arith.constant 0 : index
      %346 = arith.index_cast %345 : i32 to index
      %c2_265 = arith.constant 2 : index
      %c0_266 = arith.constant 0 : index
      %347 = vector.load %arg2[%c0_264, %346, %c2_265, %c0_266] : memref<1x22x22x3xbf16, #tpu.memory_space<vmem>>, vector<1x1x16x3xbf16>
      %348 = vector.shape_cast %347 : vector<1x1x16x3xbf16> to vector<16x3xbf16>
      %c37 = arith.constant 37 : index
      %c0_267 = arith.constant 0 : index
      %c0_268 = arith.constant 0 : index
      %349 = vector.load %arg3[%c37, %c0_267, %c0_268] : memref<49x3x128xbf16, #tpu.memory_space<vmem>>, vector<1x3x128xbf16>
      %350 = vector.shape_cast %349 : vector<1x3x128xbf16> to vector<3x128xbf16>
      %cst_269 = arith.constant dense<0.000000e+00> : vector<16x128xf32>
      %351 = tpu.matmul %348, %350, %cst_269 {dimension_numbers = #tpu.dot_dimension_numbers<[1], [0], [0], [1], [0, 0, 1, 1], [], []>} : vector<16x3xbf16>, vector<3x128xbf16>, vector<16x128xf32> -> vector<16x128xf32>
      %352 = arith.addf %343, %351 : vector<16x128xf32>
      %353 = arith.addi %3, %9 : i32
      %c5_i32_270 = arith.constant 5 : i32
      %354 = arith.addi %353, %c5_i32_270 : i32
      %c0_271 = arith.constant 0 : index
      %355 = arith.index_cast %354 : i32 to index
      %c3_272 = arith.constant 3 : index
      %c0_273 = arith.constant 0 : index
      %356 = vector.load %arg2[%c0_271, %355, %c3_272, %c0_273] : memref<1x22x22x3xbf16, #tpu.memory_space<vmem>>, vector<1x1x16x3xbf16>
      %357 = vector.shape_cast %356 : vector<1x1x16x3xbf16> to vector<16x3xbf16>
      %c38 = arith.constant 38 : index
      %c0_274 = arith.constant 0 : index
      %c0_275 = arith.constant 0 : index
      %358 = vector.load %arg3[%c38, %c0_274, %c0_275] : memref<49x3x128xbf16, #tpu.memory_space<vmem>>, vector<1x3x128xbf16>
      %359 = vector.shape_cast %358 : vector<1x3x128xbf16> to vector<3x128xbf16>
      %cst_276 = arith.constant dense<0.000000e+00> : vector<16x128xf32>
      %360 = tpu.matmul %357, %359, %cst_276 {dimension_numbers = #tpu.dot_dimension_numbers<[1], [0], [0], [1], [0, 0, 1, 1], [], []>} : vector<16x3xbf16>, vector<3x128xbf16>, vector<16x128xf32> -> vector<16x128xf32>
      %361 = arith.addf %352, %360 : vector<16x128xf32>
      %362 = arith.addi %3, %9 : i32
      %c5_i32_277 = arith.constant 5 : i32
      %363 = arith.addi %362, %c5_i32_277 : i32
      %c0_278 = arith.constant 0 : index
      %364 = arith.index_cast %363 : i32 to index
      %c4_279 = arith.constant 4 : index
      %c0_280 = arith.constant 0 : index
      %365 = vector.load %arg2[%c0_278, %364, %c4_279, %c0_280] : memref<1x22x22x3xbf16, #tpu.memory_space<vmem>>, vector<1x1x16x3xbf16>
      %366 = vector.shape_cast %365 : vector<1x1x16x3xbf16> to vector<16x3xbf16>
      %c39 = arith.constant 39 : index
      %c0_281 = arith.constant 0 : index
      %c0_282 = arith.constant 0 : index
      %367 = vector.load %arg3[%c39, %c0_281, %c0_282] : memref<49x3x128xbf16, #tpu.memory_space<vmem>>, vector<1x3x128xbf16>
      %368 = vector.shape_cast %367 : vector<1x3x128xbf16> to vector<3x128xbf16>
      %cst_283 = arith.constant dense<0.000000e+00> : vector<16x128xf32>
      %369 = tpu.matmul %366, %368, %cst_283 {dimension_numbers = #tpu.dot_dimension_numbers<[1], [0], [0], [1], [0, 0, 1, 1], [], []>} : vector<16x3xbf16>, vector<3x128xbf16>, vector<16x128xf32> -> vector<16x128xf32>
      %370 = arith.addf %361, %369 : vector<16x128xf32>
      %371 = arith.addi %3, %9 : i32
      %c5_i32_284 = arith.constant 5 : i32
      %372 = arith.addi %371, %c5_i32_284 : i32
      %c0_285 = arith.constant 0 : index
      %373 = arith.index_cast %372 : i32 to index
      %c5_286 = arith.constant 5 : index
      %c0_287 = arith.constant 0 : index
      %374 = vector.load %arg2[%c0_285, %373, %c5_286, %c0_287] : memref<1x22x22x3xbf16, #tpu.memory_space<vmem>>, vector<1x1x16x3xbf16>
      %375 = vector.shape_cast %374 : vector<1x1x16x3xbf16> to vector<16x3xbf16>
      %c40 = arith.constant 40 : index
      %c0_288 = arith.constant 0 : index
      %c0_289 = arith.constant 0 : index
      %376 = vector.load %arg3[%c40, %c0_288, %c0_289] : memref<49x3x128xbf16, #tpu.memory_space<vmem>>, vector<1x3x128xbf16>
      %377 = vector.shape_cast %376 : vector<1x3x128xbf16> to vector<3x128xbf16>
      %cst_290 = arith.constant dense<0.000000e+00> : vector<16x128xf32>
      %378 = tpu.matmul %375, %377, %cst_290 {dimension_numbers = #tpu.dot_dimension_numbers<[1], [0], [0], [1], [0, 0, 1, 1], [], []>} : vector<16x3xbf16>, vector<3x128xbf16>, vector<16x128xf32> -> vector<16x128xf32>
      %379 = arith.addf %370, %378 : vector<16x128xf32>
      %380 = arith.addi %3, %9 : i32
      %c5_i32_291 = arith.constant 5 : i32
      %381 = arith.addi %380, %c5_i32_291 : i32
      %c0_292 = arith.constant 0 : index
      %382 = arith.index_cast %381 : i32 to index
      %c6_293 = arith.constant 6 : index
      %c0_294 = arith.constant 0 : index
      %383 = vector.load %arg2[%c0_292, %382, %c6_293, %c0_294] : memref<1x22x22x3xbf16, #tpu.memory_space<vmem>>, vector<1x1x16x3xbf16>
      %384 = vector.shape_cast %383 : vector<1x1x16x3xbf16> to vector<16x3xbf16>
      %c41 = arith.constant 41 : index
      %c0_295 = arith.constant 0 : index
      %c0_296 = arith.constant 0 : index
      %385 = vector.load %arg3[%c41, %c0_295, %c0_296] : memref<49x3x128xbf16, #tpu.memory_space<vmem>>, vector<1x3x128xbf16>
      %386 = vector.shape_cast %385 : vector<1x3x128xbf16> to vector<3x128xbf16>
      %cst_297 = arith.constant dense<0.000000e+00> : vector<16x128xf32>
      %387 = tpu.matmul %384, %386, %cst_297 {dimension_numbers = #tpu.dot_dimension_numbers<[1], [0], [0], [1], [0, 0, 1, 1], [], []>} : vector<16x3xbf16>, vector<3x128xbf16>, vector<16x128xf32> -> vector<16x128xf32>
      %388 = arith.addf %379, %387 : vector<16x128xf32>
      %389 = arith.addi %3, %9 : i32
      %c6_i32 = arith.constant 6 : i32
      %390 = arith.addi %389, %c6_i32 : i32
      %c0_298 = arith.constant 0 : index
      %391 = arith.index_cast %390 : i32 to index
      %c0_299 = arith.constant 0 : index
      %c0_300 = arith.constant 0 : index
      %392 = vector.load %arg2[%c0_298, %391, %c0_299, %c0_300] : memref<1x22x22x3xbf16, #tpu.memory_space<vmem>>, vector<1x1x16x3xbf16>
      %393 = vector.shape_cast %392 : vector<1x1x16x3xbf16> to vector<16x3xbf16>
      %c42 = arith.constant 42 : index
      %c0_301 = arith.constant 0 : index
      %c0_302 = arith.constant 0 : index
      %394 = vector.load %arg3[%c42, %c0_301, %c0_302] : memref<49x3x128xbf16, #tpu.memory_space<vmem>>, vector<1x3x128xbf16>
      %395 = vector.shape_cast %394 : vector<1x3x128xbf16> to vector<3x128xbf16>
      %cst_303 = arith.constant dense<0.000000e+00> : vector<16x128xf32>
      %396 = tpu.matmul %393, %395, %cst_303 {dimension_numbers = #tpu.dot_dimension_numbers<[1], [0], [0], [1], [0, 0, 1, 1], [], []>} : vector<16x3xbf16>, vector<3x128xbf16>, vector<16x128xf32> -> vector<16x128xf32>
      %397 = arith.addf %388, %396 : vector<16x128xf32>
      %398 = arith.addi %3, %9 : i32
      %c6_i32_304 = arith.constant 6 : i32
      %399 = arith.addi %398, %c6_i32_304 : i32
      %c0_305 = arith.constant 0 : index
      %400 = arith.index_cast %399 : i32 to index
      %c1_306 = arith.constant 1 : index
      %c0_307 = arith.constant 0 : index
      %401 = vector.load %arg2[%c0_305, %400, %c1_306, %c0_307] : memref<1x22x22x3xbf16, #tpu.memory_space<vmem>>, vector<1x1x16x3xbf16>
      %402 = vector.shape_cast %401 : vector<1x1x16x3xbf16> to vector<16x3xbf16>
      %c43 = arith.constant 43 : index
      %c0_308 = arith.constant 0 : index
      %c0_309 = arith.constant 0 : index
      %403 = vector.load %arg3[%c43, %c0_308, %c0_309] : memref<49x3x128xbf16, #tpu.memory_space<vmem>>, vector<1x3x128xbf16>
      %404 = vector.shape_cast %403 : vector<1x3x128xbf16> to vector<3x128xbf16>
      %cst_310 = arith.constant dense<0.000000e+00> : vector<16x128xf32>
      %405 = tpu.matmul %402, %404, %cst_310 {dimension_numbers = #tpu.dot_dimension_numbers<[1], [0], [0], [1], [0, 0, 1, 1], [], []>} : vector<16x3xbf16>, vector<3x128xbf16>, vector<16x128xf32> -> vector<16x128xf32>
      %406 = arith.addf %397, %405 : vector<16x128xf32>
      %407 = arith.addi %3, %9 : i32
      %c6_i32_311 = arith.constant 6 : i32
      %408 = arith.addi %407, %c6_i32_311 : i32
      %c0_312 = arith.constant 0 : index
      %409 = arith.index_cast %408 : i32 to index
      %c2_313 = arith.constant 2 : index
      %c0_314 = arith.constant 0 : index
      %410 = vector.load %arg2[%c0_312, %409, %c2_313, %c0_314] : memref<1x22x22x3xbf16, #tpu.memory_space<vmem>>, vector<1x1x16x3xbf16>
      %411 = vector.shape_cast %410 : vector<1x1x16x3xbf16> to vector<16x3xbf16>
      %c44 = arith.constant 44 : index
      %c0_315 = arith.constant 0 : index
      %c0_316 = arith.constant 0 : index
      %412 = vector.load %arg3[%c44, %c0_315, %c0_316] : memref<49x3x128xbf16, #tpu.memory_space<vmem>>, vector<1x3x128xbf16>
      %413 = vector.shape_cast %412 : vector<1x3x128xbf16> to vector<3x128xbf16>
      %cst_317 = arith.constant dense<0.000000e+00> : vector<16x128xf32>
      %414 = tpu.matmul %411, %413, %cst_317 {dimension_numbers = #tpu.dot_dimension_numbers<[1], [0], [0], [1], [0, 0, 1, 1], [], []>} : vector<16x3xbf16>, vector<3x128xbf16>, vector<16x128xf32> -> vector<16x128xf32>
      %415 = arith.addf %406, %414 : vector<16x128xf32>
      %416 = arith.addi %3, %9 : i32
      %c6_i32_318 = arith.constant 6 : i32
      %417 = arith.addi %416, %c6_i32_318 : i32
      %c0_319 = arith.constant 0 : index
      %418 = arith.index_cast %417 : i32 to index
      %c3_320 = arith.constant 3 : index
      %c0_321 = arith.constant 0 : index
      %419 = vector.load %arg2[%c0_319, %418, %c3_320, %c0_321] : memref<1x22x22x3xbf16, #tpu.memory_space<vmem>>, vector<1x1x16x3xbf16>
      %420 = vector.shape_cast %419 : vector<1x1x16x3xbf16> to vector<16x3xbf16>
      %c45 = arith.constant 45 : index
      %c0_322 = arith.constant 0 : index
      %c0_323 = arith.constant 0 : index
      %421 = vector.load %arg3[%c45, %c0_322, %c0_323] : memref<49x3x128xbf16, #tpu.memory_space<vmem>>, vector<1x3x128xbf16>
      %422 = vector.shape_cast %421 : vector<1x3x128xbf16> to vector<3x128xbf16>
      %cst_324 = arith.constant dense<0.000000e+00> : vector<16x128xf32>
      %423 = tpu.matmul %420, %422, %cst_324 {dimension_numbers = #tpu.dot_dimension_numbers<[1], [0], [0], [1], [0, 0, 1, 1], [], []>} : vector<16x3xbf16>, vector<3x128xbf16>, vector<16x128xf32> -> vector<16x128xf32>
      %424 = arith.addf %415, %423 : vector<16x128xf32>
      %425 = arith.addi %3, %9 : i32
      %c6_i32_325 = arith.constant 6 : i32
      %426 = arith.addi %425, %c6_i32_325 : i32
      %c0_326 = arith.constant 0 : index
      %427 = arith.index_cast %426 : i32 to index
      %c4_327 = arith.constant 4 : index
      %c0_328 = arith.constant 0 : index
      %428 = vector.load %arg2[%c0_326, %427, %c4_327, %c0_328] : memref<1x22x22x3xbf16, #tpu.memory_space<vmem>>, vector<1x1x16x3xbf16>
      %429 = vector.shape_cast %428 : vector<1x1x16x3xbf16> to vector<16x3xbf16>
      %c46 = arith.constant 46 : index
      %c0_329 = arith.constant 0 : index
      %c0_330 = arith.constant 0 : index
      %430 = vector.load %arg3[%c46, %c0_329, %c0_330] : memref<49x3x128xbf16, #tpu.memory_space<vmem>>, vector<1x3x128xbf16>
      %431 = vector.shape_cast %430 : vector<1x3x128xbf16> to vector<3x128xbf16>
      %cst_331 = arith.constant dense<0.000000e+00> : vector<16x128xf32>
      %432 = tpu.matmul %429, %431, %cst_331 {dimension_numbers = #tpu.dot_dimension_numbers<[1], [0], [0], [1], [0, 0, 1, 1], [], []>} : vector<16x3xbf16>, vector<3x128xbf16>, vector<16x128xf32> -> vector<16x128xf32>
      %433 = arith.addf %424, %432 : vector<16x128xf32>
      %434 = arith.addi %3, %9 : i32
      %c6_i32_332 = arith.constant 6 : i32
      %435 = arith.addi %434, %c6_i32_332 : i32
      %c0_333 = arith.constant 0 : index
      %436 = arith.index_cast %435 : i32 to index
      %c5_334 = arith.constant 5 : index
      %c0_335 = arith.constant 0 : index
      %437 = vector.load %arg2[%c0_333, %436, %c5_334, %c0_335] : memref<1x22x22x3xbf16, #tpu.memory_space<vmem>>, vector<1x1x16x3xbf16>
      %438 = vector.shape_cast %437 : vector<1x1x16x3xbf16> to vector<16x3xbf16>
      %c47 = arith.constant 47 : index
      %c0_336 = arith.constant 0 : index
      %c0_337 = arith.constant 0 : index
      %439 = vector.load %arg3[%c47, %c0_336, %c0_337] : memref<49x3x128xbf16, #tpu.memory_space<vmem>>, vector<1x3x128xbf16>
      %440 = vector.shape_cast %439 : vector<1x3x128xbf16> to vector<3x128xbf16>
      %cst_338 = arith.constant dense<0.000000e+00> : vector<16x128xf32>
      %441 = tpu.matmul %438, %440, %cst_338 {dimension_numbers = #tpu.dot_dimension_numbers<[1], [0], [0], [1], [0, 0, 1, 1], [], []>} : vector<16x3xbf16>, vector<3x128xbf16>, vector<16x128xf32> -> vector<16x128xf32>
      %442 = arith.addf %433, %441 : vector<16x128xf32>
      %443 = arith.addi %3, %9 : i32
      %c6_i32_339 = arith.constant 6 : i32
      %444 = arith.addi %443, %c6_i32_339 : i32
      %c0_340 = arith.constant 0 : index
      %445 = arith.index_cast %444 : i32 to index
      %c6_341 = arith.constant 6 : index
      %c0_342 = arith.constant 0 : index
      %446 = vector.load %arg2[%c0_340, %445, %c6_341, %c0_342] : memref<1x22x22x3xbf16, #tpu.memory_space<vmem>>, vector<1x1x16x3xbf16>
      %447 = vector.shape_cast %446 : vector<1x1x16x3xbf16> to vector<16x3xbf16>
      %c48 = arith.constant 48 : index
      %c0_343 = arith.constant 0 : index
      %c0_344 = arith.constant 0 : index
      %448 = vector.load %arg3[%c48, %c0_343, %c0_344] : memref<49x3x128xbf16, #tpu.memory_space<vmem>>, vector<1x3x128xbf16>
      %449 = vector.shape_cast %448 : vector<1x3x128xbf16> to vector<3x128xbf16>
      %cst_345 = arith.constant dense<0.000000e+00> : vector<16x128xf32>
      %450 = tpu.matmul %447, %449, %cst_345 {dimension_numbers = #tpu.dot_dimension_numbers<[1], [0], [0], [1], [0, 0, 1, 1], [], []>} : vector<16x3xbf16>, vector<3x128xbf16>, vector<16x128xf32> -> vector<16x128xf32>
      %451 = arith.addf %442, %450 : vector<16x128xf32>
      %c0_346 = arith.constant 0 : index
      %452 = arith.index_cast %9 : i32 to index
      %c0_347 = arith.constant 0 : index
      %c0_348 = arith.constant 0 : index
      %453 = vector.load %arg4[%c0_346, %452, %c0_347, %c0_348] : memref<1x8x16x128xf32, #tpu.memory_space<vmem>>, vector<1x1x16x128xf32>
      %454 = vector.shape_cast %453 : vector<1x1x16x128xf32> to vector<16x128xf32>
      %455 = vector.shape_cast %451 : vector<16x128xf32> to vector<1x1x16x128xf32>
      tpu.vector_store %arg4[%c0_346, %452, %c0_347, %c0_348], %455 {strides = array<i32>} : memref<1x8x16x128xf32, #tpu.memory_space<vmem>>, vector<1x1x16x128xf32>,
      %c0_349 = arith.constant 0 : index
      %c0_350 = arith.constant 0 : index
      %456 = vector.load %arg6[%c0_349, %c0_350] : memref<1x128xf32, #tpu.memory_space<vmem>>, vector<1x128xf32>
      %cst_351 = arith.constant dense<0.000000e+00> : vector<128xf32>
      %457 = vector.multi_reduction <add>, %451, %cst_351 [0] : vector<16x128xf32> to vector<128xf32>
      %458 = vector.shape_cast %457 : vector<128xf32> to vector<1x128xf32>
      %459 = arith.addf %456, %458 : vector<1x128xf32>
      %c0_352 = arith.constant 0 : index
      %c0_353 = arith.constant 0 : index
      %460 = vector.load %arg6[%c0_352, %c0_353] : memref<1x128xf32, #tpu.memory_space<vmem>>, vector<1x128xf32>
      tpu.vector_store %arg6[%c0_352, %c0_353], %459 {strides = array<i32>} : memref<1x128xf32, #tpu.memory_space<vmem>>, vector<1x128xf32>,
      %c0_354 = arith.constant 0 : index
      %c0_355 = arith.constant 0 : index
      %461 = vector.load %arg7[%c0_354, %c0_355] : memref<1x128xf32, #tpu.memory_space<vmem>>, vector<1x128xf32>
      %462 = arith.mulf %451, %451 : vector<16x128xf32>
      %cst_356 = arith.constant dense<0.000000e+00> : vector<128xf32>
      %463 = vector.multi_reduction <add>, %462, %cst_356 [0] : vector<16x128xf32> to vector<128xf32>
      %464 = vector.shape_cast %463 : vector<128xf32> to vector<1x128xf32>
      %465 = arith.addf %461, %464 : vector<1x128xf32>
      %c0_357 = arith.constant 0 : index
      %c0_358 = arith.constant 0 : index
      %466 = vector.load %arg7[%c0_357, %c0_358] : memref<1x128xf32, #tpu.memory_space<vmem>>, vector<1x128xf32>
      tpu.vector_store %arg7[%c0_357, %c0_358], %465 {strides = array<i32>} : memref<1x128xf32, #tpu.memory_space<vmem>>, vector<1x128xf32>,
    }
    %c8_i32_3 = arith.constant 8 : i32
    %c1_i32_4 = arith.constant 1 : i32
    %5 = arith.cmpi eq, %arg1, %c1_i32_4 : i32
    %6 = arith.extui %5 : i1 to i32
    %c0_i32_5 = arith.constant 0 : i32
    %7 = arith.cmpi ne, %6, %c0_i32_5 : i32
    scf.if %7 {
      %c0 = arith.constant 0 : index
      %c0_6 = arith.constant 0 : index
      %8 = vector.load %arg6[%c0, %c0_6] : memref<1x128xf32, #tpu.memory_space<vmem>>, vector<1x128xf32>
      %cst = arith.constant 3.906250e-03 : f32
      %9 = vector.broadcast %cst : f32 to vector<1x128xf32>
      %10 = arith.mulf %8, %9 : vector<1x128xf32>
      %c0_7 = arith.constant 0 : index
      %c0_8 = arith.constant 0 : index
      %11 = vector.load %arg7[%c0_7, %c0_8] : memref<1x128xf32, #tpu.memory_space<vmem>>, vector<1x128xf32>
      %cst_9 = arith.constant 3.906250e-03 : f32
      %12 = vector.broadcast %cst_9 : f32 to vector<1x128xf32>
      %13 = arith.mulf %11, %12 : vector<1x128xf32>
      %14 = arith.mulf %10, %10 : vector<1x128xf32>
      %15 = arith.subf %13, %14 : vector<1x128xf32>
      %cst_10 = arith.constant 0.000000e+00 : f32
      %16 = vector.broadcast %cst_10 : f32 to vector<1x128xf32>
      %17 = arith.maximumf %15, %16 : vector<1x128xf32>
      %cst_11 = arith.constant 9.99999974E-6 : f32
      %18 = vector.broadcast %cst_11 : f32 to vector<1x128xf32>
      %19 = arith.addf %17, %18 : vector<1x128xf32>
      %20 = math.rsqrt %19 : vector<1x128xf32>
      %21 = tpu.concatenate %10, %20 in 0 : vector<1x128xf32>, vector<1x128xf32> -> vector<2x128xf32>
      %c0_12 = arith.constant 0 : index
      %c0_13 = arith.constant 0 : index
      %c0_14 = arith.constant 0 : index
      %22 = vector.load %arg5[%c0_12, %c0_13, %c0_14] : memref<1x2x128xf32, #tpu.memory_space<vmem>>, vector<1x2x128xf32>
      %23 = vector.shape_cast %22 : vector<1x2x128xf32> to vector<2x128xf32>
      %24 = vector.shape_cast %21 : vector<2x128xf32> to vector<1x2x128xf32>
      tpu.vector_store %arg5[%c0_12, %c0_13, %c0_14], %24 {strides = array<i32>} : memref<1x2x128xf32, #tpu.memory_space<vmem>>, vector<1x2x128xf32>,
    } else {
    }
    return
  }
  func.func @transform_0(%arg0: i32, %arg1: i32) -> (i32, i32, i32, i32) {
    %c0_i32 = arith.constant 0 : i32
    %c0_i32_0 = arith.constant 0 : i32
    %c0_i32_1 = arith.constant 0 : i32
    %c0_i32_2 = arith.constant 0 : i32
    return %arg0, %c0_i32, %c0_i32_0, %c0_i32_1 : i32, i32, i32, i32
  }
  func.func @transform_1(%arg0: i32, %arg1: i32) -> (i32, i32, i32) {
    %c0_i32 = arith.constant 0 : i32
    %c0_i32_0 = arith.constant 0 : i32
    %c0_i32_1 = arith.constant 0 : i32
    %c0_i32_2 = arith.constant 0 : i32
    return %c0_i32, %c0_i32_0, %c0_i32_1 : i32, i32, i32
  }
  func.func @transform_2(%arg0: i32, %arg1: i32) -> (i32, i32, i32, i32) {
    %c0_i32 = arith.constant 0 : i32
    %c0_i32_0 = arith.constant 0 : i32
    %c0_i32_1 = arith.constant 0 : i32
    return %arg0, %arg1, %c0_i32, %c0_i32_0 : i32, i32, i32, i32
  }
  func.func @transform_3(%arg0: i32, %arg1: i32) -> (i32, i32, i32) {
    %c0_i32 = arith.constant 0 : i32
    %c0_i32_0 = arith.constant 0 : i32
    %c0_i32_1 = arith.constant 0 : i32
    return %arg0, %c0_i32, %c0_i32_0 : i32, i32, i32
  }
}

module attributes {stable_mosaic.version = 11 : i64} {
  func.func @_conv_stats_kernel(%arg0: i32, %arg1: i32, %arg2: memref<1x9x9x64xbf16, #tpu.memory_space<vmem>>, %arg3: memref<4x64x128xbf16, #tpu.memory_space<vmem>>, %arg4: memref<1x4x8x128xf32, #tpu.memory_space<vmem>>, %arg5: memref<1x2x128xf32, #tpu.memory_space<vmem>>, %arg6: memref<1x128xf32, #tpu.memory_space<vmem>>, %arg7: memref<1x128xf32, #tpu.memory_space<vmem>>) attributes {dimension_semantics = [#tpu.dimension_semantics<parallel>, #tpu.dimension_semantics<arbitrary>], iteration_bounds = array<i64: 2, 2>, scalar_prefetch = 0 : i64, scratch_operands = 2 : i64, tpu.core_type = #tpu.core_type<tc>, window_params = [{transform_indices = @transform_0, window_bounds = array<i64: 1, 9, 9, 64>}, {pipeline_mode = #tpu.pipeline_mode<synchronous>, transform_indices = @transform_1, window_bounds = array<i64: 4, 64, 128>}, {transform_indices = @transform_2, window_bounds = array<i64: 1, 4, 8, 128>}, {transform_indices = @transform_3, window_bounds = array<i64: 1, 2, 128>}]} {
    %c0_i32 = arith.constant 0 : i32
    %0 = arith.cmpi eq, %arg1, %c0_i32 : i32
    %1 = arith.extui %0 : i1 to i32
    %c0_i32_0 = arith.constant 0 : i32
    %2 = arith.cmpi ne, %1, %c0_i32_0 : i32
    scf.if %2 {
      %cst = arith.constant 0.000000e+00 : f32
      %8 = vector.broadcast %cst : f32 to vector<1x128xf32>
      %c0 = arith.constant 0 : index
      %c0_6 = arith.constant 0 : index
      %9 = vector.load %arg6[%c0, %c0_6] : memref<1x128xf32, #tpu.memory_space<vmem>>, vector<1x128xf32>
      tpu.vector_store %arg6[%c0, %c0_6], %8 {strides = array<i32>} : memref<1x128xf32, #tpu.memory_space<vmem>>, vector<1x128xf32>,
      %cst_7 = arith.constant 0.000000e+00 : f32
      %10 = vector.broadcast %cst_7 : f32 to vector<1x128xf32>
      %c0_8 = arith.constant 0 : index
      %c0_9 = arith.constant 0 : index
      %11 = vector.load %arg7[%c0_8, %c0_9] : memref<1x128xf32, #tpu.memory_space<vmem>>, vector<1x128xf32>
      tpu.vector_store %arg7[%c0_8, %c0_9], %10 {strides = array<i32>} : memref<1x128xf32, #tpu.memory_space<vmem>>, vector<1x128xf32>,
    } else {
    }
    %c4_i32 = arith.constant 4 : i32
    %3 = arith.muli %arg1, %c4_i32 : i32
    %c0_i32_1 = arith.constant 0 : i32
    %c4_i32_2 = arith.constant 4 : i32
    %4 = arith.addi %c0_i32_1, %c4_i32_2 : i32
    %c1_i32 = arith.constant 1 : i32
    scf.for %arg8 = %c0_i32_1 to %4 step %c1_i32  : i32 {
      %c1_i32_6 = arith.constant 1 : i32
      %8 = arith.muli %arg8, %c1_i32_6 : i32
      %c0_i32_7 = arith.constant 0 : i32
      %9 = arith.addi %c0_i32_7, %8 : i32
      %cst = arith.constant 0.000000e+00 : f32
      %10 = vector.broadcast %cst : f32 to vector<8x128xf32>
      %11 = arith.addi %3, %9 : i32
      %c0_i32_8 = arith.constant 0 : i32
      %12 = arith.addi %11, %c0_i32_8 : i32
      %c0 = arith.constant 0 : index
      %13 = arith.index_cast %12 : i32 to index
      %c0_9 = arith.constant 0 : index
      %c0_10 = arith.constant 0 : index
      %14 = vector.load %arg2[%c0, %13, %c0_9, %c0_10] : memref<1x9x9x64xbf16, #tpu.memory_space<vmem>>, vector<1x1x8x64xbf16>
      %15 = vector.shape_cast %14 : vector<1x1x8x64xbf16> to vector<8x64xbf16>
      %c0_11 = arith.constant 0 : index
      %c0_12 = arith.constant 0 : index
      %c0_13 = arith.constant 0 : index
      %16 = vector.load %arg3[%c0_11, %c0_12, %c0_13] : memref<4x64x128xbf16, #tpu.memory_space<vmem>>, vector<1x64x128xbf16>
      %17 = vector.shape_cast %16 : vector<1x64x128xbf16> to vector<64x128xbf16>
      %cst_14 = arith.constant dense<0.000000e+00> : vector<8x128xf32>
      %18 = tpu.matmul %15, %17, %cst_14 {dimension_numbers = #tpu.dot_dimension_numbers<[1], [0], [0], [1], [0, 0, 1, 1], [], []>} : vector<8x64xbf16>, vector<64x128xbf16>, vector<8x128xf32> -> vector<8x128xf32>
      %19 = arith.addf %10, %18 : vector<8x128xf32>
      %20 = arith.addi %3, %9 : i32
      %c0_i32_15 = arith.constant 0 : i32
      %21 = arith.addi %20, %c0_i32_15 : i32
      %c0_16 = arith.constant 0 : index
      %22 = arith.index_cast %21 : i32 to index
      %c1 = arith.constant 1 : index
      %c0_17 = arith.constant 0 : index
      %23 = vector.load %arg2[%c0_16, %22, %c1, %c0_17] : memref<1x9x9x64xbf16, #tpu.memory_space<vmem>>, vector<1x1x8x64xbf16>
      %24 = vector.shape_cast %23 : vector<1x1x8x64xbf16> to vector<8x64xbf16>
      %c1_18 = arith.constant 1 : index
      %c0_19 = arith.constant 0 : index
      %c0_20 = arith.constant 0 : index
      %25 = vector.load %arg3[%c1_18, %c0_19, %c0_20] : memref<4x64x128xbf16, #tpu.memory_space<vmem>>, vector<1x64x128xbf16>
      %26 = vector.shape_cast %25 : vector<1x64x128xbf16> to vector<64x128xbf16>
      %cst_21 = arith.constant dense<0.000000e+00> : vector<8x128xf32>
      %27 = tpu.matmul %24, %26, %cst_21 {dimension_numbers = #tpu.dot_dimension_numbers<[1], [0], [0], [1], [0, 0, 1, 1], [], []>} : vector<8x64xbf16>, vector<64x128xbf16>, vector<8x128xf32> -> vector<8x128xf32>
      %28 = arith.addf %19, %27 : vector<8x128xf32>
      %29 = arith.addi %3, %9 : i32
      %c1_i32_22 = arith.constant 1 : i32
      %30 = arith.addi %29, %c1_i32_22 : i32
      %c0_23 = arith.constant 0 : index
      %31 = arith.index_cast %30 : i32 to index
      %c0_24 = arith.constant 0 : index
      %c0_25 = arith.constant 0 : index
      %32 = vector.load %arg2[%c0_23, %31, %c0_24, %c0_25] : memref<1x9x9x64xbf16, #tpu.memory_space<vmem>>, vector<1x1x8x64xbf16>
      %33 = vector.shape_cast %32 : vector<1x1x8x64xbf16> to vector<8x64xbf16>
      %c2 = arith.constant 2 : index
      %c0_26 = arith.constant 0 : index
      %c0_27 = arith.constant 0 : index
      %34 = vector.load %arg3[%c2, %c0_26, %c0_27] : memref<4x64x128xbf16, #tpu.memory_space<vmem>>, vector<1x64x128xbf16>
      %35 = vector.shape_cast %34 : vector<1x64x128xbf16> to vector<64x128xbf16>
      %cst_28 = arith.constant dense<0.000000e+00> : vector<8x128xf32>
      %36 = tpu.matmul %33, %35, %cst_28 {dimension_numbers = #tpu.dot_dimension_numbers<[1], [0], [0], [1], [0, 0, 1, 1], [], []>} : vector<8x64xbf16>, vector<64x128xbf16>, vector<8x128xf32> -> vector<8x128xf32>
      %37 = arith.addf %28, %36 : vector<8x128xf32>
      %38 = arith.addi %3, %9 : i32
      %c1_i32_29 = arith.constant 1 : i32
      %39 = arith.addi %38, %c1_i32_29 : i32
      %c0_30 = arith.constant 0 : index
      %40 = arith.index_cast %39 : i32 to index
      %c1_31 = arith.constant 1 : index
      %c0_32 = arith.constant 0 : index
      %41 = vector.load %arg2[%c0_30, %40, %c1_31, %c0_32] : memref<1x9x9x64xbf16, #tpu.memory_space<vmem>>, vector<1x1x8x64xbf16>
      %42 = vector.shape_cast %41 : vector<1x1x8x64xbf16> to vector<8x64xbf16>
      %c3 = arith.constant 3 : index
      %c0_33 = arith.constant 0 : index
      %c0_34 = arith.constant 0 : index
      %43 = vector.load %arg3[%c3, %c0_33, %c0_34] : memref<4x64x128xbf16, #tpu.memory_space<vmem>>, vector<1x64x128xbf16>
      %44 = vector.shape_cast %43 : vector<1x64x128xbf16> to vector<64x128xbf16>
      %cst_35 = arith.constant dense<0.000000e+00> : vector<8x128xf32>
      %45 = tpu.matmul %42, %44, %cst_35 {dimension_numbers = #tpu.dot_dimension_numbers<[1], [0], [0], [1], [0, 0, 1, 1], [], []>} : vector<8x64xbf16>, vector<64x128xbf16>, vector<8x128xf32> -> vector<8x128xf32>
      %46 = arith.addf %37, %45 : vector<8x128xf32>
      %c0_36 = arith.constant 0 : index
      %47 = arith.index_cast %9 : i32 to index
      %c0_37 = arith.constant 0 : index
      %c0_38 = arith.constant 0 : index
      %48 = vector.load %arg4[%c0_36, %47, %c0_37, %c0_38] : memref<1x4x8x128xf32, #tpu.memory_space<vmem>>, vector<1x1x8x128xf32>
      %49 = vector.shape_cast %48 : vector<1x1x8x128xf32> to vector<8x128xf32>
      %50 = vector.shape_cast %46 : vector<8x128xf32> to vector<1x1x8x128xf32>
      tpu.vector_store %arg4[%c0_36, %47, %c0_37, %c0_38], %50 {strides = array<i32>} : memref<1x4x8x128xf32, #tpu.memory_space<vmem>>, vector<1x1x8x128xf32>,
      %c0_39 = arith.constant 0 : index
      %c0_40 = arith.constant 0 : index
      %51 = vector.load %arg6[%c0_39, %c0_40] : memref<1x128xf32, #tpu.memory_space<vmem>>, vector<1x128xf32>
      %cst_41 = arith.constant dense<0.000000e+00> : vector<128xf32>
      %52 = vector.multi_reduction <add>, %46, %cst_41 [0] : vector<8x128xf32> to vector<128xf32>
      %53 = vector.shape_cast %52 : vector<128xf32> to vector<1x128xf32>
      %54 = arith.addf %51, %53 : vector<1x128xf32>
      %c0_42 = arith.constant 0 : index
      %c0_43 = arith.constant 0 : index
      %55 = vector.load %arg6[%c0_42, %c0_43] : memref<1x128xf32, #tpu.memory_space<vmem>>, vector<1x128xf32>
      tpu.vector_store %arg6[%c0_42, %c0_43], %54 {strides = array<i32>} : memref<1x128xf32, #tpu.memory_space<vmem>>, vector<1x128xf32>,
      %c0_44 = arith.constant 0 : index
      %c0_45 = arith.constant 0 : index
      %56 = vector.load %arg7[%c0_44, %c0_45] : memref<1x128xf32, #tpu.memory_space<vmem>>, vector<1x128xf32>
      %57 = arith.mulf %46, %46 : vector<8x128xf32>
      %cst_46 = arith.constant dense<0.000000e+00> : vector<128xf32>
      %58 = vector.multi_reduction <add>, %57, %cst_46 [0] : vector<8x128xf32> to vector<128xf32>
      %59 = vector.shape_cast %58 : vector<128xf32> to vector<1x128xf32>
      %60 = arith.addf %56, %59 : vector<1x128xf32>
      %c0_47 = arith.constant 0 : index
      %c0_48 = arith.constant 0 : index
      %61 = vector.load %arg7[%c0_47, %c0_48] : memref<1x128xf32, #tpu.memory_space<vmem>>, vector<1x128xf32>
      tpu.vector_store %arg7[%c0_47, %c0_48], %60 {strides = array<i32>} : memref<1x128xf32, #tpu.memory_space<vmem>>, vector<1x128xf32>,
    }
    %c4_i32_3 = arith.constant 4 : i32
    %c1_i32_4 = arith.constant 1 : i32
    %5 = arith.cmpi eq, %arg1, %c1_i32_4 : i32
    %6 = arith.extui %5 : i1 to i32
    %c0_i32_5 = arith.constant 0 : i32
    %7 = arith.cmpi ne, %6, %c0_i32_5 : i32
    scf.if %7 {
      %c0 = arith.constant 0 : index
      %c0_6 = arith.constant 0 : index
      %8 = vector.load %arg6[%c0, %c0_6] : memref<1x128xf32, #tpu.memory_space<vmem>>, vector<1x128xf32>
      %cst = arith.constant 1.562500e-02 : f32
      %9 = vector.broadcast %cst : f32 to vector<1x128xf32>
      %10 = arith.mulf %8, %9 : vector<1x128xf32>
      %c0_7 = arith.constant 0 : index
      %c0_8 = arith.constant 0 : index
      %11 = vector.load %arg7[%c0_7, %c0_8] : memref<1x128xf32, #tpu.memory_space<vmem>>, vector<1x128xf32>
      %cst_9 = arith.constant 1.562500e-02 : f32
      %12 = vector.broadcast %cst_9 : f32 to vector<1x128xf32>
      %13 = arith.mulf %11, %12 : vector<1x128xf32>
      %14 = arith.mulf %10, %10 : vector<1x128xf32>
      %15 = arith.subf %13, %14 : vector<1x128xf32>
      %cst_10 = arith.constant 0.000000e+00 : f32
      %16 = vector.broadcast %cst_10 : f32 to vector<1x128xf32>
      %17 = arith.maximumf %15, %16 : vector<1x128xf32>
      %cst_11 = arith.constant 9.99999974E-6 : f32
      %18 = vector.broadcast %cst_11 : f32 to vector<1x128xf32>
      %19 = arith.addf %17, %18 : vector<1x128xf32>
      %20 = math.rsqrt %19 : vector<1x128xf32>
      %21 = tpu.concatenate %10, %20 in 0 : vector<1x128xf32>, vector<1x128xf32> -> vector<2x128xf32>
      %c0_12 = arith.constant 0 : index
      %c0_13 = arith.constant 0 : index
      %c0_14 = arith.constant 0 : index
      %22 = vector.load %arg5[%c0_12, %c0_13, %c0_14] : memref<1x2x128xf32, #tpu.memory_space<vmem>>, vector<1x2x128xf32>
      %23 = vector.shape_cast %22 : vector<1x2x128xf32> to vector<2x128xf32>
      %24 = vector.shape_cast %21 : vector<2x128xf32> to vector<1x2x128xf32>
      tpu.vector_store %arg5[%c0_12, %c0_13, %c0_14], %24 {strides = array<i32>} : memref<1x2x128xf32, #tpu.memory_space<vmem>>, vector<1x2x128xf32>,
    } else {
    }
    return
  }
  func.func @transform_0(%arg0: i32, %arg1: i32) -> (i32, i32, i32, i32) {
    %c0_i32 = arith.constant 0 : i32
    %c0_i32_0 = arith.constant 0 : i32
    %c0_i32_1 = arith.constant 0 : i32
    %c0_i32_2 = arith.constant 0 : i32
    return %arg0, %c0_i32, %c0_i32_0, %c0_i32_1 : i32, i32, i32, i32
  }
  func.func @transform_1(%arg0: i32, %arg1: i32) -> (i32, i32, i32) {
    %c0_i32 = arith.constant 0 : i32
    %c0_i32_0 = arith.constant 0 : i32
    %c0_i32_1 = arith.constant 0 : i32
    %c0_i32_2 = arith.constant 0 : i32
    return %c0_i32, %c0_i32_0, %c0_i32_1 : i32, i32, i32
  }
  func.func @transform_2(%arg0: i32, %arg1: i32) -> (i32, i32, i32, i32) {
    %c0_i32 = arith.constant 0 : i32
    %c0_i32_0 = arith.constant 0 : i32
    %c0_i32_1 = arith.constant 0 : i32
    return %arg0, %arg1, %c0_i32, %c0_i32_0 : i32, i32, i32, i32
  }
  func.func @transform_3(%arg0: i32, %arg1: i32) -> (i32, i32, i32) {
    %c0_i32 = arith.constant 0 : i32
    %c0_i32_0 = arith.constant 0 : i32
    %c0_i32_1 = arith.constant 0 : i32
    return %arg0, %c0_i32, %c0_i32_0 : i32, i32, i32
  }
}

module attributes {stable_mosaic.version = 11 : i64} {
  func.func @_norm_affine_kernel(%arg0: i32, %arg1: i32, %arg2: memref<1x4x8x128xf32, #tpu.memory_space<vmem>>, %arg3: memref<1x2x128xf32, #tpu.memory_space<vmem>>, %arg4: memref<1x128xf32, #tpu.memory_space<vmem>>, %arg5: memref<1x128xf32, #tpu.memory_space<vmem>>, %arg6: memref<1x4x8x128xbf16, #tpu.memory_space<vmem>>) attributes {dimension_semantics = [#tpu.dimension_semantics<parallel>, #tpu.dimension_semantics<parallel>], iteration_bounds = array<i64: 2, 2>, scalar_prefetch = 0 : i64, scratch_operands = 0 : i64, tpu.core_type = #tpu.core_type<tc>, window_params = [{transform_indices = @transform_0, window_bounds = array<i64: 1, 4, 8, 128>}, {transform_indices = @transform_1, window_bounds = array<i64: 1, 2, 128>}, {pipeline_mode = #tpu.pipeline_mode<synchronous>, transform_indices = @transform_2, window_bounds = array<i64: 1, 128>}, {pipeline_mode = #tpu.pipeline_mode<synchronous>, transform_indices = @transform_3, window_bounds = array<i64: 1, 128>}, {transform_indices = @transform_4, window_bounds = array<i64: 1, 4, 8, 128>}]} {
    %c0 = arith.constant 0 : index
    %c0_0 = arith.constant 0 : index
    %c0_1 = arith.constant 0 : index
    %c0_2 = arith.constant 0 : index
    %0 = vector.load %arg2[%c0, %c0_0, %c0_1, %c0_2] : memref<1x4x8x128xf32, #tpu.memory_space<vmem>>, vector<1x4x8x128xf32>
    %1 = vector.shape_cast %0 : vector<1x4x8x128xf32> to vector<4x8x128xf32>
    %c0_3 = arith.constant 0 : index
    %c0_4 = arith.constant 0 : index
    %c0_5 = arith.constant 0 : index
    %2 = vector.load %arg3[%c0_3, %c0_4, %c0_5] : memref<1x2x128xf32, #tpu.memory_space<vmem>>, vector<1x2x128xf32>
    %3 = vector.shape_cast %2 : vector<1x2x128xf32> to vector<2x128xf32>
    %4 = vector.extract_strided_slice %3 {offsets = [0, 0], sizes = [1, 128], strides = [1, 1]} : vector<2x128xf32> to vector<1x128xf32>
    %5 = vector.extract_strided_slice %3 {offsets = [1, 0], sizes = [1, 128], strides = [1, 1]} : vector<2x128xf32> to vector<1x128xf32>
    %6 = vector.shape_cast %4 : vector<1x128xf32> to vector<1x1x128xf32>
    %7 = vector.broadcast %6 : vector<1x1x128xf32> to vector<4x8x128xf32>
    %8 = arith.subf %1, %7 : vector<4x8x128xf32>
    %c0_6 = arith.constant 0 : index
    %c0_7 = arith.constant 0 : index
    %9 = vector.load %arg4[%c0_6, %c0_7] : memref<1x128xf32, #tpu.memory_space<vmem>>, vector<1x128xf32>
    %10 = arith.mulf %5, %9 : vector<1x128xf32>
    %11 = vector.shape_cast %10 : vector<1x128xf32> to vector<1x1x128xf32>
    %12 = vector.broadcast %11 : vector<1x1x128xf32> to vector<4x8x128xf32>
    %13 = arith.mulf %8, %12 : vector<4x8x128xf32>
    %c0_8 = arith.constant 0 : index
    %c0_9 = arith.constant 0 : index
    %14 = vector.load %arg5[%c0_8, %c0_9] : memref<1x128xf32, #tpu.memory_space<vmem>>, vector<1x128xf32>
    %15 = vector.shape_cast %14 : vector<1x128xf32> to vector<1x1x128xf32>
    %16 = vector.broadcast %15 : vector<1x1x128xf32> to vector<4x8x128xf32>
    %17 = arith.addf %13, %16 : vector<4x8x128xf32>
    %cst = arith.constant 0.000000e+00 : f32
    %18 = vector.broadcast %cst : f32 to vector<4x8x128xf32>
    %19 = arith.maximumf %17, %18 : vector<4x8x128xf32>
    %20 = arith.truncf %19 : vector<4x8x128xf32> to vector<4x8x128xbf16>
    %c0_10 = arith.constant 0 : index
    %c0_11 = arith.constant 0 : index
    %c0_12 = arith.constant 0 : index
    %c0_13 = arith.constant 0 : index
    %21 = vector.load %arg6[%c0_10, %c0_11, %c0_12, %c0_13] : memref<1x4x8x128xbf16, #tpu.memory_space<vmem>>, vector<1x4x8x128xbf16>
    %22 = vector.shape_cast %21 : vector<1x4x8x128xbf16> to vector<4x8x128xbf16>
    %23 = vector.shape_cast %20 : vector<4x8x128xbf16> to vector<1x4x8x128xbf16>
    tpu.vector_store %arg6[%c0_10, %c0_11, %c0_12, %c0_13], %23 {strides = array<i32>} : memref<1x4x8x128xbf16, #tpu.memory_space<vmem>>, vector<1x4x8x128xbf16>,
    return
  }
  func.func @transform_0(%arg0: i32, %arg1: i32) -> (i32, i32, i32, i32) {
    %c0_i32 = arith.constant 0 : i32
    %c0_i32_0 = arith.constant 0 : i32
    %c0_i32_1 = arith.constant 0 : i32
    return %arg0, %arg1, %c0_i32, %c0_i32_0 : i32, i32, i32, i32
  }
  func.func @transform_1(%arg0: i32, %arg1: i32) -> (i32, i32, i32) {
    %c0_i32 = arith.constant 0 : i32
    %c0_i32_0 = arith.constant 0 : i32
    %c0_i32_1 = arith.constant 0 : i32
    return %arg0, %c0_i32, %c0_i32_0 : i32, i32, i32
  }
  func.func @transform_2(%arg0: i32, %arg1: i32) -> (i32, i32) {
    %c0_i32 = arith.constant 0 : i32
    %c0_i32_0 = arith.constant 0 : i32
    %c0_i32_1 = arith.constant 0 : i32
    return %c0_i32, %c0_i32_0 : i32, i32
  }
  func.func @transform_3(%arg0: i32, %arg1: i32) -> (i32, i32) {
    %c0_i32 = arith.constant 0 : i32
    %c0_i32_0 = arith.constant 0 : i32
    %c0_i32_1 = arith.constant 0 : i32
    return %c0_i32, %c0_i32_0 : i32, i32
  }
  func.func @transform_4(%arg0: i32, %arg1: i32) -> (i32, i32, i32, i32) {
    %c0_i32 = arith.constant 0 : i32
    %c0_i32_0 = arith.constant 0 : i32
    %c0_i32_1 = arith.constant 0 : i32
    return %arg0, %arg1, %c0_i32, %c0_i32_0 : i32, i32, i32, i32
  }
}

module attributes {stable_mosaic.version = 11 : i64} {
  func.func @_conv_stats_kernel(%arg0: i32, %arg1: i32, %arg2: memref<1x5x5x128xbf16, #tpu.memory_space<vmem>>, %arg3: memref<4x128x128xbf16, #tpu.memory_space<vmem>>, %arg4: memref<1x2x4x128xf32, #tpu.memory_space<vmem>>, %arg5: memref<1x2x128xf32, #tpu.memory_space<vmem>>, %arg6: memref<1x128xf32, #tpu.memory_space<vmem>>, %arg7: memref<1x128xf32, #tpu.memory_space<vmem>>) attributes {dimension_semantics = [#tpu.dimension_semantics<parallel>, #tpu.dimension_semantics<arbitrary>], iteration_bounds = array<i64: 2, 2>, scalar_prefetch = 0 : i64, scratch_operands = 2 : i64, tpu.core_type = #tpu.core_type<tc>, window_params = [{transform_indices = @transform_0, window_bounds = array<i64: 1, 5, 5, 128>}, {pipeline_mode = #tpu.pipeline_mode<synchronous>, transform_indices = @transform_1, window_bounds = array<i64: 4, 128, 128>}, {transform_indices = @transform_2, window_bounds = array<i64: 1, 2, 4, 128>}, {transform_indices = @transform_3, window_bounds = array<i64: 1, 2, 128>}]} {
    %c0_i32 = arith.constant 0 : i32
    %0 = arith.cmpi eq, %arg1, %c0_i32 : i32
    %1 = arith.extui %0 : i1 to i32
    %c0_i32_0 = arith.constant 0 : i32
    %2 = arith.cmpi ne, %1, %c0_i32_0 : i32
    scf.if %2 {
      %cst = arith.constant 0.000000e+00 : f32
      %8 = vector.broadcast %cst : f32 to vector<1x128xf32>
      %c0 = arith.constant 0 : index
      %c0_6 = arith.constant 0 : index
      %9 = vector.load %arg6[%c0, %c0_6] : memref<1x128xf32, #tpu.memory_space<vmem>>, vector<1x128xf32>
      tpu.vector_store %arg6[%c0, %c0_6], %8 {strides = array<i32>} : memref<1x128xf32, #tpu.memory_space<vmem>>, vector<1x128xf32>,
      %cst_7 = arith.constant 0.000000e+00 : f32
      %10 = vector.broadcast %cst_7 : f32 to vector<1x128xf32>
      %c0_8 = arith.constant 0 : index
      %c0_9 = arith.constant 0 : index
      %11 = vector.load %arg7[%c0_8, %c0_9] : memref<1x128xf32, #tpu.memory_space<vmem>>, vector<1x128xf32>
      tpu.vector_store %arg7[%c0_8, %c0_9], %10 {strides = array<i32>} : memref<1x128xf32, #tpu.memory_space<vmem>>, vector<1x128xf32>,
    } else {
    }
    %c2_i32 = arith.constant 2 : i32
    %3 = arith.muli %arg1, %c2_i32 : i32
    %c0_i32_1 = arith.constant 0 : i32
    %c2_i32_2 = arith.constant 2 : i32
    %4 = arith.addi %c0_i32_1, %c2_i32_2 : i32
    %c1_i32 = arith.constant 1 : i32
    scf.for %arg8 = %c0_i32_1 to %4 step %c1_i32  : i32 {
      %c1_i32_6 = arith.constant 1 : i32
      %8 = arith.muli %arg8, %c1_i32_6 : i32
      %c0_i32_7 = arith.constant 0 : i32
      %9 = arith.addi %c0_i32_7, %8 : i32
      %cst = arith.constant 0.000000e+00 : f32
      %10 = vector.broadcast %cst : f32 to vector<4x128xf32>
      %11 = arith.addi %3, %9 : i32
      %c0_i32_8 = arith.constant 0 : i32
      %12 = arith.addi %11, %c0_i32_8 : i32
      %c0 = arith.constant 0 : index
      %13 = arith.index_cast %12 : i32 to index
      %c0_9 = arith.constant 0 : index
      %c0_10 = arith.constant 0 : index
      %14 = vector.load %arg2[%c0, %13, %c0_9, %c0_10] : memref<1x5x5x128xbf16, #tpu.memory_space<vmem>>, vector<1x1x4x128xbf16>
      %15 = vector.shape_cast %14 : vector<1x1x4x128xbf16> to vector<4x128xbf16>
      %c0_11 = arith.constant 0 : index
      %c0_12 = arith.constant 0 : index
      %c0_13 = arith.constant 0 : index
      %16 = vector.load %arg3[%c0_11, %c0_12, %c0_13] : memref<4x128x128xbf16, #tpu.memory_space<vmem>>, vector<1x128x128xbf16>
      %17 = vector.shape_cast %16 : vector<1x128x128xbf16> to vector<128x128xbf16>
      %cst_14 = arith.constant dense<0.000000e+00> : vector<4x128xf32>
      %18 = tpu.matmul %15, %17, %cst_14 {dimension_numbers = #tpu.dot_dimension_numbers<[1], [0], [0], [1], [0, 0, 1, 1], [], []>} : vector<4x128xbf16>, vector<128x128xbf16>, vector<4x128xf32> -> vector<4x128xf32>
      %19 = arith.addf %10, %18 : vector<4x128xf32>
      %20 = arith.addi %3, %9 : i32
      %c0_i32_15 = arith.constant 0 : i32
      %21 = arith.addi %20, %c0_i32_15 : i32
      %c0_16 = arith.constant 0 : index
      %22 = arith.index_cast %21 : i32 to index
      %c1 = arith.constant 1 : index
      %c0_17 = arith.constant 0 : index
      %23 = vector.load %arg2[%c0_16, %22, %c1, %c0_17] : memref<1x5x5x128xbf16, #tpu.memory_space<vmem>>, vector<1x1x4x128xbf16>
      %24 = vector.shape_cast %23 : vector<1x1x4x128xbf16> to vector<4x128xbf16>
      %c1_18 = arith.constant 1 : index
      %c0_19 = arith.constant 0 : index
      %c0_20 = arith.constant 0 : index
      %25 = vector.load %arg3[%c1_18, %c0_19, %c0_20] : memref<4x128x128xbf16, #tpu.memory_space<vmem>>, vector<1x128x128xbf16>
      %26 = vector.shape_cast %25 : vector<1x128x128xbf16> to vector<128x128xbf16>
      %cst_21 = arith.constant dense<0.000000e+00> : vector<4x128xf32>
      %27 = tpu.matmul %24, %26, %cst_21 {dimension_numbers = #tpu.dot_dimension_numbers<[1], [0], [0], [1], [0, 0, 1, 1], [], []>} : vector<4x128xbf16>, vector<128x128xbf16>, vector<4x128xf32> -> vector<4x128xf32>
      %28 = arith.addf %19, %27 : vector<4x128xf32>
      %29 = arith.addi %3, %9 : i32
      %c1_i32_22 = arith.constant 1 : i32
      %30 = arith.addi %29, %c1_i32_22 : i32
      %c0_23 = arith.constant 0 : index
      %31 = arith.index_cast %30 : i32 to index
      %c0_24 = arith.constant 0 : index
      %c0_25 = arith.constant 0 : index
      %32 = vector.load %arg2[%c0_23, %31, %c0_24, %c0_25] : memref<1x5x5x128xbf16, #tpu.memory_space<vmem>>, vector<1x1x4x128xbf16>
      %33 = vector.shape_cast %32 : vector<1x1x4x128xbf16> to vector<4x128xbf16>
      %c2 = arith.constant 2 : index
      %c0_26 = arith.constant 0 : index
      %c0_27 = arith.constant 0 : index
      %34 = vector.load %arg3[%c2, %c0_26, %c0_27] : memref<4x128x128xbf16, #tpu.memory_space<vmem>>, vector<1x128x128xbf16>
      %35 = vector.shape_cast %34 : vector<1x128x128xbf16> to vector<128x128xbf16>
      %cst_28 = arith.constant dense<0.000000e+00> : vector<4x128xf32>
      %36 = tpu.matmul %33, %35, %cst_28 {dimension_numbers = #tpu.dot_dimension_numbers<[1], [0], [0], [1], [0, 0, 1, 1], [], []>} : vector<4x128xbf16>, vector<128x128xbf16>, vector<4x128xf32> -> vector<4x128xf32>
      %37 = arith.addf %28, %36 : vector<4x128xf32>
      %38 = arith.addi %3, %9 : i32
      %c1_i32_29 = arith.constant 1 : i32
      %39 = arith.addi %38, %c1_i32_29 : i32
      %c0_30 = arith.constant 0 : index
      %40 = arith.index_cast %39 : i32 to index
      %c1_31 = arith.constant 1 : index
      %c0_32 = arith.constant 0 : index
      %41 = vector.load %arg2[%c0_30, %40, %c1_31, %c0_32] : memref<1x5x5x128xbf16, #tpu.memory_space<vmem>>, vector<1x1x4x128xbf16>
      %42 = vector.shape_cast %41 : vector<1x1x4x128xbf16> to vector<4x128xbf16>
      %c3 = arith.constant 3 : index
      %c0_33 = arith.constant 0 : index
      %c0_34 = arith.constant 0 : index
      %43 = vector.load %arg3[%c3, %c0_33, %c0_34] : memref<4x128x128xbf16, #tpu.memory_space<vmem>>, vector<1x128x128xbf16>
      %44 = vector.shape_cast %43 : vector<1x128x128xbf16> to vector<128x128xbf16>
      %cst_35 = arith.constant dense<0.000000e+00> : vector<4x128xf32>
      %45 = tpu.matmul %42, %44, %cst_35 {dimension_numbers = #tpu.dot_dimension_numbers<[1], [0], [0], [1], [0, 0, 1, 1], [], []>} : vector<4x128xbf16>, vector<128x128xbf16>, vector<4x128xf32> -> vector<4x128xf32>
      %46 = arith.addf %37, %45 : vector<4x128xf32>
      %c0_36 = arith.constant 0 : index
      %47 = arith.index_cast %9 : i32 to index
      %c0_37 = arith.constant 0 : index
      %c0_38 = arith.constant 0 : index
      %48 = vector.load %arg4[%c0_36, %47, %c0_37, %c0_38] : memref<1x2x4x128xf32, #tpu.memory_space<vmem>>, vector<1x1x4x128xf32>
      %49 = vector.shape_cast %48 : vector<1x1x4x128xf32> to vector<4x128xf32>
      %50 = vector.shape_cast %46 : vector<4x128xf32> to vector<1x1x4x128xf32>
      tpu.vector_store %arg4[%c0_36, %47, %c0_37, %c0_38], %50 {strides = array<i32>} : memref<1x2x4x128xf32, #tpu.memory_space<vmem>>, vector<1x1x4x128xf32>,
      %c0_39 = arith.constant 0 : index
      %c0_40 = arith.constant 0 : index
      %51 = vector.load %arg6[%c0_39, %c0_40] : memref<1x128xf32, #tpu.memory_space<vmem>>, vector<1x128xf32>
      %cst_41 = arith.constant dense<0.000000e+00> : vector<128xf32>
      %52 = vector.multi_reduction <add>, %46, %cst_41 [0] : vector<4x128xf32> to vector<128xf32>
      %53 = vector.shape_cast %52 : vector<128xf32> to vector<1x128xf32>
      %54 = arith.addf %51, %53 : vector<1x128xf32>
      %c0_42 = arith.constant 0 : index
      %c0_43 = arith.constant 0 : index
      %55 = vector.load %arg6[%c0_42, %c0_43] : memref<1x128xf32, #tpu.memory_space<vmem>>, vector<1x128xf32>
      tpu.vector_store %arg6[%c0_42, %c0_43], %54 {strides = array<i32>} : memref<1x128xf32, #tpu.memory_space<vmem>>, vector<1x128xf32>,
      %c0_44 = arith.constant 0 : index
      %c0_45 = arith.constant 0 : index
      %56 = vector.load %arg7[%c0_44, %c0_45] : memref<1x128xf32, #tpu.memory_space<vmem>>, vector<1x128xf32>
      %57 = arith.mulf %46, %46 : vector<4x128xf32>
      %cst_46 = arith.constant dense<0.000000e+00> : vector<128xf32>
      %58 = vector.multi_reduction <add>, %57, %cst_46 [0] : vector<4x128xf32> to vector<128xf32>
      %59 = vector.shape_cast %58 : vector<128xf32> to vector<1x128xf32>
      %60 = arith.addf %56, %59 : vector<1x128xf32>
      %c0_47 = arith.constant 0 : index
      %c0_48 = arith.constant 0 : index
      %61 = vector.load %arg7[%c0_47, %c0_48] : memref<1x128xf32, #tpu.memory_space<vmem>>, vector<1x128xf32>
      tpu.vector_store %arg7[%c0_47, %c0_48], %60 {strides = array<i32>} : memref<1x128xf32, #tpu.memory_space<vmem>>, vector<1x128xf32>,
    }
    %c2_i32_3 = arith.constant 2 : i32
    %c1_i32_4 = arith.constant 1 : i32
    %5 = arith.cmpi eq, %arg1, %c1_i32_4 : i32
    %6 = arith.extui %5 : i1 to i32
    %c0_i32_5 = arith.constant 0 : i32
    %7 = arith.cmpi ne, %6, %c0_i32_5 : i32
    scf.if %7 {
      %c0 = arith.constant 0 : index
      %c0_6 = arith.constant 0 : index
      %8 = vector.load %arg6[%c0, %c0_6] : memref<1x128xf32, #tpu.memory_space<vmem>>, vector<1x128xf32>
      %cst = arith.constant 6.250000e-02 : f32
      %9 = vector.broadcast %cst : f32 to vector<1x128xf32>
      %10 = arith.mulf %8, %9 : vector<1x128xf32>
      %c0_7 = arith.constant 0 : index
      %c0_8 = arith.constant 0 : index
      %11 = vector.load %arg7[%c0_7, %c0_8] : memref<1x128xf32, #tpu.memory_space<vmem>>, vector<1x128xf32>
      %cst_9 = arith.constant 6.250000e-02 : f32
      %12 = vector.broadcast %cst_9 : f32 to vector<1x128xf32>
      %13 = arith.mulf %11, %12 : vector<1x128xf32>
      %14 = arith.mulf %10, %10 : vector<1x128xf32>
      %15 = arith.subf %13, %14 : vector<1x128xf32>
      %cst_10 = arith.constant 0.000000e+00 : f32
      %16 = vector.broadcast %cst_10 : f32 to vector<1x128xf32>
      %17 = arith.maximumf %15, %16 : vector<1x128xf32>
      %cst_11 = arith.constant 9.99999974E-6 : f32
      %18 = vector.broadcast %cst_11 : f32 to vector<1x128xf32>
      %19 = arith.addf %17, %18 : vector<1x128xf32>
      %20 = math.rsqrt %19 : vector<1x128xf32>
      %21 = tpu.concatenate %10, %20 in 0 : vector<1x128xf32>, vector<1x128xf32> -> vector<2x128xf32>
      %c0_12 = arith.constant 0 : index
      %c0_13 = arith.constant 0 : index
      %c0_14 = arith.constant 0 : index
      %22 = vector.load %arg5[%c0_12, %c0_13, %c0_14] : memref<1x2x128xf32, #tpu.memory_space<vmem>>, vector<1x2x128xf32>
      %23 = vector.shape_cast %22 : vector<1x2x128xf32> to vector<2x128xf32>
      %24 = vector.shape_cast %21 : vector<2x128xf32> to vector<1x2x128xf32>
      tpu.vector_store %arg5[%c0_12, %c0_13, %c0_14], %24 {strides = array<i32>} : memref<1x2x128xf32, #tpu.memory_space<vmem>>, vector<1x2x128xf32>,
    } else {
    }
    return
  }
  func.func @transform_0(%arg0: i32, %arg1: i32) -> (i32, i32, i32, i32) {
    %c0_i32 = arith.constant 0 : i32
    %c0_i32_0 = arith.constant 0 : i32
    %c0_i32_1 = arith.constant 0 : i32
    %c0_i32_2 = arith.constant 0 : i32
    return %arg0, %c0_i32, %c0_i32_0, %c0_i32_1 : i32, i32, i32, i32
  }
  func.func @transform_1(%arg0: i32, %arg1: i32) -> (i32, i32, i32) {
    %c0_i32 = arith.constant 0 : i32
    %c0_i32_0 = arith.constant 0 : i32
    %c0_i32_1 = arith.constant 0 : i32
    %c0_i32_2 = arith.constant 0 : i32
    return %c0_i32, %c0_i32_0, %c0_i32_1 : i32, i32, i32
  }
  func.func @transform_2(%arg0: i32, %arg1: i32) -> (i32, i32, i32, i32) {
    %c0_i32 = arith.constant 0 : i32
    %c0_i32_0 = arith.constant 0 : i32
    %c0_i32_1 = arith.constant 0 : i32
    return %arg0, %arg1, %c0_i32, %c0_i32_0 : i32, i32, i32, i32
  }
  func.func @transform_3(%arg0: i32, %arg1: i32) -> (i32, i32, i32) {
    %c0_i32 = arith.constant 0 : i32
    %c0_i32_0 = arith.constant 0 : i32
    %c0_i32_1 = arith.constant 0 : i32
    return %arg0, %c0_i32, %c0_i32_0 : i32, i32, i32
  }
}

module attributes {stable_mosaic.version = 11 : i64} {
  func.func @_norm_affine_kernel(%arg0: i32, %arg1: i32, %arg2: memref<1x2x4x128xf32, #tpu.memory_space<vmem>>, %arg3: memref<1x2x128xf32, #tpu.memory_space<vmem>>, %arg4: memref<1x128xf32, #tpu.memory_space<vmem>>, %arg5: memref<1x128xf32, #tpu.memory_space<vmem>>, %arg6: memref<1x2x4x128xbf16, #tpu.memory_space<vmem>>) attributes {dimension_semantics = [#tpu.dimension_semantics<parallel>, #tpu.dimension_semantics<parallel>], iteration_bounds = array<i64: 2, 2>, scalar_prefetch = 0 : i64, scratch_operands = 0 : i64, tpu.core_type = #tpu.core_type<tc>, window_params = [{transform_indices = @transform_0, window_bounds = array<i64: 1, 2, 4, 128>}, {transform_indices = @transform_1, window_bounds = array<i64: 1, 2, 128>}, {pipeline_mode = #tpu.pipeline_mode<synchronous>, transform_indices = @transform_2, window_bounds = array<i64: 1, 128>}, {pipeline_mode = #tpu.pipeline_mode<synchronous>, transform_indices = @transform_3, window_bounds = array<i64: 1, 128>}, {transform_indices = @transform_4, window_bounds = array<i64: 1, 2, 4, 128>}]} {
    %c0 = arith.constant 0 : index
    %c0_0 = arith.constant 0 : index
    %c0_1 = arith.constant 0 : index
    %c0_2 = arith.constant 0 : index
    %0 = vector.load %arg2[%c0, %c0_0, %c0_1, %c0_2] : memref<1x2x4x128xf32, #tpu.memory_space<vmem>>, vector<1x2x4x128xf32>
    %1 = vector.shape_cast %0 : vector<1x2x4x128xf32> to vector<2x4x128xf32>
    %c0_3 = arith.constant 0 : index
    %c0_4 = arith.constant 0 : index
    %c0_5 = arith.constant 0 : index
    %2 = vector.load %arg3[%c0_3, %c0_4, %c0_5] : memref<1x2x128xf32, #tpu.memory_space<vmem>>, vector<1x2x128xf32>
    %3 = vector.shape_cast %2 : vector<1x2x128xf32> to vector<2x128xf32>
    %4 = vector.extract_strided_slice %3 {offsets = [0, 0], sizes = [1, 128], strides = [1, 1]} : vector<2x128xf32> to vector<1x128xf32>
    %5 = vector.extract_strided_slice %3 {offsets = [1, 0], sizes = [1, 128], strides = [1, 1]} : vector<2x128xf32> to vector<1x128xf32>
    %6 = vector.shape_cast %4 : vector<1x128xf32> to vector<1x1x128xf32>
    %7 = vector.broadcast %6 : vector<1x1x128xf32> to vector<2x4x128xf32>
    %8 = arith.subf %1, %7 : vector<2x4x128xf32>
    %c0_6 = arith.constant 0 : index
    %c0_7 = arith.constant 0 : index
    %9 = vector.load %arg4[%c0_6, %c0_7] : memref<1x128xf32, #tpu.memory_space<vmem>>, vector<1x128xf32>
    %10 = arith.mulf %5, %9 : vector<1x128xf32>
    %11 = vector.shape_cast %10 : vector<1x128xf32> to vector<1x1x128xf32>
    %12 = vector.broadcast %11 : vector<1x1x128xf32> to vector<2x4x128xf32>
    %13 = arith.mulf %8, %12 : vector<2x4x128xf32>
    %c0_8 = arith.constant 0 : index
    %c0_9 = arith.constant 0 : index
    %14 = vector.load %arg5[%c0_8, %c0_9] : memref<1x128xf32, #tpu.memory_space<vmem>>, vector<1x128xf32>
    %15 = vector.shape_cast %14 : vector<1x128xf32> to vector<1x1x128xf32>
    %16 = vector.broadcast %15 : vector<1x1x128xf32> to vector<2x4x128xf32>
    %17 = arith.addf %13, %16 : vector<2x4x128xf32>
    %cst = arith.constant 0.000000e+00 : f32
    %18 = vector.broadcast %cst : f32 to vector<2x4x128xf32>
    %19 = arith.maximumf %17, %18 : vector<2x4x128xf32>
    %20 = arith.truncf %19 : vector<2x4x128xf32> to vector<2x4x128xbf16>
    %c0_10 = arith.constant 0 : index
    %c0_11 = arith.constant 0 : index
    %c0_12 = arith.constant 0 : index
    %c0_13 = arith.constant 0 : index
    %21 = vector.load %arg6[%c0_10, %c0_11, %c0_12, %c0_13] : memref<1x2x4x128xbf16, #tpu.memory_space<vmem>>, vector<1x2x4x128xbf16>
    %22 = vector.shape_cast %21 : vector<1x2x4x128xbf16> to vector<2x4x128xbf16>
    %23 = vector.shape_cast %20 : vector<2x4x128xbf16> to vector<1x2x4x128xbf16>
    tpu.vector_store %arg6[%c0_10, %c0_11, %c0_12, %c0_13], %23 {strides = array<i32>} : memref<1x2x4x128xbf16, #tpu.memory_space<vmem>>, vector<1x2x4x128xbf16>,
    return
  }
  func.func @transform_0(%arg0: i32, %arg1: i32) -> (i32, i32, i32, i32) {
    %c0_i32 = arith.constant 0 : i32
    %c0_i32_0 = arith.constant 0 : i32
    %c0_i32_1 = arith.constant 0 : i32
    return %arg0, %arg1, %c0_i32, %c0_i32_0 : i32, i32, i32, i32
  }
  func.func @transform_1(%arg0: i32, %arg1: i32) -> (i32, i32, i32) {
    %c0_i32 = arith.constant 0 : i32
    %c0_i32_0 = arith.constant 0 : i32
    %c0_i32_1 = arith.constant 0 : i32
    return %arg0, %c0_i32, %c0_i32_0 : i32, i32, i32
  }
  func.func @transform_2(%arg0: i32, %arg1: i32) -> (i32, i32) {
    %c0_i32 = arith.constant 0 : i32
    %c0_i32_0 = arith.constant 0 : i32
    %c0_i32_1 = arith.constant 0 : i32
    return %c0_i32, %c0_i32_0 : i32, i32
  }
  func.func @transform_3(%arg0: i32, %arg1: i32) -> (i32, i32) {
    %c0_i32 = arith.constant 0 : i32
    %c0_i32_0 = arith.constant 0 : i32
    %c0_i32_1 = arith.constant 0 : i32
    return %c0_i32, %c0_i32_0 : i32, i32
  }
  func.func @transform_4(%arg0: i32, %arg1: i32) -> (i32, i32, i32, i32) {
    %c0_i32 = arith.constant 0 : i32
    %c0_i32_0 = arith.constant 0 : i32
    %c0_i32_1 = arith.constant 0 : i32
    return %arg0, %arg1, %c0_i32, %c0_i32_0 : i32, i32, i32, i32
  }
}

module attributes {stable_mosaic.version = 11 : i64} {
  func.func @_conv_stats_kernel(%arg0: i32, %arg1: i32, %arg2: memref<1x6x6x64xbf16, #tpu.memory_space<vmem>>, %arg3: memref<9x64x128xbf16, #tpu.memory_space<vmem>>, %arg4: memref<1x2x4x128xf32, #tpu.memory_space<vmem>>, %arg5: memref<1x2x128xf32, #tpu.memory_space<vmem>>, %arg6: memref<1x128xf32, #tpu.memory_space<vmem>>, %arg7: memref<1x128xf32, #tpu.memory_space<vmem>>) attributes {dimension_semantics = [#tpu.dimension_semantics<parallel>, #tpu.dimension_semantics<arbitrary>], iteration_bounds = array<i64: 2, 2>, scalar_prefetch = 0 : i64, scratch_operands = 2 : i64, tpu.core_type = #tpu.core_type<tc>, window_params = [{transform_indices = @transform_0, window_bounds = array<i64: 1, 6, 6, 64>}, {pipeline_mode = #tpu.pipeline_mode<synchronous>, transform_indices = @transform_1, window_bounds = array<i64: 9, 64, 128>}, {transform_indices = @transform_2, window_bounds = array<i64: 1, 2, 4, 128>}, {transform_indices = @transform_3, window_bounds = array<i64: 1, 2, 128>}]} {
    %c0_i32 = arith.constant 0 : i32
    %0 = arith.cmpi eq, %arg1, %c0_i32 : i32
    %1 = arith.extui %0 : i1 to i32
    %c0_i32_0 = arith.constant 0 : i32
    %2 = arith.cmpi ne, %1, %c0_i32_0 : i32
    scf.if %2 {
      %cst = arith.constant 0.000000e+00 : f32
      %8 = vector.broadcast %cst : f32 to vector<1x128xf32>
      %c0 = arith.constant 0 : index
      %c0_6 = arith.constant 0 : index
      %9 = vector.load %arg6[%c0, %c0_6] : memref<1x128xf32, #tpu.memory_space<vmem>>, vector<1x128xf32>
      tpu.vector_store %arg6[%c0, %c0_6], %8 {strides = array<i32>} : memref<1x128xf32, #tpu.memory_space<vmem>>, vector<1x128xf32>,
      %cst_7 = arith.constant 0.000000e+00 : f32
      %10 = vector.broadcast %cst_7 : f32 to vector<1x128xf32>
      %c0_8 = arith.constant 0 : index
      %c0_9 = arith.constant 0 : index
      %11 = vector.load %arg7[%c0_8, %c0_9] : memref<1x128xf32, #tpu.memory_space<vmem>>, vector<1x128xf32>
      tpu.vector_store %arg7[%c0_8, %c0_9], %10 {strides = array<i32>} : memref<1x128xf32, #tpu.memory_space<vmem>>, vector<1x128xf32>,
    } else {
    }
    %c2_i32 = arith.constant 2 : i32
    %3 = arith.muli %arg1, %c2_i32 : i32
    %c0_i32_1 = arith.constant 0 : i32
    %c2_i32_2 = arith.constant 2 : i32
    %4 = arith.addi %c0_i32_1, %c2_i32_2 : i32
    %c1_i32 = arith.constant 1 : i32
    scf.for %arg8 = %c0_i32_1 to %4 step %c1_i32  : i32 {
      %c1_i32_6 = arith.constant 1 : i32
      %8 = arith.muli %arg8, %c1_i32_6 : i32
      %c0_i32_7 = arith.constant 0 : i32
      %9 = arith.addi %c0_i32_7, %8 : i32
      %cst = arith.constant 0.000000e+00 : f32
      %10 = vector.broadcast %cst : f32 to vector<4x128xf32>
      %11 = arith.addi %3, %9 : i32
      %c0_i32_8 = arith.constant 0 : i32
      %12 = arith.addi %11, %c0_i32_8 : i32
      %c0 = arith.constant 0 : index
      %13 = arith.index_cast %12 : i32 to index
      %c0_9 = arith.constant 0 : index
      %c0_10 = arith.constant 0 : index
      %14 = vector.load %arg2[%c0, %13, %c0_9, %c0_10] : memref<1x6x6x64xbf16, #tpu.memory_space<vmem>>, vector<1x1x4x64xbf16>
      %15 = vector.shape_cast %14 : vector<1x1x4x64xbf16> to vector<4x64xbf16>
      %c0_11 = arith.constant 0 : index
      %c0_12 = arith.constant 0 : index
      %c0_13 = arith.constant 0 : index
      %16 = vector.load %arg3[%c0_11, %c0_12, %c0_13] : memref<9x64x128xbf16, #tpu.memory_space<vmem>>, vector<1x64x128xbf16>
      %17 = vector.shape_cast %16 : vector<1x64x128xbf16> to vector<64x128xbf16>
      %cst_14 = arith.constant dense<0.000000e+00> : vector<4x128xf32>
      %18 = tpu.matmul %15, %17, %cst_14 {dimension_numbers = #tpu.dot_dimension_numbers<[1], [0], [0], [1], [0, 0, 1, 1], [], []>} : vector<4x64xbf16>, vector<64x128xbf16>, vector<4x128xf32> -> vector<4x128xf32>
      %19 = arith.addf %10, %18 : vector<4x128xf32>
      %20 = arith.addi %3, %9 : i32
      %c0_i32_15 = arith.constant 0 : i32
      %21 = arith.addi %20, %c0_i32_15 : i32
      %c0_16 = arith.constant 0 : index
      %22 = arith.index_cast %21 : i32 to index
      %c1 = arith.constant 1 : index
      %c0_17 = arith.constant 0 : index
      %23 = vector.load %arg2[%c0_16, %22, %c1, %c0_17] : memref<1x6x6x64xbf16, #tpu.memory_space<vmem>>, vector<1x1x4x64xbf16>
      %24 = vector.shape_cast %23 : vector<1x1x4x64xbf16> to vector<4x64xbf16>
      %c1_18 = arith.constant 1 : index
      %c0_19 = arith.constant 0 : index
      %c0_20 = arith.constant 0 : index
      %25 = vector.load %arg3[%c1_18, %c0_19, %c0_20] : memref<9x64x128xbf16, #tpu.memory_space<vmem>>, vector<1x64x128xbf16>
      %26 = vector.shape_cast %25 : vector<1x64x128xbf16> to vector<64x128xbf16>
      %cst_21 = arith.constant dense<0.000000e+00> : vector<4x128xf32>
      %27 = tpu.matmul %24, %26, %cst_21 {dimension_numbers = #tpu.dot_dimension_numbers<[1], [0], [0], [1], [0, 0, 1, 1], [], []>} : vector<4x64xbf16>, vector<64x128xbf16>, vector<4x128xf32> -> vector<4x128xf32>
      %28 = arith.addf %19, %27 : vector<4x128xf32>
      %29 = arith.addi %3, %9 : i32
      %c0_i32_22 = arith.constant 0 : i32
      %30 = arith.addi %29, %c0_i32_22 : i32
      %c0_23 = arith.constant 0 : index
      %31 = arith.index_cast %30 : i32 to index
      %c2 = arith.constant 2 : index
      %c0_24 = arith.constant 0 : index
      %32 = vector.load %arg2[%c0_23, %31, %c2, %c0_24] : memref<1x6x6x64xbf16, #tpu.memory_space<vmem>>, vector<1x1x4x64xbf16>
      %33 = vector.shape_cast %32 : vector<1x1x4x64xbf16> to vector<4x64xbf16>
      %c2_25 = arith.constant 2 : index
      %c0_26 = arith.constant 0 : index
      %c0_27 = arith.constant 0 : index
      %34 = vector.load %arg3[%c2_25, %c0_26, %c0_27] : memref<9x64x128xbf16, #tpu.memory_space<vmem>>, vector<1x64x128xbf16>
      %35 = vector.shape_cast %34 : vector<1x64x128xbf16> to vector<64x128xbf16>
      %cst_28 = arith.constant dense<0.000000e+00> : vector<4x128xf32>
      %36 = tpu.matmul %33, %35, %cst_28 {dimension_numbers = #tpu.dot_dimension_numbers<[1], [0], [0], [1], [0, 0, 1, 1], [], []>} : vector<4x64xbf16>, vector<64x128xbf16>, vector<4x128xf32> -> vector<4x128xf32>
      %37 = arith.addf %28, %36 : vector<4x128xf32>
      %38 = arith.addi %3, %9 : i32
      %c1_i32_29 = arith.constant 1 : i32
      %39 = arith.addi %38, %c1_i32_29 : i32
      %c0_30 = arith.constant 0 : index
      %40 = arith.index_cast %39 : i32 to index
      %c0_31 = arith.constant 0 : index
      %c0_32 = arith.constant 0 : index
      %41 = vector.load %arg2[%c0_30, %40, %c0_31, %c0_32] : memref<1x6x6x64xbf16, #tpu.memory_space<vmem>>, vector<1x1x4x64xbf16>
      %42 = vector.shape_cast %41 : vector<1x1x4x64xbf16> to vector<4x64xbf16>
      %c3 = arith.constant 3 : index
      %c0_33 = arith.constant 0 : index
      %c0_34 = arith.constant 0 : index
      %43 = vector.load %arg3[%c3, %c0_33, %c0_34] : memref<9x64x128xbf16, #tpu.memory_space<vmem>>, vector<1x64x128xbf16>
      %44 = vector.shape_cast %43 : vector<1x64x128xbf16> to vector<64x128xbf16>
      %cst_35 = arith.constant dense<0.000000e+00> : vector<4x128xf32>
      %45 = tpu.matmul %42, %44, %cst_35 {dimension_numbers = #tpu.dot_dimension_numbers<[1], [0], [0], [1], [0, 0, 1, 1], [], []>} : vector<4x64xbf16>, vector<64x128xbf16>, vector<4x128xf32> -> vector<4x128xf32>
      %46 = arith.addf %37, %45 : vector<4x128xf32>
      %47 = arith.addi %3, %9 : i32
      %c1_i32_36 = arith.constant 1 : i32
      %48 = arith.addi %47, %c1_i32_36 : i32
      %c0_37 = arith.constant 0 : index
      %49 = arith.index_cast %48 : i32 to index
      %c1_38 = arith.constant 1 : index
      %c0_39 = arith.constant 0 : index
      %50 = vector.load %arg2[%c0_37, %49, %c1_38, %c0_39] : memref<1x6x6x64xbf16, #tpu.memory_space<vmem>>, vector<1x1x4x64xbf16>
      %51 = vector.shape_cast %50 : vector<1x1x4x64xbf16> to vector<4x64xbf16>
      %c4 = arith.constant 4 : index
      %c0_40 = arith.constant 0 : index
      %c0_41 = arith.constant 0 : index
      %52 = vector.load %arg3[%c4, %c0_40, %c0_41] : memref<9x64x128xbf16, #tpu.memory_space<vmem>>, vector<1x64x128xbf16>
      %53 = vector.shape_cast %52 : vector<1x64x128xbf16> to vector<64x128xbf16>
      %cst_42 = arith.constant dense<0.000000e+00> : vector<4x128xf32>
      %54 = tpu.matmul %51, %53, %cst_42 {dimension_numbers = #tpu.dot_dimension_numbers<[1], [0], [0], [1], [0, 0, 1, 1], [], []>} : vector<4x64xbf16>, vector<64x128xbf16>, vector<4x128xf32> -> vector<4x128xf32>
      %55 = arith.addf %46, %54 : vector<4x128xf32>
      %56 = arith.addi %3, %9 : i32
      %c1_i32_43 = arith.constant 1 : i32
      %57 = arith.addi %56, %c1_i32_43 : i32
      %c0_44 = arith.constant 0 : index
      %58 = arith.index_cast %57 : i32 to index
      %c2_45 = arith.constant 2 : index
      %c0_46 = arith.constant 0 : index
      %59 = vector.load %arg2[%c0_44, %58, %c2_45, %c0_46] : memref<1x6x6x64xbf16, #tpu.memory_space<vmem>>, vector<1x1x4x64xbf16>
      %60 = vector.shape_cast %59 : vector<1x1x4x64xbf16> to vector<4x64xbf16>
      %c5 = arith.constant 5 : index
      %c0_47 = arith.constant 0 : index
      %c0_48 = arith.constant 0 : index
      %61 = vector.load %arg3[%c5, %c0_47, %c0_48] : memref<9x64x128xbf16, #tpu.memory_space<vmem>>, vector<1x64x128xbf16>
      %62 = vector.shape_cast %61 : vector<1x64x128xbf16> to vector<64x128xbf16>
      %cst_49 = arith.constant dense<0.000000e+00> : vector<4x128xf32>
      %63 = tpu.matmul %60, %62, %cst_49 {dimension_numbers = #tpu.dot_dimension_numbers<[1], [0], [0], [1], [0, 0, 1, 1], [], []>} : vector<4x64xbf16>, vector<64x128xbf16>, vector<4x128xf32> -> vector<4x128xf32>
      %64 = arith.addf %55, %63 : vector<4x128xf32>
      %65 = arith.addi %3, %9 : i32
      %c2_i32_50 = arith.constant 2 : i32
      %66 = arith.addi %65, %c2_i32_50 : i32
      %c0_51 = arith.constant 0 : index
      %67 = arith.index_cast %66 : i32 to index
      %c0_52 = arith.constant 0 : index
      %c0_53 = arith.constant 0 : index
      %68 = vector.load %arg2[%c0_51, %67, %c0_52, %c0_53] : memref<1x6x6x64xbf16, #tpu.memory_space<vmem>>, vector<1x1x4x64xbf16>
      %69 = vector.shape_cast %68 : vector<1x1x4x64xbf16> to vector<4x64xbf16>
      %c6 = arith.constant 6 : index
      %c0_54 = arith.constant 0 : index
      %c0_55 = arith.constant 0 : index
      %70 = vector.load %arg3[%c6, %c0_54, %c0_55] : memref<9x64x128xbf16, #tpu.memory_space<vmem>>, vector<1x64x128xbf16>
      %71 = vector.shape_cast %70 : vector<1x64x128xbf16> to vector<64x128xbf16>
      %cst_56 = arith.constant dense<0.000000e+00> : vector<4x128xf32>
      %72 = tpu.matmul %69, %71, %cst_56 {dimension_numbers = #tpu.dot_dimension_numbers<[1], [0], [0], [1], [0, 0, 1, 1], [], []>} : vector<4x64xbf16>, vector<64x128xbf16>, vector<4x128xf32> -> vector<4x128xf32>
      %73 = arith.addf %64, %72 : vector<4x128xf32>
      %74 = arith.addi %3, %9 : i32
      %c2_i32_57 = arith.constant 2 : i32
      %75 = arith.addi %74, %c2_i32_57 : i32
      %c0_58 = arith.constant 0 : index
      %76 = arith.index_cast %75 : i32 to index
      %c1_59 = arith.constant 1 : index
      %c0_60 = arith.constant 0 : index
      %77 = vector.load %arg2[%c0_58, %76, %c1_59, %c0_60] : memref<1x6x6x64xbf16, #tpu.memory_space<vmem>>, vector<1x1x4x64xbf16>
      %78 = vector.shape_cast %77 : vector<1x1x4x64xbf16> to vector<4x64xbf16>
      %c7 = arith.constant 7 : index
      %c0_61 = arith.constant 0 : index
      %c0_62 = arith.constant 0 : index
      %79 = vector.load %arg3[%c7, %c0_61, %c0_62] : memref<9x64x128xbf16, #tpu.memory_space<vmem>>, vector<1x64x128xbf16>
      %80 = vector.shape_cast %79 : vector<1x64x128xbf16> to vector<64x128xbf16>
      %cst_63 = arith.constant dense<0.000000e+00> : vector<4x128xf32>
      %81 = tpu.matmul %78, %80, %cst_63 {dimension_numbers = #tpu.dot_dimension_numbers<[1], [0], [0], [1], [0, 0, 1, 1], [], []>} : vector<4x64xbf16>, vector<64x128xbf16>, vector<4x128xf32> -> vector<4x128xf32>
      %82 = arith.addf %73, %81 : vector<4x128xf32>
      %83 = arith.addi %3, %9 : i32
      %c2_i32_64 = arith.constant 2 : i32
      %84 = arith.addi %83, %c2_i32_64 : i32
      %c0_65 = arith.constant 0 : index
      %85 = arith.index_cast %84 : i32 to index
      %c2_66 = arith.constant 2 : index
      %c0_67 = arith.constant 0 : index
      %86 = vector.load %arg2[%c0_65, %85, %c2_66, %c0_67] : memref<1x6x6x64xbf16, #tpu.memory_space<vmem>>, vector<1x1x4x64xbf16>
      %87 = vector.shape_cast %86 : vector<1x1x4x64xbf16> to vector<4x64xbf16>
      %c8 = arith.constant 8 : index
      %c0_68 = arith.constant 0 : index
      %c0_69 = arith.constant 0 : index
      %88 = vector.load %arg3[%c8, %c0_68, %c0_69] : memref<9x64x128xbf16, #tpu.memory_space<vmem>>, vector<1x64x128xbf16>
      %89 = vector.shape_cast %88 : vector<1x64x128xbf16> to vector<64x128xbf16>
      %cst_70 = arith.constant dense<0.000000e+00> : vector<4x128xf32>
      %90 = tpu.matmul %87, %89, %cst_70 {dimension_numbers = #tpu.dot_dimension_numbers<[1], [0], [0], [1], [0, 0, 1, 1], [], []>} : vector<4x64xbf16>, vector<64x128xbf16>, vector<4x128xf32> -> vector<4x128xf32>
      %91 = arith.addf %82, %90 : vector<4x128xf32>
      %c0_71 = arith.constant 0 : index
      %92 = arith.index_cast %9 : i32 to index
      %c0_72 = arith.constant 0 : index
      %c0_73 = arith.constant 0 : index
      %93 = vector.load %arg4[%c0_71, %92, %c0_72, %c0_73] : memref<1x2x4x128xf32, #tpu.memory_space<vmem>>, vector<1x1x4x128xf32>
      %94 = vector.shape_cast %93 : vector<1x1x4x128xf32> to vector<4x128xf32>
      %95 = vector.shape_cast %91 : vector<4x128xf32> to vector<1x1x4x128xf32>
      tpu.vector_store %arg4[%c0_71, %92, %c0_72, %c0_73], %95 {strides = array<i32>} : memref<1x2x4x128xf32, #tpu.memory_space<vmem>>, vector<1x1x4x128xf32>,
      %c0_74 = arith.constant 0 : index
      %c0_75 = arith.constant 0 : index
      %96 = vector.load %arg6[%c0_74, %c0_75] : memref<1x128xf32, #tpu.memory_space<vmem>>, vector<1x128xf32>
      %cst_76 = arith.constant dense<0.000000e+00> : vector<128xf32>
      %97 = vector.multi_reduction <add>, %91, %cst_76 [0] : vector<4x128xf32> to vector<128xf32>
      %98 = vector.shape_cast %97 : vector<128xf32> to vector<1x128xf32>
      %99 = arith.addf %96, %98 : vector<1x128xf32>
      %c0_77 = arith.constant 0 : index
      %c0_78 = arith.constant 0 : index
      %100 = vector.load %arg6[%c0_77, %c0_78] : memref<1x128xf32, #tpu.memory_space<vmem>>, vector<1x128xf32>
      tpu.vector_store %arg6[%c0_77, %c0_78], %99 {strides = array<i32>} : memref<1x128xf32, #tpu.memory_space<vmem>>, vector<1x128xf32>,
      %c0_79 = arith.constant 0 : index
      %c0_80 = arith.constant 0 : index
      %101 = vector.load %arg7[%c0_79, %c0_80] : memref<1x128xf32, #tpu.memory_space<vmem>>, vector<1x128xf32>
      %102 = arith.mulf %91, %91 : vector<4x128xf32>
      %cst_81 = arith.constant dense<0.000000e+00> : vector<128xf32>
      %103 = vector.multi_reduction <add>, %102, %cst_81 [0] : vector<4x128xf32> to vector<128xf32>
      %104 = vector.shape_cast %103 : vector<128xf32> to vector<1x128xf32>
      %105 = arith.addf %101, %104 : vector<1x128xf32>
      %c0_82 = arith.constant 0 : index
      %c0_83 = arith.constant 0 : index
      %106 = vector.load %arg7[%c0_82, %c0_83] : memref<1x128xf32, #tpu.memory_space<vmem>>, vector<1x128xf32>
      tpu.vector_store %arg7[%c0_82, %c0_83], %105 {strides = array<i32>} : memref<1x128xf32, #tpu.memory_space<vmem>>, vector<1x128xf32>,
    }
    %c2_i32_3 = arith.constant 2 : i32
    %c1_i32_4 = arith.constant 1 : i32
    %5 = arith.cmpi eq, %arg1, %c1_i32_4 : i32
    %6 = arith.extui %5 : i1 to i32
    %c0_i32_5 = arith.constant 0 : i32
    %7 = arith.cmpi ne, %6, %c0_i32_5 : i32
    scf.if %7 {
      %c0 = arith.constant 0 : index
      %c0_6 = arith.constant 0 : index
      %8 = vector.load %arg6[%c0, %c0_6] : memref<1x128xf32, #tpu.memory_space<vmem>>, vector<1x128xf32>
      %cst = arith.constant 6.250000e-02 : f32
      %9 = vector.broadcast %cst : f32 to vector<1x128xf32>
      %10 = arith.mulf %8, %9 : vector<1x128xf32>
      %c0_7 = arith.constant 0 : index
      %c0_8 = arith.constant 0 : index
      %11 = vector.load %arg7[%c0_7, %c0_8] : memref<1x128xf32, #tpu.memory_space<vmem>>, vector<1x128xf32>
      %cst_9 = arith.constant 6.250000e-02 : f32
      %12 = vector.broadcast %cst_9 : f32 to vector<1x128xf32>
      %13 = arith.mulf %11, %12 : vector<1x128xf32>
      %14 = arith.mulf %10, %10 : vector<1x128xf32>
      %15 = arith.subf %13, %14 : vector<1x128xf32>
      %cst_10 = arith.constant 0.000000e+00 : f32
      %16 = vector.broadcast %cst_10 : f32 to vector<1x128xf32>
      %17 = arith.maximumf %15, %16 : vector<1x128xf32>
      %cst_11 = arith.constant 9.99999974E-6 : f32
      %18 = vector.broadcast %cst_11 : f32 to vector<1x128xf32>
      %19 = arith.addf %17, %18 : vector<1x128xf32>
      %20 = math.rsqrt %19 : vector<1x128xf32>
      %21 = tpu.concatenate %10, %20 in 0 : vector<1x128xf32>, vector<1x128xf32> -> vector<2x128xf32>
      %c0_12 = arith.constant 0 : index
      %c0_13 = arith.constant 0 : index
      %c0_14 = arith.constant 0 : index
      %22 = vector.load %arg5[%c0_12, %c0_13, %c0_14] : memref<1x2x128xf32, #tpu.memory_space<vmem>>, vector<1x2x128xf32>
      %23 = vector.shape_cast %22 : vector<1x2x128xf32> to vector<2x128xf32>
      %24 = vector.shape_cast %21 : vector<2x128xf32> to vector<1x2x128xf32>
      tpu.vector_store %arg5[%c0_12, %c0_13, %c0_14], %24 {strides = array<i32>} : memref<1x2x128xf32, #tpu.memory_space<vmem>>, vector<1x2x128xf32>,
    } else {
    }
    return
  }
  func.func @transform_0(%arg0: i32, %arg1: i32) -> (i32, i32, i32, i32) {
    %c0_i32 = arith.constant 0 : i32
    %c0_i32_0 = arith.constant 0 : i32
    %c0_i32_1 = arith.constant 0 : i32
    %c0_i32_2 = arith.constant 0 : i32
    return %arg0, %c0_i32, %c0_i32_0, %c0_i32_1 : i32, i32, i32, i32
  }
  func.func @transform_1(%arg0: i32, %arg1: i32) -> (i32, i32, i32) {
    %c0_i32 = arith.constant 0 : i32
    %c0_i32_0 = arith.constant 0 : i32
    %c0_i32_1 = arith.constant 0 : i32
    %c0_i32_2 = arith.constant 0 : i32
    return %c0_i32, %c0_i32_0, %c0_i32_1 : i32, i32, i32
  }
  func.func @transform_2(%arg0: i32, %arg1: i32) -> (i32, i32, i32, i32) {
    %c0_i32 = arith.constant 0 : i32
    %c0_i32_0 = arith.constant 0 : i32
    %c0_i32_1 = arith.constant 0 : i32
    return %arg0, %arg1, %c0_i32, %c0_i32_0 : i32, i32, i32, i32
  }
  func.func @transform_3(%arg0: i32, %arg1: i32) -> (i32, i32, i32) {
    %c0_i32 = arith.constant 0 : i32
    %c0_i32_0 = arith.constant 0 : i32
    %c0_i32_1 = arith.constant 0 : i32
    return %arg0, %c0_i32, %c0_i32_0 : i32, i32, i32
  }
}

module attributes {stable_mosaic.version = 11 : i64} {
  func.func @_norm_affine_res_kernel(%arg0: i32, %arg1: i32, %arg2: memref<1x2x4x128xf32, #tpu.memory_space<vmem>>, %arg3: memref<1x2x128xf32, #tpu.memory_space<vmem>>, %arg4: memref<1x128xf32, #tpu.memory_space<vmem>>, %arg5: memref<1x128xf32, #tpu.memory_space<vmem>>, %arg6: memref<1x2x4x128xbf16, #tpu.memory_space<vmem>>, %arg7: memref<1x2x4x128xbf16, #tpu.memory_space<vmem>>) attributes {dimension_semantics = [#tpu.dimension_semantics<parallel>, #tpu.dimension_semantics<parallel>], iteration_bounds = array<i64: 2, 2>, scalar_prefetch = 0 : i64, scratch_operands = 0 : i64, tpu.core_type = #tpu.core_type<tc>, window_params = [{transform_indices = @transform_0, window_bounds = array<i64: 1, 2, 4, 128>}, {transform_indices = @transform_1, window_bounds = array<i64: 1, 2, 128>}, {pipeline_mode = #tpu.pipeline_mode<synchronous>, transform_indices = @transform_2, window_bounds = array<i64: 1, 128>}, {pipeline_mode = #tpu.pipeline_mode<synchronous>, transform_indices = @transform_3, window_bounds = array<i64: 1, 128>}, {transform_indices = @transform_4, window_bounds = array<i64: 1, 2, 4, 128>}, {transform_indices = @transform_5, window_bounds = array<i64: 1, 2, 4, 128>}]} {
    %c0 = arith.constant 0 : index
    %c0_0 = arith.constant 0 : index
    %c0_1 = arith.constant 0 : index
    %c0_2 = arith.constant 0 : index
    %0 = vector.load %arg2[%c0, %c0_0, %c0_1, %c0_2] : memref<1x2x4x128xf32, #tpu.memory_space<vmem>>, vector<1x2x4x128xf32>
    %1 = vector.shape_cast %0 : vector<1x2x4x128xf32> to vector<2x4x128xf32>
    %c0_3 = arith.constant 0 : index
    %c0_4 = arith.constant 0 : index
    %c0_5 = arith.constant 0 : index
    %2 = vector.load %arg3[%c0_3, %c0_4, %c0_5] : memref<1x2x128xf32, #tpu.memory_space<vmem>>, vector<1x2x128xf32>
    %3 = vector.shape_cast %2 : vector<1x2x128xf32> to vector<2x128xf32>
    %4 = vector.extract_strided_slice %3 {offsets = [0, 0], sizes = [1, 128], strides = [1, 1]} : vector<2x128xf32> to vector<1x128xf32>
    %5 = vector.extract_strided_slice %3 {offsets = [1, 0], sizes = [1, 128], strides = [1, 1]} : vector<2x128xf32> to vector<1x128xf32>
    %6 = vector.shape_cast %4 : vector<1x128xf32> to vector<1x1x128xf32>
    %7 = vector.broadcast %6 : vector<1x1x128xf32> to vector<2x4x128xf32>
    %8 = arith.subf %1, %7 : vector<2x4x128xf32>
    %c0_6 = arith.constant 0 : index
    %c0_7 = arith.constant 0 : index
    %9 = vector.load %arg4[%c0_6, %c0_7] : memref<1x128xf32, #tpu.memory_space<vmem>>, vector<1x128xf32>
    %10 = arith.mulf %5, %9 : vector<1x128xf32>
    %11 = vector.shape_cast %10 : vector<1x128xf32> to vector<1x1x128xf32>
    %12 = vector.broadcast %11 : vector<1x1x128xf32> to vector<2x4x128xf32>
    %13 = arith.mulf %8, %12 : vector<2x4x128xf32>
    %c0_8 = arith.constant 0 : index
    %c0_9 = arith.constant 0 : index
    %14 = vector.load %arg5[%c0_8, %c0_9] : memref<1x128xf32, #tpu.memory_space<vmem>>, vector<1x128xf32>
    %15 = vector.shape_cast %14 : vector<1x128xf32> to vector<1x1x128xf32>
    %16 = vector.broadcast %15 : vector<1x1x128xf32> to vector<2x4x128xf32>
    %17 = arith.addf %13, %16 : vector<2x4x128xf32>
    %c0_10 = arith.constant 0 : index
    %c0_11 = arith.constant 0 : index
    %c0_12 = arith.constant 0 : index
    %c0_13 = arith.constant 0 : index
    %18 = vector.load %arg6[%c0_10, %c0_11, %c0_12, %c0_13] : memref<1x2x4x128xbf16, #tpu.memory_space<vmem>>, vector<1x2x4x128xbf16>
    %19 = vector.shape_cast %18 : vector<1x2x4x128xbf16> to vector<2x4x128xbf16>
    %20 = arith.extf %19 : vector<2x4x128xbf16> to vector<2x4x128xf32>
    %21 = arith.addf %17, %20 : vector<2x4x128xf32>
    %22 = arith.truncf %21 : vector<2x4x128xf32> to vector<2x4x128xbf16>
    %c0_14 = arith.constant 0 : index
    %c0_15 = arith.constant 0 : index
    %c0_16 = arith.constant 0 : index
    %c0_17 = arith.constant 0 : index
    %23 = vector.load %arg7[%c0_14, %c0_15, %c0_16, %c0_17] : memref<1x2x4x128xbf16, #tpu.memory_space<vmem>>, vector<1x2x4x128xbf16>
    %24 = vector.shape_cast %23 : vector<1x2x4x128xbf16> to vector<2x4x128xbf16>
    %25 = vector.shape_cast %22 : vector<2x4x128xbf16> to vector<1x2x4x128xbf16>
    tpu.vector_store %arg7[%c0_14, %c0_15, %c0_16, %c0_17], %25 {strides = array<i32>} : memref<1x2x4x128xbf16, #tpu.memory_space<vmem>>, vector<1x2x4x128xbf16>,
    return
  }
  func.func @transform_0(%arg0: i32, %arg1: i32) -> (i32, i32, i32, i32) {
    %c0_i32 = arith.constant 0 : i32
    %c0_i32_0 = arith.constant 0 : i32
    %c0_i32_1 = arith.constant 0 : i32
    return %arg0, %arg1, %c0_i32, %c0_i32_0 : i32, i32, i32, i32
  }
  func.func @transform_1(%arg0: i32, %arg1: i32) -> (i32, i32, i32) {
    %c0_i32 = arith.constant 0 : i32
    %c0_i32_0 = arith.constant 0 : i32
    %c0_i32_1 = arith.constant 0 : i32
    return %arg0, %c0_i32, %c0_i32_0 : i32, i32, i32
  }
  func.func @transform_2(%arg0: i32, %arg1: i32) -> (i32, i32) {
    %c0_i32 = arith.constant 0 : i32
    %c0_i32_0 = arith.constant 0 : i32
    %c0_i32_1 = arith.constant 0 : i32
    return %c0_i32, %c0_i32_0 : i32, i32
  }
  func.func @transform_3(%arg0: i32, %arg1: i32) -> (i32, i32) {
    %c0_i32 = arith.constant 0 : i32
    %c0_i32_0 = arith.constant 0 : i32
    %c0_i32_1 = arith.constant 0 : i32
    return %c0_i32, %c0_i32_0 : i32, i32
  }
  func.func @transform_4(%arg0: i32, %arg1: i32) -> (i32, i32, i32, i32) {
    %c0_i32 = arith.constant 0 : i32
    %c0_i32_0 = arith.constant 0 : i32
    %c0_i32_1 = arith.constant 0 : i32
    return %arg0, %arg1, %c0_i32, %c0_i32_0 : i32, i32, i32, i32
  }
  func.func @transform_5(%arg0: i32, %arg1: i32) -> (i32, i32, i32, i32) {
    %c0_i32 = arith.constant 0 : i32
    %c0_i32_0 = arith.constant 0 : i32
    %c0_i32_1 = arith.constant 0 : i32
    return %arg0, %arg1, %c0_i32, %c0_i32_0 : i32, i32, i32, i32
  }
}

</mosaic_0001>

<llo_original>
// kernel: makeup_distillation_forward.19
$region0: #{makeup_distillation_forward.19}
  #allocation0 [shape = 'u32[]', space=smem, size = 0x4, offset = 0x4, fixed_abs, tag = 'smem constant byte address 0x4 - core index']
  #allocation1 [shape = 'u32[72,128]{1,0:T(1,128)}', space=vmem, size = 0x9000, scoped, tag = 'internal scratch']
  %s0 = inlined_call_operand.vmem [shape: f32[2,16,16,128], index: 0, kind: input, shape index: {}]
  %s1 = inlined_call_operand.vmem [shape: f32[2,2,128], index: 1, kind: input, shape index: {}]
  %s2 = inlined_call_operand.vmem [shape: f32[1,128], index: 2, kind: input, shape index: {}]
  %s3 = inlined_call_operand.vmem [shape: f32[1,128], index: 3, kind: input, shape index: {}]
  %s4 = inlined_call_operand.vmem [shape: bf16[2,16,16,128], index: 4, kind: output, shape index: {}]
  %s5 = sld [smem:[#allocation0]]
  $region49: #{makeup_distillation_forward.19} parent=0
    _
  %s7 = ssub.s32 1, %s5
  %s8 = scalar_select 0, %s7, %s5
  loop: start=0, step=1, limit=6
  $region2: #{makeup_distillation_forward.19} parent=0 // loop_pre_header
    _
  $region3: #{makeup_distillation_forward.19} parent=0 // loop_header
    %s10 = sphi 0, %s14
    %p11 = scmp.ge.s32.totalorder %s10, 6
    %s17 = sphi 0, %s29
    %s18 = sphi 0, %s25
    %s19 = sphi 0, %s17
    %s20 = sphi 0, %s18
    %s21 = sphi 0, %s19
    %s22 = sphi 0, %s20
    %s34 = sphi 0, %s36
    %s37 = sphi 0, %s34
    %s38 = sphi 0, %s37
    %s54 = sphi 0, %s38
    %s60 = sphi 0, %s62
    %s63 = sphi 0, %s60
    %s64 = sphi 0, %s63
    %s80 = sphi 0, %s64
    %s84 = sphi 0, %s84
    %s86 = sphi 0, %s84
    %s87 = sphi 0, %s86
    %s101 = sphi 0, %s87
    %s105 = sphi 0, %s105
    %s107 = sphi 0, %s105
    %s108 = sphi 0, %s107
    %s122 = sphi 0, %s108
    %s130 = sphi 0, %s132
    %s133 = sphi 0, %s130
    %s134 = sphi 0, %s133
    %s150 = sphi 0, %s134
  $region4: #{makeup_distillation_forward.19} parent=0 // loop_header_branch
    %13 = sbr.rel (%p11) target = $region8
  $region5: #{makeup_distillation_forward.19} parent=0 // loop_body
    %s15 = ssub.s32 %s10, 1
    %s16 = ssub.s32 %s10, 2
    %s23 = sadd.s32 1, %s18
    %p24 = scmp.ge.s32.totalorder %s23, 2
    %s25 = scalar_select %p24, 0, %s23
    %s26 = sadd.s32 1, %s17
    %s27 = scalar_select %p24, %s26, %s17
    %p28 = scmp.ge.s32.totalorder %s27, 2
    %s29 = scalar_select %p28, 0, %s27
    %s30 = ssub.s32 %s17, %s29
    %s31 = ssub.s32 %s18, %s25
    %s32 = sor.u32 %s30, %s31
    %p33 = scmp.eq.s32.totalorder %s32, 0
    %s35 = sadd.s32 %s34, 1
    %s36 = scalar_select %p33, %s34, %s35
    %p39 = pneg %p33
    %p40 = scmp.eq.s32.totalorder %s10, 3
    %p41 = por %p39, %p40
    %p42 = scmp.ne.s32.totalorder %s34, %s37
    %p43 = scmp.eq.s32.totalorder %s10, 0
    %p44 = por %p42, %p43
    %p45 = scmp.ne.s32.totalorder %s34, %s37
    %p46 = scmp.eq.s32.totalorder %s15, 3
    %p47 = por %p45, %p46
    %p48 = scmp.ne.s32.totalorder %s37, %s38
    %p49 = scmp.eq.s32.totalorder %s15, 0
    %p50 = por %p48, %p49
    %p51 = scmp.ne.s32.totalorder %s37, %s38
    %p52 = scmp.eq.s32.totalorder %s16, 3
    %p53 = por %p51, %p52
    %p55 = scmp.ne.s32.totalorder %s38, %s54
    %p56 = scmp.eq.s32.totalorder %s16, 0
    %p57 = por %p55, %p56
    %s58 = ssub.s32 %s17, %s29
    %p59 = scmp.eq.s32.totalorder %s58, 0
    %s61 = sadd.s32 %s60, 1
    %s62 = scalar_select %p59, %s60, %s61
    %p65 = pneg %p59
    %p66 = scmp.eq.s32.totalorder %s10, 3
    %p67 = por %p65, %p66
    %p68 = scmp.ne.s32.totalorder %s60, %s63
    %p69 = scmp.eq.s32.totalorder %s10, 0
    %p70 = por %p68, %p69
    %p71 = scmp.ne.s32.totalorder %s60, %s63
    %p72 = scmp.eq.s32.totalorder %s15, 3
    %p73 = por %p71, %p72
    %p74 = scmp.ne.s32.totalorder %s63, %s64
    %p75 = scmp.eq.s32.totalorder %s15, 0
    %p76 = por %p74, %p75
    %p77 = scmp.ne.s32.totalorder %s63, %s64
    %p78 = scmp.eq.s32.totalorder %s16, 3
    %p79 = por %p77, %p78
    %p81 = scmp.ne.s32.totalorder %s64, %s80
    %p82 = scmp.eq.s32.totalorder %s16, 0
    %p83 = por %p81, %p82
    %s85 = sadd.s32 %s84, 1
    %p88 = scmp.eq.s32.totalorder %s10, 3
    %p89 = scmp.ne.s32.totalorder %s84, %s86
    %p90 = scmp.eq.s32.totalorder %s10, 0
    %p91 = por %p89, %p90
    %p92 = scmp.ne.s32.totalorder %s84, %s86
    %p93 = scmp.eq.s32.totalorder %s15, 3
    %p94 = por %p92, %p93
    %p95 = scmp.ne.s32.totalorder %s86, %s87
    %p96 = scmp.eq.s32.totalorder %s15, 0
    %p97 = por %p95, %p96
    %p98 = scmp.ne.s32.totalorder %s86, %s87
    %p99 = scmp.eq.s32.totalorder %s16, 3
    %p100 = por %p98, %p99
    %p102 = scmp.ne.s32.totalorder %s87, %s101
    %p103 = scmp.eq.s32.totalorder %s16, 0
    %p104 = por %p102, %p103
    %s106 = sadd.s32 %s105, 1
    %p109 = scmp.eq.s32.totalorder %s10, 3
    %p110 = scmp.ne.s32.totalorder %s105, %s107
    %p111 = scmp.eq.s32.totalorder %s10, 0
    %p112 = por %p110, %p111
    %p113 = scmp.ne.s32.totalorder %s105, %s107
    %p114 = scmp.eq.s32.totalorder %s15, 3
    %p115 = por %p113, %p114
    %p116 = scmp.ne.s32.totalorder %s107, %s108
    %p117 = scmp.eq.s32.totalorder %s15, 0
    %p118 = por %p116, %p117
    %p119 = scmp.ne.s32.totalorder %s107, %s108
    %p120 = scmp.eq.s32.totalorder %s16, 3
    %p121 = por %p119, %p120
    %p123 = scmp.ne.s32.totalorder %s108, %s122
    %p124 = scmp.eq.s32.totalorder %s16, 0
    %p125 = por %p123, %p124
    %s126 = ssub.s32 %s17, %s29
    %s127 = ssub.s32 %s18, %s25
    %s128 = sor.u32 %s126, %s127
    %p129 = scmp.eq.s32.totalorder %s128, 0
    %s131 = sadd.s32 %s130, 1
    %s132 = scalar_select %p129, %s130, %s131
    %p135 = pneg %p129
    %p136 = scmp.eq.s32.totalorder %s10, 3
    %p137 = por %p135, %p136
    %p138 = scmp.ne.s32.totalorder %s130, %s133
    %p139 = scmp.eq.s32.totalorder %s10, 0
    %p140 = por %p138, %p139
    %p141 = scmp.ne.s32.totalorder %s130, %s133
    %p142 = scmp.eq.s32.totalorder %s15, 3
    %p143 = por %p141, %p142
    %p144 = scmp.ne.s32.totalorder %s133, %s134
    %p145 = scmp.eq.s32.totalorder %s15, 0
    %p146 = por %p144, %p145
    %p147 = scmp.ne.s32.totalorder %s133, %s134
    %p148 = scmp.eq.s32.totalorder %s16, 3
    %p149 = por %p147, %p148
    %p151 = scmp.ne.s32.totalorder %s134, %s150
    %p152 = scmp.eq.s32.totalorder %s16, 0
    %p153 = por %p151, %p152
    %p154 = scmp.le.s32.totalorder 1, %s10
    %p155 = scmp.lt.s32.totalorder %s10, 5
    %p156 = pnand %p154, %p155
    %p157 = pneg %p156
    // Predicated region
    $region9: #{makeup_distillation_forward.19} parent=5 // pred_check
      _
    $region10: #{makeup_distillation_forward.19} parent=5 // pred_check_branch
      %159 = sbr.rel (%p156) target = $region12
    $region11: #{makeup_distillation_forward.19} parent=5 // pred_region
      %s160 = ssub.s32 %s10, 1
      // Predicated region
      $region13: #{makeup_distillation_forward.19} parent=11 // pred_check
        %p161 = pneg %p97
      $region14: #{makeup_distillation_forward.19} parent=11 // pred_check_branch
        %163 = sbr.rel (%p161) target = $region16
      $region15: #{makeup_distillation_forward.19} parent=11 // pred_region
        _
      $region16: #{makeup_distillation_forward.19} parent=11 // pred_fallthru
        _
      // Predicated region
      $region17: #{makeup_distillation_forward.19} parent=11 // pred_check
        %p164 = pneg %p118
      $region18: #{makeup_distillation_forward.19} parent=11 // pred_check_branch
        %166 = sbr.rel (%p164) target = $region20
      $region19: #{makeup_distillation_forward.19} parent=11 // pred_region
        _
      $region20: #{makeup_distillation_forward.19} parent=11 // pred_fallthru
        _
    $region12: #{makeup_distillation_forward.19} parent=5 // pred_fallthru
      _
    %p167 = scmp.lt.s32.totalorder %s10, 4
    // Predicated region
    $region21: #{makeup_distillation_forward.19} parent=5 // pred_check
      %p168 = pneg %p167
    $region22: #{makeup_distillation_forward.19} parent=5 // pred_check_branch
      %170 = sbr.rel (%p168) target = $region24
    $region23: #{makeup_distillation_forward.19} parent=5 // pred_region
      // Predicated region
      $region25: #{makeup_distillation_forward.19} parent=23 // pred_check
        %p171 = pneg %p44
      $region26: #{makeup_distillation_forward.19} parent=23 // pred_check_branch
        %173 = sbr.rel (%p171) target = $region28
      $region27: #{makeup_distillation_forward.19} parent=23 // pred_region
        %s174 = smul.u32 8, %s18
        %p175 = scmp.lt.s32.totalorder %s17, 1
        %s176 = scalar_select %p175, %s17, 1
        %p177 = scmp.lt.s32.totalorder %s174, 15
        %s178 = scalar_select %p177, %s174, 15
        %s179 = smul.addr %s178, 2
        %s180 = smul.addr %s176, 32
        %s181 = sadd.s32 %s179, %s180
        %s182 = smul.addr %s181, 8
        %s183 = scalar_lea.vmem %s0, %s182
        %s184 = smul.u32 8, %s18
      $region28: #{makeup_distillation_forward.19} parent=23 // pred_fallthru
        _
      // Predicated region
      $region29: #{makeup_distillation_forward.19} parent=23 // pred_check
        %p185 = pneg %p70
      $region30: #{makeup_distillation_forward.19} parent=23 // pred_check_branch
        %187 = sbr.rel (%p185) target = $region32
      $region31: #{makeup_distillation_forward.19} parent=23 // pred_region
        %p188 = scmp.lt.s32.totalorder %s17, 1
        %s189 = scalar_select %p188, %s17, 1
        %s190 = smul.addr %s189, 2
        %s191 = scalar_lea.vmem %s1, %s190
      $region32: #{makeup_distillation_forward.19} parent=23 // pred_fallthru
        _
    $region24: #{makeup_distillation_forward.19} parent=5 // pred_fallthru
      _
    %p192 = scmp.le.s32.totalorder 1, %s10
    %p193 = scmp.lt.s32.totalorder %s10, 5
    %p194 = pnand %p192, %p193
    %p195 = pneg %p194
    // Predicated region
    $region33: #{makeup_distillation_forward.19} parent=5 // pred_check
      _
    $region34: #{makeup_distillation_forward.19} parent=5 // pred_check_branch
      %197 = sbr.rel (%p194) target = $region36
    $region35: #{makeup_distillation_forward.19} parent=5 // pred_region
      %s198 = ssub.s32 %s10, 1
      %s199 = smul.u32 8, %s20
      %p200 = scmp.lt.s32.totalorder %s19, 1
      %s201 = scalar_select %p200, %s19, 1
      %p202 = scmp.lt.s32.totalorder %s199, 15
      %s203 = scalar_select %p202, %s199, 15
      %s204 = smul.addr %s203, 2
      %s205 = smul.addr %s201, 32
      %s206 = sadd.s32 %s204, %s205
      %s207 = smul.addr %s206, 8
      %s208 = scalar_lea.vmem %s0, %s207
      %p209 = pneg %p50
      %p210 = pneg %p47
      %p211 = scmp.lt.s32.totalorder %s19, 1
      %s212 = scalar_select %p211, %s19, 1
      %s213 = smul.addr %s212, 2
      %s214 = scalar_lea.vmem %s1, %s213
      %p215 = pneg %p76
      %p216 = pneg %p73
      %p217 = pneg %p97
      %p218 = pneg %p94
      %p219 = pneg %p118
      %p220 = pneg %p115
      %p221 = pneg %p146
      %p222 = pneg %p143
      %s223 = smul.u32 8, %s20
      %p224 = scmp.lt.s32.totalorder %s19, 1
      %s225 = scalar_select %p224, %s19, 1
      %p226 = scmp.lt.s32.totalorder %s223, 15
      %s227 = scalar_select %p226, %s223, 15
      %s228 = smul.addr %s227, 2
      %s229 = smul.addr %s225, 32
      %s230 = sadd.s32 %s228, %s229
      %s231 = smul.addr %s230, 4
      %s232 = scalar_lea.vmem %s4, %s231
      %s233 = smul.u32 8, %s20
      %p234 = scmp.lt.s32.totalorder %s19, 1
      %s235 = scalar_select %p234, %s19, 1
      %p236 = scmp.lt.s32.totalorder %s233, 15
      %s237 = scalar_select %p236, %s233, 15
      %s238 = smul.addr %s237, 2
      %s239 = smul.addr %s235, 32
      %s240 = sadd.s32 %s238, %s239
      %s241 = smul.addr %s240, 8
      %s242 = scalar_lea.vmem %s0, %s241
      %s243 = smul.u32 8, %s20
      %p244 = scmp.lt.s32.totalorder %s19, 1
      %s245 = scalar_select %p244, %s19, 1
      %s246 = smul.addr %s245, 2
      %s247 = scalar_lea.vmem %s1, %s246
      %s248 = smul.u32 8, %s20
      %p249 = scmp.lt.s32.totalorder %s19, 1
      %s250 = scalar_select %p249, %s19, 1
      %p251 = scmp.lt.s32.totalorder %s248, 15
      %s252 = scalar_select %p251, %s248, 15
      %s253 = smul.addr %s252, 2
      %s254 = smul.addr %s250, 32
      %s255 = sadd.s32 %s253, %s254
      %s256 = smul.addr %s255, 4
      %s257 = scalar_lea.vmem %s4, %s256
      %s258 = smul.u32 8, %s20
      %v259 = vld [vmem:[%s242] sm:$0xff]
      %v260 = vld [vmem:[%s242 + $0x8] sm:$0xff]
      %v261 = vld [vmem:[%s242 + $0x10] sm:$0xff]
      %v262 = vld [vmem:[%s242 + $0x18] sm:$0xff]
      %v263 = vld [vmem:[%s242 + $0x20] sm:$0xff]
      %v264 = vld [vmem:[%s242 + $0x28] sm:$0xff]
      %v265 = vld [vmem:[%s242 + $0x30] sm:$0xff]
      %v266 = vld [vmem:[%s242 + $0x38] sm:$0xff]
      %v267 = vld [vmem:[%s242 + $0x40] sm:$0xff]
      %v268 = vld [vmem:[%s242 + $0x48] sm:$0xff]
      %v269 = vld [vmem:[%s242 + $0x50] sm:$0xff]
      %v270 = vld [vmem:[%s242 + $0x58] sm:$0xff]
      %v271 = vld [vmem:[%s242 + $0x60] sm:$0xff]
      %v272 = vld [vmem:[%s242 + $0x68] sm:$0xff]
      %v273 = vld [vmem:[%s242 + $0x70] sm:$0xff]
      %v274 = vld [vmem:[%s242 + $0x78] sm:$0xff]
      %v275 = vld [vmem:[%s247] sm:$0x3]
      %v276 = vperm.slane %v275, 0
      %v277 = vsub.f32 %v259, %v276
      %v278 = vsub.f32 %v260, %v276
      %v279 = vsub.f32 %v261, %v276
      %v280 = vsub.f32 %v262, %v276
      %v281 = vsub.f32 %v263, %v276
      %v282 = vsub.f32 %v264, %v276
      %v283 = vsub.f32 %v265, %v276
      %v284 = vsub.f32 %v266, %v276
      %v285 = vsub.f32 %v267, %v276
      %v286 = vsub.f32 %v268, %v276
      %v287 = vsub.f32 %v269, %v276
      %v288 = vsub.f32 %v270, %v276
      %v289 = vsub.f32 %v271, %v276
      %v290 = vsub.f32 %v272, %v276
      %v291 = vsub.f32 %v273, %v276
      %v292 = vsub.f32 %v274, %v276
      %v293 = vld [vmem:[%s2] sm:$0x1]
      %v295 = vperm.slane %v293, 0
      %v297 = vmul.f32 %v275, %v295
      %v298 = vperm.slane %v297, 1
      %v299 = vmul.f32 %v277, %v298
      %v300 = vmul.f32 %v278, %v298
      %v301 = vmul.f32 %v279, %v298
      %v302 = vmul.f32 %v280, %v298
      %v303 = vmul.f32 %v281, %v298
      %v304 = vmul.f32 %v282, %v298
      %v305 = vmul.f32 %v283, %v298
      %v306 = vmul.f32 %v284, %v298
      %v307 = vmul.f32 %v285, %v298
      %v308 = vmul.f32 %v286, %v298
      %v309 = vmul.f32 %v287, %v298
      %v310 = vmul.f32 %v288, %v298
      %v311 = vmul.f32 %v289, %v298
      %v312 = vmul.f32 %v290, %v298
      %v313 = vmul.f32 %v291, %v298
      %v314 = vmul.f32 %v292, %v298
      %v315 = vld [vmem:[%s3] sm:$0x1]
      %v317 = vperm.slane %v315, 0
      %v319 = vadd.f32 %v299, %v317
      %v320 = vadd.f32 %v300, %v317
      %v321 = vadd.f32 %v301, %v317
      %v322 = vadd.f32 %v302, %v317
      %v323 = vadd.f32 %v303, %v317
      %v324 = vadd.f32 %v304, %v317
      %v325 = vadd.f32 %v305, %v317
      %v326 = vadd.f32 %v306, %v317
      %v327 = vadd.f32 %v307, %v317
      %v328 = vadd.f32 %v308, %v317
      %v329 = vadd.f32 %v309, %v317
      %v330 = vadd.f32 %v310, %v317
      %v331 = vadd.f32 %v311, %v317
      %v332 = vadd.f32 %v312, %v317
      %v333 = vadd.f32 %v313, %v317
      %v334 = vadd.f32 %v314, %v317
      %v335 = vmax.f32 %v319, 0.0
      %v336 = vmax.f32 %v320, 0.0
      %v337 = vmax.f32 %v321, 0.0
      %v338 = vmax.f32 %v322, 0.0
      %v339 = vmax.f32 %v323, 0.0
      %v340 = vmax.f32 %v324, 0.0
      %v341 = vmax.f32 %v325, 0.0
      %v342 = vmax.f32 %v326, 0.0
      %v343 = vmax.f32 %v327, 0.0
      %v344 = vmax.f32 %v328, 0.0
      %v345 = vmax.f32 %v329, 0.0
      %v346 = vmax.f32 %v330, 0.0
      %v347 = vmax.f32 %v331, 0.0
      %v348 = vmax.f32 %v332, 0.0
      %v349 = vmax.f32 %v333, 0.0
      %v350 = vmax.f32 %v334, 0.0
      %v351 = vpack.c.bf16 %v335, %v335
      %v352 = vpack.c.bf16 %v336, %v336
      %v353 = vpack.c.bf16 %v337, %v337
      %v354 = vpack.c.bf16 %v338, %v338
      %v355 = vpack.c.bf16 %v339, %v339
      %v356 = vpack.c.bf16 %v340, %v340
      %v357 = vpack.c.bf16 %v341, %v341
      %v358 = vpack.c.bf16 %v342, %v342
      %v359 = vpack.c.bf16 %v343, %v343
      %v360 = vpack.c.bf16 %v344, %v344
      %v361 = vpack.c.bf16 %v345, %v345
      %v362 = vpack.c.bf16 %v346, %v346
      %v363 = vpack.c.bf16 %v347, %v347
      %v364 = vpack.c.bf16 %v348, %v348
      %v365 = vpack.c.bf16 %v349, %v349
      %v366 = vpack.c.bf16 %v350, %v350
      %367 = vst [vmem:[%s257] sm:$0xf] %v351
      %368 = vst [vmem:[%s257 + $0x4] sm:$0xf] %v352
      %369 = vst [vmem:[%s257 + $0x8] sm:$0xf] %v353
      %370 = vst [vmem:[%s257 + $0xc] sm:$0xf] %v354
      %371 = vst [vmem:[%s257 + $0x10] sm:$0xf] %v355
      %372 = vst [vmem:[%s257 + $0x14] sm:$0xf] %v356
      %373 = vst [vmem:[%s257 + $0x18] sm:$0xf] %v357
      %374 = vst [vmem:[%s257 + $0x1c] sm:$0xf] %v358
      %375 = vst [vmem:[%s257 + $0x20] sm:$0xf] %v359
      %376 = vst [vmem:[%s257 + $0x24] sm:$0xf] %v360
      %377 = vst [vmem:[%s257 + $0x28] sm:$0xf] %v361
      %378 = vst [vmem:[%s257 + $0x2c] sm:$0xf] %v362
      %379 = vst [vmem:[%s257 + $0x30] sm:$0xf] %v363
      %380 = vst [vmem:[%s257 + $0x34] sm:$0xf] %v364
      %381 = vst [vmem:[%s257 + $0x38] sm:$0xf] %v365
      %382 = vst [vmem:[%s257 + $0x3c] sm:$0xf] %v366
      %s383 = smul.u32 8, %s20
      %p384 = scmp.lt.s32.totalorder %s19, 1
      %s385 = scalar_select %p384, %s19, 1
      %p386 = scmp.lt.s32.totalorder %s383, 15
      %s387 = scalar_select %p386, %s383, 15
      %s388 = smul.addr %s387, 2
      %s389 = smul.addr %s385, 32
      %s390 = sadd.s32 %s388, %s389
      %s391 = smul.addr %s390, 4
      %s392 = scalar_lea.vmem %s4, %s391
      // Predicated region
      $region37: #{makeup_distillation_forward.19} parent=35 // pred_check
        %p393 = pneg %p143
      $region38: #{makeup_distillation_forward.19} parent=35 // pred_check_branch
        %395 = sbr.rel (%p393) target = $region40
      $region39: #{makeup_distillation_forward.19} parent=35 // pred_region
        %s396 = smul.u32 8, %s20
      $region40: #{makeup_distillation_forward.19} parent=35 // pred_fallthru
        _
    $region36: #{makeup_distillation_forward.19} parent=5 // pred_fallthru
      _
    %p397 = scmp.le.s32.totalorder 2, %s10
    // Predicated region
    $region41: #{makeup_distillation_forward.19} parent=5 // pred_check
      %p398 = pneg %p397
    $region42: #{makeup_distillation_forward.19} parent=5 // pred_check_branch
      %400 = sbr.rel (%p398) target = $region44
    $region43: #{makeup_distillation_forward.19} parent=5 // pred_region
      %s401 = ssub.s32 %s10, 2
      // Predicated region
      $region45: #{makeup_distillation_forward.19} parent=43 // pred_check
        %p402 = pneg %p149
      $region46: #{makeup_distillation_forward.19} parent=43 // pred_check_branch
        %404 = sbr.rel (%p402) target = $region48
      $region47: #{makeup_distillation_forward.19} parent=43 // pred_region
        %s405 = smul.u32 8, %s22
        %p406 = scmp.lt.s32.totalorder %s21, 1
        %s407 = scalar_select %p406, %s21, 1
        %p408 = scmp.lt.s32.totalorder %s405, 15
        %s409 = scalar_select %p408, %s405, 15
        %s410 = smul.addr %s409, 2
        %s411 = smul.addr %s407, 32
        %s412 = sadd.s32 %s410, %s411
        %s413 = smul.addr %s412, 4
        %s414 = scalar_lea.vmem %s4, %s413
      $region48: #{makeup_distillation_forward.19} parent=43 // pred_fallthru
        _
    $region44: #{makeup_distillation_forward.19} parent=5 // pred_fallthru
      _
  $region6: #{makeup_distillation_forward.19} parent=0 // loop_footer
    %s14 = sadd.s32 1, %s10
  $region7: #{makeup_distillation_forward.19} parent=0 // loop_footer_branch
    %9 = sbr.rel target = $region3
  $region8: #{makeup_distillation_forward.19} parent=0 // loop_exit
    _

// kernel: makeup_distillation_forward.18
$region0: #{makeup_distillation_forward.18}
  #allocation0 [shape = 'u32[]', space=smem, size = 0x4, offset = 0x4, fixed_abs, tag = 'smem constant byte address 0x4 - core index']
  #allocation1 [shape = 'u32[72,128]{1,0:T(1,128)}', space=vmem, size = 0x9000, scoped, tag = 'internal scratch']
  #allocation2 [shape = 'f32[1,128]{1,0:T(1,128)}', space=vmem, size = 0x200, scoped, tag = 'scratch operand']
  #allocation3 [shape = 'f32[1,128]{1,0:T(1,128)}', space=vmem, size = 0x200, scoped, tag = 'scratch operand']
  %s0 = inlined_call_operand.vmem [shape: bf16[2,22,22,3], index: 0, kind: input, shape index: {}]
  %s1 = inlined_call_operand.vmem [shape: bf16[49,3,128], index: 1, kind: input, shape index: {}]
  %s2 = inlined_call_operand.vmem [shape: f32[2,16,16,128], index: 2, kind: output, shape index: {0}]
  %s3 = inlined_call_operand.vmem [shape: f32[2,2,128], index: 3, kind: output, shape index: {1}]
  %4 = xla_tuple %s2, %s3
  %s5 = sld [smem:[#allocation0]]
  $region64: #{makeup_distillation_forward.18} parent=0
    _
  %s7 = ssub.s32 1, %s5
  %s8 = scalar_select 0, %s7, %s5
  loop: start=0, step=1, limit=6
  $region2: #{makeup_distillation_forward.18} parent=0 // loop_pre_header
    _
  $region3: #{makeup_distillation_forward.18} parent=0 // loop_header
    %s10 = sphi 0, %s14
    %p11 = scmp.ge.s32.totalorder %s10, 6
    %s17 = sphi 0, %s29
    %s18 = sphi 0, %s25
    %s19 = sphi 0, %s17
    %s20 = sphi 0, %s18
    %s21 = sphi 0, %s19
    %s22 = sphi 0, %s20
    %s32 = sphi 0, %s34
    %s35 = sphi 0, %s32
    %s36 = sphi 0, %s35
    %s52 = sphi 0, %s36
    %s56 = sphi 0, %s56
    %s58 = sphi 0, %s56
    %s59 = sphi 0, %s58
    %s73 = sphi 0, %s59
    %s81 = sphi 0, %s83
    %s84 = sphi 0, %s81
    %s85 = sphi 0, %s84
    %s101 = sphi 0, %s85
    %s107 = sphi 0, %s109
    %s110 = sphi 0, %s107
    %s111 = sphi 0, %s110
    %s127 = sphi 0, %s111
  $region4: #{makeup_distillation_forward.18} parent=0 // loop_header_branch
    %13 = sbr.rel (%p11) target = $region8
  $region5: #{makeup_distillation_forward.18} parent=0 // loop_body
    %s15 = ssub.s32 %s10, 1
    %s16 = ssub.s32 %s10, 2
    %s23 = sadd.s32 1, %s18
    %p24 = scmp.ge.s32.totalorder %s23, 2
    %s25 = scalar_select %p24, 0, %s23
    %s26 = sadd.s32 1, %s17
    %s27 = scalar_select %p24, %s26, %s17
    %p28 = scmp.ge.s32.totalorder %s27, 2
    %s29 = scalar_select %p28, 0, %s27
    %s30 = ssub.s32 %s17, %s29
    %p31 = scmp.eq.s32.totalorder %s30, 0
    %s33 = sadd.s32 %s32, 1
    %s34 = scalar_select %p31, %s32, %s33
    %p37 = pneg %p31
    %p38 = scmp.eq.s32.totalorder %s10, 3
    %p39 = por %p37, %p38
    %p40 = scmp.ne.s32.totalorder %s32, %s35
    %p41 = scmp.eq.s32.totalorder %s10, 0
    %p42 = por %p40, %p41
    %p43 = scmp.ne.s32.totalorder %s32, %s35
    %p44 = scmp.eq.s32.totalorder %s15, 3
    %p45 = por %p43, %p44
    %p46 = scmp.ne.s32.totalorder %s35, %s36
    %p47 = scmp.eq.s32.totalorder %s15, 0
    %p48 = por %p46, %p47
    %p49 = scmp.ne.s32.totalorder %s35, %s36
    %p50 = scmp.eq.s32.totalorder %s16, 3
    %p51 = por %p49, %p50
    %p53 = scmp.ne.s32.totalorder %s36, %s52
    %p54 = scmp.eq.s32.totalorder %s16, 0
    %p55 = por %p53, %p54
    %s57 = sadd.s32 %s56, 1
    %p60 = scmp.eq.s32.totalorder %s10, 3
    %p61 = scmp.ne.s32.totalorder %s56, %s58
    %p62 = scmp.eq.s32.totalorder %s10, 0
    %p63 = por %p61, %p62
    %p64 = scmp.ne.s32.totalorder %s56, %s58
    %p65 = scmp.eq.s32.totalorder %s15, 3
    %p66 = por %p64, %p65
    %p67 = scmp.ne.s32.totalorder %s58, %s59
    %p68 = scmp.eq.s32.totalorder %s15, 0
    %p69 = por %p67, %p68
    %p70 = scmp.ne.s32.totalorder %s58, %s59
    %p71 = scmp.eq.s32.totalorder %s16, 3
    %p72 = por %p70, %p71
    %p74 = scmp.ne.s32.totalorder %s59, %s73
    %p75 = scmp.eq.s32.totalorder %s16, 0
    %p76 = por %p74, %p75
    %s77 = ssub.s32 %s17, %s29
    %s78 = ssub.s32 %s18, %s25
    %s79 = sor.u32 %s77, %s78
    %p80 = scmp.eq.s32.totalorder %s79, 0
    %s82 = sadd.s32 %s81, 1
    %s83 = scalar_select %p80, %s81, %s82
    %p86 = pneg %p80
    %p87 = scmp.eq.s32.totalorder %s10, 3
    %p88 = por %p86, %p87
    %p89 = scmp.ne.s32.totalorder %s81, %s84
    %p90 = scmp.eq.s32.totalorder %s10, 0
    %p91 = por %p89, %p90
    %p92 = scmp.ne.s32.totalorder %s81, %s84
    %p93 = scmp.eq.s32.totalorder %s15, 3
    %p94 = por %p92, %p93
    %p95 = scmp.ne.s32.totalorder %s84, %s85
    %p96 = scmp.eq.s32.totalorder %s15, 0
    %p97 = por %p95, %p96
    %p98 = scmp.ne.s32.totalorder %s84, %s85
    %p99 = scmp.eq.s32.totalorder %s16, 3
    %p100 = por %p98, %p99
    %p102 = scmp.ne.s32.totalorder %s85, %s101
    %p103 = scmp.eq.s32.totalorder %s16, 0
    %p104 = por %p102, %p103
    %s105 = ssub.s32 %s17, %s29
    %p106 = scmp.eq.s32.totalorder %s105, 0
    %s108 = sadd.s32 %s107, 1
    %s109 = scalar_select %p106, %s107, %s108
    %p112 = pneg %p106
    %p113 = scmp.eq.s32.totalorder %s10, 3
    %p114 = por %p112, %p113
    %p115 = scmp.ne.s32.totalorder %s107, %s110
    %p116 = scmp.eq.s32.totalorder %s10, 0
    %p117 = por %p115, %p116
    %p118 = scmp.ne.s32.totalorder %s107, %s110
    %p119 = scmp.eq.s32.totalorder %s15, 3
    %p120 = por %p118, %p119
    %p121 = scmp.ne.s32.totalorder %s110, %s111
    %p122 = scmp.eq.s32.totalorder %s15, 0
    %p123 = por %p121, %p122
    %p124 = scmp.ne.s32.totalorder %s110, %s111
    %p125 = scmp.eq.s32.totalorder %s16, 3
    %p126 = por %p124, %p125
    %p128 = scmp.ne.s32.totalorder %s111, %s127
    %p129 = scmp.eq.s32.totalorder %s16, 0
    %p130 = por %p128, %p129
    %p131 = scmp.le.s32.totalorder 1, %s10
    %p132 = scmp.lt.s32.totalorder %s10, 5
    %p133 = pnand %p131, %p132
    %p134 = pneg %p133
    // Predicated region
    $region9: #{makeup_distillation_forward.18} parent=5 // pred_check
      _
    $region10: #{makeup_distillation_forward.18} parent=5 // pred_check_branch
      %136 = sbr.rel (%p133) target = $region12
    $region11: #{makeup_distillation_forward.18} parent=5 // pred_region
      %s137 = ssub.s32 %s10, 1
      // Predicated region
      $region13: #{makeup_distillation_forward.18} parent=11 // pred_check
        %p138 = pneg %p69
      $region14: #{makeup_distillation_forward.18} parent=11 // pred_check_branch
        %140 = sbr.rel (%p138) target = $region16
      $region15: #{makeup_distillation_forward.18} parent=11 // pred_region
        _
      $region16: #{makeup_distillation_forward.18} parent=11 // pred_fallthru
        _
    $region12: #{makeup_distillation_forward.18} parent=5 // pred_fallthru
      _
    %p141 = scmp.lt.s32.totalorder %s10, 4
    // Predicated region
    $region17: #{makeup_distillation_forward.18} parent=5 // pred_check
      %p142 = pneg %p141
    $region18: #{makeup_distillation_forward.18} parent=5 // pred_check_branch
      %144 = sbr.rel (%p142) target = $region20
    $region19: #{makeup_distillation_forward.18} parent=5 // pred_region
      // Predicated region
      $region21: #{makeup_distillation_forward.18} parent=19 // pred_check
        %p145 = pneg %p42
      $region22: #{makeup_distillation_forward.18} parent=19 // pred_check_branch
        %147 = sbr.rel (%p145) target = $region24
      $region23: #{makeup_distillation_forward.18} parent=19 // pred_region
        %p148 = scmp.lt.s32.totalorder %s17, 1
        %s149 = scalar_select %p148, %s17, 1
        %s150 = smul.addr %s149, 66
        %s151 = smul.addr %s150, 4
        %s152 = scalar_lea.vmem %s0, %s151
      $region24: #{makeup_distillation_forward.18} parent=19 // pred_fallthru
        _
    $region20: #{makeup_distillation_forward.18} parent=5 // pred_fallthru
      _
    %p153 = scmp.le.s32.totalorder 1, %s10
    %p154 = scmp.lt.s32.totalorder %s10, 5
    %p155 = pnand %p153, %p154
    %p156 = pneg %p155
    // Predicated region
    $region25: #{makeup_distillation_forward.18} parent=5 // pred_check
      _
    $region26: #{makeup_distillation_forward.18} parent=5 // pred_check_branch
      %158 = sbr.rel (%p155) target = $region28
    $region27: #{makeup_distillation_forward.18} parent=5 // pred_region
      %s159 = ssub.s32 %s10, 1
      %p160 = scmp.lt.s32.totalorder %s19, 1
      %s161 = scalar_select %p160, %s19, 1
      %s162 = smul.addr %s161, 66
      %s163 = smul.addr %s162, 4
      %s164 = scalar_lea.vmem %s0, %s163
      %p165 = pneg %p48
      %p166 = pneg %p45
      %p167 = pneg %p69
      %p168 = pneg %p66
      %p169 = pneg %p97
      %p170 = pneg %p94
      %s171 = smul.u32 8, %s20
      %p172 = scmp.lt.s32.totalorder %s19, 1
      %s173 = scalar_select %p172, %s19, 1
      %p174 = scmp.lt.s32.totalorder %s171, 15
      %s175 = scalar_select %p174, %s171, 15
      %s176 = smul.addr %s175, 2
      %s177 = smul.addr %s173, 32
      %s178 = sadd.s32 %s176, %s177
      %s179 = smul.addr %s178, 8
      %s180 = scalar_lea.vmem %s2, %s179
      %p181 = pneg %p123
      %p182 = pneg %p120
      %p183 = scmp.lt.s32.totalorder %s19, 1
      %s184 = scalar_select %p183, %s19, 1
      %s185 = smul.addr %s184, 2
      %s186 = scalar_lea.vmem %s3, %s185
      %p187 = scmp.lt.s32.totalorder %s19, 1
      %s188 = scalar_select %p187, %s19, 1
      %s189 = smul.addr %s188, 66
      %s190 = smul.addr %s189, 4
      %s191 = scalar_lea.vmem %s0, %s190
      %s192 = smul.u32 8, %s20
      %p193 = scmp.lt.s32.totalorder %s19, 1
      %s194 = scalar_select %p193, %s19, 1
      %p195 = scmp.lt.s32.totalorder %s192, 15
      %s196 = scalar_select %p195, %s192, 15
      %s197 = smul.addr %s196, 2
      %s198 = smul.addr %s194, 32
      %s199 = sadd.s32 %s197, %s198
      %s200 = smul.addr %s199, 8
      %s201 = scalar_lea.vmem %s2, %s200
      %s202 = smul.u32 8, %s20
      %p203 = scmp.lt.s32.totalorder %s19, 1
      %s204 = scalar_select %p203, %s19, 1
      %s205 = smul.addr %s204, 2
      %s206 = scalar_lea.vmem %s3, %s205
      %p208 = scmp.eq.s32.totalorder %s20, 0
      // Predicated region
      $region29: #{makeup_distillation_forward.18} parent=27 // pred_check
        %p209 = pneg %p208
      $region30: #{makeup_distillation_forward.18} parent=27 // pred_check_branch
        %211 = sbr.rel (%p209) target = $region32
      $region31: #{makeup_distillation_forward.18} parent=27 // pred_region
        %212 = vst [vmem:[#allocation2] sm:$0x1] 0.0
        %213 = vst [vmem:[#allocation3] sm:$0x1] 0.0
      $region32: #{makeup_distillation_forward.18} parent=27 // pred_fallthru
        _
      %s214 = smul.u32 %s20, 8
      loop: start=0, step=1, limit=8
      $region33: #{makeup_distillation_forward.18} parent=27 // loop_pre_header
        _
      $region34: #{makeup_distillation_forward.18} parent=27 // loop_header
        %s216 = sphi 0, %s220
        %p217 = scmp.ge.s32.totalorder %s216, 8
      $region35: #{makeup_distillation_forward.18} parent=27 // loop_header_branch
        %219 = sbr.rel (%p217) target = $region39
      $region36: #{makeup_distillation_forward.18} parent=27 // loop_body
        %s221 = sadd.s32 %s214, %s216
        %s222 = smul.u32 %s221, 3
        %s223 = smul.addr %s222, 4
        %s224 = scalar_lea.vmem %s191, %s223
        %v225 = vld [vmem:[%s224] sm:$0xf]
        %v226 = vld [vmem:[%s224 + $0x4] sm:$0xf]
        %v227 = vld [vmem:[%s1] sm:$0x3]
        %v228 = vld [vmem:[%s224 + $0x8] sm:$0x1]
        %s229 = scalar_lea.vmem %s1, 2
        %v230 = vld [vmem:[%s229] sm:$0x3]
        %v234 = vunpack.c.l.b16 %v225
        %v235 = vunpack.c.l.b16 %v226
        %v236 = vunpack.c.l.b16 %v228
        %v237 = vpack.c.b16 %v235, %v234
        %v238 = vpack.c.b16 %v236, %v236
        %vm239 = vsmask.f32 7424
        %v241 = vshrl.u32 %v237, 16
        %v243 = vshll.u32 %v237, 16
        %v245 = vrot.slane %v243, 1
        %v246 = vor.u32 %v241, %v245
        %v248 = vshll.u32 %v238, 16
        %v250 = vrot.slane %v248, 1
        %v251 = vsel %vm239, %v246, %v250
        %vm252 = vcmask 23552
        %v254 = vsel %vm252, %v251, 0
        %vm256 = vcmask 1040384
        %vm257 = vcmask 1041408
        %v258 = vsel %vm256, 4294967295, 65535
        %v259 = vsel %vm257, %v258, 0
        %v261 = vand.u32 %v230, %v259
        %263 = vmatpush.bf16.msra.mxu0 0
        %264 = vmatpush.bf16.msra.mxu0 0
        %265 = vmatpush.bf16.msra.mxu0 0
        %266 = vmatpush.bf16.msra.mxu0 0
        %267 = vmatpush.bf16.msra.mxu0 0
        %268 = vmatpush.bf16.msra.mxu0 0
        %269 = vmatpush.bf16.msra.mxu0 0
        %270 = vmatpush.bf16.msra.mxu0 %v261
        %271 = vmatmul.bf16.gmra.mxu0 %v254
        %v272 = vpop.f32.mrf.mxu0
        %v273 = vadd.f32 0.0, %v272
        %v274 = vpop.f32.mrf.mxu0
        %v275 = vadd.f32 0.0, %v274
        %276 = vdwg.mxu0
        %v277 = vsel %vm252, %v237, 0
        %v280 = vand.u32 %v227, %v259
        %282 = vmatpush.bf16.msra.mxu0 0
        %283 = vmatpush.bf16.msra.mxu0 0
        %284 = vmatpush.bf16.msra.mxu0 0
        %285 = vmatpush.bf16.msra.mxu0 0
        %286 = vmatpush.bf16.msra.mxu0 0
        %287 = vmatpush.bf16.msra.mxu0 0
        %288 = vmatpush.bf16.msra.mxu0 0
        %289 = vmatpush.bf16.msra.mxu0 %v280
        %290 = vmatmul.bf16.gmra.mxu0 %v277
        %v291 = vpop.f32.mrf.mxu0
        %v292 = vadd.f32 %v273, %v291
        %v293 = vpop.f32.mrf.mxu0
        %v294 = vadd.f32 %v275, %v293
        %295 = vdwg.mxu0
        %v296 = vld [vmem:[%s224] sm:$0xe]
        %s297 = scalar_lea.vmem %s1, 4
        %v298 = vld [vmem:[%s297] sm:$0x3]
        %v300 = vunpack.c.l.b16 %v296
        %v301 = vpack.c.b16 %v235, %v300
        %vm302 = vcmask 1046528
        %v303 = vrot.slane %v301, 1
        %v304 = vrot.slane %v238, 1
        %v305 = vsel %vm302, %v303, %v304
        %v307 = vsel %vm252, %v305, 0
        %v310 = vand.u32 %v298, %v259
        %312 = vmatpush.bf16.msra.mxu0 0
        %313 = vmatpush.bf16.msra.mxu0 0
        %314 = vmatpush.bf16.msra.mxu0 0
        %315 = vmatpush.bf16.msra.mxu0 0
        %316 = vmatpush.bf16.msra.mxu0 0
        %317 = vmatpush.bf16.msra.mxu0 0
        %318 = vmatpush.bf16.msra.mxu0 0
        %319 = vmatpush.bf16.msra.mxu0 %v310
        %320 = vmatmul.bf16.gmra.mxu0 %v307
        %v321 = vpop.f32.mrf.mxu0
        %v322 = vadd.f32 0.0, %v321
        %v323 = vpop.f32.mrf.mxu0
        %v324 = vadd.f32 0.0, %v323
        %325 = vdwg.mxu0
        %v326 = vadd.f32 %v292, %v322
        %v327 = vadd.f32 %v294, %v324
        %v328 = vld [vmem:[%s224 + $0x8] sm:$0x3]
        %s329 = scalar_lea.vmem %s1, 6
        %v330 = vld [vmem:[%s329] sm:$0x3]
        %v332 = vunpack.c.l.b16 %v328
        %v333 = vpack.c.b16 %v332, %v332
        %vm334 = vsmask.f32 6400
        %v336 = vshrl.u32 %v301, 16
        %v338 = vrot.slane %v336, 1
        %v339 = vshll.u32 %v301, 16
        %v341 = vrot.slane %v339, 2
        %v342 = vor.u32 %v338, %v341
        %v344 = vshrl.u32 %v333, 16
        %v346 = vrot.slane %v344, 1
        %v347 = vshll.u32 %v333, 16
        %v349 = vrot.slane %v347, 2
        %v350 = vor.u32 %v346, %v349
        %v351 = vsel %vm334, %v342, %v350
        %v353 = vsel %vm252, %v351, 0
        %v356 = vand.u32 %v330, %v259
        %358 = vmatpush.bf16.msra.mxu0 0
        %359 = vmatpush.bf16.msra.mxu0 0
        %360 = vmatpush.bf16.msra.mxu0 0
        %361 = vmatpush.bf16.msra.mxu0 0
        %362 = vmatpush.bf16.msra.mxu0 0
        %363 = vmatpush.bf16.msra.mxu0 0
        %364 = vmatpush.bf16.msra.mxu0 0
        %365 = vmatpush.bf16.msra.mxu0 %v356
        %366 = vmatmul.bf16.gmra.mxu0 %v353
        %v367 = vpop.f32.mrf.mxu0
        %v368 = vadd.f32 0.0, %v367
        %v369 = vpop.f32.mrf.mxu0
        %v370 = vadd.f32 0.0, %v369
        %371 = vdwg.mxu0
        %v372 = vadd.f32 %v326, %v368
        %v373 = vadd.f32 %v327, %v370
        %v374 = vld [vmem:[%s224] sm:$0xc]
        %s375 = scalar_lea.vmem %s1, 8
        %v376 = vld [vmem:[%s375] sm:$0x3]
        %v378 = vunpack.c.l.b16 %v374
        %v379 = vpack.c.b16 %v235, %v378
        %vm380 = vcmask 1045504
        %v381 = vrot.slane %v379, 2
        %v382 = vrot.slane %v333, 2
        %v383 = vsel %vm380, %v381, %v382
        %v385 = vsel %vm252, %v383, 0
        %v388 = vand.u32 %v376, %v259
        %390 = vmatpush.bf16.msra.mxu0 0
        %391 = vmatpush.bf16.msra.mxu0 0
        %392 = vmatpush.bf16.msra.mxu0 0
        %393 = vmatpush.bf16.msra.mxu0 0
        %394 = vmatpush.bf16.msra.mxu0 0
        %395 = vmatpush.bf16.msra.mxu0 0
        %396 = vmatpush.bf16.msra.mxu0 0
        %397 = vmatpush.bf16.msra.mxu0 %v388
        %398 = vmatmul.bf16.gmra.mxu0 %v385
        %v399 = vpop.f32.mrf.mxu0
        %v400 = vadd.f32 0.0, %v399
        %v401 = vpop.f32.mrf.mxu0
        %v402 = vadd.f32 0.0, %v401
        %403 = vdwg.mxu0
        %v404 = vadd.f32 %v372, %v400
        %v405 = vadd.f32 %v373, %v402
        %v406 = vld [vmem:[%s224 + $0x8] sm:$0x7]
        %s407 = scalar_lea.vmem %s1, 10
        %v408 = vld [vmem:[%s407] sm:$0x3]
        %v410 = vunpack.c.l.b16 %v406
        %v411 = vpack.c.b16 %v410, %v410
        %vm412 = vsmask.f32 5376
        %v414 = vshrl.u32 %v379, 16
        %v416 = vrot.slane %v414, 2
        %v417 = vshll.u32 %v379, 16
        %v419 = vrot.slane %v417, 3
        %v420 = vor.u32 %v416, %v419
        %v422 = vshrl.u32 %v411, 16
        %v424 = vrot.slane %v422, 2
        %v425 = vshll.u32 %v411, 16
        %v427 = vrot.slane %v425, 3
        %v428 = vor.u32 %v424, %v427
        %v429 = vsel %vm412, %v420, %v428
        %v431 = vsel %vm252, %v429, 0
        %v434 = vand.u32 %v408, %v259
        %436 = vmatpush.bf16.msra.mxu0 0
        %437 = vmatpush.bf16.msra.mxu0 0
        %438 = vmatpush.bf16.msra.mxu0 0
        %439 = vmatpush.bf16.msra.mxu0 0
        %440 = vmatpush.bf16.msra.mxu0 0
        %441 = vmatpush.bf16.msra.mxu0 0
        %442 = vmatpush.bf16.msra.mxu0 0
        %443 = vmatpush.bf16.msra.mxu0 %v434
        %444 = vmatmul.bf16.gmra.mxu0 %v431
        %v445 = vpop.f32.mrf.mxu0
        %v446 = vadd.f32 0.0, %v445
        %v447 = vpop.f32.mrf.mxu0
        %v448 = vadd.f32 0.0, %v447
        %449 = vdwg.mxu0
        %v450 = vadd.f32 %v404, %v446
        %v451 = vadd.f32 %v405, %v448
        %v452 = vld [vmem:[%s224] sm:$0x8]
        %s453 = scalar_lea.vmem %s1, 12
        %v454 = vld [vmem:[%s453] sm:$0x3]
        %v456 = vunpack.c.l.b16 %v452
        %v457 = vpack.c.b16 %v235, %v456
        %vm458 = vcmask 1044480
        %v459 = vrot.slane %v457, 3
        %v460 = vrot.slane %v411, 3
        %v461 = vsel %vm458, %v459, %v460
        %v463 = vsel %vm252, %v461, 0
        %v466 = vand.u32 %v454, %v259
        %468 = vmatpush.bf16.msra.mxu0 0
        %469 = vmatpush.bf16.msra.mxu0 0
        %470 = vmatpush.bf16.msra.mxu0 0
        %471 = vmatpush.bf16.msra.mxu0 0
        %472 = vmatpush.bf16.msra.mxu0 0
        %473 = vmatpush.bf16.msra.mxu0 0
        %474 = vmatpush.bf16.msra.mxu0 0
        %475 = vmatpush.bf16.msra.mxu0 %v466
        %476 = vmatmul.bf16.gmra.mxu0 %v463
        %v477 = vpop.f32.mrf.mxu0
        %v478 = vadd.f32 0.0, %v477
        %v479 = vpop.f32.mrf.mxu0
        %v480 = vadd.f32 0.0, %v479
        %481 = vdwg.mxu0
        %v482 = vadd.f32 %v450, %v478
        %v483 = vadd.f32 %v451, %v480
        %s484 = sadd.s32 %s221, 1
        %s485 = smul.u32 %s484, 3
        %s486 = smul.addr %s485, 4
        %s487 = scalar_lea.vmem %s191, %s486
        %v488 = vld [vmem:[%s487] sm:$0xf]
        %v489 = vld [vmem:[%s487 + $0x4] sm:$0xf]
        %s490 = scalar_lea.vmem %s1, 14
        %v491 = vld [vmem:[%s490] sm:$0x3]
        %v494 = vunpack.c.l.b16 %v488
        %v495 = vunpack.c.l.b16 %v489
        %v496 = vpack.c.b16 %v495, %v494
        %v498 = vsel %vm252, %v496, 0
        %v501 = vand.u32 %v491, %v259
        %503 = vmatpush.bf16.msra.mxu0 0
        %504 = vmatpush.bf16.msra.mxu0 0
        %505 = vmatpush.bf16.msra.mxu0 0
        %506 = vmatpush.bf16.msra.mxu0 0
        %507 = vmatpush.bf16.msra.mxu0 0
        %508 = vmatpush.bf16.msra.mxu0 0
        %509 = vmatpush.bf16.msra.mxu0 0
        %510 = vmatpush.bf16.msra.mxu0 %v501
        %511 = vmatmul.bf16.gmra.mxu0 %v498
        %v512 = vpop.f32.mrf.mxu0
        %v513 = vadd.f32 0.0, %v512
        %v514 = vpop.f32.mrf.mxu0
        %v515 = vadd.f32 0.0, %v514
        %516 = vdwg.mxu0
        %v517 = vadd.f32 %v482, %v513
        %v518 = vadd.f32 %v483, %v515
        %v519 = vld [vmem:[%s487] sm:$0xf]
        %v520 = vld [vmem:[%s487 + $0x4] sm:$0xf]
        %v521 = vld [vmem:[%s487 + $0x8] sm:$0x1]
        %s522 = scalar_lea.vmem %s1, 16
        %v523 = vld [vmem:[%s522] sm:$0x3]
        %v527 = vunpack.c.l.b16 %v519
        %v528 = vunpack.c.l.b16 %v520
        %v529 = vunpack.c.l.b16 %v521
        %v530 = vpack.c.b16 %v528, %v527
        %v531 = vpack.c.b16 %v529, %v529
        %v533 = vshrl.u32 %v530, 16
        %v535 = vshll.u32 %v530, 16
        %v537 = vrot.slane %v535, 1
        %v538 = vor.u32 %v533, %v537
        %v540 = vshll.u32 %v531, 16
        %v542 = vrot.slane %v540, 1
        %v543 = vsel %vm239, %v538, %v542
        %v545 = vsel %vm252, %v543, 0
        %v548 = vand.u32 %v523, %v259
        %550 = vmatpush.bf16.msra.mxu0 0
        %551 = vmatpush.bf16.msra.mxu0 0
        %552 = vmatpush.bf16.msra.mxu0 0
        %553 = vmatpush.bf16.msra.mxu0 0
        %554 = vmatpush.bf16.msra.mxu0 0
        %555 = vmatpush.bf16.msra.mxu0 0
        %556 = vmatpush.bf16.msra.mxu0 0
        %557 = vmatpush.bf16.msra.mxu0 %v548
        %558 = vmatmul.bf16.gmra.mxu0 %v545
        %v559 = vpop.f32.mrf.mxu0
        %v560 = vadd.f32 0.0, %v559
        %v561 = vpop.f32.mrf.mxu0
        %v562 = vadd.f32 0.0, %v561
        %563 = vdwg.mxu0
        %v564 = vadd.f32 %v517, %v560
        %v565 = vadd.f32 %v518, %v562
        %v566 = vld [vmem:[%s487] sm:$0xe]
        %s567 = scalar_lea.vmem %s1, 18
        %v568 = vld [vmem:[%s567] sm:$0x3]
        %v570 = vunpack.c.l.b16 %v566
        %v571 = vpack.c.b16 %v528, %v570
        %v572 = vrot.slane %v571, 1
        %v573 = vrot.slane %v531, 1
        %v574 = vsel %vm302, %v572, %v573
        %v576 = vsel %vm252, %v574, 0
        %v579 = vand.u32 %v568, %v259
        %581 = vmatpush.bf16.msra.mxu0 0
        %582 = vmatpush.bf16.msra.mxu0 0
        %583 = vmatpush.bf16.msra.mxu0 0
        %584 = vmatpush.bf16.msra.mxu0 0
        %585 = vmatpush.bf16.msra.mxu0 0
        %586 = vmatpush.bf16.msra.mxu0 0
        %587 = vmatpush.bf16.msra.mxu0 0
        %588 = vmatpush.bf16.msra.mxu0 %v579
        %589 = vmatmul.bf16.gmra.mxu0 %v576
        %v590 = vpop.f32.mrf.mxu0
        %v591 = vadd.f32 0.0, %v590
        %v592 = vpop.f32.mrf.mxu0
        %v593 = vadd.f32 0.0, %v592
        %594 = vdwg.mxu0
        %v595 = vadd.f32 %v564, %v591
        %v596 = vadd.f32 %v565, %v593
        %v597 = vld [vmem:[%s487 + $0x8] sm:$0x3]
        %s598 = scalar_lea.vmem %s1, 20
        %v599 = vld [vmem:[%s598] sm:$0x3]
        %v601 = vunpack.c.l.b16 %v597
        %v602 = vpack.c.b16 %v601, %v601
        %v604 = vshrl.u32 %v571, 16
        %v606 = vrot.slane %v604, 1
        %v607 = vshll.u32 %v571, 16
        %v609 = vrot.slane %v607, 2
        %v610 = vor.u32 %v606, %v609
        %v612 = vshrl.u32 %v602, 16
        %v614 = vrot.slane %v612, 1
        %v615 = vshll.u32 %v602, 16
        %v617 = vrot.slane %v615, 2
        %v618 = vor.u32 %v614, %v617
        %v619 = vsel %vm334, %v610, %v618
        %v621 = vsel %vm252, %v619, 0
        %v624 = vand.u32 %v599, %v259
        %626 = vmatpush.bf16.msra.mxu0 0
        %627 = vmatpush.bf16.msra.mxu0 0
        %628 = vmatpush.bf16.msra.mxu0 0
        %629 = vmatpush.bf16.msra.mxu0 0
        %630 = vmatpush.bf16.msra.mxu0 0
        %631 = vmatpush.bf16.msra.mxu0 0
        %632 = vmatpush.bf16.msra.mxu0 0
        %633 = vmatpush.bf16.msra.mxu0 %v624
        %634 = vmatmul.bf16.gmra.mxu0 %v621
        %v635 = vpop.f32.mrf.mxu0
        %v636 = vadd.f32 0.0, %v635
        %v637 = vpop.f32.mrf.mxu0
        %v638 = vadd.f32 0.0, %v637
        %639 = vdwg.mxu0
        %v640 = vadd.f32 %v595, %v636
        %v641 = vadd.f32 %v596, %v638
        %v642 = vld [vmem:[%s487] sm:$0xc]
        %s643 = scalar_lea.vmem %s1, 22
        %v644 = vld [vmem:[%s643] sm:$0x3]
        %v646 = vunpack.c.l.b16 %v642
        %v647 = vpack.c.b16 %v528, %v646
        %v648 = vrot.slane %v647, 2
        %v649 = vrot.slane %v602, 2
        %v650 = vsel %vm380, %v648, %v649
        %v652 = vsel %vm252, %v650, 0
        %v655 = vand.u32 %v644, %v259
        %657 = vmatpush.bf16.msra.mxu0 0
        %658 = vmatpush.bf16.msra.mxu0 0
        %659 = vmatpush.bf16.msra.mxu0 0
        %660 = vmatpush.bf16.msra.mxu0 0
        %661 = vmatpush.bf16.msra.mxu0 0
        %662 = vmatpush.bf16.msra.mxu0 0
        %663 = vmatpush.bf16.msra.mxu0 0
        %664 = vmatpush.bf16.msra.mxu0 %v655
        %665 = vmatmul.bf16.gmra.mxu0 %v652
        %v666 = vpop.f32.mrf.mxu0
        %v667 = vadd.f32 0.0, %v666
        %v668 = vpop.f32.mrf.mxu0
        %v669 = vadd.f32 0.0, %v668
        %670 = vdwg.mxu0
        %v671 = vadd.f32 %v640, %v667
        %v672 = vadd.f32 %v641, %v669
        %v673 = vld [vmem:[%s487 + $0x8] sm:$0x7]
        %s674 = scalar_lea.vmem %s1, 24
        %v675 = vld [vmem:[%s674] sm:$0x3]
        %v677 = vunpack.c.l.b16 %v673
        %v678 = vpack.c.b16 %v677, %v677
        %v680 = vshrl.u32 %v647, 16
        %v682 = vrot.slane %v680, 2
        %v683 = vshll.u32 %v647, 16
        %v685 = vrot.slane %v683, 3
        %v686 = vor.u32 %v682, %v685
        %v688 = vshrl.u32 %v678, 16
        %v690 = vrot.slane %v688, 2
        %v691 = vshll.u32 %v678, 16
        %v693 = vrot.slane %v691, 3
        %v694 = vor.u32 %v690, %v693
        %v695 = vsel %vm412, %v686, %v694
        %v697 = vsel %vm252, %v695, 0
        %v700 = vand.u32 %v675, %v259
        %702 = vmatpush.bf16.msra.mxu0 0
        %703 = vmatpush.bf16.msra.mxu0 0
        %704 = vmatpush.bf16.msra.mxu0 0
        %705 = vmatpush.bf16.msra.mxu0 0
        %706 = vmatpush.bf16.msra.mxu0 0
        %707 = vmatpush.bf16.msra.mxu0 0
        %708 = vmatpush.bf16.msra.mxu0 0
        %709 = vmatpush.bf16.msra.mxu0 %v700
        %710 = vmatmul.bf16.gmra.mxu0 %v697
        %v711 = vpop.f32.mrf.mxu0
        %v712 = vadd.f32 0.0, %v711
        %v713 = vpop.f32.mrf.mxu0
        %v714 = vadd.f32 0.0, %v713
        %715 = vdwg.mxu0
        %v716 = vadd.f32 %v671, %v712
        %v717 = vadd.f32 %v672, %v714
        %v718 = vld [vmem:[%s487] sm:$0x8]
        %s719 = scalar_lea.vmem %s1, 26
        %v720 = vld [vmem:[%s719] sm:$0x3]
        %v722 = vunpack.c.l.b16 %v718
        %v723 = vpack.c.b16 %v528, %v722
        %v724 = vrot.slane %v723, 3
        %v725 = vrot.slane %v678, 3
        %v726 = vsel %vm458, %v724, %v725
        %v728 = vsel %vm252, %v726, 0
        %v731 = vand.u32 %v720, %v259
        %733 = vmatpush.bf16.msra.mxu0 0
        %734 = vmatpush.bf16.msra.mxu0 0
        %735 = vmatpush.bf16.msra.mxu0 0
        %736 = vmatpush.bf16.msra.mxu0 0
        %737 = vmatpush.bf16.msra.mxu0 0
        %738 = vmatpush.bf16.msra.mxu0 0
        %739 = vmatpush.bf16.msra.mxu0 0
        %740 = vmatpush.bf16.msra.mxu0 %v731
        %741 = vmatmul.bf16.gmra.mxu0 %v728
        %v742 = vpop.f32.mrf.mxu0
        %v743 = vadd.f32 0.0, %v742
        %v744 = vpop.f32.mrf.mxu0
        %v745 = vadd.f32 0.0, %v744
        %746 = vdwg.mxu0
        %v747 = vadd.f32 %v716, %v743
        %v748 = vadd.f32 %v717, %v745
        %s749 = sadd.s32 %s221, 2
        %s750 = smul.u32 %s749, 3
        %s751 = smul.addr %s750, 4
        %s752 = scalar_lea.vmem %s191, %s751
        %v753 = vld [vmem:[%s752] sm:$0xf]
        %v754 = vld [vmem:[%s752 + $0x4] sm:$0xf]
        %s755 = scalar_lea.vmem %s1, 28
        %v756 = vld [vmem:[%s755] sm:$0x3]
        %v759 = vunpack.c.l.b16 %v753
        %v760 = vunpack.c.l.b16 %v754
        %v761 = vpack.c.b16 %v760, %v759
        %v763 = vsel %vm252, %v761, 0
        %v766 = vand.u32 %v756, %v259
        %768 = vmatpush.bf16.msra.mxu0 0
        %769 = vmatpush.bf16.msra.mxu0 0
        %770 = vmatpush.bf16.msra.mxu0 0
        %771 = vmatpush.bf16.msra.mxu0 0
        %772 = vmatpush.bf16.msra.mxu0 0
        %773 = vmatpush.bf16.msra.mxu0 0
        %774 = vmatpush.bf16.msra.mxu0 0
        %775 = vmatpush.bf16.msra.mxu0 %v766
        %776 = vmatmul.bf16.gmra.mxu0 %v763
        %v777 = vpop.f32.mrf.mxu0
        %v778 = vadd.f32 0.0, %v777
        %v779 = vpop.f32.mrf.mxu0
        %v780 = vadd.f32 0.0, %v779
        %781 = vdwg.mxu0
        %v782 = vadd.f32 %v747, %v778
        %v783 = vadd.f32 %v748, %v780
        %v784 = vld [vmem:[%s752] sm:$0xf]
        %v785 = vld [vmem:[%s752 + $0x4] sm:$0xf]
        %v786 = vld [vmem:[%s752 + $0x8] sm:$0x1]
        %s787 = scalar_lea.vmem %s1, 30
        %v788 = vld [vmem:[%s787] sm:$0x3]
        %v792 = vunpack.c.l.b16 %v784
        %v793 = vunpack.c.l.b16 %v785
        %v794 = vunpack.c.l.b16 %v786
        %v795 = vpack.c.b16 %v793, %v792
        %v796 = vpack.c.b16 %v794, %v794
        %v798 = vshrl.u32 %v795, 16
        %v800 = vshll.u32 %v795, 16
        %v802 = vrot.slane %v800, 1
        %v803 = vor.u32 %v798, %v802
        %v805 = vshll.u32 %v796, 16
        %v807 = vrot.slane %v805, 1
        %v808 = vsel %vm239, %v803, %v807
        %v810 = vsel %vm252, %v808, 0
        %v813 = vand.u32 %v788, %v259
        %815 = vmatpush.bf16.msra.mxu0 0
        %816 = vmatpush.bf16.msra.mxu0 0
        %817 = vmatpush.bf16.msra.mxu0 0
        %818 = vmatpush.bf16.msra.mxu0 0
        %819 = vmatpush.bf16.msra.mxu0 0
        %820 = vmatpush.bf16.msra.mxu0 0
        %821 = vmatpush.bf16.msra.mxu0 0
        %822 = vmatpush.bf16.msra.mxu0 %v813
        %823 = vmatmul.bf16.gmra.mxu0 %v810
        %v824 = vpop.f32.mrf.mxu0
        %v825 = vadd.f32 0.0, %v824
        %v826 = vpop.f32.mrf.mxu0
        %v827 = vadd.f32 0.0, %v826
        %828 = vdwg.mxu0
        %v829 = vadd.f32 %v782, %v825
        %v830 = vadd.f32 %v783, %v827
        %v831 = vld [vmem:[%s752] sm:$0xe]
        %s832 = scalar_lea.vmem %s1, 32
        %v833 = vld [vmem:[%s832] sm:$0x3]
        %v835 = vunpack.c.l.b16 %v831
        %v836 = vpack.c.b16 %v793, %v835
        %v837 = vrot.slane %v836, 1
        %v838 = vrot.slane %v796, 1
        %v839 = vsel %vm302, %v837, %v838
        %v841 = vsel %vm252, %v839, 0
        %v844 = vand.u32 %v833, %v259
        %846 = vmatpush.bf16.msra.mxu0 0
        %847 = vmatpush.bf16.msra.mxu0 0
        %848 = vmatpush.bf16.msra.mxu0 0
        %849 = vmatpush.bf16.msra.mxu0 0
        %850 = vmatpush.bf16.msra.mxu0 0
        %851 = vmatpush.bf16.msra.mxu0 0
        %852 = vmatpush.bf16.msra.mxu0 0
        %853 = vmatpush.bf16.msra.mxu0 %v844
        %854 = vmatmul.bf16.gmra.mxu0 %v841
        %v855 = vpop.f32.mrf.mxu0
        %v856 = vadd.f32 0.0, %v855
        %v857 = vpop.f32.mrf.mxu0
        %v858 = vadd.f32 0.0, %v857
        %859 = vdwg.mxu0
        %v860 = vadd.f32 %v829, %v856
        %v861 = vadd.f32 %v830, %v858
        %v862 = vld [vmem:[%s752 + $0x8] sm:$0x3]
        %s863 = scalar_lea.vmem %s1, 34
        %v864 = vld [vmem:[%s863] sm:$0x3]
        %v866 = vunpack.c.l.b16 %v862
        %v867 = vpack.c.b16 %v866, %v866
        %v869 = vshrl.u32 %v836, 16
        %v871 = vrot.slane %v869, 1
        %v872 = vshll.u32 %v836, 16
        %v874 = vrot.slane %v872, 2
        %v875 = vor.u32 %v871, %v874
        %v877 = vshrl.u32 %v867, 16
        %v879 = vrot.slane %v877, 1
        %v880 = vshll.u32 %v867, 16
        %v882 = vrot.slane %v880, 2
        %v883 = vor.u32 %v879, %v882
        %v884 = vsel %vm334, %v875, %v883
        %v886 = vsel %vm252, %v884, 0
        %v889 = vand.u32 %v864, %v259
        %891 = vmatpush.bf16.msra.mxu0 0
        %892 = vmatpush.bf16.msra.mxu0 0
        %893 = vmatpush.bf16.msra.mxu0 0
        %894 = vmatpush.bf16.msra.mxu0 0
        %895 = vmatpush.bf16.msra.mxu0 0
        %896 = vmatpush.bf16.msra.mxu0 0
        %897 = vmatpush.bf16.msra.mxu0 0
        %898 = vmatpush.bf16.msra.mxu0 %v889
        %899 = vmatmul.bf16.gmra.mxu0 %v886
        %v900 = vpop.f32.mrf.mxu0
        %v901 = vadd.f32 0.0, %v900
        %v902 = vpop.f32.mrf.mxu0
        %v903 = vadd.f32 0.0, %v902
        %904 = vdwg.mxu0
        %v905 = vadd.f32 %v860, %v901
        %v906 = vadd.f32 %v861, %v903
        %v907 = vld [vmem:[%s752] sm:$0xc]
        %s908 = scalar_lea.vmem %s1, 36
        %v909 = vld [vmem:[%s908] sm:$0x3]
        %v911 = vunpack.c.l.b16 %v907
        %v912 = vpack.c.b16 %v793, %v911
        %v913 = vrot.slane %v912, 2
        %v914 = vrot.slane %v867, 2
        %v915 = vsel %vm380, %v913, %v914
        %v917 = vsel %vm252, %v915, 0
        %v920 = vand.u32 %v909, %v259
        %922 = vmatpush.bf16.msra.mxu0 0
        %923 = vmatpush.bf16.msra.mxu0 0
        %924 = vmatpush.bf16.msra.mxu0 0
        %925 = vmatpush.bf16.msra.mxu0 0
        %926 = vmatpush.bf16.msra.mxu0 0
        %927 = vmatpush.bf16.msra.mxu0 0
        %928 = vmatpush.bf16.msra.mxu0 0
        %929 = vmatpush.bf16.msra.mxu0 %v920
        %930 = vmatmul.bf16.gmra.mxu0 %v917
        %v931 = vpop.f32.mrf.mxu0
        %v932 = vadd.f32 0.0, %v931
        %v933 = vpop.f32.mrf.mxu0
        %v934 = vadd.f32 0.0, %v933
        %935 = vdwg.mxu0
        %v936 = vadd.f32 %v905, %v932
        %v937 = vadd.f32 %v906, %v934
        %v938 = vld [vmem:[%s752 + $0x8] sm:$0x7]
        %s939 = scalar_lea.vmem %s1, 38
        %v940 = vld [vmem:[%s939] sm:$0x3]
        %v942 = vunpack.c.l.b16 %v938
        %v943 = vpack.c.b16 %v942, %v942
        %v945 = vshrl.u32 %v912, 16
        %v947 = vrot.slane %v945, 2
        %v948 = vshll.u32 %v912, 16
        %v950 = vrot.slane %v948, 3
        %v951 = vor.u32 %v947, %v950
        %v953 = vshrl.u32 %v943, 16
        %v955 = vrot.slane %v953, 2
        %v956 = vshll.u32 %v943, 16
        %v958 = vrot.slane %v956, 3
        %v959 = vor.u32 %v955, %v958
        %v960 = vsel %vm412, %v951, %v959
        %v962 = vsel %vm252, %v960, 0
        %v965 = vand.u32 %v940, %v259
        %967 = vmatpush.bf16.msra.mxu0 0
        %968 = vmatpush.bf16.msra.mxu0 0
        %969 = vmatpush.bf16.msra.mxu0 0
        %970 = vmatpush.bf16.msra.mxu0 0
        %971 = vmatpush.bf16.msra.mxu0 0
        %972 = vmatpush.bf16.msra.mxu0 0
        %973 = vmatpush.bf16.msra.mxu0 0
        %974 = vmatpush.bf16.msra.mxu0 %v965
        %975 = vmatmul.bf16.gmra.mxu0 %v962
        %v976 = vpop.f32.mrf.mxu0
        %v977 = vadd.f32 0.0, %v976
        %v978 = vpop.f32.mrf.mxu0
        %v979 = vadd.f32 0.0, %v978
        %980 = vdwg.mxu0
        %v981 = vadd.f32 %v936, %v977
        %v982 = vadd.f32 %v937, %v979
        %v983 = vld [vmem:[%s752] sm:$0x8]
        %s984 = scalar_lea.vmem %s1, 40
        %v985 = vld [vmem:[%s984] sm:$0x3]
        %v987 = vunpack.c.l.b16 %v983
        %v988 = vpack.c.b16 %v793, %v987
        %v989 = vrot.slane %v988, 3
        %v990 = vrot.slane %v943, 3
        %v991 = vsel %vm458, %v989, %v990
        %v993 = vsel %vm252, %v991, 0
        %v996 = vand.u32 %v985, %v259
        %998 = vmatpush.bf16.msra.mxu0 0
        %999 = vmatpush.bf16.msra.mxu0 0
        %1000 = vmatpush.bf16.msra.mxu0 0
        %1001 = vmatpush.bf16.msra.mxu0 0
        %1002 = vmatpush.bf16.msra.mxu0 0
        %1003 = vmatpush.bf16.msra.mxu0 0
        %1004 = vmatpush.bf16.msra.mxu0 0
        %1005 = vmatpush.bf16.msra.mxu0 %v996
        %1006 = vmatmul.bf16.gmra.mxu0 %v993
        %v1007 = vpop.f32.mrf.mxu0
        %v1008 = vadd.f32 0.0, %v1007
        %v1009 = vpop.f32.mrf.mxu0
        %v1010 = vadd.f32 0.0, %v1009
        %1011 = vdwg.mxu0
        %v1012 = vadd.f32 %v981, %v1008
        %v1013 = vadd.f32 %v982, %v1010
        %s1014 = sadd.s32 %s221, 3
        %s1015 = smul.u32 %s1014, 3
        %s1016 = smul.addr %s1015, 4
        %s1017 = scalar_lea.vmem %s191, %s1016
        %v1018 = vld [vmem:[%s1017] sm:$0xf]
        %v1019 = vld [vmem:[%s1017 + $0x4] sm:$0xf]
        %s1020 = scalar_lea.vmem %s1, 42
        %v1021 = vld [vmem:[%s1020] sm:$0x3]
        %v1024 = vunpack.c.l.b16 %v1018
        %v1025 = vunpack.c.l.b16 %v1019
        %v1026 = vpack.c.b16 %v1025, %v1024
        %v1028 = vsel %vm252, %v1026, 0
        %v1031 = vand.u32 %v1021, %v259
        %1033 = vmatpush.bf16.msra.mxu0 0
        %1034 = vmatpush.bf16.msra.mxu0 0
        %1035 = vmatpush.bf16.msra.mxu0 0
        %1036 = vmatpush.bf16.msra.mxu0 0
        %1037 = vmatpush.bf16.msra.mxu0 0
        %1038 = vmatpush.bf16.msra.mxu0 0
        %1039 = vmatpush.bf16.msra.mxu0 0
        %1040 = vmatpush.bf16.msra.mxu0 %v1031
        %1041 = vmatmul.bf16.gmra.mxu0 %v1028
        %v1042 = vpop.f32.mrf.mxu0
        %v1043 = vadd.f32 0.0, %v1042
        %v1044 = vpop.f32.mrf.mxu0
        %v1045 = vadd.f32 0.0, %v1044
        %1046 = vdwg.mxu0
        %v1047 = vadd.f32 %v1012, %v1043
        %v1048 = vadd.f32 %v1013, %v1045
        %v1049 = vld [vmem:[%s1017] sm:$0xf]
        %v1050 = vld [vmem:[%s1017 + $0x4] sm:$0xf]
        %v1051 = vld [vmem:[%s1017 + $0x8] sm:$0x1]
        %s1052 = scalar_lea.vmem %s1, 44
        %v1053 = vld [vmem:[%s1052] sm:$0x3]
        %v1057 = vunpack.c.l.b16 %v1049
        %v1058 = vunpack.c.l.b16 %v1050
        %v1059 = vunpack.c.l.b16 %v1051
        %v1060 = vpack.c.b16 %v1058, %v1057
        %v1061 = vpack.c.b16 %v1059, %v1059
        %v1063 = vshrl.u32 %v1060, 16
        %v1065 = vshll.u32 %v1060, 16
        %v1067 = vrot.slane %v1065, 1
        %v1068 = vor.u32 %v1063, %v1067
        %v1070 = vshll.u32 %v1061, 16
        %v1072 = vrot.slane %v1070, 1
        %v1073 = vsel %vm239, %v1068, %v1072
        %v1075 = vsel %vm252, %v1073, 0
        %v1078 = vand.u32 %v1053, %v259
        %1080 = vmatpush.bf16.msra.mxu0 0
        %1081 = vmatpush.bf16.msra.mxu0 0
        %1082 = vmatpush.bf16.msra.mxu0 0
        %1083 = vmatpush.bf16.msra.mxu0 0
        %1084 = vmatpush.bf16.msra.mxu0 0
        %1085 = vmatpush.bf16.msra.mxu0 0
        %1086 = vmatpush.bf16.msra.mxu0 0
        %1087 = vmatpush.bf16.msra.mxu0 %v1078
        %1088 = vmatmul.bf16.gmra.mxu0 %v1075
        %v1089 = vpop.f32.mrf.mxu0
        %v1090 = vadd.f32 0.0, %v1089
        %v1091 = vpop.f32.mrf.mxu0
        %v1092 = vadd.f32 0.0, %v1091
        %1093 = vdwg.mxu0
        %v1094 = vadd.f32 %v1047, %v1090
        %v1095 = vadd.f32 %v1048, %v1092
        %v1096 = vld [vmem:[%s1017] sm:$0xe]
        %s1097 = scalar_lea.vmem %s1, 46
        %v1098 = vld [vmem:[%s1097] sm:$0x3]
        %v1100 = vunpack.c.l.b16 %v1096
        %v1101 = vpack.c.b16 %v1058, %v1100
        %v1102 = vrot.slane %v1101, 1
        %v1103 = vrot.slane %v1061, 1
        %v1104 = vsel %vm302, %v1102, %v1103
        %v1106 = vsel %vm252, %v1104, 0
        %v1109 = vand.u32 %v1098, %v259
        %1111 = vmatpush.bf16.msra.mxu0 0
        %1112 = vmatpush.bf16.msra.mxu0 0
        %1113 = vmatpush.bf16.msra.mxu0 0
        %1114 = vmatpush.bf16.msra.mxu0 0
        %1115 = vmatpush.bf16.msra.mxu0 0
        %1116 = vmatpush.bf16.msra.mxu0 0
        %1117 = vmatpush.bf16.msra.mxu0 0
        %1118 = vmatpush.bf16.msra.mxu0 %v1109
        %1119 = vmatmul.bf16.gmra.mxu0 %v1106
        %v1120 = vpop.f32.mrf.mxu0
        %v1121 = vadd.f32 0.0, %v1120
        %v1122 = vpop.f32.mrf.mxu0
        %v1123 = vadd.f32 0.0, %v1122
        %1124 = vdwg.mxu0
        %v1125 = vadd.f32 %v1094, %v1121
        %v1126 = vadd.f32 %v1095, %v1123
        %v1127 = vld [vmem:[%s1017 + $0x8] sm:$0x3]
        %s1128 = scalar_lea.vmem %s1, 48
        %v1129 = vld [vmem:[%s1128] sm:$0x3]
        %v1131 = vunpack.c.l.b16 %v1127
        %v1132 = vpack.c.b16 %v1131, %v1131
        %v1134 = vshrl.u32 %v1101, 16
        %v1136 = vrot.slane %v1134, 1
        %v1137 = vshll.u32 %v1101, 16
        %v1139 = vrot.slane %v1137, 2
        %v1140 = vor.u32 %v1136, %v1139
        %v1142 = vshrl.u32 %v1132, 16
        %v1144 = vrot.slane %v1142, 1
        %v1145 = vshll.u32 %v1132, 16
        %v1147 = vrot.slane %v1145, 2
        %v1148 = vor.u32 %v1144, %v1147
        %v1149 = vsel %vm334, %v1140, %v1148
        %v1151 = vsel %vm252, %v1149, 0
        %v1154 = vand.u32 %v1129, %v259
        %1156 = vmatpush.bf16.msra.mxu0 0
        %1157 = vmatpush.bf16.msra.mxu0 0
        %1158 = vmatpush.bf16.msra.mxu0 0
        %1159 = vmatpush.bf16.msra.mxu0 0
        %1160 = vmatpush.bf16.msra.mxu0 0
        %1161 = vmatpush.bf16.msra.mxu0 0
        %1162 = vmatpush.bf16.msra.mxu0 0
        %1163 = vmatpush.bf16.msra.mxu0 %v1154
        %1164 = vmatmul.bf16.gmra.mxu0 %v1151
        %v1165 = vpop.f32.mrf.mxu0
        %v1166 = vadd.f32 0.0, %v1165
        %v1167 = vpop.f32.mrf.mxu0
        %v1168 = vadd.f32 0.0, %v1167
        %1169 = vdwg.mxu0
        %v1170 = vadd.f32 %v1125, %v1166
        %v1171 = vadd.f32 %v1126, %v1168
        %v1172 = vld [vmem:[%s1017] sm:$0xc]
        %s1173 = scalar_lea.vmem %s1, 50
        %v1174 = vld [vmem:[%s1173] sm:$0x3]
        %v1176 = vunpack.c.l.b16 %v1172
        %v1177 = vpack.c.b16 %v1058, %v1176
        %v1178 = vrot.slane %v1177, 2
        %v1179 = vrot.slane %v1132, 2
        %v1180 = vsel %vm380, %v1178, %v1179
        %v1182 = vsel %vm252, %v1180, 0
        %v1185 = vand.u32 %v1174, %v259
        %1187 = vmatpush.bf16.msra.mxu0 0
        %1188 = vmatpush.bf16.msra.mxu0 0
        %1189 = vmatpush.bf16.msra.mxu0 0
        %1190 = vmatpush.bf16.msra.mxu0 0
        %1191 = vmatpush.bf16.msra.mxu0 0
        %1192 = vmatpush.bf16.msra.mxu0 0
        %1193 = vmatpush.bf16.msra.mxu0 0
        %1194 = vmatpush.bf16.msra.mxu0 %v1185
        %1195 = vmatmul.bf16.gmra.mxu0 %v1182
        %v1196 = vpop.f32.mrf.mxu0
        %v1197 = vadd.f32 0.0, %v1196
        %v1198 = vpop.f32.mrf.mxu0
        %v1199 = vadd.f32 0.0, %v1198
        %1200 = vdwg.mxu0
        %v1201 = vadd.f32 %v1170, %v1197
        %v1202 = vadd.f32 %v1171, %v1199
        %v1203 = vld [vmem:[%s1017 + $0x8] sm:$0x7]
        %s1204 = scalar_lea.vmem %s1, 52
        %v1205 = vld [vmem:[%s1204] sm:$0x3]
        %v1207 = vunpack.c.l.b16 %v1203
        %v1208 = vpack.c.b16 %v1207, %v1207
        %v1210 = vshrl.u32 %v1177, 16
        %v1212 = vrot.slane %v1210, 2
        %v1213 = vshll.u32 %v1177, 16
        %v1215 = vrot.slane %v1213, 3
        %v1216 = vor.u32 %v1212, %v1215
        %v1218 = vshrl.u32 %v1208, 16
        %v1220 = vrot.slane %v1218, 2
        %v1221 = vshll.u32 %v1208, 16
        %v1223 = vrot.slane %v1221, 3
        %v1224 = vor.u32 %v1220, %v1223
        %v1225 = vsel %vm412, %v1216, %v1224
        %v1227 = vsel %vm252, %v1225, 0
        %v1230 = vand.u32 %v1205, %v259
        %1232 = vmatpush.bf16.msra.mxu0 0
        %1233 = vmatpush.bf16.msra.mxu0 0
        %1234 = vmatpush.bf16.msra.mxu0 0
        %1235 = vmatpush.bf16.msra.mxu0 0
        %1236 = vmatpush.bf16.msra.mxu0 0
        %1237 = vmatpush.bf16.msra.mxu0 0
        %1238 = vmatpush.bf16.msra.mxu0 0
        %1239 = vmatpush.bf16.msra.mxu0 %v1230
        %1240 = vmatmul.bf16.gmra.mxu0 %v1227
        %v1241 = vpop.f32.mrf.mxu0
        %v1242 = vadd.f32 0.0, %v1241
        %v1243 = vpop.f32.mrf.mxu0
        %v1244 = vadd.f32 0.0, %v1243
        %1245 = vdwg.mxu0
        %v1246 = vadd.f32 %v1201, %v1242
        %v1247 = vadd.f32 %v1202, %v1244
        %v1248 = vld [vmem:[%s1017] sm:$0x8]
        %s1249 = scalar_lea.vmem %s1, 54
        %v1250 = vld [vmem:[%s1249] sm:$0x3]
        %v1252 = vunpack.c.l.b16 %v1248
        %v1253 = vpack.c.b16 %v1058, %v1252
        %v1254 = vrot.slane %v1253, 3
        %v1255 = vrot.slane %v1208, 3
        %v1256 = vsel %vm458, %v1254, %v1255
        %v1258 = vsel %vm252, %v1256, 0
        %v1261 = vand.u32 %v1250, %v259
        %1263 = vmatpush.bf16.msra.mxu0 0
        %1264 = vmatpush.bf16.msra.mxu0 0
        %1265 = vmatpush.bf16.msra.mxu0 0
        %1266 = vmatpush.bf16.msra.mxu0 0
        %1267 = vmatpush.bf16.msra.mxu0 0
        %1268 = vmatpush.bf16.msra.mxu0 0
        %1269 = vmatpush.bf16.msra.mxu0 0
        %1270 = vmatpush.bf16.msra.mxu0 %v1261
        %1271 = vmatmul.bf16.gmra.mxu0 %v1258
        %v1272 = vpop.f32.mrf.mxu0
        %v1273 = vadd.f32 0.0, %v1272
        %v1274 = vpop.f32.mrf.mxu0
        %v1275 = vadd.f32 0.0, %v1274
        %1276 = vdwg.mxu0
        %v1277 = vadd.f32 %v1246, %v1273
        %v1278 = vadd.f32 %v1247, %v1275
        %s1279 = sadd.s32 %s221, 4
        %s1280 = smul.u32 %s1279, 3
        %s1281 = smul.addr %s1280, 4
        %s1282 = scalar_lea.vmem %s191, %s1281
        %v1283 = vld [vmem:[%s1282] sm:$0xf]
        %v1284 = vld [vmem:[%s1282 + $0x4] sm:$0xf]
        %s1285 = scalar_lea.vmem %s1, 56
        %v1286 = vld [vmem:[%s1285] sm:$0x3]
        %v1289 = vunpack.c.l.b16 %v1283
        %v1290 = vunpack.c.l.b16 %v1284
        %v1291 = vpack.c.b16 %v1290, %v1289
        %v1293 = vsel %vm252, %v1291, 0
        %v1296 = vand.u32 %v1286, %v259
        %1298 = vmatpush.bf16.msra.mxu0 0
        %1299 = vmatpush.bf16.msra.mxu0 0
        %1300 = vmatpush.bf16.msra.mxu0 0
        %1301 = vmatpush.bf16.msra.mxu0 0
        %1302 = vmatpush.bf16.msra.mxu0 0
        %1303 = vmatpush.bf16.msra.mxu0 0
        %1304 = vmatpush.bf16.msra.mxu0 0
        %1305 = vmatpush.bf16.msra.mxu0 %v1296
        %1306 = vmatmul.bf16.gmra.mxu0 %v1293
        %v1307 = vpop.f32.mrf.mxu0
        %v1308 = vadd.f32 0.0, %v1307
        %v1309 = vpop.f32.mrf.mxu0
        %v1310 = vadd.f32 0.0, %v1309
        %1311 = vdwg.mxu0
        %v1312 = vadd.f32 %v1277, %v1308
        %v1313 = vadd.f32 %v1278, %v1310
        %v1314 = vld [vmem:[%s1282] sm:$0xf]
        %v1315 = vld [vmem:[%s1282 + $0x4] sm:$0xf]
        %v1316 = vld [vmem:[%s1282 + $0x8] sm:$0x1]
        %s1317 = scalar_lea.vmem %s1, 58
        %v1318 = vld [vmem:[%s1317] sm:$0x3]
        %v1322 = vunpack.c.l.b16 %v1314
        %v1323 = vunpack.c.l.b16 %v1315
        %v1324 = vunpack.c.l.b16 %v1316
        %v1325 = vpack.c.b16 %v1323, %v1322
        %v1326 = vpack.c.b16 %v1324, %v1324
        %v1328 = vshrl.u32 %v1325, 16
        %v1330 = vshll.u32 %v1325, 16
        %v1332 = vrot.slane %v1330, 1
        %v1333 = vor.u32 %v1328, %v1332
        %v1335 = vshll.u32 %v1326, 16
        %v1337 = vrot.slane %v1335, 1
        %v1338 = vsel %vm239, %v1333, %v1337
        %v1340 = vsel %vm252, %v1338, 0
        %v1343 = vand.u32 %v1318, %v259
        %1345 = vmatpush.bf16.msra.mxu0 0
        %1346 = vmatpush.bf16.msra.mxu0 0
        %1347 = vmatpush.bf16.msra.mxu0 0
        %1348 = vmatpush.bf16.msra.mxu0 0
        %1349 = vmatpush.bf16.msra.mxu0 0
        %1350 = vmatpush.bf16.msra.mxu0 0
        %1351 = vmatpush.bf16.msra.mxu0 0
        %1352 = vmatpush.bf16.msra.mxu0 %v1343
        %1353 = vmatmul.bf16.gmra.mxu0 %v1340
        %v1354 = vpop.f32.mrf.mxu0
        %v1355 = vadd.f32 0.0, %v1354
        %v1356 = vpop.f32.mrf.mxu0
        %v1357 = vadd.f32 0.0, %v1356
        %1358 = vdwg.mxu0
        %v1359 = vadd.f32 %v1312, %v1355
        %v1360 = vadd.f32 %v1313, %v1357
        %v1361 = vld [vmem:[%s1282] sm:$0xe]
        %s1362 = scalar_lea.vmem %s1, 60
        %v1363 = vld [vmem:[%s1362] sm:$0x3]
        %v1365 = vunpack.c.l.b16 %v1361
        %v1366 = vpack.c.b16 %v1323, %v1365
        %v1367 = vrot.slane %v1366, 1
        %v1368 = vrot.slane %v1326, 1
        %v1369 = vsel %vm302, %v1367, %v1368
        %v1371 = vsel %vm252, %v1369, 0
        %v1374 = vand.u32 %v1363, %v259
        %1376 = vmatpush.bf16.msra.mxu0 0
        %1377 = vmatpush.bf16.msra.mxu0 0
        %1378 = vmatpush.bf16.msra.mxu0 0
        %1379 = vmatpush.bf16.msra.mxu0 0
        %1380 = vmatpush.bf16.msra.mxu0 0
        %1381 = vmatpush.bf16.msra.mxu0 0
        %1382 = vmatpush.bf16.msra.mxu0 0
        %1383 = vmatpush.bf16.msra.mxu0 %v1374
        %1384 = vmatmul.bf16.gmra.mxu0 %v1371
        %v1385 = vpop.f32.mrf.mxu0
        %v1386 = vadd.f32 0.0, %v1385
        %v1387 = vpop.f32.mrf.mxu0
        %v1388 = vadd.f32 0.0, %v1387
        %1389 = vdwg.mxu0
        %v1390 = vadd.f32 %v1359, %v1386
        %v1391 = vadd.f32 %v1360, %v1388
        %v1392 = vld [vmem:[%s1282 + $0x8] sm:$0x3]
        %s1393 = scalar_lea.vmem %s1, 62
        %v1394 = vld [vmem:[%s1393] sm:$0x3]
        %v1396 = vunpack.c.l.b16 %v1392
        %v1397 = vpack.c.b16 %v1396, %v1396
        %v1399 = vshrl.u32 %v1366, 16
        %v1401 = vrot.slane %v1399, 1
        %v1402 = vshll.u32 %v1366, 16
        %v1404 = vrot.slane %v1402, 2
        %v1405 = vor.u32 %v1401, %v1404
        %v1407 = vshrl.u32 %v1397, 16
        %v1409 = vrot.slane %v1407, 1
        %v1410 = vshll.u32 %v1397, 16
        %v1412 = vrot.slane %v1410, 2
        %v1413 = vor.u32 %v1409, %v1412
        %v1414 = vsel %vm334, %v1405, %v1413
        %v1416 = vsel %vm252, %v1414, 0
        %v1419 = vand.u32 %v1394, %v259
        %1421 = vmatpush.bf16.msra.mxu0 0
        %1422 = vmatpush.bf16.msra.mxu0 0
        %1423 = vmatpush.bf16.msra.mxu0 0
        %1424 = vmatpush.bf16.msra.mxu0 0
        %1425 = vmatpush.bf16.msra.mxu0 0
        %1426 = vmatpush.bf16.msra.mxu0 0
        %1427 = vmatpush.bf16.msra.mxu0 0
        %1428 = vmatpush.bf16.msra.mxu0 %v1419
        %1429 = vmatmul.bf16.gmra.mxu0 %v1416
        %v1430 = vpop.f32.mrf.mxu0
        %v1431 = vadd.f32 0.0, %v1430
        %v1432 = vpop.f32.mrf.mxu0
        %v1433 = vadd.f32 0.0, %v1432
        %1434 = vdwg.mxu0
        %v1435 = vadd.f32 %v1390, %v1431
        %v1436 = vadd.f32 %v1391, %v1433
        %v1437 = vld [vmem:[%s1282] sm:$0xc]
        %s1438 = scalar_lea.vmem %s1, 64
        %v1439 = vld [vmem:[%s1438] sm:$0x3]
        %v1441 = vunpack.c.l.b16 %v1437
        %v1442 = vpack.c.b16 %v1323, %v1441
        %v1443 = vrot.slane %v1442, 2
        %v1444 = vrot.slane %v1397, 2
        %v1445 = vsel %vm380, %v1443, %v1444
        %v1447 = vsel %vm252, %v1445, 0
        %v1450 = vand.u32 %v1439, %v259
        %1452 = vmatpush.bf16.msra.mxu0 0
        %1453 = vmatpush.bf16.msra.mxu0 0
        %1454 = vmatpush.bf16.msra.mxu0 0
        %1455 = vmatpush.bf16.msra.mxu0 0
        %1456 = vmatpush.bf16.msra.mxu0 0
        %1457 = vmatpush.bf16.msra.mxu0 0
        %1458 = vmatpush.bf16.msra.mxu0 0
        %1459 = vmatpush.bf16.msra.mxu0 %v1450
        %1460 = vmatmul.bf16.gmra.mxu0 %v1447
        %v1461 = vpop.f32.mrf.mxu0
        %v1462 = vadd.f32 0.0, %v1461
        %v1463 = vpop.f32.mrf.mxu0
        %v1464 = vadd.f32 0.0, %v1463
        %1465 = vdwg.mxu0
        %v1466 = vadd.f32 %v1435, %v1462
        %v1467 = vadd.f32 %v1436, %v1464
        %v1468 = vld [vmem:[%s1282 + $0x8] sm:$0x7]
        %s1469 = scalar_lea.vmem %s1, 66
        %v1470 = vld [vmem:[%s1469] sm:$0x3]
        %v1472 = vunpack.c.l.b16 %v1468
        %v1473 = vpack.c.b16 %v1472, %v1472
        %v1475 = vshrl.u32 %v1442, 16
        %v1477 = vrot.slane %v1475, 2
        %v1478 = vshll.u32 %v1442, 16
        %v1480 = vrot.slane %v1478, 3
        %v1481 = vor.u32 %v1477, %v1480
        %v1483 = vshrl.u32 %v1473, 16
        %v1485 = vrot.slane %v1483, 2
        %v1486 = vshll.u32 %v1473, 16
        %v1488 = vrot.slane %v1486, 3
        %v1489 = vor.u32 %v1485, %v1488
        %v1490 = vsel %vm412, %v1481, %v1489
        %v1492 = vsel %vm252, %v1490, 0
        %v1495 = vand.u32 %v1470, %v259
        %1497 = vmatpush.bf16.msra.mxu0 0
        %1498 = vmatpush.bf16.msra.mxu0 0
        %1499 = vmatpush.bf16.msra.mxu0 0
        %1500 = vmatpush.bf16.msra.mxu0 0
        %1501 = vmatpush.bf16.msra.mxu0 0
        %1502 = vmatpush.bf16.msra.mxu0 0
        %1503 = vmatpush.bf16.msra.mxu0 0
        %1504 = vmatpush.bf16.msra.mxu0 %v1495
        %1505 = vmatmul.bf16.gmra.mxu0 %v1492
        %v1506 = vpop.f32.mrf.mxu0
        %v1507 = vadd.f32 0.0, %v1506
        %v1508 = vpop.f32.mrf.mxu0
        %v1509 = vadd.f32 0.0, %v1508
        %1510 = vdwg.mxu0
        %v1511 = vadd.f32 %v1466, %v1507
        %v1512 = vadd.f32 %v1467, %v1509
        %v1513 = vld [vmem:[%s1282] sm:$0x8]
        %s1514 = scalar_lea.vmem %s1, 68
        %v1515 = vld [vmem:[%s1514] sm:$0x3]
        %v1517 = vunpack.c.l.b16 %v1513
        %v1518 = vpack.c.b16 %v1323, %v1517
        %v1519 = vrot.slane %v1518, 3
        %v1520 = vrot.slane %v1473, 3
        %v1521 = vsel %vm458, %v1519, %v1520
        %v1523 = vsel %vm252, %v1521, 0
        %v1526 = vand.u32 %v1515, %v259
        %1528 = vmatpush.bf16.msra.mxu0 0
        %1529 = vmatpush.bf16.msra.mxu0 0
        %1530 = vmatpush.bf16.msra.mxu0 0
        %1531 = vmatpush.bf16.msra.mxu0 0
        %1532 = vmatpush.bf16.msra.mxu0 0
        %1533 = vmatpush.bf16.msra.mxu0 0
        %1534 = vmatpush.bf16.msra.mxu0 0
        %1535 = vmatpush.bf16.msra.mxu0 %v1526
        %1536 = vmatmul.bf16.gmra.mxu0 %v1523
        %v1537 = vpop.f32.mrf.mxu0
        %v1538 = vadd.f32 0.0, %v1537
        %v1539 = vpop.f32.mrf.mxu0
        %v1540 = vadd.f32 0.0, %v1539
        %1541 = vdwg.mxu0
        %v1542 = vadd.f32 %v1511, %v1538
        %v1543 = vadd.f32 %v1512, %v1540
        %s1544 = sadd.s32 %s221, 5
        %s1545 = smul.u32 %s1544, 3
        %s1546 = smul.addr %s1545, 4
        %s1547 = scalar_lea.vmem %s191, %s1546
        %v1548 = vld [vmem:[%s1547] sm:$0xf]
        %v1549 = vld [vmem:[%s1547 + $0x4] sm:$0xf]
        %s1550 = scalar_lea.vmem %s1, 70
        %v1551 = vld [vmem:[%s1550] sm:$0x3]
        %v1554 = vunpack.c.l.b16 %v1548
        %v1555 = vunpack.c.l.b16 %v1549
        %v1556 = vpack.c.b16 %v1555, %v1554
        %v1558 = vsel %vm252, %v1556, 0
        %v1561 = vand.u32 %v1551, %v259
        %1563 = vmatpush.bf16.msra.mxu0 0
        %1564 = vmatpush.bf16.msra.mxu0 0
        %1565 = vmatpush.bf16.msra.mxu0 0
        %1566 = vmatpush.bf16.msra.mxu0 0
        %1567 = vmatpush.bf16.msra.mxu0 0
        %1568 = vmatpush.bf16.msra.mxu0 0
        %1569 = vmatpush.bf16.msra.mxu0 0
        %1570 = vmatpush.bf16.msra.mxu0 %v1561
        %1571 = vmatmul.bf16.gmra.mxu0 %v1558
        %v1572 = vpop.f32.mrf.mxu0
        %v1573 = vadd.f32 0.0, %v1572
        %v1574 = vpop.f32.mrf.mxu0
        %v1575 = vadd.f32 0.0, %v1574
        %1576 = vdwg.mxu0
        %v1577 = vadd.f32 %v1542, %v1573
        %v1578 = vadd.f32 %v1543, %v1575
        %v1579 = vld [vmem:[%s1547] sm:$0xf]
        %v1580 = vld [vmem:[%s1547 + $0x4] sm:$0xf]
        %v1581 = vld [vmem:[%s1547 + $0x8] sm:$0x1]
        %s1582 = scalar_lea.vmem %s1, 72
        %v1583 = vld [vmem:[%s1582] sm:$0x3]
        %v1587 = vunpack.c.l.b16 %v1579
        %v1588 = vunpack.c.l.b16 %v1580
        %v1589 = vunpack.c.l.b16 %v1581
        %v1590 = vpack.c.b16 %v1588, %v1587
        %v1591 = vpack.c.b16 %v1589, %v1589
        %v1593 = vshrl.u32 %v1590, 16
        %v1595 = vshll.u32 %v1590, 16
        %v1597 = vrot.slane %v1595, 1
        %v1598 = vor.u32 %v1593, %v1597
        %v1600 = vshll.u32 %v1591, 16
        %v1602 = vrot.slane %v1600, 1
        %v1603 = vsel %vm239, %v1598, %v1602
        %v1605 = vsel %vm252, %v1603, 0
        %v1608 = vand.u32 %v1583, %v259
        %1610 = vmatpush.bf16.msra.mxu0 0
        %1611 = vmatpush.bf16.msra.mxu0 0
        %1612 = vmatpush.bf16.msra.mxu0 0
        %1613 = vmatpush.bf16.msra.mxu0 0
        %1614 = vmatpush.bf16.msra.mxu0 0
        %1615 = vmatpush.bf16.msra.mxu0 0
        %1616 = vmatpush.bf16.msra.mxu0 0
        %1617 = vmatpush.bf16.msra.mxu0 %v1608
        %1618 = vmatmul.bf16.gmra.mxu0 %v1605
        %v1619 = vpop.f32.mrf.mxu0
        %v1620 = vadd.f32 0.0, %v1619
        %v1621 = vpop.f32.mrf.mxu0
        %v1622 = vadd.f32 0.0, %v1621
        %1623 = vdwg.mxu0
        %v1624 = vadd.f32 %v1577, %v1620
        %v1625 = vadd.f32 %v1578, %v1622
        %v1626 = vld [vmem:[%s1547] sm:$0xe]
        %s1627 = scalar_lea.vmem %s1, 74
        %v1628 = vld [vmem:[%s1627] sm:$0x3]
        %v1630 = vunpack.c.l.b16 %v1626
        %v1631 = vpack.c.b16 %v1588, %v1630
        %v1632 = vrot.slane %v1631, 1
        %v1633 = vrot.slane %v1591, 1
        %v1634 = vsel %vm302, %v1632, %v1633
        %v1636 = vsel %vm252, %v1634, 0
        %v1639 = vand.u32 %v1628, %v259
        %1641 = vmatpush.bf16.msra.mxu0 0
        %1642 = vmatpush.bf16.msra.mxu0 0
        %1643 = vmatpush.bf16.msra.mxu0 0
        %1644 = vmatpush.bf16.msra.mxu0 0
        %1645 = vmatpush.bf16.msra.mxu0 0
        %1646 = vmatpush.bf16.msra.mxu0 0
        %1647 = vmatpush.bf16.msra.mxu0 0
        %1648 = vmatpush.bf16.msra.mxu0 %v1639
        %1649 = vmatmul.bf16.gmra.mxu0 %v1636
        %v1650 = vpop.f32.mrf.mxu0
        %v1651 = vadd.f32 0.0, %v1650
        %v1652 = vpop.f32.mrf.mxu0
        %v1653 = vadd.f32 0.0, %v1652
        %1654 = vdwg.mxu0
        %v1655 = vadd.f32 %v1624, %v1651
        %v1656 = vadd.f32 %v1625, %v1653
        %v1657 = vld [vmem:[%s1547 + $0x8] sm:$0x3]
        %s1658 = scalar_lea.vmem %s1, 76
        %v1659 = vld [vmem:[%s1658] sm:$0x3]
        %v1661 = vunpack.c.l.b16 %v1657
        %v1662 = vpack.c.b16 %v1661, %v1661
        %v1664 = vshrl.u32 %v1631, 16
        %v1666 = vrot.slane %v1664, 1
        %v1667 = vshll.u32 %v1631, 16
        %v1669 = vrot.slane %v1667, 2
        %v1670 = vor.u32 %v1666, %v1669
        %v1672 = vshrl.u32 %v1662, 16
        %v1674 = vrot.slane %v1672, 1
        %v1675 = vshll.u32 %v1662, 16
        %v1677 = vrot.slane %v1675, 2
        %v1678 = vor.u32 %v1674, %v1677
        %v1679 = vsel %vm334, %v1670, %v1678
        %v1681 = vsel %vm252, %v1679, 0
        %v1684 = vand.u32 %v1659, %v259
        %1686 = vmatpush.bf16.msra.mxu0 0
        %1687 = vmatpush.bf16.msra.mxu0 0
        %1688 = vmatpush.bf16.msra.mxu0 0
        %1689 = vmatpush.bf16.msra.mxu0 0
        %1690 = vmatpush.bf16.msra.mxu0 0
        %1691 = vmatpush.bf16.msra.mxu0 0
        %1692 = vmatpush.bf16.msra.mxu0 0
        %1693 = vmatpush.bf16.msra.mxu0 %v1684
        %1694 = vmatmul.bf16.gmra.mxu0 %v1681
        %v1695 = vpop.f32.mrf.mxu0
        %v1696 = vadd.f32 0.0, %v1695
        %v1697 = vpop.f32.mrf.mxu0
        %v1698 = vadd.f32 0.0, %v1697
        %1699 = vdwg.mxu0
        %v1700 = vadd.f32 %v1655, %v1696
        %v1701 = vadd.f32 %v1656, %v1698
        %v1702 = vld [vmem:[%s1547] sm:$0xc]
        %s1703 = scalar_lea.vmem %s1, 78
        %v1704 = vld [vmem:[%s1703] sm:$0x3]
        %v1706 = vunpack.c.l.b16 %v1702
        %v1707 = vpack.c.b16 %v1588, %v1706
        %v1708 = vrot.slane %v1707, 2
        %v1709 = vrot.slane %v1662, 2
        %v1710 = vsel %vm380, %v1708, %v1709
        %v1712 = vsel %vm252, %v1710, 0
        %v1715 = vand.u32 %v1704, %v259
        %1717 = vmatpush.bf16.msra.mxu0 0
        %1718 = vmatpush.bf16.msra.mxu0 0
        %1719 = vmatpush.bf16.msra.mxu0 0
        %1720 = vmatpush.bf16.msra.mxu0 0
        %1721 = vmatpush.bf16.msra.mxu0 0
        %1722 = vmatpush.bf16.msra.mxu0 0
        %1723 = vmatpush.bf16.msra.mxu0 0
        %1724 = vmatpush.bf16.msra.mxu0 %v1715
        %1725 = vmatmul.bf16.gmra.mxu0 %v1712
        %v1726 = vpop.f32.mrf.mxu0
        %v1727 = vadd.f32 0.0, %v1726
        %v1728 = vpop.f32.mrf.mxu0
        %v1729 = vadd.f32 0.0, %v1728
        %1730 = vdwg.mxu0
        %v1731 = vadd.f32 %v1700, %v1727
        %v1732 = vadd.f32 %v1701, %v1729
        %v1733 = vld [vmem:[%s1547 + $0x8] sm:$0x7]
        %s1734 = scalar_lea.vmem %s1, 80
        %v1735 = vld [vmem:[%s1734] sm:$0x3]
        %v1737 = vunpack.c.l.b16 %v1733
        %v1738 = vpack.c.b16 %v1737, %v1737
        %v1740 = vshrl.u32 %v1707, 16
        %v1742 = vrot.slane %v1740, 2
        %v1743 = vshll.u32 %v1707, 16
        %v1745 = vrot.slane %v1743, 3
        %v1746 = vor.u32 %v1742, %v1745
        %v1748 = vshrl.u32 %v1738, 16
        %v1750 = vrot.slane %v1748, 2
        %v1751 = vshll.u32 %v1738, 16
        %v1753 = vrot.slane %v1751, 3
        %v1754 = vor.u32 %v1750, %v1753
        %v1755 = vsel %vm412, %v1746, %v1754
        %v1757 = vsel %vm252, %v1755, 0
        %v1760 = vand.u32 %v1735, %v259
        %1762 = vmatpush.bf16.msra.mxu0 0
        %1763 = vmatpush.bf16.msra.mxu0 0
        %1764 = vmatpush.bf16.msra.mxu0 0
        %1765 = vmatpush.bf16.msra.mxu0 0
        %1766 = vmatpush.bf16.msra.mxu0 0
        %1767 = vmatpush.bf16.msra.mxu0 0
        %1768 = vmatpush.bf16.msra.mxu0 0
        %1769 = vmatpush.bf16.msra.mxu0 %v1760
        %1770 = vmatmul.bf16.gmra.mxu0 %v1757
        %v1771 = vpop.f32.mrf.mxu0
        %v1772 = vadd.f32 0.0, %v1771
        %v1773 = vpop.f32.mrf.mxu0
        %v1774 = vadd.f32 0.0, %v1773
        %1775 = vdwg.mxu0
        %v1776 = vadd.f32 %v1731, %v1772
        %v1777 = vadd.f32 %v1732, %v1774
        %v1778 = vld [vmem:[%s1547] sm:$0x8]
        %s1779 = scalar_lea.vmem %s1, 82
        %v1780 = vld [vmem:[%s1779] sm:$0x3]
        %v1782 = vunpack.c.l.b16 %v1778
        %v1783 = vpack.c.b16 %v1588, %v1782
        %v1784 = vrot.slane %v1783, 3
        %v1785 = vrot.slane %v1738, 3
        %v1786 = vsel %vm458, %v1784, %v1785
        %v1788 = vsel %vm252, %v1786, 0
        %v1791 = vand.u32 %v1780, %v259
        %1793 = vmatpush.bf16.msra.mxu0 0
        %1794 = vmatpush.bf16.msra.mxu0 0
        %1795 = vmatpush.bf16.msra.mxu0 0
        %1796 = vmatpush.bf16.msra.mxu0 0
        %1797 = vmatpush.bf16.msra.mxu0 0
        %1798 = vmatpush.bf16.msra.mxu0 0
        %1799 = vmatpush.bf16.msra.mxu0 0
        %1800 = vmatpush.bf16.msra.mxu0 %v1791
        %1801 = vmatmul.bf16.gmra.mxu0 %v1788
        %v1802 = vpop.f32.mrf.mxu0
        %v1803 = vadd.f32 0.0, %v1802
        %v1804 = vpop.f32.mrf.mxu0
        %v1805 = vadd.f32 0.0, %v1804
        %1806 = vdwg.mxu0
        %v1807 = vadd.f32 %v1776, %v1803
        %v1808 = vadd.f32 %v1777, %v1805
        %s1809 = sadd.s32 %s221, 6
        %s1810 = smul.u32 %s1809, 3
        %s1811 = smul.addr %s1810, 4
        %s1812 = scalar_lea.vmem %s191, %s1811
        %v1813 = vld [vmem:[%s1812] sm:$0xf]
        %v1814 = vld [vmem:[%s1812 + $0x4] sm:$0xf]
        %s1815 = scalar_lea.vmem %s1, 84
        %v1816 = vld [vmem:[%s1815] sm:$0x3]
        %v1819 = vunpack.c.l.b16 %v1813
        %v1820 = vunpack.c.l.b16 %v1814
        %v1821 = vpack.c.b16 %v1820, %v1819
        %v1823 = vsel %vm252, %v1821, 0
        %v1826 = vand.u32 %v1816, %v259
        %1828 = vmatpush.bf16.msra.mxu0 0
        %1829 = vmatpush.bf16.msra.mxu0 0
        %1830 = vmatpush.bf16.msra.mxu0 0
        %1831 = vmatpush.bf16.msra.mxu0 0
        %1832 = vmatpush.bf16.msra.mxu0 0
        %1833 = vmatpush.bf16.msra.mxu0 0
        %1834 = vmatpush.bf16.msra.mxu0 0
        %1835 = vmatpush.bf16.msra.mxu0 %v1826
        %1836 = vmatmul.bf16.gmra.mxu0 %v1823
        %v1837 = vpop.f32.mrf.mxu0
        %v1838 = vadd.f32 0.0, %v1837
        %v1839 = vpop.f32.mrf.mxu0
        %v1840 = vadd.f32 0.0, %v1839
        %1841 = vdwg.mxu0
        %v1842 = vadd.f32 %v1807, %v1838
        %v1843 = vadd.f32 %v1808, %v1840
        %v1844 = vld [vmem:[%s1812] sm:$0xf]
        %v1845 = vld [vmem:[%s1812 + $0x4] sm:$0xf]
        %v1846 = vld [vmem:[%s1812 + $0x8] sm:$0x1]
        %s1847 = scalar_lea.vmem %s1, 86
        %v1848 = vld [vmem:[%s1847] sm:$0x3]
        %v1852 = vunpack.c.l.b16 %v1844
        %v1853 = vunpack.c.l.b16 %v1845
        %v1854 = vunpack.c.l.b16 %v1846
        %v1855 = vpack.c.b16 %v1853, %v1852
        %v1856 = vpack.c.b16 %v1854, %v1854
        %v1858 = vshrl.u32 %v1855, 16
        %v1860 = vshll.u32 %v1855, 16
        %v1862 = vrot.slane %v1860, 1
        %v1863 = vor.u32 %v1858, %v1862
        %v1865 = vshll.u32 %v1856, 16
        %v1867 = vrot.slane %v1865, 1
        %v1868 = vsel %vm239, %v1863, %v1867
        %v1870 = vsel %vm252, %v1868, 0
        %v1873 = vand.u32 %v1848, %v259
        %1875 = vmatpush.bf16.msra.mxu0 0
        %1876 = vmatpush.bf16.msra.mxu0 0
        %1877 = vmatpush.bf16.msra.mxu0 0
        %1878 = vmatpush.bf16.msra.mxu0 0
        %1879 = vmatpush.bf16.msra.mxu0 0
        %1880 = vmatpush.bf16.msra.mxu0 0
        %1881 = vmatpush.bf16.msra.mxu0 0
        %1882 = vmatpush.bf16.msra.mxu0 %v1873
        %1883 = vmatmul.bf16.gmra.mxu0 %v1870
        %v1884 = vpop.f32.mrf.mxu0
        %v1885 = vadd.f32 0.0, %v1884
        %v1886 = vpop.f32.mrf.mxu0
        %v1887 = vadd.f32 0.0, %v1886
        %1888 = vdwg.mxu0
        %v1889 = vadd.f32 %v1842, %v1885
        %v1890 = vadd.f32 %v1843, %v1887
        %v1891 = vld [vmem:[%s1812] sm:$0xe]
        %s1892 = scalar_lea.vmem %s1, 88
        %v1893 = vld [vmem:[%s1892] sm:$0x3]
        %v1895 = vunpack.c.l.b16 %v1891
        %v1896 = vpack.c.b16 %v1853, %v1895
        %v1897 = vrot.slane %v1896, 1
        %v1898 = vrot.slane %v1856, 1
        %v1899 = vsel %vm302, %v1897, %v1898
        %v1901 = vsel %vm252, %v1899, 0
        %v1904 = vand.u32 %v1893, %v259
        %1906 = vmatpush.bf16.msra.mxu0 0
        %1907 = vmatpush.bf16.msra.mxu0 0
        %1908 = vmatpush.bf16.msra.mxu0 0
        %1909 = vmatpush.bf16.msra.mxu0 0
        %1910 = vmatpush.bf16.msra.mxu0 0
        %1911 = vmatpush.bf16.msra.mxu0 0
        %1912 = vmatpush.bf16.msra.mxu0 0
        %1913 = vmatpush.bf16.msra.mxu0 %v1904
        %1914 = vmatmul.bf16.gmra.mxu0 %v1901
        %v1915 = vpop.f32.mrf.mxu0
        %v1916 = vadd.f32 0.0, %v1915
        %v1917 = vpop.f32.mrf.mxu0
        %v1918 = vadd.f32 0.0, %v1917
        %1919 = vdwg.mxu0
        %v1920 = vadd.f32 %v1889, %v1916
        %v1921 = vadd.f32 %v1890, %v1918
        %v1922 = vld [vmem:[%s1812 + $0x8] sm:$0x3]
        %s1923 = scalar_lea.vmem %s1, 90
        %v1924 = vld [vmem:[%s1923] sm:$0x3]
        %v1926 = vunpack.c.l.b16 %v1922
        %v1927 = vpack.c.b16 %v1926, %v1926
        %v1929 = vshrl.u32 %v1896, 16
        %v1931 = vrot.slane %v1929, 1
        %v1932 = vshll.u32 %v1896, 16
        %v1934 = vrot.slane %v1932, 2
        %v1935 = vor.u32 %v1931, %v1934
        %v1937 = vshrl.u32 %v1927, 16
        %v1939 = vrot.slane %v1937, 1
        %v1940 = vshll.u32 %v1927, 16
        %v1942 = vrot.slane %v1940, 2
        %v1943 = vor.u32 %v1939, %v1942
        %v1944 = vsel %vm334, %v1935, %v1943
        %v1946 = vsel %vm252, %v1944, 0
        %v1949 = vand.u32 %v1924, %v259
        %1951 = vmatpush.bf16.msra.mxu0 0
        %1952 = vmatpush.bf16.msra.mxu0 0
        %1953 = vmatpush.bf16.msra.mxu0 0
        %1954 = vmatpush.bf16.msra.mxu0 0
        %1955 = vmatpush.bf16.msra.mxu0 0
        %1956 = vmatpush.bf16.msra.mxu0 0
        %1957 = vmatpush.bf16.msra.mxu0 0
        %1958 = vmatpush.bf16.msra.mxu0 %v1949
        %1959 = vmatmul.bf16.gmra.mxu0 %v1946
        %v1960 = vpop.f32.mrf.mxu0
        %v1961 = vadd.f32 0.0, %v1960
        %v1962 = vpop.f32.mrf.mxu0
        %v1963 = vadd.f32 0.0, %v1962
        %1964 = vdwg.mxu0
        %v1965 = vadd.f32 %v1920, %v1961
        %v1966 = vadd.f32 %v1921, %v1963
        %v1967 = vld [vmem:[%s1812] sm:$0xc]
        %s1968 = scalar_lea.vmem %s1, 92
        %v1969 = vld [vmem:[%s1968] sm:$0x3]
        %v1971 = vunpack.c.l.b16 %v1967
        %v1972 = vpack.c.b16 %v1853, %v1971
        %v1973 = vrot.slane %v1972, 2
        %v1974 = vrot.slane %v1927, 2
        %v1975 = vsel %vm380, %v1973, %v1974
        %v1977 = vsel %vm252, %v1975, 0
        %v1980 = vand.u32 %v1969, %v259
        %1982 = vmatpush.bf16.msra.mxu0 0
        %1983 = vmatpush.bf16.msra.mxu0 0
        %1984 = vmatpush.bf16.msra.mxu0 0
        %1985 = vmatpush.bf16.msra.mxu0 0
        %1986 = vmatpush.bf16.msra.mxu0 0
        %1987 = vmatpush.bf16.msra.mxu0 0
        %1988 = vmatpush.bf16.msra.mxu0 0
        %1989 = vmatpush.bf16.msra.mxu0 %v1980
        %1990 = vmatmul.bf16.gmra.mxu0 %v1977
        %v1991 = vpop.f32.mrf.mxu0
        %v1992 = vadd.f32 0.0, %v1991
        %v1993 = vpop.f32.mrf.mxu0
        %v1994 = vadd.f32 0.0, %v1993
        %1995 = vdwg.mxu0
        %v1996 = vadd.f32 %v1965, %v1992
        %v1997 = vadd.f32 %v1966, %v1994
        %v1998 = vld [vmem:[%s1812 + $0x8] sm:$0x7]
        %s1999 = scalar_lea.vmem %s1, 94
        %v2000 = vld [vmem:[%s1999] sm:$0x3]
        %v2002 = vunpack.c.l.b16 %v1998
        %v2003 = vpack.c.b16 %v2002, %v2002
        %v2005 = vshrl.u32 %v1972, 16
        %v2007 = vrot.slane %v2005, 2
        %v2008 = vshll.u32 %v1972, 16
        %v2010 = vrot.slane %v2008, 3
        %v2011 = vor.u32 %v2007, %v2010
        %v2013 = vshrl.u32 %v2003, 16
        %v2015 = vrot.slane %v2013, 2
        %v2016 = vshll.u32 %v2003, 16
        %v2018 = vrot.slane %v2016, 3
        %v2019 = vor.u32 %v2015, %v2018
        %v2020 = vsel %vm412, %v2011, %v2019
        %v2022 = vsel %vm252, %v2020, 0
        %v2025 = vand.u32 %v2000, %v259
        %2027 = vmatpush.bf16.msra.mxu0 0
        %2028 = vmatpush.bf16.msra.mxu0 0
        %2029 = vmatpush.bf16.msra.mxu0 0
        %2030 = vmatpush.bf16.msra.mxu0 0
        %2031 = vmatpush.bf16.msra.mxu0 0
        %2032 = vmatpush.bf16.msra.mxu0 0
        %2033 = vmatpush.bf16.msra.mxu0 0
        %2034 = vmatpush.bf16.msra.mxu0 %v2025
        %2035 = vmatmul.bf16.gmra.mxu0 %v2022
        %v2036 = vpop.f32.mrf.mxu0
        %v2037 = vadd.f32 0.0, %v2036
        %v2038 = vpop.f32.mrf.mxu0
        %v2039 = vadd.f32 0.0, %v2038
        %2040 = vdwg.mxu0
        %v2041 = vadd.f32 %v1996, %v2037
        %v2042 = vadd.f32 %v1997, %v2039
        %v2043 = vld [vmem:[%s1812] sm:$0x8]
        %s2044 = scalar_lea.vmem %s1, 96
        %v2045 = vld [vmem:[%s2044] sm:$0x3]
        %v2047 = vunpack.c.l.b16 %v2043
        %v2048 = vpack.c.b16 %v1853, %v2047
        %v2049 = vrot.slane %v2048, 3
        %v2050 = vrot.slane %v2003, 3
        %v2051 = vsel %vm458, %v2049, %v2050
        %v2053 = vsel %vm252, %v2051, 0
        %v2056 = vand.u32 %v2045, %v259
        %2058 = vmatpush.bf16.msra.mxu0 0
        %2059 = vmatpush.bf16.msra.mxu0 0
        %2060 = vmatpush.bf16.msra.mxu0 0
        %2061 = vmatpush.bf16.msra.mxu0 0
        %2062 = vmatpush.bf16.msra.mxu0 0
        %2063 = vmatpush.bf16.msra.mxu0 0
        %2064 = vmatpush.bf16.msra.mxu0 0
        %2065 = vmatpush.bf16.msra.mxu0 %v2056
        %2066 = vmatmul.bf16.gmra.mxu0 %v2053
        %v2067 = vpop.f32.mrf.mxu0
        %v2068 = vadd.f32 0.0, %v2067
        %v2069 = vpop.f32.mrf.mxu0
        %v2070 = vadd.f32 0.0, %v2069
        %2071 = vdwg.mxu0
        %v2072 = vadd.f32 %v2041, %v2068
        %v2073 = vadd.f32 %v2042, %v2070
        %s2074 = smul.u32 %s216, 16
        %s2075 = scalar_lea.vmem %s201, %s2074
        %2076 = vst [vmem:[%s2075] sm:$0xff] %v2072
        %2077 = vst [vmem:[%s2075 + $0x8] sm:$0xff] %v2073
        %v2078 = vld [vmem:[#allocation2] sm:$0x1]
        %v2079 = vadd.f32 %v2072, %v2073
        %v2080 = vrot.slane %v2079, 4
        %v2081 = vadd.f32 %v2079, %v2080
        %v2082 = vrot.slane %v2081, 2
        %v2083 = vadd.f32 %v2081, %v2082
        %v2084 = vrot.slane %v2083, 1
        %v2085 = vadd.f32 %v2083, %v2084
        %v2086 = vadd.f32 %v2078, %v2085
        %2087 = vst [vmem:[#allocation2] sm:$0x1] %v2086
        %v2088 = vld [vmem:[#allocation3] sm:$0x1]
        %v2089 = vmul.f32 %v2072, %v2072
        %v2090 = vmul.f32 %v2073, %v2073
        %v2091 = vadd.f32 %v2089, %v2090
        %v2092 = vrot.slane %v2091, 4
        %v2093 = vadd.f32 %v2091, %v2092
        %v2094 = vrot.slane %v2093, 2
        %v2095 = vadd.f32 %v2093, %v2094
        %v2096 = vrot.slane %v2095, 1
        %v2097 = vadd.f32 %v2095, %v2096
        %v2098 = vadd.f32 %v2088, %v2097
        %2099 = vst [vmem:[#allocation3] sm:$0x1] %v2098
      $region37: #{makeup_distillation_forward.18} parent=27 // loop_footer
        %s220 = sadd.s32 1, %s216
      $region38: #{makeup_distillation_forward.18} parent=27 // loop_footer_branch
        %215 = sbr.rel target = $region34
      $region39: #{makeup_distillation_forward.18} parent=27 // loop_exit
        _
      %p2100 = scmp.eq.s32.totalorder %s20, 1
      // Predicated region
      $region40: #{makeup_distillation_forward.18} parent=27 // pred_check
        %p2101 = pneg %p2100
      $region41: #{makeup_distillation_forward.18} parent=27 // pred_check_branch
        %2103 = sbr.rel (%p2101) target = $region43
      $region42: #{makeup_distillation_forward.18} parent=27 // pred_region
        %v2104 = vld [vmem:[#allocation2] sm:$0x1]
        %v2105 = vmul.f32 %v2104, 0.00390625
        %v2106 = vld [vmem:[#allocation3] sm:$0x1]
        %v2107 = vmul.f32 %v2106, 0.00390625
        %v2108 = vmul.f32 %v2105, %v2105
        %v2109 = vsub.f32 %v2107, %v2108
        %v2110 = vmax.f32 %v2109, 0.0
        %v2111 = vadd.f32 %v2110, 1e-05
        %v2112 = vrsqrt.pop %v2111
        %v2113 = vmul.f32 %v2112, %v2111
        %v2114 = vmul.f32 %v2113, %v2112
        %v2115 = vmul.f32 0.5, %v2114
        %v2116 = vsub.f32 1.5, %v2115
        %v2117 = vmul.f32 %v2112, %v2116
        %vm2118 = vweird.f32 %v2111
        %vm2119 = vweird.f32 %v2112
        %vm2120 = vmor %vm2118, %vm2119
        %v2121 = vsel %vm2120, %v2112, %v2117
        %v2123 = vperm.slane %v2121, 0
        %vm2125 = vcmask 1040384
        %v2126 = vsel %vm2125, %v2105, %v2123
        %2127 = vst [vmem:[%s206] sm:$0x3] %v2126
      $region43: #{makeup_distillation_forward.18} parent=27 // pred_fallthru
        _
      %s2128 = smul.u32 8, %s20
      %p2129 = scmp.lt.s32.totalorder %s19, 1
      %s2130 = scalar_select %p2129, %s19, 1
      %p2131 = scmp.lt.s32.totalorder %s2128, 15
      %s2132 = scalar_select %p2131, %s2128, 15
      %s2133 = smul.addr %s2132, 2
      %s2134 = smul.addr %s2130, 32
      %s2135 = sadd.s32 %s2133, %s2134
      %s2136 = smul.addr %s2135, 8
      %s2137 = scalar_lea.vmem %s2, %s2136
      %p2138 = scmp.lt.s32.totalorder %s19, 1
      %s2139 = scalar_select %p2138, %s19, 1
      %s2140 = smul.addr %s2139, 2
      %s2141 = scalar_lea.vmem %s3, %s2140
      // Predicated region
      $region44: #{makeup_distillation_forward.18} parent=27 // pred_check
        %p2142 = pneg %p94
      $region45: #{makeup_distillation_forward.18} parent=27 // pred_check_branch
        %2144 = sbr.rel (%p2142) target = $region47
      $region46: #{makeup_distillation_forward.18} parent=27 // pred_region
        %s2145 = smul.u32 8, %s20
      $region47: #{makeup_distillation_forward.18} parent=27 // pred_fallthru
        _
      // Predicated region
      $region48: #{makeup_distillation_forward.18} parent=27 // pred_check
        %p2146 = pneg %p120
      $region49: #{makeup_distillation_forward.18} parent=27 // pred_check_branch
        %2148 = sbr.rel (%p2146) target = $region51
      $region50: #{makeup_distillation_forward.18} parent=27 // pred_region
        _
      $region51: #{makeup_distillation_forward.18} parent=27 // pred_fallthru
        _
    $region28: #{makeup_distillation_forward.18} parent=5 // pred_fallthru
      _
    %p2149 = scmp.le.s32.totalorder 2, %s10
    // Predicated region
    $region52: #{makeup_distillation_forward.18} parent=5 // pred_check
      %p2150 = pneg %p2149
    $region53: #{makeup_distillation_forward.18} parent=5 // pred_check_branch
      %2152 = sbr.rel (%p2150) target = $region55
    $region54: #{makeup_distillation_forward.18} parent=5 // pred_region
      %s2153 = ssub.s32 %s10, 2
      // Predicated region
      $region56: #{makeup_distillation_forward.18} parent=54 // pred_check
        %p2154 = pneg %p100
      $region57: #{makeup_distillation_forward.18} parent=54 // pred_check_branch
        %2156 = sbr.rel (%p2154) target = $region59
      $region58: #{makeup_distillation_forward.18} parent=54 // pred_region
        %s2157 = smul.u32 8, %s22
        %p2158 = scmp.lt.s32.totalorder %s21, 1
        %s2159 = scalar_select %p2158, %s21, 1
        %p2160 = scmp.lt.s32.totalorder %s2157, 15
        %s2161 = scalar_select %p2160, %s2157, 15
        %s2162 = smul.addr %s2161, 2
        %s2163 = smul.addr %s2159, 32
        %s2164 = sadd.s32 %s2162, %s2163
        %s2165 = smul.addr %s2164, 8
        %s2166 = scalar_lea.vmem %s2, %s2165
      $region59: #{makeup_distillation_forward.18} parent=54 // pred_fallthru
        _
      // Predicated region
      $region60: #{makeup_distillation_forward.18} parent=54 // pred_check
        %p2167 = pneg %p126
      $region61: #{makeup_distillation_forward.18} parent=54 // pred_check_branch
        %2169 = sbr.rel (%p2167) target = $region63
      $region62: #{makeup_distillation_forward.18} parent=54 // pred_region
        %p2170 = scmp.lt.s32.totalorder %s21, 1
        %s2171 = scalar_select %p2170, %s21, 1
        %s2172 = smul.addr %s2171, 2
        %s2173 = scalar_lea.vmem %s3, %s2172
      $region63: #{makeup_distillation_forward.18} parent=54 // pred_fallthru
        _
    $region55: #{makeup_distillation_forward.18} parent=5 // pred_fallthru
      _
  $region6: #{makeup_distillation_forward.18} parent=0 // loop_footer
    %s14 = sadd.s32 1, %s10
  $region7: #{makeup_distillation_forward.18} parent=0 // loop_footer_branch
    %9 = sbr.rel target = $region3
  $region8: #{makeup_distillation_forward.18} parent=0 // loop_exit
    _

// kernel: makeup_distillation_forward.20
$region0: #{makeup_distillation_forward.20}
  #allocation0 [shape = 'u32[]', space=smem, size = 0x4, offset = 0x4, fixed_abs, tag = 'smem constant byte address 0x4 - core index']
  #allocation1 [shape = 'u32[72,128]{1,0:T(1,128)}', space=vmem, size = 0x9000, scoped, tag = 'internal scratch']
  #allocation2 [shape = 'f32[1,128]{1,0:T(1,128)}', space=vmem, size = 0x200, scoped, tag = 'scratch operand']
  #allocation3 [shape = 'f32[1,128]{1,0:T(1,128)}', space=vmem, size = 0x200, scoped, tag = 'scratch operand']
  %s0 = inlined_call_operand.vmem [shape: bf16[2,9,9,64], index: 0, kind: input, shape index: {}]
  %s1 = inlined_call_operand.vmem [shape: bf16[4,64,128], index: 1, kind: input, shape index: {}]
  %s2 = inlined_call_operand.vmem [shape: f32[2,8,8,128], index: 2, kind: output, shape index: {0}]
  %s3 = inlined_call_operand.vmem [shape: f32[2,2,128], index: 3, kind: output, shape index: {1}]
  %4 = xla_tuple %s2, %s3
  %s5 = sld [smem:[#allocation0]]
  $region64: #{makeup_distillation_forward.20} parent=0
    _
  %s7 = ssub.s32 1, %s5
  %s8 = scalar_select 0, %s7, %s5
  loop: start=0, step=1, limit=6
  $region2: #{makeup_distillation_forward.20} parent=0 // loop_pre_header
    _
  $region3: #{makeup_distillation_forward.20} parent=0 // loop_header
    %s10 = sphi 0, %s14
    %p11 = scmp.ge.s32.totalorder %s10, 6
    %s17 = sphi 0, %s29
    %s18 = sphi 0, %s25
    %s19 = sphi 0, %s17
    %s20 = sphi 0, %s18
    %s21 = sphi 0, %s19
    %s22 = sphi 0, %s20
    %s32 = sphi 0, %s34
    %s35 = sphi 0, %s32
    %s36 = sphi 0, %s35
    %s52 = sphi 0, %s36
    %s56 = sphi 0, %s56
    %s58 = sphi 0, %s56
    %s59 = sphi 0, %s58
    %s73 = sphi 0, %s59
    %s81 = sphi 0, %s83
    %s84 = sphi 0, %s81
    %s85 = sphi 0, %s84
    %s101 = sphi 0, %s85
    %s107 = sphi 0, %s109
    %s110 = sphi 0, %s107
    %s111 = sphi 0, %s110
    %s127 = sphi 0, %s111
  $region4: #{makeup_distillation_forward.20} parent=0 // loop_header_branch
    %13 = sbr.rel (%p11) target = $region8
  $region5: #{makeup_distillation_forward.20} parent=0 // loop_body
    %s15 = ssub.s32 %s10, 1
    %s16 = ssub.s32 %s10, 2
    %s23 = sadd.s32 1, %s18
    %p24 = scmp.ge.s32.totalorder %s23, 2
    %s25 = scalar_select %p24, 0, %s23
    %s26 = sadd.s32 1, %s17
    %s27 = scalar_select %p24, %s26, %s17
    %p28 = scmp.ge.s32.totalorder %s27, 2
    %s29 = scalar_select %p28, 0, %s27
    %s30 = ssub.s32 %s17, %s29
    %p31 = scmp.eq.s32.totalorder %s30, 0
    %s33 = sadd.s32 %s32, 1
    %s34 = scalar_select %p31, %s32, %s33
    %p37 = pneg %p31
    %p38 = scmp.eq.s32.totalorder %s10, 3
    %p39 = por %p37, %p38
    %p40 = scmp.ne.s32.totalorder %s32, %s35
    %p41 = scmp.eq.s32.totalorder %s10, 0
    %p42 = por %p40, %p41
    %p43 = scmp.ne.s32.totalorder %s32, %s35
    %p44 = scmp.eq.s32.totalorder %s15, 3
    %p45 = por %p43, %p44
    %p46 = scmp.ne.s32.totalorder %s35, %s36
    %p47 = scmp.eq.s32.totalorder %s15, 0
    %p48 = por %p46, %p47
    %p49 = scmp.ne.s32.totalorder %s35, %s36
    %p50 = scmp.eq.s32.totalorder %s16, 3
    %p51 = por %p49, %p50
    %p53 = scmp.ne.s32.totalorder %s36, %s52
    %p54 = scmp.eq.s32.totalorder %s16, 0
    %p55 = por %p53, %p54
    %s57 = sadd.s32 %s56, 1
    %p60 = scmp.eq.s32.totalorder %s10, 3
    %p61 = scmp.ne.s32.totalorder %s56, %s58
    %p62 = scmp.eq.s32.totalorder %s10, 0
    %p63 = por %p61, %p62
    %p64 = scmp.ne.s32.totalorder %s56, %s58
    %p65 = scmp.eq.s32.totalorder %s15, 3
    %p66 = por %p64, %p65
    %p67 = scmp.ne.s32.totalorder %s58, %s59
    %p68 = scmp.eq.s32.totalorder %s15, 0
    %p69 = por %p67, %p68
    %p70 = scmp.ne.s32.totalorder %s58, %s59
    %p71 = scmp.eq.s32.totalorder %s16, 3
    %p72 = por %p70, %p71
    %p74 = scmp.ne.s32.totalorder %s59, %s73
    %p75 = scmp.eq.s32.totalorder %s16, 0
    %p76 = por %p74, %p75
    %s77 = ssub.s32 %s17, %s29
    %s78 = ssub.s32 %s18, %s25
    %s79 = sor.u32 %s77, %s78
    %p80 = scmp.eq.s32.totalorder %s79, 0
    %s82 = sadd.s32 %s81, 1
    %s83 = scalar_select %p80, %s81, %s82
    %p86 = pneg %p80
    %p87 = scmp.eq.s32.totalorder %s10, 3
    %p88 = por %p86, %p87
    %p89 = scmp.ne.s32.totalorder %s81, %s84
    %p90 = scmp.eq.s32.totalorder %s10, 0
    %p91 = por %p89, %p90
    %p92 = scmp.ne.s32.totalorder %s81, %s84
    %p93 = scmp.eq.s32.totalorder %s15, 3
    %p94 = por %p92, %p93
    %p95 = scmp.ne.s32.totalorder %s84, %s85
    %p96 = scmp.eq.s32.totalorder %s15, 0
    %p97 = por %p95, %p96
    %p98 = scmp.ne.s32.totalorder %s84, %s85
    %p99 = scmp.eq.s32.totalorder %s16, 3
    %p100 = por %p98, %p99
    %p102 = scmp.ne.s32.totalorder %s85, %s101
    %p103 = scmp.eq.s32.totalorder %s16, 0
    %p104 = por %p102, %p103
    %s105 = ssub.s32 %s17, %s29
    %p106 = scmp.eq.s32.totalorder %s105, 0
    %s108 = sadd.s32 %s107, 1
    %s109 = scalar_select %p106, %s107, %s108
    %p112 = pneg %p106
    %p113 = scmp.eq.s32.totalorder %s10, 3
    %p114 = por %p112, %p113
    %p115 = scmp.ne.s32.totalorder %s107, %s110
    %p116 = scmp.eq.s32.totalorder %s10, 0
    %p117 = por %p115, %p116
    %p118 = scmp.ne.s32.totalorder %s107, %s110
    %p119 = scmp.eq.s32.totalorder %s15, 3
    %p120 = por %p118, %p119
    %p121 = scmp.ne.s32.totalorder %s110, %s111
    %p122 = scmp.eq.s32.totalorder %s15, 0
    %p123 = por %p121, %p122
    %p124 = scmp.ne.s32.totalorder %s110, %s111
    %p125 = scmp.eq.s32.totalorder %s16, 3
    %p126 = por %p124, %p125
    %p128 = scmp.ne.s32.totalorder %s111, %s127
    %p129 = scmp.eq.s32.totalorder %s16, 0
    %p130 = por %p128, %p129
    %p131 = scmp.le.s32.totalorder 1, %s10
    %p132 = scmp.lt.s32.totalorder %s10, 5
    %p133 = pnand %p131, %p132
    %p134 = pneg %p133
    // Predicated region
    $region9: #{makeup_distillation_forward.20} parent=5 // pred_check
      _
    $region10: #{makeup_distillation_forward.20} parent=5 // pred_check_branch
      %136 = sbr.rel (%p133) target = $region12
    $region11: #{makeup_distillation_forward.20} parent=5 // pred_region
      %s137 = ssub.s32 %s10, 1
      // Predicated region
      $region13: #{makeup_distillation_forward.20} parent=11 // pred_check
        %p138 = pneg %p69
      $region14: #{makeup_distillation_forward.20} parent=11 // pred_check_branch
        %140 = sbr.rel (%p138) target = $region16
      $region15: #{makeup_distillation_forward.20} parent=11 // pred_region
        _
      $region16: #{makeup_distillation_forward.20} parent=11 // pred_fallthru
        _
    $region12: #{makeup_distillation_forward.20} parent=5 // pred_fallthru
      _
    %p141 = scmp.lt.s32.totalorder %s10, 4
    // Predicated region
    $region17: #{makeup_distillation_forward.20} parent=5 // pred_check
      %p142 = pneg %p141
    $region18: #{makeup_distillation_forward.20} parent=5 // pred_check_branch
      %144 = sbr.rel (%p142) target = $region20
    $region19: #{makeup_distillation_forward.20} parent=5 // pred_region
      // Predicated region
      $region21: #{makeup_distillation_forward.20} parent=19 // pred_check
        %p145 = pneg %p42
      $region22: #{makeup_distillation_forward.20} parent=19 // pred_check_branch
        %147 = sbr.rel (%p145) target = $region24
      $region23: #{makeup_distillation_forward.20} parent=19 // pred_region
        %p148 = scmp.lt.s32.totalorder %s17, 1
        %s149 = scalar_select %p148, %s17, 1
        %s150 = smul.addr %s149, 18
        %s151 = smul.addr %s150, 4
        %s152 = scalar_lea.vmem %s0, %s151
      $region24: #{makeup_distillation_forward.20} parent=19 // pred_fallthru
        _
    $region20: #{makeup_distillation_forward.20} parent=5 // pred_fallthru
      _
    %p153 = scmp.le.s32.totalorder 1, %s10
    %p154 = scmp.lt.s32.totalorder %s10, 5
    %p155 = pnand %p153, %p154
    %p156 = pneg %p155
    // Predicated region
    $region25: #{makeup_distillation_forward.20} parent=5 // pred_check
      _
    $region26: #{makeup_distillation_forward.20} parent=5 // pred_check_branch
      %158 = sbr.rel (%p155) target = $region28
    $region27: #{makeup_distillation_forward.20} parent=5 // pred_region
      %s159 = ssub.s32 %s10, 1
      %p160 = scmp.lt.s32.totalorder %s19, 1
      %s161 = scalar_select %p160, %s19, 1
      %s162 = smul.addr %s161, 18
      %s163 = smul.addr %s162, 4
      %s164 = scalar_lea.vmem %s0, %s163
      %p165 = pneg %p48
      %p166 = pneg %p45
      %p167 = pneg %p69
      %p168 = pneg %p66
      %p169 = pneg %p97
      %p170 = pneg %p94
      %s171 = smul.u32 4, %s20
      %p172 = scmp.lt.s32.totalorder %s19, 1
      %s173 = scalar_select %p172, %s19, 1
      %p174 = scmp.lt.s32.totalorder %s171, 7
      %s175 = scalar_select %p174, %s171, 7
      %s176 = smul.addr %s173, 8
      %s177 = sadd.s32 %s175, %s176
      %s178 = smul.addr %s177, 8
      %s179 = scalar_lea.vmem %s2, %s178
      %p180 = pneg %p123
      %p181 = pneg %p120
      %p182 = scmp.lt.s32.totalorder %s19, 1
      %s183 = scalar_select %p182, %s19, 1
      %s184 = smul.addr %s183, 2
      %s185 = scalar_lea.vmem %s3, %s184
      %p186 = scmp.lt.s32.totalorder %s19, 1
      %s187 = scalar_select %p186, %s19, 1
      %s188 = smul.addr %s187, 18
      %s189 = smul.addr %s188, 4
      %s190 = scalar_lea.vmem %s0, %s189
      %s191 = smul.u32 4, %s20
      %p192 = scmp.lt.s32.totalorder %s19, 1
      %s193 = scalar_select %p192, %s19, 1
      %p194 = scmp.lt.s32.totalorder %s191, 7
      %s195 = scalar_select %p194, %s191, 7
      %s196 = smul.addr %s193, 8
      %s197 = sadd.s32 %s195, %s196
      %s198 = smul.addr %s197, 8
      %s199 = scalar_lea.vmem %s2, %s198
      %s200 = smul.u32 4, %s20
      %p201 = scmp.lt.s32.totalorder %s19, 1
      %s202 = scalar_select %p201, %s19, 1
      %s203 = smul.addr %s202, 2
      %s204 = scalar_lea.vmem %s3, %s203
      %p206 = scmp.eq.s32.totalorder %s20, 0
      // Predicated region
      $region29: #{makeup_distillation_forward.20} parent=27 // pred_check
        %p207 = pneg %p206
      $region30: #{makeup_distillation_forward.20} parent=27 // pred_check_branch
        %209 = sbr.rel (%p207) target = $region32
      $region31: #{makeup_distillation_forward.20} parent=27 // pred_region
        %210 = vst [vmem:[#allocation2] sm:$0x1] 0.0
        %211 = vst [vmem:[#allocation3] sm:$0x1] 0.0
      $region32: #{makeup_distillation_forward.20} parent=27 // pred_fallthru
        _
      %s212 = smul.u32 %s20, 4
      loop: start=0, step=1, limit=4
      $region33: #{makeup_distillation_forward.20} parent=27 // loop_pre_header
        _
      $region34: #{makeup_distillation_forward.20} parent=27 // loop_header
        %s214 = sphi 0, %s218
        %p215 = scmp.ge.s32.totalorder %s214, 4
      $region35: #{makeup_distillation_forward.20} parent=27 // loop_header_branch
        %217 = sbr.rel (%p215) target = $region39
      $region36: #{makeup_distillation_forward.20} parent=27 // loop_body
        %s219 = sadd.s32 %s212, %s214
        %s220 = smul.u32 %s219, 2
        %s221 = smul.addr %s220, 4
        %s222 = scalar_lea.vmem %s190, %s221
        %v223 = vld [vmem:[%s222] sm:$0xf]
        %v224 = vld [vmem:[%s1] sm:$0xf]
        %v225 = vld [vmem:[%s1 + $0x4] sm:$0xf]
        %v226 = vld [vmem:[%s1 + $0x8] sm:$0xf]
        %v227 = vld [vmem:[%s1 + $0xc] sm:$0xf]
        %v228 = vld [vmem:[%s1 + $0x10] sm:$0xf]
        %v229 = vld [vmem:[%s1 + $0x14] sm:$0xf]
        %v230 = vld [vmem:[%s1 + $0x18] sm:$0xf]
        %v231 = vld [vmem:[%s1 + $0x1c] sm:$0xf]
        %v232 = vld [vmem:[%s222 + $0x4] sm:$0x1]
        %s233 = scalar_lea.vmem %s1, 32
        %v234 = vld [vmem:[%s233] sm:$0xf]
        %v235 = vld [vmem:[%s233 + $0x4] sm:$0xf]
        %v236 = vld [vmem:[%s233 + $0x8] sm:$0xf]
        %v237 = vld [vmem:[%s233 + $0xc] sm:$0xf]
        %v238 = vld [vmem:[%s233 + $0x10] sm:$0xf]
        %v239 = vld [vmem:[%s233 + $0x14] sm:$0xf]
        %v240 = vld [vmem:[%s233 + $0x18] sm:$0xf]
        %v241 = vld [vmem:[%s233 + $0x1c] sm:$0xf]
        %v244 = vunpack.c.l.b16 %v223
        %v245 = vunpack.c.l.b16 %v232
        %v246 = vpack.c.b16 %v245, %v244
        %v248 = vshrl.u32 %v246, 16
        %v250 = vshll.u32 %v246, 16
        %v252 = vrot.slane %v250, 1
        %v253 = vor.u32 %v248, %v252
        %v262 = vunpack.c.l.b16 %v234
        %v263 = vunpack.c.l.b16 %v235
        %v264 = vunpack.c.l.b16 %v236
        %v265 = vunpack.c.l.b16 %v237
        %v266 = vunpack.c.l.b16 %v238
        %v267 = vunpack.c.l.b16 %v239
        %v268 = vunpack.c.l.b16 %v240
        %v269 = vunpack.c.l.b16 %v241
        %v270 = vpack.c.b16 %v263, %v262
        %v271 = vpack.c.b16 %v265, %v264
        %v272 = vpack.c.b16 %v267, %v266
        %v273 = vpack.c.b16 %v269, %v268
        %vm278 = vcmask 523264
        %v280 = vsel %vm278, %v253, 0
        %282 = vmatpush.bf16.msra.mxu0 0
        %283 = vmatpush.bf16.msra.mxu0 0
        %284 = vmatpush.bf16.msra.mxu0 0
        %285 = vmatpush.bf16.msra.mxu0 0
        %286 = vmatpush.bf16.msra.mxu0 %v273
        %287 = vmatpush.bf16.msra.mxu0 %v272
        %288 = vmatpush.bf16.msra.mxu0 %v271
        %289 = vmatpush.bf16.msra.mxu0 %v270
        %290 = vmatmul.bf16.gmra.mxu0 %v280
        %v291 = vpop.f32.mrf.mxu0
        %v292 = vadd.f32 0.0, %v291
        %v293 = vpop.f32.mrf.mxu0
        %294 = vdwg.mxu0
        %v303 = vunpack.c.l.b16 %v224
        %v304 = vunpack.c.l.b16 %v225
        %v305 = vunpack.c.l.b16 %v226
        %v306 = vunpack.c.l.b16 %v227
        %v307 = vunpack.c.l.b16 %v228
        %v308 = vunpack.c.l.b16 %v229
        %v309 = vunpack.c.l.b16 %v230
        %v310 = vunpack.c.l.b16 %v231
        %v311 = vpack.c.b16 %v304, %v303
        %v312 = vpack.c.b16 %v306, %v305
        %v313 = vpack.c.b16 %v308, %v307
        %v314 = vpack.c.b16 %v310, %v309
        %v320 = vsel %vm278, %v223, 0
        %322 = vmatpush.bf16.msra.mxu0 0
        %323 = vmatpush.bf16.msra.mxu0 0
        %324 = vmatpush.bf16.msra.mxu0 0
        %325 = vmatpush.bf16.msra.mxu0 0
        %326 = vmatpush.bf16.msra.mxu0 %v314
        %327 = vmatpush.bf16.msra.mxu0 %v313
        %328 = vmatpush.bf16.msra.mxu0 %v312
        %329 = vmatpush.bf16.msra.mxu0 %v311
        %330 = vmatmul.bf16.gmra.mxu0 %v320
        %v331 = vpop.f32.mrf.mxu0
        %v332 = vadd.f32 %v292, %v331
        %v333 = vpop.f32.mrf.mxu0
        %334 = vdwg.mxu0
        %s335 = sadd.s32 %s219, 1
        %s336 = smul.u32 %s335, 2
        %s337 = smul.addr %s336, 4
        %s338 = scalar_lea.vmem %s190, %s337
        %v339 = vld [vmem:[%s338] sm:$0xf]
        %s340 = scalar_lea.vmem %s1, 64
        %v341 = vld [vmem:[%s340] sm:$0xf]
        %v342 = vld [vmem:[%s340 + $0x4] sm:$0xf]
        %v343 = vld [vmem:[%s340 + $0x8] sm:$0xf]
        %v344 = vld [vmem:[%s340 + $0xc] sm:$0xf]
        %v345 = vld [vmem:[%s340 + $0x10] sm:$0xf]
        %v346 = vld [vmem:[%s340 + $0x14] sm:$0xf]
        %v347 = vld [vmem:[%s340 + $0x18] sm:$0xf]
        %v348 = vld [vmem:[%s340 + $0x1c] sm:$0xf]
        %v357 = vunpack.c.l.b16 %v341
        %v358 = vunpack.c.l.b16 %v342
        %v359 = vunpack.c.l.b16 %v343
        %v360 = vunpack.c.l.b16 %v344
        %v361 = vunpack.c.l.b16 %v345
        %v362 = vunpack.c.l.b16 %v346
        %v363 = vunpack.c.l.b16 %v347
        %v364 = vunpack.c.l.b16 %v348
        %v365 = vpack.c.b16 %v358, %v357
        %v366 = vpack.c.b16 %v360, %v359
        %v367 = vpack.c.b16 %v362, %v361
        %v368 = vpack.c.b16 %v364, %v363
        %v374 = vsel %vm278, %v339, 0
        %376 = vmatpush.bf16.msra.mxu0 0
        %377 = vmatpush.bf16.msra.mxu0 0
        %378 = vmatpush.bf16.msra.mxu0 0
        %379 = vmatpush.bf16.msra.mxu0 0
        %380 = vmatpush.bf16.msra.mxu0 %v368
        %381 = vmatpush.bf16.msra.mxu0 %v367
        %382 = vmatpush.bf16.msra.mxu0 %v366
        %383 = vmatpush.bf16.msra.mxu0 %v365
        %384 = vmatmul.bf16.gmra.mxu0 %v374
        %v385 = vpop.f32.mrf.mxu0
        %v386 = vadd.f32 0.0, %v385
        %v387 = vpop.f32.mrf.mxu0
        %388 = vdwg.mxu0
        %v389 = vadd.f32 %v332, %v386
        %v390 = vld [vmem:[%s338] sm:$0xf]
        %v391 = vld [vmem:[%s338 + $0x4] sm:$0x1]
        %s392 = scalar_lea.vmem %s1, 96
        %v393 = vld [vmem:[%s392] sm:$0xf]
        %v394 = vld [vmem:[%s392 + $0x4] sm:$0xf]
        %v395 = vld [vmem:[%s392 + $0x8] sm:$0xf]
        %v396 = vld [vmem:[%s392 + $0xc] sm:$0xf]
        %v397 = vld [vmem:[%s392 + $0x10] sm:$0xf]
        %v398 = vld [vmem:[%s392 + $0x14] sm:$0xf]
        %v399 = vld [vmem:[%s392 + $0x18] sm:$0xf]
        %v400 = vld [vmem:[%s392 + $0x1c] sm:$0xf]
        %v403 = vunpack.c.l.b16 %v390
        %v404 = vunpack.c.l.b16 %v391
        %v405 = vpack.c.b16 %v404, %v403
        %v407 = vshrl.u32 %v405, 16
        %v409 = vshll.u32 %v405, 16
        %v411 = vrot.slane %v409, 1
        %v412 = vor.u32 %v407, %v411
        %v421 = vunpack.c.l.b16 %v393
        %v422 = vunpack.c.l.b16 %v394
        %v423 = vunpack.c.l.b16 %v395
        %v424 = vunpack.c.l.b16 %v396
        %v425 = vunpack.c.l.b16 %v397
        %v426 = vunpack.c.l.b16 %v398
        %v427 = vunpack.c.l.b16 %v399
        %v428 = vunpack.c.l.b16 %v400
        %v429 = vpack.c.b16 %v422, %v421
        %v430 = vpack.c.b16 %v424, %v423
        %v431 = vpack.c.b16 %v426, %v425
        %v432 = vpack.c.b16 %v428, %v427
        %v438 = vsel %vm278, %v412, 0
        %440 = vmatpush.bf16.msra.mxu0 0
        %441 = vmatpush.bf16.msra.mxu0 0
        %442 = vmatpush.bf16.msra.mxu0 0
        %443 = vmatpush.bf16.msra.mxu0 0
        %444 = vmatpush.bf16.msra.mxu0 %v432
        %445 = vmatpush.bf16.msra.mxu0 %v431
        %446 = vmatpush.bf16.msra.mxu0 %v430
        %447 = vmatpush.bf16.msra.mxu0 %v429
        %448 = vmatmul.bf16.gmra.mxu0 %v438
        %v449 = vpop.f32.mrf.mxu0
        %v450 = vadd.f32 0.0, %v449
        %v451 = vpop.f32.mrf.mxu0
        %452 = vdwg.mxu0
        %v453 = vadd.f32 %v389, %v450
        %s454 = smul.u32 %s214, 8
        %s455 = scalar_lea.vmem %s199, %s454
        %456 = vst [vmem:[%s455] sm:$0xff] %v453
        %v457 = vld [vmem:[#allocation2] sm:$0x1]
        %v458 = vrot.slane %v453, 4
        %v459 = vadd.f32 %v453, %v458
        %v460 = vrot.slane %v459, 2
        %v461 = vadd.f32 %v459, %v460
        %v462 = vrot.slane %v461, 1
        %v463 = vadd.f32 %v461, %v462
        %v464 = vadd.f32 %v457, %v463
        %465 = vst [vmem:[#allocation2] sm:$0x1] %v464
        %v466 = vld [vmem:[#allocation3] sm:$0x1]
        %v467 = vmul.f32 %v453, %v453
        %v468 = vrot.slane %v467, 4
        %v469 = vadd.f32 %v467, %v468
        %v470 = vrot.slane %v469, 2
        %v471 = vadd.f32 %v469, %v470
        %v472 = vrot.slane %v471, 1
        %v473 = vadd.f32 %v471, %v472
        %v474 = vadd.f32 %v466, %v473
        %475 = vst [vmem:[#allocation3] sm:$0x1] %v474
      $region37: #{makeup_distillation_forward.20} parent=27 // loop_footer
        %s218 = sadd.s32 1, %s214
      $region38: #{makeup_distillation_forward.20} parent=27 // loop_footer_branch
        %213 = sbr.rel target = $region34
      $region39: #{makeup_distillation_forward.20} parent=27 // loop_exit
        _
      %p476 = scmp.eq.s32.totalorder %s20, 1
      // Predicated region
      $region40: #{makeup_distillation_forward.20} parent=27 // pred_check
        %p477 = pneg %p476
      $region41: #{makeup_distillation_forward.20} parent=27 // pred_check_branch
        %479 = sbr.rel (%p477) target = $region43
      $region42: #{makeup_distillation_forward.20} parent=27 // pred_region
        %v480 = vld [vmem:[#allocation2] sm:$0x1]
        %v481 = vmul.f32 %v480, 0.015625
        %v482 = vld [vmem:[#allocation3] sm:$0x1]
        %v483 = vmul.f32 %v482, 0.015625
        %v484 = vmul.f32 %v481, %v481
        %v485 = vsub.f32 %v483, %v484
        %v486 = vmax.f32 %v485, 0.0
        %v487 = vadd.f32 %v486, 1e-05
        %v488 = vrsqrt.pop %v487
        %v489 = vmul.f32 %v488, %v487
        %v490 = vmul.f32 %v489, %v488
        %v491 = vmul.f32 0.5, %v490
        %v492 = vsub.f32 1.5, %v491
        %v493 = vmul.f32 %v488, %v492
        %vm494 = vweird.f32 %v487
        %vm495 = vweird.f32 %v488
        %vm496 = vmor %vm494, %vm495
        %v497 = vsel %vm496, %v488, %v493
        %v499 = vperm.slane %v497, 0
        %vm501 = vcmask 1040384
        %v502 = vsel %vm501, %v481, %v499
        %503 = vst [vmem:[%s204] sm:$0x3] %v502
      $region43: #{makeup_distillation_forward.20} parent=27 // pred_fallthru
        _
      %s504 = smul.u32 4, %s20
      %p505 = scmp.lt.s32.totalorder %s19, 1
      %s506 = scalar_select %p505, %s19, 1
      %p507 = scmp.lt.s32.totalorder %s504, 7
      %s508 = scalar_select %p507, %s504, 7
      %s509 = smul.addr %s506, 8
      %s510 = sadd.s32 %s508, %s509
      %s511 = smul.addr %s510, 8
      %s512 = scalar_lea.vmem %s2, %s511
      %p513 = scmp.lt.s32.totalorder %s19, 1
      %s514 = scalar_select %p513, %s19, 1
      %s515 = smul.addr %s514, 2
      %s516 = scalar_lea.vmem %s3, %s515
      // Predicated region
      $region44: #{makeup_distillation_forward.20} parent=27 // pred_check
        %p517 = pneg %p94
      $region45: #{makeup_distillation_forward.20} parent=27 // pred_check_branch
        %519 = sbr.rel (%p517) target = $region47
      $region46: #{makeup_distillation_forward.20} parent=27 // pred_region
        %s520 = smul.u32 4, %s20
      $region47: #{makeup_distillation_forward.20} parent=27 // pred_fallthru
        _
      // Predicated region
      $region48: #{makeup_distillation_forward.20} parent=27 // pred_check
        %p521 = pneg %p120
      $region49: #{makeup_distillation_forward.20} parent=27 // pred_check_branch
        %523 = sbr.rel (%p521) target = $region51
      $region50: #{makeup_distillation_forward.20} parent=27 // pred_region
        _
      $region51: #{makeup_distillation_forward.20} parent=27 // pred_fallthru
        _
    $region28: #{makeup_distillation_forward.20} parent=5 // pred_fallthru
      _
    %p524 = scmp.le.s32.totalorder 2, %s10
    // Predicated region
    $region52: #{makeup_distillation_forward.20} parent=5 // pred_check
      %p525 = pneg %p524
    $region53: #{makeup_distillation_forward.20} parent=5 // pred_check_branch
      %527 = sbr.rel (%p525) target = $region55
    $region54: #{makeup_distillation_forward.20} parent=5 // pred_region
      %s528 = ssub.s32 %s10, 2
      // Predicated region
      $region56: #{makeup_distillation_forward.20} parent=54 // pred_check
        %p529 = pneg %p100
      $region57: #{makeup_distillation_forward.20} parent=54 // pred_check_branch
        %531 = sbr.rel (%p529) target = $region59
      $region58: #{makeup_distillation_forward.20} parent=54 // pred_region
        %s532 = smul.u32 4, %s22
        %p533 = scmp.lt.s32.totalorder %s21, 1
        %s534 = scalar_select %p533, %s21, 1
        %p535 = scmp.lt.s32.totalorder %s532, 7
        %s536 = scalar_select %p535, %s532, 7
        %s537 = smul.addr %s534, 8
        %s538 = sadd.s32 %s536, %s537
        %s539 = smul.addr %s538, 8
        %s540 = scalar_lea.vmem %s2, %s539
      $region59: #{makeup_distillation_forward.20} parent=54 // pred_fallthru
        _
      // Predicated region
      $region60: #{makeup_distillation_forward.20} parent=54 // pred_check
        %p541 = pneg %p126
      $region61: #{makeup_distillation_forward.20} parent=54 // pred_check_branch
        %543 = sbr.rel (%p541) target = $region63
      $region62: #{makeup_distillation_forward.20} parent=54 // pred_region
        %p544 = scmp.lt.s32.totalorder %s21, 1
        %s545 = scalar_select %p544, %s21, 1
        %s546 = smul.addr %s545, 2
        %s547 = scalar_lea.vmem %s3, %s546
      $region63: #{makeup_distillation_forward.20} parent=54 // pred_fallthru
        _
    $region55: #{makeup_distillation_forward.20} parent=5 // pred_fallthru
      _
  $region6: #{makeup_distillation_forward.20} parent=0 // loop_footer
    %s14 = sadd.s32 1, %s10
  $region7: #{makeup_distillation_forward.20} parent=0 // loop_footer_branch
    %9 = sbr.rel target = $region3
  $region8: #{makeup_distillation_forward.20} parent=0 // loop_exit
    _

// kernel: makeup_distillation_forward.21
$region0: #{makeup_distillation_forward.21}
  #allocation0 [shape = 'u32[]', space=smem, size = 0x4, offset = 0x4, fixed_abs, tag = 'smem constant byte address 0x4 - core index']
  #allocation1 [shape = 'u32[72,128]{1,0:T(1,128)}', space=vmem, size = 0x9000, scoped, tag = 'internal scratch']
  %s0 = inlined_call_operand.vmem [shape: f32[2,8,8,128], index: 0, kind: input, shape index: {}]
  %s1 = inlined_call_operand.vmem [shape: f32[2,2,128], index: 1, kind: input, shape index: {}]
  %s2 = inlined_call_operand.vmem [shape: f32[1,128], index: 2, kind: input, shape index: {}]
  %s3 = inlined_call_operand.vmem [shape: f32[1,128], index: 3, kind: input, shape index: {}]
  %s4 = inlined_call_operand.vmem [shape: bf16[2,8,8,128], index: 4, kind: output, shape index: {}]
  %s5 = sld [smem:[#allocation0]]
  $region49: #{makeup_distillation_forward.21} parent=0
    _
  %s7 = ssub.s32 1, %s5
  %s8 = scalar_select 0, %s7, %s5
  loop: start=0, step=1, limit=6
  $region2: #{makeup_distillation_forward.21} parent=0 // loop_pre_header
    _
  $region3: #{makeup_distillation_forward.21} parent=0 // loop_header
    %s10 = sphi 0, %s14
    %p11 = scmp.ge.s32.totalorder %s10, 6
    %s17 = sphi 0, %s29
    %s18 = sphi 0, %s25
    %s19 = sphi 0, %s17
    %s20 = sphi 0, %s18
    %s21 = sphi 0, %s19
    %s22 = sphi 0, %s20
    %s34 = sphi 0, %s36
    %s37 = sphi 0, %s34
    %s38 = sphi 0, %s37
    %s54 = sphi 0, %s38
    %s60 = sphi 0, %s62
    %s63 = sphi 0, %s60
    %s64 = sphi 0, %s63
    %s80 = sphi 0, %s64
    %s84 = sphi 0, %s84
    %s86 = sphi 0, %s84
    %s87 = sphi 0, %s86
    %s101 = sphi 0, %s87
    %s105 = sphi 0, %s105
    %s107 = sphi 0, %s105
    %s108 = sphi 0, %s107
    %s122 = sphi 0, %s108
    %s130 = sphi 0, %s132
    %s133 = sphi 0, %s130
    %s134 = sphi 0, %s133
    %s150 = sphi 0, %s134
  $region4: #{makeup_distillation_forward.21} parent=0 // loop_header_branch
    %13 = sbr.rel (%p11) target = $region8
  $region5: #{makeup_distillation_forward.21} parent=0 // loop_body
    %s15 = ssub.s32 %s10, 1
    %s16 = ssub.s32 %s10, 2
    %s23 = sadd.s32 1, %s18
    %p24 = scmp.ge.s32.totalorder %s23, 2
    %s25 = scalar_select %p24, 0, %s23
    %s26 = sadd.s32 1, %s17
    %s27 = scalar_select %p24, %s26, %s17
    %p28 = scmp.ge.s32.totalorder %s27, 2
    %s29 = scalar_select %p28, 0, %s27
    %s30 = ssub.s32 %s17, %s29
    %s31 = ssub.s32 %s18, %s25
    %s32 = sor.u32 %s30, %s31
    %p33 = scmp.eq.s32.totalorder %s32, 0
    %s35 = sadd.s32 %s34, 1
    %s36 = scalar_select %p33, %s34, %s35
    %p39 = pneg %p33
    %p40 = scmp.eq.s32.totalorder %s10, 3
    %p41 = por %p39, %p40
    %p42 = scmp.ne.s32.totalorder %s34, %s37
    %p43 = scmp.eq.s32.totalorder %s10, 0
    %p44 = por %p42, %p43
    %p45 = scmp.ne.s32.totalorder %s34, %s37
    %p46 = scmp.eq.s32.totalorder %s15, 3
    %p47 = por %p45, %p46
    %p48 = scmp.ne.s32.totalorder %s37, %s38
    %p49 = scmp.eq.s32.totalorder %s15, 0
    %p50 = por %p48, %p49
    %p51 = scmp.ne.s32.totalorder %s37, %s38
    %p52 = scmp.eq.s32.totalorder %s16, 3
    %p53 = por %p51, %p52
    %p55 = scmp.ne.s32.totalorder %s38, %s54
    %p56 = scmp.eq.s32.totalorder %s16, 0
    %p57 = por %p55, %p56
    %s58 = ssub.s32 %s17, %s29
    %p59 = scmp.eq.s32.totalorder %s58, 0
    %s61 = sadd.s32 %s60, 1
    %s62 = scalar_select %p59, %s60, %s61
    %p65 = pneg %p59
    %p66 = scmp.eq.s32.totalorder %s10, 3
    %p67 = por %p65, %p66
    %p68 = scmp.ne.s32.totalorder %s60, %s63
    %p69 = scmp.eq.s32.totalorder %s10, 0
    %p70 = por %p68, %p69
    %p71 = scmp.ne.s32.totalorder %s60, %s63
    %p72 = scmp.eq.s32.totalorder %s15, 3
    %p73 = por %p71, %p72
    %p74 = scmp.ne.s32.totalorder %s63, %s64
    %p75 = scmp.eq.s32.totalorder %s15, 0
    %p76 = por %p74, %p75
    %p77 = scmp.ne.s32.totalorder %s63, %s64
    %p78 = scmp.eq.s32.totalorder %s16, 3
    %p79 = por %p77, %p78
    %p81 = scmp.ne.s32.totalorder %s64, %s80
    %p82 = scmp.eq.s32.totalorder %s16, 0
    %p83 = por %p81, %p82
    %s85 = sadd.s32 %s84, 1
    %p88 = scmp.eq.s32.totalorder %s10, 3
    %p89 = scmp.ne.s32.totalorder %s84, %s86
    %p90 = scmp.eq.s32.totalorder %s10, 0
    %p91 = por %p89, %p90
    %p92 = scmp.ne.s32.totalorder %s84, %s86
    %p93 = scmp.eq.s32.totalorder %s15, 3
    %p94 = por %p92, %p93
    %p95 = scmp.ne.s32.totalorder %s86, %s87
    %p96 = scmp.eq.s32.totalorder %s15, 0
    %p97 = por %p95, %p96
    %p98 = scmp.ne.s32.totalorder %s86, %s87
    %p99 = scmp.eq.s32.totalorder %s16, 3
    %p100 = por %p98, %p99
    %p102 = scmp.ne.s32.totalorder %s87, %s101
    %p103 = scmp.eq.s32.totalorder %s16, 0
    %p104 = por %p102, %p103
    %s106 = sadd.s32 %s105, 1
    %p109 = scmp.eq.s32.totalorder %s10, 3
    %p110 = scmp.ne.s32.totalorder %s105, %s107
    %p111 = scmp.eq.s32.totalorder %s10, 0
    %p112 = por %p110, %p111
    %p113 = scmp.ne.s32.totalorder %s105, %s107
    %p114 = scmp.eq.s32.totalorder %s15, 3
    %p115 = por %p113, %p114
    %p116 = scmp.ne.s32.totalorder %s107, %s108
    %p117 = scmp.eq.s32.totalorder %s15, 0
    %p118 = por %p116, %p117
    %p119 = scmp.ne.s32.totalorder %s107, %s108
    %p120 = scmp.eq.s32.totalorder %s16, 3
    %p121 = por %p119, %p120
    %p123 = scmp.ne.s32.totalorder %s108, %s122
    %p124 = scmp.eq.s32.totalorder %s16, 0
    %p125 = por %p123, %p124
    %s126 = ssub.s32 %s17, %s29
    %s127 = ssub.s32 %s18, %s25
    %s128 = sor.u32 %s126, %s127
    %p129 = scmp.eq.s32.totalorder %s128, 0
    %s131 = sadd.s32 %s130, 1
    %s132 = scalar_select %p129, %s130, %s131
    %p135 = pneg %p129
    %p136 = scmp.eq.s32.totalorder %s10, 3
    %p137 = por %p135, %p136
    %p138 = scmp.ne.s32.totalorder %s130, %s133
    %p139 = scmp.eq.s32.totalorder %s10, 0
    %p140 = por %p138, %p139
    %p141 = scmp.ne.s32.totalorder %s130, %s133
    %p142 = scmp.eq.s32.totalorder %s15, 3
    %p143 = por %p141, %p142
    %p144 = scmp.ne.s32.totalorder %s133, %s134
    %p145 = scmp.eq.s32.totalorder %s15, 0
    %p146 = por %p144, %p145
    %p147 = scmp.ne.s32.totalorder %s133, %s134
    %p148 = scmp.eq.s32.totalorder %s16, 3
    %p149 = por %p147, %p148
    %p151 = scmp.ne.s32.totalorder %s134, %s150
    %p152 = scmp.eq.s32.totalorder %s16, 0
    %p153 = por %p151, %p152
    %p154 = scmp.le.s32.totalorder 1, %s10
    %p155 = scmp.lt.s32.totalorder %s10, 5
    %p156 = pnand %p154, %p155
    %p157 = pneg %p156
    // Predicated region
    $region9: #{makeup_distillation_forward.21} parent=5 // pred_check
      _
    $region10: #{makeup_distillation_forward.21} parent=5 // pred_check_branch
      %159 = sbr.rel (%p156) target = $region12
    $region11: #{makeup_distillation_forward.21} parent=5 // pred_region
      %s160 = ssub.s32 %s10, 1
      // Predicated region
      $region13: #{makeup_distillation_forward.21} parent=11 // pred_check
        %p161 = pneg %p97
      $region14: #{makeup_distillation_forward.21} parent=11 // pred_check_branch
        %163 = sbr.rel (%p161) target = $region16
      $region15: #{makeup_distillation_forward.21} parent=11 // pred_region
        _
      $region16: #{makeup_distillation_forward.21} parent=11 // pred_fallthru
        _
      // Predicated region
      $region17: #{makeup_distillation_forward.21} parent=11 // pred_check
        %p164 = pneg %p118
      $region18: #{makeup_distillation_forward.21} parent=11 // pred_check_branch
        %166 = sbr.rel (%p164) target = $region20
      $region19: #{makeup_distillation_forward.21} parent=11 // pred_region
        _
      $region20: #{makeup_distillation_forward.21} parent=11 // pred_fallthru
        _
    $region12: #{makeup_distillation_forward.21} parent=5 // pred_fallthru
      _
    %p167 = scmp.lt.s32.totalorder %s10, 4
    // Predicated region
    $region21: #{makeup_distillation_forward.21} parent=5 // pred_check
      %p168 = pneg %p167
    $region22: #{makeup_distillation_forward.21} parent=5 // pred_check_branch
      %170 = sbr.rel (%p168) target = $region24
    $region23: #{makeup_distillation_forward.21} parent=5 // pred_region
      // Predicated region
      $region25: #{makeup_distillation_forward.21} parent=23 // pred_check
        %p171 = pneg %p44
      $region26: #{makeup_distillation_forward.21} parent=23 // pred_check_branch
        %173 = sbr.rel (%p171) target = $region28
      $region27: #{makeup_distillation_forward.21} parent=23 // pred_region
        %s174 = smul.u32 4, %s18
        %p175 = scmp.lt.s32.totalorder %s17, 1
        %s176 = scalar_select %p175, %s17, 1
        %p177 = scmp.lt.s32.totalorder %s174, 7
        %s178 = scalar_select %p177, %s174, 7
        %s179 = smul.addr %s176, 8
        %s180 = sadd.s32 %s178, %s179
        %s181 = smul.addr %s180, 8
        %s182 = scalar_lea.vmem %s0, %s181
        %s183 = smul.u32 4, %s18
      $region28: #{makeup_distillation_forward.21} parent=23 // pred_fallthru
        _
      // Predicated region
      $region29: #{makeup_distillation_forward.21} parent=23 // pred_check
        %p184 = pneg %p70
      $region30: #{makeup_distillation_forward.21} parent=23 // pred_check_branch
        %186 = sbr.rel (%p184) target = $region32
      $region31: #{makeup_distillation_forward.21} parent=23 // pred_region
        %p187 = scmp.lt.s32.totalorder %s17, 1
        %s188 = scalar_select %p187, %s17, 1
        %s189 = smul.addr %s188, 2
        %s190 = scalar_lea.vmem %s1, %s189
      $region32: #{makeup_distillation_forward.21} parent=23 // pred_fallthru
        _
    $region24: #{makeup_distillation_forward.21} parent=5 // pred_fallthru
      _
    %p191 = scmp.le.s32.totalorder 1, %s10
    %p192 = scmp.lt.s32.totalorder %s10, 5
    %p193 = pnand %p191, %p192
    %p194 = pneg %p193
    // Predicated region
    $region33: #{makeup_distillation_forward.21} parent=5 // pred_check
      _
    $region34: #{makeup_distillation_forward.21} parent=5 // pred_check_branch
      %196 = sbr.rel (%p193) target = $region36
    $region35: #{makeup_distillation_forward.21} parent=5 // pred_region
      %s197 = ssub.s32 %s10, 1
      %s198 = smul.u32 4, %s20
      %p199 = scmp.lt.s32.totalorder %s19, 1
      %s200 = scalar_select %p199, %s19, 1
      %p201 = scmp.lt.s32.totalorder %s198, 7
      %s202 = scalar_select %p201, %s198, 7
      %s203 = smul.addr %s200, 8
      %s204 = sadd.s32 %s202, %s203
      %s205 = smul.addr %s204, 8
      %s206 = scalar_lea.vmem %s0, %s205
      %p207 = pneg %p50
      %p208 = pneg %p47
      %p209 = scmp.lt.s32.totalorder %s19, 1
      %s210 = scalar_select %p209, %s19, 1
      %s211 = smul.addr %s210, 2
      %s212 = scalar_lea.vmem %s1, %s211
      %p213 = pneg %p76
      %p214 = pneg %p73
      %p215 = pneg %p97
      %p216 = pneg %p94
      %p217 = pneg %p118
      %p218 = pneg %p115
      %p219 = pneg %p146
      %p220 = pneg %p143
      %s221 = smul.u32 4, %s20
      %p222 = scmp.lt.s32.totalorder %s19, 1
      %s223 = scalar_select %p222, %s19, 1
      %p224 = scmp.lt.s32.totalorder %s221, 7
      %s225 = scalar_select %p224, %s221, 7
      %s226 = smul.addr %s223, 8
      %s227 = sadd.s32 %s225, %s226
      %s228 = smul.addr %s227, 4
      %s229 = scalar_lea.vmem %s4, %s228
      %s230 = smul.u32 4, %s20
      %p231 = scmp.lt.s32.totalorder %s19, 1
      %s232 = scalar_select %p231, %s19, 1
      %p233 = scmp.lt.s32.totalorder %s230, 7
      %s234 = scalar_select %p233, %s230, 7
      %s235 = smul.addr %s232, 8
      %s236 = sadd.s32 %s234, %s235
      %s237 = smul.addr %s236, 8
      %s238 = scalar_lea.vmem %s0, %s237
      %s239 = smul.u32 4, %s20
      %p240 = scmp.lt.s32.totalorder %s19, 1
      %s241 = scalar_select %p240, %s19, 1
      %s242 = smul.addr %s241, 2
      %s243 = scalar_lea.vmem %s1, %s242
      %s244 = smul.u32 4, %s20
      %p245 = scmp.lt.s32.totalorder %s19, 1
      %s246 = scalar_select %p245, %s19, 1
      %p247 = scmp.lt.s32.totalorder %s244, 7
      %s248 = scalar_select %p247, %s244, 7
      %s249 = smul.addr %s246, 8
      %s250 = sadd.s32 %s248, %s249
      %s251 = smul.addr %s250, 4
      %s252 = scalar_lea.vmem %s4, %s251
      %s253 = smul.u32 4, %s20
      %v254 = vld [vmem:[%s238] sm:$0xff]
      %v255 = vld [vmem:[%s238 + $0x8] sm:$0xff]
      %v256 = vld [vmem:[%s238 + $0x10] sm:$0xff]
      %v257 = vld [vmem:[%s238 + $0x18] sm:$0xff]
      %v258 = vld [vmem:[%s243] sm:$0x3]
      %v259 = vperm.slane %v258, 0
      %v260 = vsub.f32 %v254, %v259
      %v261 = vsub.f32 %v255, %v259
      %v262 = vsub.f32 %v256, %v259
      %v263 = vsub.f32 %v257, %v259
      %v264 = vld [vmem:[%s2] sm:$0x1]
      %v266 = vperm.slane %v264, 0
      %v268 = vmul.f32 %v258, %v266
      %v269 = vperm.slane %v268, 1
      %v270 = vmul.f32 %v260, %v269
      %v271 = vmul.f32 %v261, %v269
      %v272 = vmul.f32 %v262, %v269
      %v273 = vmul.f32 %v263, %v269
      %v274 = vld [vmem:[%s3] sm:$0x1]
      %v276 = vperm.slane %v274, 0
      %v278 = vadd.f32 %v270, %v276
      %v279 = vadd.f32 %v271, %v276
      %v280 = vadd.f32 %v272, %v276
      %v281 = vadd.f32 %v273, %v276
      %v282 = vmax.f32 %v278, 0.0
      %v283 = vmax.f32 %v279, 0.0
      %v284 = vmax.f32 %v280, 0.0
      %v285 = vmax.f32 %v281, 0.0
      %v286 = vpack.c.bf16 %v282, %v282
      %v287 = vpack.c.bf16 %v283, %v283
      %v288 = vpack.c.bf16 %v284, %v284
      %v289 = vpack.c.bf16 %v285, %v285
      %290 = vst [vmem:[%s252] sm:$0xf] %v286
      %291 = vst [vmem:[%s252 + $0x4] sm:$0xf] %v287
      %292 = vst [vmem:[%s252 + $0x8] sm:$0xf] %v288
      %293 = vst [vmem:[%s252 + $0xc] sm:$0xf] %v289
      %s294 = smul.u32 4, %s20
      %p295 = scmp.lt.s32.totalorder %s19, 1
      %s296 = scalar_select %p295, %s19, 1
      %p297 = scmp.lt.s32.totalorder %s294, 7
      %s298 = scalar_select %p297, %s294, 7
      %s299 = smul.addr %s296, 8
      %s300 = sadd.s32 %s298, %s299
      %s301 = smul.addr %s300, 4
      %s302 = scalar_lea.vmem %s4, %s301
      // Predicated region
      $region37: #{makeup_distillation_forward.21} parent=35 // pred_check
        %p303 = pneg %p143
      $region38: #{makeup_distillation_forward.21} parent=35 // pred_check_branch
        %305 = sbr.rel (%p303) target = $region40
      $region39: #{makeup_distillation_forward.21} parent=35 // pred_region
        %s306 = smul.u32 4, %s20
      $region40: #{makeup_distillation_forward.21} parent=35 // pred_fallthru
        _
    $region36: #{makeup_distillation_forward.21} parent=5 // pred_fallthru
      _
    %p307 = scmp.le.s32.totalorder 2, %s10
    // Predicated region
    $region41: #{makeup_distillation_forward.21} parent=5 // pred_check
      %p308 = pneg %p307
    $region42: #{makeup_distillation_forward.21} parent=5 // pred_check_branch
      %310 = sbr.rel (%p308) target = $region44
    $region43: #{makeup_distillation_forward.21} parent=5 // pred_region
      %s311 = ssub.s32 %s10, 2
      // Predicated region
      $region45: #{makeup_distillation_forward.21} parent=43 // pred_check
        %p312 = pneg %p149
      $region46: #{makeup_distillation_forward.21} parent=43 // pred_check_branch
        %314 = sbr.rel (%p312) target = $region48
      $region47: #{makeup_distillation_forward.21} parent=43 // pred_region
        %s315 = smul.u32 4, %s22
        %p316 = scmp.lt.s32.totalorder %s21, 1
        %s317 = scalar_select %p316, %s21, 1
        %p318 = scmp.lt.s32.totalorder %s315, 7
        %s319 = scalar_select %p318, %s315, 7
        %s320 = smul.addr %s317, 8
        %s321 = sadd.s32 %s319, %s320
        %s322 = smul.addr %s321, 4
        %s323 = scalar_lea.vmem %s4, %s322
      $region48: #{makeup_distillation_forward.21} parent=43 // pred_fallthru
        _
    $region44: #{makeup_distillation_forward.21} parent=5 // pred_fallthru
      _
  $region6: #{makeup_distillation_forward.21} parent=0 // loop_footer
    %s14 = sadd.s32 1, %s10
  $region7: #{makeup_distillation_forward.21} parent=0 // loop_footer_branch
    %9 = sbr.rel target = $region3
  $region8: #{makeup_distillation_forward.21} parent=0 // loop_exit
    _

// kernel: makeup_distillation_forward.23
$region0: #{makeup_distillation_forward.23}
  #allocation0 [shape = 'u32[]', space=smem, size = 0x4, offset = 0x4, fixed_abs, tag = 'smem constant byte address 0x4 - core index']
  #allocation1 [shape = 'u32[72,128]{1,0:T(1,128)}', space=vmem, size = 0x9000, scoped, tag = 'internal scratch']
  %s0 = inlined_call_operand.vmem [shape: f32[2,4,4,128], index: 0, kind: input, shape index: {}]
  %s1 = inlined_call_operand.vmem [shape: f32[2,2,128], index: 1, kind: input, shape index: {}]
  %s2 = inlined_call_operand.vmem [shape: f32[1,128], index: 2, kind: input, shape index: {}]
  %s3 = inlined_call_operand.vmem [shape: f32[1,128], index: 3, kind: input, shape index: {}]
  %s4 = inlined_call_operand.vmem [shape: bf16[2,4,4,128], index: 4, kind: output, shape index: {}]
  %s5 = sld [smem:[#allocation0]]
  $region49: #{makeup_distillation_forward.23} parent=0
    _
  %s7 = ssub.s32 1, %s5
  %s8 = scalar_select 0, %s7, %s5
  loop: start=0, step=1, limit=6
  $region2: #{makeup_distillation_forward.23} parent=0 // loop_pre_header
    _
  $region3: #{makeup_distillation_forward.23} parent=0 // loop_header
    %s10 = sphi 0, %s14
    %p11 = scmp.ge.s32.totalorder %s10, 6
    %s17 = sphi 0, %s29
    %s18 = sphi 0, %s25
    %s19 = sphi 0, %s17
    %s20 = sphi 0, %s18
    %s21 = sphi 0, %s19
    %s22 = sphi 0, %s20
    %s34 = sphi 0, %s36
    %s37 = sphi 0, %s34
    %s38 = sphi 0, %s37
    %s54 = sphi 0, %s38
    %s60 = sphi 0, %s62
    %s63 = sphi 0, %s60
    %s64 = sphi 0, %s63
    %s80 = sphi 0, %s64
    %s84 = sphi 0, %s84
    %s86 = sphi 0, %s84
    %s87 = sphi 0, %s86
    %s101 = sphi 0, %s87
    %s105 = sphi 0, %s105
    %s107 = sphi 0, %s105
    %s108 = sphi 0, %s107
    %s122 = sphi 0, %s108
    %s130 = sphi 0, %s132
    %s133 = sphi 0, %s130
    %s134 = sphi 0, %s133
    %s150 = sphi 0, %s134
  $region4: #{makeup_distillation_forward.23} parent=0 // loop_header_branch
    %13 = sbr.rel (%p11) target = $region8
  $region5: #{makeup_distillation_forward.23} parent=0 // loop_body
    %s15 = ssub.s32 %s10, 1
    %s16 = ssub.s32 %s10, 2
    %s23 = sadd.s32 1, %s18
    %p24 = scmp.ge.s32.totalorder %s23, 2
    %s25 = scalar_select %p24, 0, %s23
    %s26 = sadd.s32 1, %s17
    %s27 = scalar_select %p24, %s26, %s17
    %p28 = scmp.ge.s32.totalorder %s27, 2
    %s29 = scalar_select %p28, 0, %s27
    %s30 = ssub.s32 %s17, %s29
    %s31 = ssub.s32 %s18, %s25
    %s32 = sor.u32 %s30, %s31
    %p33 = scmp.eq.s32.totalorder %s32, 0
    %s35 = sadd.s32 %s34, 1
    %s36 = scalar_select %p33, %s34, %s35
    %p39 = pneg %p33
    %p40 = scmp.eq.s32.totalorder %s10, 3
    %p41 = por %p39, %p40
    %p42 = scmp.ne.s32.totalorder %s34, %s37
    %p43 = scmp.eq.s32.totalorder %s10, 0
    %p44 = por %p42, %p43
    %p45 = scmp.ne.s32.totalorder %s34, %s37
    %p46 = scmp.eq.s32.totalorder %s15, 3
    %p47 = por %p45, %p46
    %p48 = scmp.ne.s32.totalorder %s37, %s38
    %p49 = scmp.eq.s32.totalorder %s15, 0
    %p50 = por %p48, %p49
    %p51 = scmp.ne.s32.totalorder %s37, %s38
    %p52 = scmp.eq.s32.totalorder %s16, 3
    %p53 = por %p51, %p52
    %p55 = scmp.ne.s32.totalorder %s38, %s54
    %p56 = scmp.eq.s32.totalorder %s16, 0
    %p57 = por %p55, %p56
    %s58 = ssub.s32 %s17, %s29
    %p59 = scmp.eq.s32.totalorder %s58, 0
    %s61 = sadd.s32 %s60, 1
    %s62 = scalar_select %p59, %s60, %s61
    %p65 = pneg %p59
    %p66 = scmp.eq.s32.totalorder %s10, 3
    %p67 = por %p65, %p66
    %p68 = scmp.ne.s32.totalorder %s60, %s63
    %p69 = scmp.eq.s32.totalorder %s10, 0
    %p70 = por %p68, %p69
    %p71 = scmp.ne.s32.totalorder %s60, %s63
    %p72 = scmp.eq.s32.totalorder %s15, 3
    %p73 = por %p71, %p72
    %p74 = scmp.ne.s32.totalorder %s63, %s64
    %p75 = scmp.eq.s32.totalorder %s15, 0
    %p76 = por %p74, %p75
    %p77 = scmp.ne.s32.totalorder %s63, %s64
    %p78 = scmp.eq.s32.totalorder %s16, 3
    %p79 = por %p77, %p78
    %p81 = scmp.ne.s32.totalorder %s64, %s80
    %p82 = scmp.eq.s32.totalorder %s16, 0
    %p83 = por %p81, %p82
    %s85 = sadd.s32 %s84, 1
    %p88 = scmp.eq.s32.totalorder %s10, 3
    %p89 = scmp.ne.s32.totalorder %s84, %s86
    %p90 = scmp.eq.s32.totalorder %s10, 0
    %p91 = por %p89, %p90
    %p92 = scmp.ne.s32.totalorder %s84, %s86
    %p93 = scmp.eq.s32.totalorder %s15, 3
    %p94 = por %p92, %p93
    %p95 = scmp.ne.s32.totalorder %s86, %s87
    %p96 = scmp.eq.s32.totalorder %s15, 0
    %p97 = por %p95, %p96
    %p98 = scmp.ne.s32.totalorder %s86, %s87
    %p99 = scmp.eq.s32.totalorder %s16, 3
    %p100 = por %p98, %p99
    %p102 = scmp.ne.s32.totalorder %s87, %s101
    %p103 = scmp.eq.s32.totalorder %s16, 0
    %p104 = por %p102, %p103
    %s106 = sadd.s32 %s105, 1
    %p109 = scmp.eq.s32.totalorder %s10, 3
    %p110 = scmp.ne.s32.totalorder %s105, %s107
    %p111 = scmp.eq.s32.totalorder %s10, 0
    %p112 = por %p110, %p111
    %p113 = scmp.ne.s32.totalorder %s105, %s107
    %p114 = scmp.eq.s32.totalorder %s15, 3
    %p115 = por %p113, %p114
    %p116 = scmp.ne.s32.totalorder %s107, %s108
    %p117 = scmp.eq.s32.totalorder %s15, 0
    %p118 = por %p116, %p117
    %p119 = scmp.ne.s32.totalorder %s107, %s108
    %p120 = scmp.eq.s32.totalorder %s16, 3
    %p121 = por %p119, %p120
    %p123 = scmp.ne.s32.totalorder %s108, %s122
    %p124 = scmp.eq.s32.totalorder %s16, 0
    %p125 = por %p123, %p124
    %s126 = ssub.s32 %s17, %s29
    %s127 = ssub.s32 %s18, %s25
    %s128 = sor.u32 %s126, %s127
    %p129 = scmp.eq.s32.totalorder %s128, 0
    %s131 = sadd.s32 %s130, 1
    %s132 = scalar_select %p129, %s130, %s131
    %p135 = pneg %p129
    %p136 = scmp.eq.s32.totalorder %s10, 3
    %p137 = por %p135, %p136
    %p138 = scmp.ne.s32.totalorder %s130, %s133
    %p139 = scmp.eq.s32.totalorder %s10, 0
    %p140 = por %p138, %p139
    %p141 = scmp.ne.s32.totalorder %s130, %s133
    %p142 = scmp.eq.s32.totalorder %s15, 3
    %p143 = por %p141, %p142
    %p144 = scmp.ne.s32.totalorder %s133, %s134
    %p145 = scmp.eq.s32.totalorder %s15, 0
    %p146 = por %p144, %p145
    %p147 = scmp.ne.s32.totalorder %s133, %s134
    %p148 = scmp.eq.s32.totalorder %s16, 3
    %p149 = por %p147, %p148
    %p151 = scmp.ne.s32.totalorder %s134, %s150
    %p152 = scmp.eq.s32.totalorder %s16, 0
    %p153 = por %p151, %p152
    %p154 = scmp.le.s32.totalorder 1, %s10
    %p155 = scmp.lt.s32.totalorder %s10, 5
    %p156 = pnand %p154, %p155
    %p157 = pneg %p156
    // Predicated region
    $region9: #{makeup_distillation_forward.23} parent=5 // pred_check
      _
    $region10: #{makeup_distillation_forward.23} parent=5 // pred_check_branch
      %159 = sbr.rel (%p156) target = $region12
    $region11: #{makeup_distillation_forward.23} parent=5 // pred_region
      %s160 = ssub.s32 %s10, 1
      // Predicated region
      $region13: #{makeup_distillation_forward.23} parent=11 // pred_check
        %p161 = pneg %p97
      $region14: #{makeup_distillation_forward.23} parent=11 // pred_check_branch
        %163 = sbr.rel (%p161) target = $region16
      $region15: #{makeup_distillation_forward.23} parent=11 // pred_region
        _
      $region16: #{makeup_distillation_forward.23} parent=11 // pred_fallthru
        _
      // Predicated region
      $region17: #{makeup_distillation_forward.23} parent=11 // pred_check
        %p164 = pneg %p118
      $region18: #{makeup_distillation_forward.23} parent=11 // pred_check_branch
        %166 = sbr.rel (%p164) target = $region20
      $region19: #{makeup_distillation_forward.23} parent=11 // pred_region
        _
      $region20: #{makeup_distillation_forward.23} parent=11 // pred_fallthru
        _
    $region12: #{makeup_distillation_forward.23} parent=5 // pred_fallthru
      _
    %p167 = scmp.lt.s32.totalorder %s10, 4
    // Predicated region
    $region21: #{makeup_distillation_forward.23} parent=5 // pred_check
      %p168 = pneg %p167
    $region22: #{makeup_distillation_forward.23} parent=5 // pred_check_branch
      %170 = sbr.rel (%p168) target = $region24
    $region23: #{makeup_distillation_forward.23} parent=5 // pred_region
      // Predicated region
      $region25: #{makeup_distillation_forward.23} parent=23 // pred_check
        %p171 = pneg %p44
      $region26: #{makeup_distillation_forward.23} parent=23 // pred_check_branch
        %173 = sbr.rel (%p171) target = $region28
      $region27: #{makeup_distillation_forward.23} parent=23 // pred_region
        %s174 = smul.u32 2, %s18
        %p175 = scmp.lt.s32.totalorder %s17, 1
        %s176 = scalar_select %p175, %s17, 1
        %p177 = scmp.lt.s32.totalorder %s174, 3
        %s178 = scalar_select %p177, %s174, 3
        %s179 = smul.addr %s176, 4
        %s180 = sadd.s32 %s178, %s179
        %s181 = smul.addr %s180, 4
        %s182 = scalar_lea.vmem %s0, %s181
        %s183 = smul.u32 2, %s18
      $region28: #{makeup_distillation_forward.23} parent=23 // pred_fallthru
        _
      // Predicated region
      $region29: #{makeup_distillation_forward.23} parent=23 // pred_check
        %p184 = pneg %p70
      $region30: #{makeup_distillation_forward.23} parent=23 // pred_check_branch
        %186 = sbr.rel (%p184) target = $region32
      $region31: #{makeup_distillation_forward.23} parent=23 // pred_region
        %p187 = scmp.lt.s32.totalorder %s17, 1
        %s188 = scalar_select %p187, %s17, 1
        %s189 = smul.addr %s188, 2
        %s190 = scalar_lea.vmem %s1, %s189
      $region32: #{makeup_distillation_forward.23} parent=23 // pred_fallthru
        _
    $region24: #{makeup_distillation_forward.23} parent=5 // pred_fallthru
      _
    %p191 = scmp.le.s32.totalorder 1, %s10
    %p192 = scmp.lt.s32.totalorder %s10, 5
    %p193 = pnand %p191, %p192
    %p194 = pneg %p193
    // Predicated region
    $region33: #{makeup_distillation_forward.23} parent=5 // pred_check
      _
    $region34: #{makeup_distillation_forward.23} parent=5 // pred_check_branch
      %196 = sbr.rel (%p193) target = $region36
    $region35: #{makeup_distillation_forward.23} parent=5 // pred_region
      %s197 = ssub.s32 %s10, 1
      %s198 = smul.u32 2, %s20
      %p199 = scmp.lt.s32.totalorder %s19, 1
      %s200 = scalar_select %p199, %s19, 1
      %p201 = scmp.lt.s32.totalorder %s198, 3
      %s202 = scalar_select %p201, %s198, 3
      %s203 = smul.addr %s200, 4
      %s204 = sadd.s32 %s202, %s203
      %s205 = smul.addr %s204, 4
      %s206 = scalar_lea.vmem %s0, %s205
      %p207 = pneg %p50
      %p208 = pneg %p47
      %p209 = scmp.lt.s32.totalorder %s19, 1
      %s210 = scalar_select %p209, %s19, 1
      %s211 = smul.addr %s210, 2
      %s212 = scalar_lea.vmem %s1, %s211
      %p213 = pneg %p76
      %p214 = pneg %p73
      %p215 = pneg %p97
      %p216 = pneg %p94
      %p217 = pneg %p118
      %p218 = pneg %p115
      %p219 = pneg %p146
      %p220 = pneg %p143
      %s221 = smul.u32 2, %s20
      %p222 = scmp.lt.s32.totalorder %s19, 1
      %s223 = scalar_select %p222, %s19, 1
      %p224 = scmp.lt.s32.totalorder %s221, 3
      %s225 = scalar_select %p224, %s221, 3
      %s226 = smul.addr %s223, 4
      %s227 = sadd.s32 %s225, %s226
      %s228 = smul.addr %s227, 2
      %s229 = scalar_lea.vmem %s4, %s228
      %s230 = smul.u32 2, %s20
      %p231 = scmp.lt.s32.totalorder %s19, 1
      %s232 = scalar_select %p231, %s19, 1
      %p233 = scmp.lt.s32.totalorder %s230, 3
      %s234 = scalar_select %p233, %s230, 3
      %s235 = smul.addr %s232, 4
      %s236 = sadd.s32 %s234, %s235
      %s237 = smul.addr %s236, 4
      %s238 = scalar_lea.vmem %s0, %s237
      %s239 = smul.u32 2, %s20
      %p240 = scmp.lt.s32.totalorder %s19, 1
      %s241 = scalar_select %p240, %s19, 1
      %s242 = smul.addr %s241, 2
      %s243 = scalar_lea.vmem %s1, %s242
      %s244 = smul.u32 2, %s20
      %p245 = scmp.lt.s32.totalorder %s19, 1
      %s246 = scalar_select %p245, %s19, 1
      %p247 = scmp.lt.s32.totalorder %s244, 3
      %s248 = scalar_select %p247, %s244, 3
      %s249 = smul.addr %s246, 4
      %s250 = sadd.s32 %s248, %s249
      %s251 = smul.addr %s250, 2
      %s252 = scalar_lea.vmem %s4, %s251
      %s253 = smul.u32 2, %s20
      %v254 = vld [vmem:[%s238] sm:$0xf]
      %v255 = vld [vmem:[%s238 + $0x4] sm:$0xf]
      %v256 = vld [vmem:[%s243] sm:$0x3]
      %v257 = vperm.slane %v256, 0
      %v258 = vsub.f32 %v254, %v257
      %v259 = vsub.f32 %v255, %v257
      %v260 = vld [vmem:[%s2] sm:$0x1]
      %v262 = vperm.slane %v260, 0
      %v264 = vmul.f32 %v256, %v262
      %v265 = vperm.slane %v264, 1
      %v266 = vmul.f32 %v258, %v265
      %v267 = vmul.f32 %v259, %v265
      %v268 = vld [vmem:[%s3] sm:$0x1]
      %v270 = vperm.slane %v268, 0
      %v272 = vadd.f32 %v266, %v270
      %v273 = vadd.f32 %v267, %v270
      %v274 = vmax.f32 %v272, 0.0
      %v275 = vmax.f32 %v273, 0.0
      %v276 = vpack.c.bf16 %v274, %v274
      %v277 = vpack.c.bf16 %v275, %v275
      %278 = vst [vmem:[%s252] sm:$0x3] %v276
      %279 = vst [vmem:[%s252 + $0x2] sm:$0x3] %v277
      %s280 = smul.u32 2, %s20
      %p281 = scmp.lt.s32.totalorder %s19, 1
      %s282 = scalar_select %p281, %s19, 1
      %p283 = scmp.lt.s32.totalorder %s280, 3
      %s284 = scalar_select %p283, %s280, 3
      %s285 = smul.addr %s282, 4
      %s286 = sadd.s32 %s284, %s285
      %s287 = smul.addr %s286, 2
      %s288 = scalar_lea.vmem %s4, %s287
      // Predicated region
      $region37: #{makeup_distillation_forward.23} parent=35 // pred_check
        %p289 = pneg %p143
      $region38: #{makeup_distillation_forward.23} parent=35 // pred_check_branch
        %291 = sbr.rel (%p289) target = $region40
      $region39: #{makeup_distillation_forward.23} parent=35 // pred_region
        %s292 = smul.u32 2, %s20
      $region40: #{makeup_distillation_forward.23} parent=35 // pred_fallthru
        _
    $region36: #{makeup_distillation_forward.23} parent=5 // pred_fallthru
      _
    %p293 = scmp.le.s32.totalorder 2, %s10
    // Predicated region
    $region41: #{makeup_distillation_forward.23} parent=5 // pred_check
      %p294 = pneg %p293
    $region42: #{makeup_distillation_forward.23} parent=5 // pred_check_branch
      %296 = sbr.rel (%p294) target = $region44
    $region43: #{makeup_distillation_forward.23} parent=5 // pred_region
      %s297 = ssub.s32 %s10, 2
      // Predicated region
      $region45: #{makeup_distillation_forward.23} parent=43 // pred_check
        %p298 = pneg %p149
      $region46: #{makeup_distillation_forward.23} parent=43 // pred_check_branch
        %300 = sbr.rel (%p298) target = $region48
      $region47: #{makeup_distillation_forward.23} parent=43 // pred_region
        %s301 = smul.u32 2, %s22
        %p302 = scmp.lt.s32.totalorder %s21, 1
        %s303 = scalar_select %p302, %s21, 1
        %p304 = scmp.lt.s32.totalorder %s301, 3
        %s305 = scalar_select %p304, %s301, 3
        %s306 = smul.addr %s303, 4
        %s307 = sadd.s32 %s305, %s306
        %s308 = smul.addr %s307, 2
        %s309 = scalar_lea.vmem %s4, %s308
      $region48: #{makeup_distillation_forward.23} parent=43 // pred_fallthru
        _
    $region44: #{makeup_distillation_forward.23} parent=5 // pred_fallthru
      _
  $region6: #{makeup_distillation_forward.23} parent=0 // loop_footer
    %s14 = sadd.s32 1, %s10
  $region7: #{makeup_distillation_forward.23} parent=0 // loop_footer_branch
    %9 = sbr.rel target = $region3
  $region8: #{makeup_distillation_forward.23} parent=0 // loop_exit
    _

// kernel: makeup_distillation_forward.22
$region0: #{makeup_distillation_forward.22}
  #allocation0 [shape = 'u32[]', space=smem, size = 0x4, offset = 0x4, fixed_abs, tag = 'smem constant byte address 0x4 - core index']
  #allocation1 [shape = 'u32[72,128]{1,0:T(1,128)}', space=vmem, size = 0x9000, scoped, tag = 'internal scratch']
  #allocation2 [shape = 'f32[1,128]{1,0:T(1,128)}', space=vmem, size = 0x200, scoped, tag = 'scratch operand']
  #allocation3 [shape = 'f32[1,128]{1,0:T(1,128)}', space=vmem, size = 0x200, scoped, tag = 'scratch operand']
  %s0 = inlined_call_operand.vmem [shape: bf16[2,5,5,128], index: 0, kind: input, shape index: {}]
  %s1 = inlined_call_operand.vmem [shape: bf16[4,128,128], index: 1, kind: input, shape index: {}]
  %s2 = inlined_call_operand.vmem [shape: f32[2,4,4,128], index: 2, kind: output, shape index: {0}]
  %s3 = inlined_call_operand.vmem [shape: f32[2,2,128], index: 3, kind: output, shape index: {1}]
  %4 = xla_tuple %s2, %s3
  %s5 = sld [smem:[#allocation0]]
  $region64: #{makeup_distillation_forward.22} parent=0
    _
  %s7 = ssub.s32 1, %s5
  %s8 = scalar_select 0, %s7, %s5
  loop: start=0, step=1, limit=6
  $region2: #{makeup_distillation_forward.22} parent=0 // loop_pre_header
    _
  $region3: #{makeup_distillation_forward.22} parent=0 // loop_header
    %s10 = sphi 0, %s14
    %p11 = scmp.ge.s32.totalorder %s10, 6
    %s17 = sphi 0, %s29
    %s18 = sphi 0, %s25
    %s19 = sphi 0, %s17
    %s20 = sphi 0, %s18
    %s21 = sphi 0, %s19
    %s22 = sphi 0, %s20
    %s32 = sphi 0, %s34
    %s35 = sphi 0, %s32
    %s36 = sphi 0, %s35
    %s52 = sphi 0, %s36
    %s56 = sphi 0, %s56
    %s58 = sphi 0, %s56
    %s59 = sphi 0, %s58
    %s73 = sphi 0, %s59
    %s81 = sphi 0, %s83
    %s84 = sphi 0, %s81
    %s85 = sphi 0, %s84
    %s101 = sphi 0, %s85
    %s107 = sphi 0, %s109
    %s110 = sphi 0, %s107
    %s111 = sphi 0, %s110
    %s127 = sphi 0, %s111
  $region4: #{makeup_distillation_forward.22} parent=0 // loop_header_branch
    %13 = sbr.rel (%p11) target = $region8
  $region5: #{makeup_distillation_forward.22} parent=0 // loop_body
    %s15 = ssub.s32 %s10, 1
    %s16 = ssub.s32 %s10, 2
    %s23 = sadd.s32 1, %s18
    %p24 = scmp.ge.s32.totalorder %s23, 2
    %s25 = scalar_select %p24, 0, %s23
    %s26 = sadd.s32 1, %s17
    %s27 = scalar_select %p24, %s26, %s17
    %p28 = scmp.ge.s32.totalorder %s27, 2
    %s29 = scalar_select %p28, 0, %s27
    %s30 = ssub.s32 %s17, %s29
    %p31 = scmp.eq.s32.totalorder %s30, 0
    %s33 = sadd.s32 %s32, 1
    %s34 = scalar_select %p31, %s32, %s33
    %p37 = pneg %p31
    %p38 = scmp.eq.s32.totalorder %s10, 3
    %p39 = por %p37, %p38
    %p40 = scmp.ne.s32.totalorder %s32, %s35
    %p41 = scmp.eq.s32.totalorder %s10, 0
    %p42 = por %p40, %p41
    %p43 = scmp.ne.s32.totalorder %s32, %s35
    %p44 = scmp.eq.s32.totalorder %s15, 3
    %p45 = por %p43, %p44
    %p46 = scmp.ne.s32.totalorder %s35, %s36
    %p47 = scmp.eq.s32.totalorder %s15, 0
    %p48 = por %p46, %p47
    %p49 = scmp.ne.s32.totalorder %s35, %s36
    %p50 = scmp.eq.s32.totalorder %s16, 3
    %p51 = por %p49, %p50
    %p53 = scmp.ne.s32.totalorder %s36, %s52
    %p54 = scmp.eq.s32.totalorder %s16, 0
    %p55 = por %p53, %p54
    %s57 = sadd.s32 %s56, 1
    %p60 = scmp.eq.s32.totalorder %s10, 3
    %p61 = scmp.ne.s32.totalorder %s56, %s58
    %p62 = scmp.eq.s32.totalorder %s10, 0
    %p63 = por %p61, %p62
    %p64 = scmp.ne.s32.totalorder %s56, %s58
    %p65 = scmp.eq.s32.totalorder %s15, 3
    %p66 = por %p64, %p65
    %p67 = scmp.ne.s32.totalorder %s58, %s59
    %p68 = scmp.eq.s32.totalorder %s15, 0
    %p69 = por %p67, %p68
    %p70 = scmp.ne.s32.totalorder %s58, %s59
    %p71 = scmp.eq.s32.totalorder %s16, 3
    %p72 = por %p70, %p71
    %p74 = scmp.ne.s32.totalorder %s59, %s73
    %p75 = scmp.eq.s32.totalorder %s16, 0
    %p76 = por %p74, %p75
    %s77 = ssub.s32 %s17, %s29
    %s78 = ssub.s32 %s18, %s25
    %s79 = sor.u32 %s77, %s78
    %p80 = scmp.eq.s32.totalorder %s79, 0
    %s82 = sadd.s32 %s81, 1
    %s83 = scalar_select %p80, %s81, %s82
    %p86 = pneg %p80
    %p87 = scmp.eq.s32.totalorder %s10, 3
    %p88 = por %p86, %p87
    %p89 = scmp.ne.s32.totalorder %s81, %s84
    %p90 = scmp.eq.s32.totalorder %s10, 0
    %p91 = por %p89, %p90
    %p92 = scmp.ne.s32.totalorder %s81, %s84
    %p93 = scmp.eq.s32.totalorder %s15, 3
    %p94 = por %p92, %p93
    %p95 = scmp.ne.s32.totalorder %s84, %s85
    %p96 = scmp.eq.s32.totalorder %s15, 0
    %p97 = por %p95, %p96
    %p98 = scmp.ne.s32.totalorder %s84, %s85
    %p99 = scmp.eq.s32.totalorder %s16, 3
    %p100 = por %p98, %p99
    %p102 = scmp.ne.s32.totalorder %s85, %s101
    %p103 = scmp.eq.s32.totalorder %s16, 0
    %p104 = por %p102, %p103
    %s105 = ssub.s32 %s17, %s29
    %p106 = scmp.eq.s32.totalorder %s105, 0
    %s108 = sadd.s32 %s107, 1
    %s109 = scalar_select %p106, %s107, %s108
    %p112 = pneg %p106
    %p113 = scmp.eq.s32.totalorder %s10, 3
    %p114 = por %p112, %p113
    %p115 = scmp.ne.s32.totalorder %s107, %s110
    %p116 = scmp.eq.s32.totalorder %s10, 0
    %p117 = por %p115, %p116
    %p118 = scmp.ne.s32.totalorder %s107, %s110
    %p119 = scmp.eq.s32.totalorder %s15, 3
    %p120 = por %p118, %p119
    %p121 = scmp.ne.s32.totalorder %s110, %s111
    %p122 = scmp.eq.s32.totalorder %s15, 0
    %p123 = por %p121, %p122
    %p124 = scmp.ne.s32.totalorder %s110, %s111
    %p125 = scmp.eq.s32.totalorder %s16, 3
    %p126 = por %p124, %p125
    %p128 = scmp.ne.s32.totalorder %s111, %s127
    %p129 = scmp.eq.s32.totalorder %s16, 0
    %p130 = por %p128, %p129
    %p131 = scmp.le.s32.totalorder 1, %s10
    %p132 = scmp.lt.s32.totalorder %s10, 5
    %p133 = pnand %p131, %p132
    %p134 = pneg %p133
    // Predicated region
    $region9: #{makeup_distillation_forward.22} parent=5 // pred_check
      _
    $region10: #{makeup_distillation_forward.22} parent=5 // pred_check_branch
      %136 = sbr.rel (%p133) target = $region12
    $region11: #{makeup_distillation_forward.22} parent=5 // pred_region
      %s137 = ssub.s32 %s10, 1
      // Predicated region
      $region13: #{makeup_distillation_forward.22} parent=11 // pred_check
        %p138 = pneg %p69
      $region14: #{makeup_distillation_forward.22} parent=11 // pred_check_branch
        %140 = sbr.rel (%p138) target = $region16
      $region15: #{makeup_distillation_forward.22} parent=11 // pred_region
        _
      $region16: #{makeup_distillation_forward.22} parent=11 // pred_fallthru
        _
    $region12: #{makeup_distillation_forward.22} parent=5 // pred_fallthru
      _
    %p141 = scmp.lt.s32.totalorder %s10, 4
    // Predicated region
    $region17: #{makeup_distillation_forward.22} parent=5 // pred_check
      %p142 = pneg %p141
    $region18: #{makeup_distillation_forward.22} parent=5 // pred_check_branch
      %144 = sbr.rel (%p142) target = $region20
    $region19: #{makeup_distillation_forward.22} parent=5 // pred_region
      // Predicated region
      $region21: #{makeup_distillation_forward.22} parent=19 // pred_check
        %p145 = pneg %p42
      $region22: #{makeup_distillation_forward.22} parent=19 // pred_check_branch
        %147 = sbr.rel (%p145) target = $region24
      $region23: #{makeup_distillation_forward.22} parent=19 // pred_region
        %p148 = scmp.lt.s32.totalorder %s17, 1
        %s149 = scalar_select %p148, %s17, 1
        %s150 = smul.addr %s149, 5
        %s151 = smul.addr %s150, 4
        %s152 = scalar_lea.vmem %s0, %s151
      $region24: #{makeup_distillation_forward.22} parent=19 // pred_fallthru
        _
    $region20: #{makeup_distillation_forward.22} parent=5 // pred_fallthru
      _
    %p153 = scmp.le.s32.totalorder 1, %s10
    %p154 = scmp.lt.s32.totalorder %s10, 5
    %p155 = pnand %p153, %p154
    %p156 = pneg %p155
    // Predicated region
    $region25: #{makeup_distillation_forward.22} parent=5 // pred_check
      _
    $region26: #{makeup_distillation_forward.22} parent=5 // pred_check_branch
      %158 = sbr.rel (%p155) target = $region28
    $region27: #{makeup_distillation_forward.22} parent=5 // pred_region
      %s159 = ssub.s32 %s10, 1
      %p160 = scmp.lt.s32.totalorder %s19, 1
      %s161 = scalar_select %p160, %s19, 1
      %s162 = smul.addr %s161, 5
      %s163 = smul.addr %s162, 4
      %s164 = scalar_lea.vmem %s0, %s163
      %p165 = pneg %p48
      %p166 = pneg %p45
      %p167 = pneg %p69
      %p168 = pneg %p66
      %p169 = pneg %p97
      %p170 = pneg %p94
      %s171 = smul.u32 2, %s20
      %p172 = scmp.lt.s32.totalorder %s19, 1
      %s173 = scalar_select %p172, %s19, 1
      %p174 = scmp.lt.s32.totalorder %s171, 3
      %s175 = scalar_select %p174, %s171, 3
      %s176 = smul.addr %s173, 4
      %s177 = sadd.s32 %s175, %s176
      %s178 = smul.addr %s177, 4
      %s179 = scalar_lea.vmem %s2, %s178
      %p180 = pneg %p123
      %p181 = pneg %p120
      %p182 = scmp.lt.s32.totalorder %s19, 1
      %s183 = scalar_select %p182, %s19, 1
      %s184 = smul.addr %s183, 2
      %s185 = scalar_lea.vmem %s3, %s184
      %p186 = scmp.lt.s32.totalorder %s19, 1
      %s187 = scalar_select %p186, %s19, 1
      %s188 = smul.addr %s187, 5
      %s189 = smul.addr %s188, 4
      %s190 = scalar_lea.vmem %s0, %s189
      %s191 = smul.u32 2, %s20
      %p192 = scmp.lt.s32.totalorder %s19, 1
      %s193 = scalar_select %p192, %s19, 1
      %p194 = scmp.lt.s32.totalorder %s191, 3
      %s195 = scalar_select %p194, %s191, 3
      %s196 = smul.addr %s193, 4
      %s197 = sadd.s32 %s195, %s196
      %s198 = smul.addr %s197, 4
      %s199 = scalar_lea.vmem %s2, %s198
      %s200 = smul.u32 2, %s20
      %p201 = scmp.lt.s32.totalorder %s19, 1
      %s202 = scalar_select %p201, %s19, 1
      %s203 = smul.addr %s202, 2
      %s204 = scalar_lea.vmem %s3, %s203
      %p205 = scmp.eq.s32.totalorder %s20, 0
      // Predicated region
      $region29: #{makeup_distillation_forward.22} parent=27 // pred_check
        %p206 = pneg %p205
      $region30: #{makeup_distillation_forward.22} parent=27 // pred_check_branch
        %208 = sbr.rel (%p206) target = $region32
      $region31: #{makeup_distillation_forward.22} parent=27 // pred_region
        %209 = vst [vmem:[#allocation2] sm:$0x1] 0.0
        %210 = vst [vmem:[#allocation3] sm:$0x1] 0.0
      $region32: #{makeup_distillation_forward.22} parent=27 // pred_fallthru
        _
      %s211 = smul.u32 %s20, 2
      loop: start=0, step=1, limit=2
      $region33: #{makeup_distillation_forward.22} parent=27 // loop_pre_header
        _
      $region34: #{makeup_distillation_forward.22} parent=27 // loop_header
        %s213 = sphi 0, %s217
        %p214 = scmp.ge.s32.totalorder %s213, 2
      $region35: #{makeup_distillation_forward.22} parent=27 // loop_header_branch
        %216 = sbr.rel (%p214) target = $region39
      $region36: #{makeup_distillation_forward.22} parent=27 // loop_body
        %s218 = sadd.s32 %s211, %s213
        %s219 = smul.addr %s218, 4
        %s220 = scalar_lea.vmem %s190, %s219
        %v221 = vld [vmem:[%s220] sm:$0x3]
        %v222 = vld [vmem:[%s1] sm:$0xf]
        %v223 = vld [vmem:[%s1 + $0x4] sm:$0xf]
        %v224 = vld [vmem:[%s1 + $0x8] sm:$0xf]
        %v225 = vld [vmem:[%s1 + $0xc] sm:$0xf]
        %v226 = vld [vmem:[%s1 + $0x10] sm:$0xf]
        %v227 = vld [vmem:[%s1 + $0x14] sm:$0xf]
        %v228 = vld [vmem:[%s1 + $0x18] sm:$0xf]
        %v229 = vld [vmem:[%s1 + $0x1c] sm:$0xf]
        %v230 = vld [vmem:[%s1 + $0x20] sm:$0xf]
        %v231 = vld [vmem:[%s1 + $0x24] sm:$0xf]
        %v232 = vld [vmem:[%s1 + $0x28] sm:$0xf]
        %v233 = vld [vmem:[%s1 + $0x2c] sm:$0xf]
        %v234 = vld [vmem:[%s1 + $0x30] sm:$0xf]
        %v235 = vld [vmem:[%s1 + $0x34] sm:$0xf]
        %v236 = vld [vmem:[%s1 + $0x38] sm:$0xf]
        %v237 = vld [vmem:[%s1 + $0x3c] sm:$0xf]
        %v238 = vld [vmem:[%s220] sm:$0x7]
        %s239 = scalar_lea.vmem %s1, 64
        %v240 = vld [vmem:[%s239] sm:$0xf]
        %v241 = vld [vmem:[%s239 + $0x4] sm:$0xf]
        %v242 = vld [vmem:[%s239 + $0x8] sm:$0xf]
        %v243 = vld [vmem:[%s239 + $0xc] sm:$0xf]
        %v244 = vld [vmem:[%s239 + $0x10] sm:$0xf]
        %v245 = vld [vmem:[%s239 + $0x14] sm:$0xf]
        %v246 = vld [vmem:[%s239 + $0x18] sm:$0xf]
        %v247 = vld [vmem:[%s239 + $0x1c] sm:$0xf]
        %v248 = vld [vmem:[%s239 + $0x20] sm:$0xf]
        %v249 = vld [vmem:[%s239 + $0x24] sm:$0xf]
        %v250 = vld [vmem:[%s239 + $0x28] sm:$0xf]
        %v251 = vld [vmem:[%s239 + $0x2c] sm:$0xf]
        %v252 = vld [vmem:[%s239 + $0x30] sm:$0xf]
        %v253 = vld [vmem:[%s239 + $0x34] sm:$0xf]
        %v254 = vld [vmem:[%s239 + $0x38] sm:$0xf]
        %v255 = vld [vmem:[%s239 + $0x3c] sm:$0xf]
        %v257 = vunpack.c.l.b16 %v238
        %v258 = vpack.c.b16 %v257, %v257
        %v260 = vshrl.u32 %v258, 16
        %v262 = vshll.u32 %v258, 16
        %v264 = vrot.slane %v262, 1
        %v265 = vor.u32 %v260, %v264
        %v283 = vunpack.c.l.b16 %v240
        %v284 = vunpack.c.l.b16 %v241
        %v285 = vunpack.c.l.b16 %v242
        %v286 = vunpack.c.l.b16 %v243
        %v287 = vunpack.c.l.b16 %v244
        %v288 = vunpack.c.l.b16 %v245
        %v289 = vunpack.c.l.b16 %v246
        %v290 = vunpack.c.l.b16 %v247
        %v291 = vunpack.c.l.b16 %v248
        %v292 = vunpack.c.l.b16 %v249
        %v293 = vunpack.c.l.b16 %v250
        %v294 = vunpack.c.l.b16 %v251
        %v295 = vunpack.c.l.b16 %v252
        %v296 = vunpack.c.l.b16 %v253
        %v297 = vunpack.c.l.b16 %v254
        %v298 = vunpack.c.l.b16 %v255
        %v299 = vpack.c.b16 %v284, %v283
        %v300 = vpack.c.b16 %v286, %v285
        %v301 = vpack.c.b16 %v288, %v287
        %v302 = vpack.c.b16 %v290, %v289
        %v303 = vpack.c.b16 %v292, %v291
        %v304 = vpack.c.b16 %v294, %v293
        %v305 = vpack.c.b16 %v296, %v295
        %v306 = vpack.c.b16 %v298, %v297
        %315 = vmatpush.bf16.msra.mxu0 %v306
        %316 = vmatpush.bf16.msra.mxu0 %v305
        %317 = vmatpush.bf16.msra.mxu0 %v304
        %318 = vmatpush.bf16.msra.mxu0 %v303
        %319 = vmatpush.bf16.msra.mxu0 %v302
        %320 = vmatpush.bf16.msra.mxu0 %v301
        %321 = vmatpush.bf16.msra.mxu0 %v300
        %322 = vmatpush.bf16.msra.mxu0 %v299
        %323 = vmatmul.bf16.gmra.mxu0 %v265
        %v324 = vpop.f32.mrf.mxu0
        %v325 = vadd.f32 0.0, %v324
        %v326 = vpop.f32.mrf.mxu0
        %327 = vdwg.mxu0
        %v344 = vunpack.c.l.b16 %v222
        %v345 = vunpack.c.l.b16 %v223
        %v346 = vunpack.c.l.b16 %v224
        %v347 = vunpack.c.l.b16 %v225
        %v348 = vunpack.c.l.b16 %v226
        %v349 = vunpack.c.l.b16 %v227
        %v350 = vunpack.c.l.b16 %v228
        %v351 = vunpack.c.l.b16 %v229
        %v352 = vunpack.c.l.b16 %v230
        %v353 = vunpack.c.l.b16 %v231
        %v354 = vunpack.c.l.b16 %v232
        %v355 = vunpack.c.l.b16 %v233
        %v356 = vunpack.c.l.b16 %v234
        %v357 = vunpack.c.l.b16 %v235
        %v358 = vunpack.c.l.b16 %v236
        %v359 = vunpack.c.l.b16 %v237
        %v360 = vpack.c.b16 %v345, %v344
        %v361 = vpack.c.b16 %v347, %v346
        %v362 = vpack.c.b16 %v349, %v348
        %v363 = vpack.c.b16 %v351, %v350
        %v364 = vpack.c.b16 %v353, %v352
        %v365 = vpack.c.b16 %v355, %v354
        %v366 = vpack.c.b16 %v357, %v356
        %v367 = vpack.c.b16 %v359, %v358
        %376 = vmatpush.bf16.msra.mxu0 %v367
        %377 = vmatpush.bf16.msra.mxu0 %v366
        %378 = vmatpush.bf16.msra.mxu0 %v365
        %379 = vmatpush.bf16.msra.mxu0 %v364
        %380 = vmatpush.bf16.msra.mxu0 %v363
        %381 = vmatpush.bf16.msra.mxu0 %v362
        %382 = vmatpush.bf16.msra.mxu0 %v361
        %383 = vmatpush.bf16.msra.mxu0 %v360
        %384 = vmatmul.bf16.gmra.mxu0 %v221
        %v385 = vpop.f32.mrf.mxu0
        %v386 = vadd.f32 %v325, %v385
        %v387 = vpop.f32.mrf.mxu0
        %388 = vdwg.mxu0
        %s389 = sadd.s32 %s218, 1
        %s390 = smul.addr %s389, 4
        %s391 = scalar_lea.vmem %s190, %s390
        %v392 = vld [vmem:[%s391] sm:$0x3]
        %s393 = scalar_lea.vmem %s1, 128
        %v394 = vld [vmem:[%s393] sm:$0xf]
        %v395 = vld [vmem:[%s393 + $0x4] sm:$0xf]
        %v396 = vld [vmem:[%s393 + $0x8] sm:$0xf]
        %v397 = vld [vmem:[%s393 + $0xc] sm:$0xf]
        %v398 = vld [vmem:[%s393 + $0x10] sm:$0xf]
        %v399 = vld [vmem:[%s393 + $0x14] sm:$0xf]
        %v400 = vld [vmem:[%s393 + $0x18] sm:$0xf]
        %v401 = vld [vmem:[%s393 + $0x1c] sm:$0xf]
        %v402 = vld [vmem:[%s393 + $0x20] sm:$0xf]
        %v403 = vld [vmem:[%s393 + $0x24] sm:$0xf]
        %v404 = vld [vmem:[%s393 + $0x28] sm:$0xf]
        %v405 = vld [vmem:[%s393 + $0x2c] sm:$0xf]
        %v406 = vld [vmem:[%s393 + $0x30] sm:$0xf]
        %v407 = vld [vmem:[%s393 + $0x34] sm:$0xf]
        %v408 = vld [vmem:[%s393 + $0x38] sm:$0xf]
        %v409 = vld [vmem:[%s393 + $0x3c] sm:$0xf]
        %v426 = vunpack.c.l.b16 %v394
        %v427 = vunpack.c.l.b16 %v395
        %v428 = vunpack.c.l.b16 %v396
        %v429 = vunpack.c.l.b16 %v397
        %v430 = vunpack.c.l.b16 %v398
        %v431 = vunpack.c.l.b16 %v399
        %v432 = vunpack.c.l.b16 %v400
        %v433 = vunpack.c.l.b16 %v401
        %v434 = vunpack.c.l.b16 %v402
        %v435 = vunpack.c.l.b16 %v403
        %v436 = vunpack.c.l.b16 %v404
        %v437 = vunpack.c.l.b16 %v405
        %v438 = vunpack.c.l.b16 %v406
        %v439 = vunpack.c.l.b16 %v407
        %v440 = vunpack.c.l.b16 %v408
        %v441 = vunpack.c.l.b16 %v409
        %v442 = vpack.c.b16 %v427, %v426
        %v443 = vpack.c.b16 %v429, %v428
        %v444 = vpack.c.b16 %v431, %v430
        %v445 = vpack.c.b16 %v433, %v432
        %v446 = vpack.c.b16 %v435, %v434
        %v447 = vpack.c.b16 %v437, %v436
        %v448 = vpack.c.b16 %v439, %v438
        %v449 = vpack.c.b16 %v441, %v440
        %458 = vmatpush.bf16.msra.mxu0 %v449
        %459 = vmatpush.bf16.msra.mxu0 %v448
        %460 = vmatpush.bf16.msra.mxu0 %v447
        %461 = vmatpush.bf16.msra.mxu0 %v446
        %462 = vmatpush.bf16.msra.mxu0 %v445
        %463 = vmatpush.bf16.msra.mxu0 %v444
        %464 = vmatpush.bf16.msra.mxu0 %v443
        %465 = vmatpush.bf16.msra.mxu0 %v442
        %466 = vmatmul.bf16.gmra.mxu0 %v392
        %v467 = vpop.f32.mrf.mxu0
        %v468 = vadd.f32 0.0, %v467
        %v469 = vpop.f32.mrf.mxu0
        %470 = vdwg.mxu0
        %v471 = vadd.f32 %v386, %v468
        %v472 = vld [vmem:[%s391] sm:$0x7]
        %s473 = scalar_lea.vmem %s1, 192
        %v474 = vld [vmem:[%s473] sm:$0xf]
        %v475 = vld [vmem:[%s473 + $0x4] sm:$0xf]
        %v476 = vld [vmem:[%s473 + $0x8] sm:$0xf]
        %v477 = vld [vmem:[%s473 + $0xc] sm:$0xf]
        %v478 = vld [vmem:[%s473 + $0x10] sm:$0xf]
        %v479 = vld [vmem:[%s473 + $0x14] sm:$0xf]
        %v480 = vld [vmem:[%s473 + $0x18] sm:$0xf]
        %v481 = vld [vmem:[%s473 + $0x1c] sm:$0xf]
        %v482 = vld [vmem:[%s473 + $0x20] sm:$0xf]
        %v483 = vld [vmem:[%s473 + $0x24] sm:$0xf]
        %v484 = vld [vmem:[%s473 + $0x28] sm:$0xf]
        %v485 = vld [vmem:[%s473 + $0x2c] sm:$0xf]
        %v486 = vld [vmem:[%s473 + $0x30] sm:$0xf]
        %v487 = vld [vmem:[%s473 + $0x34] sm:$0xf]
        %v488 = vld [vmem:[%s473 + $0x38] sm:$0xf]
        %v489 = vld [vmem:[%s473 + $0x3c] sm:$0xf]
        %v491 = vunpack.c.l.b16 %v472
        %v492 = vpack.c.b16 %v491, %v491
        %v494 = vshrl.u32 %v492, 16
        %v496 = vshll.u32 %v492, 16
        %v498 = vrot.slane %v496, 1
        %v499 = vor.u32 %v494, %v498
        %v517 = vunpack.c.l.b16 %v474
        %v518 = vunpack.c.l.b16 %v475
        %v519 = vunpack.c.l.b16 %v476
        %v520 = vunpack.c.l.b16 %v477
        %v521 = vunpack.c.l.b16 %v478
        %v522 = vunpack.c.l.b16 %v479
        %v523 = vunpack.c.l.b16 %v480
        %v524 = vunpack.c.l.b16 %v481
        %v525 = vunpack.c.l.b16 %v482
        %v526 = vunpack.c.l.b16 %v483
        %v527 = vunpack.c.l.b16 %v484
        %v528 = vunpack.c.l.b16 %v485
        %v529 = vunpack.c.l.b16 %v486
        %v530 = vunpack.c.l.b16 %v487
        %v531 = vunpack.c.l.b16 %v488
        %v532 = vunpack.c.l.b16 %v489
        %v533 = vpack.c.b16 %v518, %v517
        %v534 = vpack.c.b16 %v520, %v519
        %v535 = vpack.c.b16 %v522, %v521
        %v536 = vpack.c.b16 %v524, %v523
        %v537 = vpack.c.b16 %v526, %v525
        %v538 = vpack.c.b16 %v528, %v527
        %v539 = vpack.c.b16 %v530, %v529
        %v540 = vpack.c.b16 %v532, %v531
        %549 = vmatpush.bf16.msra.mxu0 %v540
        %550 = vmatpush.bf16.msra.mxu0 %v539
        %551 = vmatpush.bf16.msra.mxu0 %v538
        %552 = vmatpush.bf16.msra.mxu0 %v537
        %553 = vmatpush.bf16.msra.mxu0 %v536
        %554 = vmatpush.bf16.msra.mxu0 %v535
        %555 = vmatpush.bf16.msra.mxu0 %v534
        %556 = vmatpush.bf16.msra.mxu0 %v533
        %557 = vmatmul.bf16.gmra.mxu0 %v499
        %v558 = vpop.f32.mrf.mxu0
        %v559 = vadd.f32 0.0, %v558
        %v560 = vpop.f32.mrf.mxu0
        %561 = vdwg.mxu0
        %v562 = vadd.f32 %v471, %v559
        %s563 = smul.u32 %s213, 4
        %s564 = scalar_lea.vmem %s199, %s563
        %565 = vst [vmem:[%s564] sm:$0xf] %v562
        %v566 = vld [vmem:[#allocation2] sm:$0x1]
        %vm567 = vcmask 1043456
        %v568 = vsel %vm567, %v562, 0.0
        %v569 = vrot.slane %v568, 4
        %v570 = vadd.f32 %v568, %v569
        %v571 = vrot.slane %v570, 2
        %v572 = vadd.f32 %v570, %v571
        %v573 = vrot.slane %v572, 1
        %v574 = vadd.f32 %v572, %v573
        %v575 = vadd.f32 %v566, %v574
        %576 = vst [vmem:[#allocation2] sm:$0x1] %v575
        %v577 = vld [vmem:[#allocation3] sm:$0x1]
        %v578 = vmul.f32 %v562, %v562
        %v579 = vsel %vm567, %v578, 0.0
        %v580 = vrot.slane %v579, 4
        %v581 = vadd.f32 %v579, %v580
        %v582 = vrot.slane %v581, 2
        %v583 = vadd.f32 %v581, %v582
        %v584 = vrot.slane %v583, 1
        %v585 = vadd.f32 %v583, %v584
        %v586 = vadd.f32 %v577, %v585
        %587 = vst [vmem:[#allocation3] sm:$0x1] %v586
      $region37: #{makeup_distillation_forward.22} parent=27 // loop_footer
        %s217 = sadd.s32 1, %s213
      $region38: #{makeup_distillation_forward.22} parent=27 // loop_footer_branch
        %212 = sbr.rel target = $region34
      $region39: #{makeup_distillation_forward.22} parent=27 // loop_exit
        _
      %p588 = scmp.eq.s32.totalorder %s20, 1
      // Predicated region
      $region40: #{makeup_distillation_forward.22} parent=27 // pred_check
        %p589 = pneg %p588
      $region41: #{makeup_distillation_forward.22} parent=27 // pred_check_branch
        %591 = sbr.rel (%p589) target = $region43
      $region42: #{makeup_distillation_forward.22} parent=27 // pred_region
        %v592 = vld [vmem:[#allocation2] sm:$0x1]
        %v593 = vmul.f32 %v592, 0.0625
        %v594 = vld [vmem:[#allocation3] sm:$0x1]
        %v595 = vmul.f32 %v594, 0.0625
        %v596 = vmul.f32 %v593, %v593
        %v597 = vsub.f32 %v595, %v596
        %v598 = vmax.f32 %v597, 0.0
        %v599 = vadd.f32 %v598, 1e-05
        %v600 = vrsqrt.pop %v599
        %v601 = vmul.f32 %v600, %v599
        %v602 = vmul.f32 %v601, %v600
        %v603 = vmul.f32 0.5, %v602
        %v604 = vsub.f32 1.5, %v603
        %v605 = vmul.f32 %v600, %v604
        %vm606 = vweird.f32 %v599
        %vm607 = vweird.f32 %v600
        %vm608 = vmor %vm606, %vm607
        %v609 = vsel %vm608, %v600, %v605
        %v611 = vperm.slane %v609, 0
        %vm613 = vcmask 1040384
        %v614 = vsel %vm613, %v593, %v611
        %615 = vst [vmem:[%s204] sm:$0x3] %v614
      $region43: #{makeup_distillation_forward.22} parent=27 // pred_fallthru
        _
      %s616 = smul.u32 2, %s20
      %p617 = scmp.lt.s32.totalorder %s19, 1
      %s618 = scalar_select %p617, %s19, 1
      %p619 = scmp.lt.s32.totalorder %s616, 3
      %s620 = scalar_select %p619, %s616, 3
      %s621 = smul.addr %s618, 4
      %s622 = sadd.s32 %s620, %s621
      %s623 = smul.addr %s622, 4
      %s624 = scalar_lea.vmem %s2, %s623
      %p625 = scmp.lt.s32.totalorder %s19, 1
      %s626 = scalar_select %p625, %s19, 1
      %s627 = smul.addr %s626, 2
      %s628 = scalar_lea.vmem %s3, %s627
      // Predicated region
      $region44: #{makeup_distillation_forward.22} parent=27 // pred_check
        %p629 = pneg %p94
      $region45: #{makeup_distillation_forward.22} parent=27 // pred_check_branch
        %631 = sbr.rel (%p629) target = $region47
      $region46: #{makeup_distillation_forward.22} parent=27 // pred_region
        %s632 = smul.u32 2, %s20
      $region47: #{makeup_distillation_forward.22} parent=27 // pred_fallthru
        _
      // Predicated region
      $region48: #{makeup_distillation_forward.22} parent=27 // pred_check
        %p633 = pneg %p120
      $region49: #{makeup_distillation_forward.22} parent=27 // pred_check_branch
        %635 = sbr.rel (%p633) target = $region51
      $region50: #{makeup_distillation_forward.22} parent=27 // pred_region
        _
      $region51: #{makeup_distillation_forward.22} parent=27 // pred_fallthru
        _
    $region28: #{makeup_distillation_forward.22} parent=5 // pred_fallthru
      _
    %p636 = scmp.le.s32.totalorder 2, %s10
    // Predicated region
    $region52: #{makeup_distillation_forward.22} parent=5 // pred_check
      %p637 = pneg %p636
    $region53: #{makeup_distillation_forward.22} parent=5 // pred_check_branch
      %639 = sbr.rel (%p637) target = $region55
    $region54: #{makeup_distillation_forward.22} parent=5 // pred_region
      %s640 = ssub.s32 %s10, 2
      // Predicated region
      $region56: #{makeup_distillation_forward.22} parent=54 // pred_check
        %p641 = pneg %p100
      $region57: #{makeup_distillation_forward.22} parent=54 // pred_check_branch
        %643 = sbr.rel (%p641) target = $region59
      $region58: #{makeup_distillation_forward.22} parent=54 // pred_region
        %s644 = smul.u32 2, %s22
        %p645 = scmp.lt.s32.totalorder %s21, 1
        %s646 = scalar_select %p645, %s21, 1
        %p647 = scmp.lt.s32.totalorder %s644, 3
        %s648 = scalar_select %p647, %s644, 3
        %s649 = smul.addr %s646, 4
        %s650 = sadd.s32 %s648, %s649
        %s651 = smul.addr %s650, 4
        %s652 = scalar_lea.vmem %s2, %s651
      $region59: #{makeup_distillation_forward.22} parent=54 // pred_fallthru
        _
      // Predicated region
      $region60: #{makeup_distillation_forward.22} parent=54 // pred_check
        %p653 = pneg %p126
      $region61: #{makeup_distillation_forward.22} parent=54 // pred_check_branch
        %655 = sbr.rel (%p653) target = $region63
      $region62: #{makeup_distillation_forward.22} parent=54 // pred_region
        %p656 = scmp.lt.s32.totalorder %s21, 1
        %s657 = scalar_select %p656, %s21, 1
        %s658 = smul.addr %s657, 2
        %s659 = scalar_lea.vmem %s3, %s658
      $region63: #{makeup_distillation_forward.22} parent=54 // pred_fallthru
        _
    $region55: #{makeup_distillation_forward.22} parent=5 // pred_fallthru
      _
  $region6: #{makeup_distillation_forward.22} parent=0 // loop_footer
    %s14 = sadd.s32 1, %s10
  $region7: #{makeup_distillation_forward.22} parent=0 // loop_footer_branch
    %9 = sbr.rel target = $region3
  $region8: #{makeup_distillation_forward.22} parent=0 // loop_exit
    _

// kernel: makeup_distillation_forward.27
$region0: #{makeup_distillation_forward.27}
  #allocation0 [shape = 'u32[]', space=smem, size = 0x4, offset = 0x4, fixed_abs, tag = 'smem constant byte address 0x4 - core index']
  #allocation1 [shape = 'u32[72,128]{1,0:T(1,128)}', space=vmem, size = 0x9000, scoped, tag = 'internal scratch']
  %s0 = inlined_call_operand.vmem [shape: f32[2,4,4,128], index: 0, kind: input, shape index: {}]
  %s1 = inlined_call_operand.vmem [shape: f32[2,2,128], index: 1, kind: input, shape index: {}]
  %s2 = inlined_call_operand.vmem [shape: f32[1,128], index: 2, kind: input, shape index: {}]
  %s3 = inlined_call_operand.vmem [shape: f32[1,128], index: 3, kind: input, shape index: {}]
  %s4 = inlined_call_operand.vmem [shape: bf16[2,4,4,128], index: 4, kind: input, shape index: {}]
  %s5 = inlined_call_operand.vmem [shape: bf16[2,4,4,128], index: 5, kind: output, shape index: {}]
  %s6 = sld [smem:[#allocation0]]
  $region53: #{makeup_distillation_forward.27} parent=0
    _
  %s8 = ssub.s32 1, %s6
  %s9 = scalar_select 0, %s8, %s6
  loop: start=0, step=1, limit=6
  $region2: #{makeup_distillation_forward.27} parent=0 // loop_pre_header
    _
  $region3: #{makeup_distillation_forward.27} parent=0 // loop_header
    %s11 = sphi 0, %s15
    %p12 = scmp.ge.s32.totalorder %s11, 6
    %s18 = sphi 0, %s30
    %s19 = sphi 0, %s26
    %s20 = sphi 0, %s18
    %s21 = sphi 0, %s19
    %s22 = sphi 0, %s20
    %s23 = sphi 0, %s21
    %s35 = sphi 0, %s37
    %s38 = sphi 0, %s35
    %s39 = sphi 0, %s38
    %s55 = sphi 0, %s39
    %s61 = sphi 0, %s63
    %s64 = sphi 0, %s61
    %s65 = sphi 0, %s64
    %s81 = sphi 0, %s65
    %s85 = sphi 0, %s85
    %s87 = sphi 0, %s85
    %s88 = sphi 0, %s87
    %s102 = sphi 0, %s88
    %s106 = sphi 0, %s106
    %s108 = sphi 0, %s106
    %s109 = sphi 0, %s108
    %s123 = sphi 0, %s109
    %s131 = sphi 0, %s133
    %s134 = sphi 0, %s131
    %s135 = sphi 0, %s134
    %s151 = sphi 0, %s135
    %s159 = sphi 0, %s161
    %s162 = sphi 0, %s159
    %s163 = sphi 0, %s162
    %s179 = sphi 0, %s163
  $region4: #{makeup_distillation_forward.27} parent=0 // loop_header_branch
    %14 = sbr.rel (%p12) target = $region8
  $region5: #{makeup_distillation_forward.27} parent=0 // loop_body
    %s16 = ssub.s32 %s11, 1
    %s17 = ssub.s32 %s11, 2
    %s24 = sadd.s32 1, %s19
    %p25 = scmp.ge.s32.totalorder %s24, 2
    %s26 = scalar_select %p25, 0, %s24
    %s27 = sadd.s32 1, %s18
    %s28 = scalar_select %p25, %s27, %s18
    %p29 = scmp.ge.s32.totalorder %s28, 2
    %s30 = scalar_select %p29, 0, %s28
    %s31 = ssub.s32 %s18, %s30
    %s32 = ssub.s32 %s19, %s26
    %s33 = sor.u32 %s31, %s32
    %p34 = scmp.eq.s32.totalorder %s33, 0
    %s36 = sadd.s32 %s35, 1
    %s37 = scalar_select %p34, %s35, %s36
    %p40 = pneg %p34
    %p41 = scmp.eq.s32.totalorder %s11, 3
    %p42 = por %p40, %p41
    %p43 = scmp.ne.s32.totalorder %s35, %s38
    %p44 = scmp.eq.s32.totalorder %s11, 0
    %p45 = por %p43, %p44
    %p46 = scmp.ne.s32.totalorder %s35, %s38
    %p47 = scmp.eq.s32.totalorder %s16, 3
    %p48 = por %p46, %p47
    %p49 = scmp.ne.s32.totalorder %s38, %s39
    %p50 = scmp.eq.s32.totalorder %s16, 0
    %p51 = por %p49, %p50
    %p52 = scmp.ne.s32.totalorder %s38, %s39
    %p53 = scmp.eq.s32.totalorder %s17, 3
    %p54 = por %p52, %p53
    %p56 = scmp.ne.s32.totalorder %s39, %s55
    %p57 = scmp.eq.s32.totalorder %s17, 0
    %p58 = por %p56, %p57
    %s59 = ssub.s32 %s18, %s30
    %p60 = scmp.eq.s32.totalorder %s59, 0
    %s62 = sadd.s32 %s61, 1
    %s63 = scalar_select %p60, %s61, %s62
    %p66 = pneg %p60
    %p67 = scmp.eq.s32.totalorder %s11, 3
    %p68 = por %p66, %p67
    %p69 = scmp.ne.s32.totalorder %s61, %s64
    %p70 = scmp.eq.s32.totalorder %s11, 0
    %p71 = por %p69, %p70
    %p72 = scmp.ne.s32.totalorder %s61, %s64
    %p73 = scmp.eq.s32.totalorder %s16, 3
    %p74 = por %p72, %p73
    %p75 = scmp.ne.s32.totalorder %s64, %s65
    %p76 = scmp.eq.s32.totalorder %s16, 0
    %p77 = por %p75, %p76
    %p78 = scmp.ne.s32.totalorder %s64, %s65
    %p79 = scmp.eq.s32.totalorder %s17, 3
    %p80 = por %p78, %p79
    %p82 = scmp.ne.s32.totalorder %s65, %s81
    %p83 = scmp.eq.s32.totalorder %s17, 0
    %p84 = por %p82, %p83
    %s86 = sadd.s32 %s85, 1
    %p89 = scmp.eq.s32.totalorder %s11, 3
    %p90 = scmp.ne.s32.totalorder %s85, %s87
    %p91 = scmp.eq.s32.totalorder %s11, 0
    %p92 = por %p90, %p91
    %p93 = scmp.ne.s32.totalorder %s85, %s87
    %p94 = scmp.eq.s32.totalorder %s16, 3
    %p95 = por %p93, %p94
    %p96 = scmp.ne.s32.totalorder %s87, %s88
    %p97 = scmp.eq.s32.totalorder %s16, 0
    %p98 = por %p96, %p97
    %p99 = scmp.ne.s32.totalorder %s87, %s88
    %p100 = scmp.eq.s32.totalorder %s17, 3
    %p101 = por %p99, %p100
    %p103 = scmp.ne.s32.totalorder %s88, %s102
    %p104 = scmp.eq.s32.totalorder %s17, 0
    %p105 = por %p103, %p104
    %s107 = sadd.s32 %s106, 1
    %p110 = scmp.eq.s32.totalorder %s11, 3
    %p111 = scmp.ne.s32.totalorder %s106, %s108
    %p112 = scmp.eq.s32.totalorder %s11, 0
    %p113 = por %p111, %p112
    %p114 = scmp.ne.s32.totalorder %s106, %s108
    %p115 = scmp.eq.s32.totalorder %s16, 3
    %p116 = por %p114, %p115
    %p117 = scmp.ne.s32.totalorder %s108, %s109
    %p118 = scmp.eq.s32.totalorder %s16, 0
    %p119 = por %p117, %p118
    %p120 = scmp.ne.s32.totalorder %s108, %s109
    %p121 = scmp.eq.s32.totalorder %s17, 3
    %p122 = por %p120, %p121
    %p124 = scmp.ne.s32.totalorder %s109, %s123
    %p125 = scmp.eq.s32.totalorder %s17, 0
    %p126 = por %p124, %p125
    %s127 = ssub.s32 %s18, %s30
    %s128 = ssub.s32 %s19, %s26
    %s129 = sor.u32 %s127, %s128
    %p130 = scmp.eq.s32.totalorder %s129, 0
    %s132 = sadd.s32 %s131, 1
    %s133 = scalar_select %p130, %s131, %s132
    %p136 = pneg %p130
    %p137 = scmp.eq.s32.totalorder %s11, 3
    %p138 = por %p136, %p137
    %p139 = scmp.ne.s32.totalorder %s131, %s134
    %p140 = scmp.eq.s32.totalorder %s11, 0
    %p141 = por %p139, %p140
    %p142 = scmp.ne.s32.totalorder %s131, %s134
    %p143 = scmp.eq.s32.totalorder %s16, 3
    %p144 = por %p142, %p143
    %p145 = scmp.ne.s32.totalorder %s134, %s135
    %p146 = scmp.eq.s32.totalorder %s16, 0
    %p147 = por %p145, %p146
    %p148 = scmp.ne.s32.totalorder %s134, %s135
    %p149 = scmp.eq.s32.totalorder %s17, 3
    %p150 = por %p148, %p149
    %p152 = scmp.ne.s32.totalorder %s135, %s151
    %p153 = scmp.eq.s32.totalorder %s17, 0
    %p154 = por %p152, %p153
    %s155 = ssub.s32 %s18, %s30
    %s156 = ssub.s32 %s19, %s26
    %s157 = sor.u32 %s155, %s156
    %p158 = scmp.eq.s32.totalorder %s157, 0
    %s160 = sadd.s32 %s159, 1
    %s161 = scalar_select %p158, %s159, %s160
    %p164 = pneg %p158
    %p165 = scmp.eq.s32.totalorder %s11, 3
    %p166 = por %p164, %p165
    %p167 = scmp.ne.s32.totalorder %s159, %s162
    %p168 = scmp.eq.s32.totalorder %s11, 0
    %p169 = por %p167, %p168
    %p170 = scmp.ne.s32.totalorder %s159, %s162
    %p171 = scmp.eq.s32.totalorder %s16, 3
    %p172 = por %p170, %p171
    %p173 = scmp.ne.s32.totalorder %s162, %s163
    %p174 = scmp.eq.s32.totalorder %s16, 0
    %p175 = por %p173, %p174
    %p176 = scmp.ne.s32.totalorder %s162, %s163
    %p177 = scmp.eq.s32.totalorder %s17, 3
    %p178 = por %p176, %p177
    %p180 = scmp.ne.s32.totalorder %s163, %s179
    %p181 = scmp.eq.s32.totalorder %s17, 0
    %p182 = por %p180, %p181
    %p183 = scmp.le.s32.totalorder 1, %s11
    %p184 = scmp.lt.s32.totalorder %s11, 5
    %p185 = pnand %p183, %p184
    %p186 = pneg %p185
    // Predicated region
    $region9: #{makeup_distillation_forward.27} parent=5 // pred_check
      _
    $region10: #{makeup_distillation_forward.27} parent=5 // pred_check_branch
      %188 = sbr.rel (%p185) target = $region12
    $region11: #{makeup_distillation_forward.27} parent=5 // pred_region
      %s189 = ssub.s32 %s11, 1
      // Predicated region
      $region13: #{makeup_distillation_forward.27} parent=11 // pred_check
        %p190 = pneg %p98
      $region14: #{makeup_distillation_forward.27} parent=11 // pred_check_branch
        %192 = sbr.rel (%p190) target = $region16
      $region15: #{makeup_distillation_forward.27} parent=11 // pred_region
        _
      $region16: #{makeup_distillation_forward.27} parent=11 // pred_fallthru
        _
      // Predicated region
      $region17: #{makeup_distillation_forward.27} parent=11 // pred_check
        %p193 = pneg %p119
      $region18: #{makeup_distillation_forward.27} parent=11 // pred_check_branch
        %195 = sbr.rel (%p193) target = $region20
      $region19: #{makeup_distillation_forward.27} parent=11 // pred_region
        _
      $region20: #{makeup_distillation_forward.27} parent=11 // pred_fallthru
        _
    $region12: #{makeup_distillation_forward.27} parent=5 // pred_fallthru
      _
    %p196 = scmp.lt.s32.totalorder %s11, 4
    // Predicated region
    $region21: #{makeup_distillation_forward.27} parent=5 // pred_check
      %p197 = pneg %p196
    $region22: #{makeup_distillation_forward.27} parent=5 // pred_check_branch
      %199 = sbr.rel (%p197) target = $region24
    $region23: #{makeup_distillation_forward.27} parent=5 // pred_region
      // Predicated region
      $region25: #{makeup_distillation_forward.27} parent=23 // pred_check
        %p200 = pneg %p45
      $region26: #{makeup_distillation_forward.27} parent=23 // pred_check_branch
        %202 = sbr.rel (%p200) target = $region28
      $region27: #{makeup_distillation_forward.27} parent=23 // pred_region
        %s203 = smul.u32 2, %s19
        %p204 = scmp.lt.s32.totalorder %s18, 1
        %s205 = scalar_select %p204, %s18, 1
        %p206 = scmp.lt.s32.totalorder %s203, 3
        %s207 = scalar_select %p206, %s203, 3
        %s208 = smul.addr %s205, 4
        %s209 = sadd.s32 %s207, %s208
        %s210 = smul.addr %s209, 4
        %s211 = scalar_lea.vmem %s0, %s210
        %s212 = smul.u32 2, %s19
      $region28: #{makeup_distillation_forward.27} parent=23 // pred_fallthru
        _
      // Predicated region
      $region29: #{makeup_distillation_forward.27} parent=23 // pred_check
        %p213 = pneg %p71
      $region30: #{makeup_distillation_forward.27} parent=23 // pred_check_branch
        %215 = sbr.rel (%p213) target = $region32
      $region31: #{makeup_distillation_forward.27} parent=23 // pred_region
        %p216 = scmp.lt.s32.totalorder %s18, 1
        %s217 = scalar_select %p216, %s18, 1
        %s218 = smul.addr %s217, 2
        %s219 = scalar_lea.vmem %s1, %s218
      $region32: #{makeup_distillation_forward.27} parent=23 // pred_fallthru
        _
      // Predicated region
      $region33: #{makeup_distillation_forward.27} parent=23 // pred_check
        %p220 = pneg %p141
      $region34: #{makeup_distillation_forward.27} parent=23 // pred_check_branch
        %222 = sbr.rel (%p220) target = $region36
      $region35: #{makeup_distillation_forward.27} parent=23 // pred_region
        %s223 = smul.u32 2, %s19
        %p224 = scmp.lt.s32.totalorder %s18, 1
        %s225 = scalar_select %p224, %s18, 1
        %p226 = scmp.lt.s32.totalorder %s223, 3
        %s227 = scalar_select %p226, %s223, 3
        %s228 = smul.addr %s225, 4
        %s229 = sadd.s32 %s227, %s228
        %s230 = smul.addr %s229, 2
        %s231 = scalar_lea.vmem %s4, %s230
        %s232 = smul.u32 2, %s19
      $region36: #{makeup_distillation_forward.27} parent=23 // pred_fallthru
        _
    $region24: #{makeup_distillation_forward.27} parent=5 // pred_fallthru
      _
    %p233 = scmp.le.s32.totalorder 1, %s11
    %p234 = scmp.lt.s32.totalorder %s11, 5
    %p235 = pnand %p233, %p234
    %p236 = pneg %p235
    // Predicated region
    $region37: #{makeup_distillation_forward.27} parent=5 // pred_check
      _
    $region38: #{makeup_distillation_forward.27} parent=5 // pred_check_branch
      %238 = sbr.rel (%p235) target = $region40
    $region39: #{makeup_distillation_forward.27} parent=5 // pred_region
      %s239 = ssub.s32 %s11, 1
      %s240 = smul.u32 2, %s21
      %p241 = scmp.lt.s32.totalorder %s20, 1
      %s242 = scalar_select %p241, %s20, 1
      %p243 = scmp.lt.s32.totalorder %s240, 3
      %s244 = scalar_select %p243, %s240, 3
      %s245 = smul.addr %s242, 4
      %s246 = sadd.s32 %s244, %s245
      %s247 = smul.addr %s246, 4
      %s248 = scalar_lea.vmem %s0, %s247
      %p249 = pneg %p51
      %p250 = pneg %p48
      %p251 = scmp.lt.s32.totalorder %s20, 1
      %s252 = scalar_select %p251, %s20, 1
      %s253 = smul.addr %s252, 2
      %s254 = scalar_lea.vmem %s1, %s253
      %p255 = pneg %p77
      %p256 = pneg %p74
      %p257 = pneg %p98
      %p258 = pneg %p95
      %p259 = pneg %p119
      %p260 = pneg %p116
      %s261 = smul.u32 2, %s21
      %p262 = scmp.lt.s32.totalorder %s20, 1
      %s263 = scalar_select %p262, %s20, 1
      %p264 = scmp.lt.s32.totalorder %s261, 3
      %s265 = scalar_select %p264, %s261, 3
      %s266 = smul.addr %s263, 4
      %s267 = sadd.s32 %s265, %s266
      %s268 = smul.addr %s267, 2
      %s269 = scalar_lea.vmem %s4, %s268
      %p270 = pneg %p147
      %p271 = pneg %p144
      %p272 = pneg %p175
      %p273 = pneg %p172
      %s274 = smul.u32 2, %s21
      %p275 = scmp.lt.s32.totalorder %s20, 1
      %s276 = scalar_select %p275, %s20, 1
      %p277 = scmp.lt.s32.totalorder %s274, 3
      %s278 = scalar_select %p277, %s274, 3
      %s279 = smul.addr %s276, 4
      %s280 = sadd.s32 %s278, %s279
      %s281 = smul.addr %s280, 2
      %s282 = scalar_lea.vmem %s5, %s281
      %s283 = smul.u32 2, %s21
      %p284 = scmp.lt.s32.totalorder %s20, 1
      %s285 = scalar_select %p284, %s20, 1
      %p286 = scmp.lt.s32.totalorder %s283, 3
      %s287 = scalar_select %p286, %s283, 3
      %s288 = smul.addr %s285, 4
      %s289 = sadd.s32 %s287, %s288
      %s290 = smul.addr %s289, 4
      %s291 = scalar_lea.vmem %s0, %s290
      %s292 = smul.u32 2, %s21
      %p293 = scmp.lt.s32.totalorder %s20, 1
      %s294 = scalar_select %p293, %s20, 1
      %s295 = smul.addr %s294, 2
      %s296 = scalar_lea.vmem %s1, %s295
      %s297 = smul.u32 2, %s21
      %p298 = scmp.lt.s32.totalorder %s20, 1
      %s299 = scalar_select %p298, %s20, 1
      %p300 = scmp.lt.s32.totalorder %s297, 3
      %s301 = scalar_select %p300, %s297, 3
      %s302 = smul.addr %s299, 4
      %s303 = sadd.s32 %s301, %s302
      %s304 = smul.addr %s303, 2
      %s305 = scalar_lea.vmem %s4, %s304
      %s306 = smul.u32 2, %s21
      %s307 = smul.u32 2, %s21
      %p308 = scmp.lt.s32.totalorder %s20, 1
      %s309 = scalar_select %p308, %s20, 1
      %p310 = scmp.lt.s32.totalorder %s307, 3
      %s311 = scalar_select %p310, %s307, 3
      %s312 = smul.addr %s309, 4
      %s313 = sadd.s32 %s311, %s312
      %s314 = smul.addr %s313, 2
      %s315 = scalar_lea.vmem %s5, %s314
      %s316 = smul.u32 2, %s21
      %v317 = vld [vmem:[%s291] sm:$0xf]
      %v318 = vld [vmem:[%s291 + $0x4] sm:$0xf]
      %v319 = vld [vmem:[%s296] sm:$0x3]
      %v320 = vperm.slane %v319, 0
      %v321 = vsub.f32 %v317, %v320
      %v322 = vsub.f32 %v318, %v320
      %v323 = vld [vmem:[%s2] sm:$0x1]
      %v325 = vperm.slane %v323, 0
      %v327 = vmul.f32 %v319, %v325
      %v328 = vperm.slane %v327, 1
      %v329 = vmul.f32 %v321, %v328
      %v330 = vmul.f32 %v322, %v328
      %v331 = vld [vmem:[%s3] sm:$0x1]
      %v333 = vperm.slane %v331, 0
      %v335 = vadd.f32 %v329, %v333
      %v336 = vadd.f32 %v330, %v333
      %v337 = vld [vmem:[%s305] sm:$0x3]
      %v338 = vld [vmem:[%s305 + $0x2] sm:$0x3]
      %v339 = vunpack.c.l.bf16 %v337
      %v340 = vunpack.c.l.bf16 %v338
      %v341 = vadd.f32 %v335, %v339
      %v342 = vadd.f32 %v336, %v340
      %v343 = vpack.c.bf16 %v341, %v341
      %v344 = vpack.c.bf16 %v342, %v342
      %345 = vst [vmem:[%s315] sm:$0x3] %v343
      %346 = vst [vmem:[%s315 + $0x2] sm:$0x3] %v344
      %s347 = smul.u32 2, %s21
      %p348 = scmp.lt.s32.totalorder %s20, 1
      %s349 = scalar_select %p348, %s20, 1
      %p350 = scmp.lt.s32.totalorder %s347, 3
      %s351 = scalar_select %p350, %s347, 3
      %s352 = smul.addr %s349, 4
      %s353 = sadd.s32 %s351, %s352
      %s354 = smul.addr %s353, 2
      %s355 = scalar_lea.vmem %s5, %s354
      // Predicated region
      $region41: #{makeup_distillation_forward.27} parent=39 // pred_check
        %p356 = pneg %p172
      $region42: #{makeup_distillation_forward.27} parent=39 // pred_check_branch
        %358 = sbr.rel (%p356) target = $region44
      $region43: #{makeup_distillation_forward.27} parent=39 // pred_region
        %s359 = smul.u32 2, %s21
      $region44: #{makeup_distillation_forward.27} parent=39 // pred_fallthru
        _
    $region40: #{makeup_distillation_forward.27} parent=5 // pred_fallthru
      _
    %p360 = scmp.le.s32.totalorder 2, %s11
    // Predicated region
    $region45: #{makeup_distillation_forward.27} parent=5 // pred_check
      %p361 = pneg %p360
    $region46: #{makeup_distillation_forward.27} parent=5 // pred_check_branch
      %363 = sbr.rel (%p361) target = $region48
    $region47: #{makeup_distillation_forward.27} parent=5 // pred_region
      %s364 = ssub.s32 %s11, 2
      // Predicated region
      $region49: #{makeup_distillation_forward.27} parent=47 // pred_check
        %p365 = pneg %p178
      $region50: #{makeup_distillation_forward.27} parent=47 // pred_check_branch
        %367 = sbr.rel (%p365) target = $region52
      $region51: #{makeup_distillation_forward.27} parent=47 // pred_region
        %s368 = smul.u32 2, %s23
        %p369 = scmp.lt.s32.totalorder %s22, 1
        %s370 = scalar_select %p369, %s22, 1
        %p371 = scmp.lt.s32.totalorder %s368, 3
        %s372 = scalar_select %p371, %s368, 3
        %s373 = smul.addr %s370, 4
        %s374 = sadd.s32 %s372, %s373
        %s375 = smul.addr %s374, 2
        %s376 = scalar_lea.vmem %s5, %s375
      $region52: #{makeup_distillation_forward.27} parent=47 // pred_fallthru
        _
    $region48: #{makeup_distillation_forward.27} parent=5 // pred_fallthru
      _
  $region6: #{makeup_distillation_forward.27} parent=0 // loop_footer
    %s15 = sadd.s32 1, %s11
  $region7: #{makeup_distillation_forward.27} parent=0 // loop_footer_branch
    %10 = sbr.rel target = $region3
  $region8: #{makeup_distillation_forward.27} parent=0 // loop_exit
    _

// kernel: makeup_distillation_forward.24
$region0: #{makeup_distillation_forward.24}
  #allocation0 [shape = 'u32[]', space=smem, size = 0x4, offset = 0x4, fixed_abs, tag = 'smem constant byte address 0x4 - core index']
  #allocation1 [shape = 'u32[72,128]{1,0:T(1,128)}', space=vmem, size = 0x9000, scoped, tag = 'internal scratch']
  #allocation2 [shape = 'f32[1,128]{1,0:T(1,128)}', space=vmem, size = 0x200, scoped, tag = 'scratch operand']
  #allocation3 [shape = 'f32[1,128]{1,0:T(1,128)}', space=vmem, size = 0x200, scoped, tag = 'scratch operand']
  %s0 = inlined_call_operand.vmem [shape: bf16[2,6,6,64], index: 0, kind: input, shape index: {}]
  %s1 = inlined_call_operand.vmem [shape: bf16[9,64,128], index: 1, kind: input, shape index: {}]
  %s2 = inlined_call_operand.vmem [shape: f32[2,4,4,128], index: 2, kind: output, shape index: {0}]
  %s3 = inlined_call_operand.vmem [shape: f32[2,2,128], index: 3, kind: output, shape index: {1}]
  %4 = xla_tuple %s2, %s3
  %s5 = sld [smem:[#allocation0]]
  $region64: #{makeup_distillation_forward.24} parent=0
    _
  %s7 = ssub.s32 1, %s5
  %s8 = scalar_select 0, %s7, %s5
  loop: start=0, step=1, limit=6
  $region2: #{makeup_distillation_forward.24} parent=0 // loop_pre_header
    _
  $region3: #{makeup_distillation_forward.24} parent=0 // loop_header
    %s10 = sphi 0, %s14
    %p11 = scmp.ge.s32.totalorder %s10, 6
    %s17 = sphi 0, %s29
    %s18 = sphi 0, %s25
    %s19 = sphi 0, %s17
    %s20 = sphi 0, %s18
    %s21 = sphi 0, %s19
    %s22 = sphi 0, %s20
    %s32 = sphi 0, %s34
    %s35 = sphi 0, %s32
    %s36 = sphi 0, %s35
    %s52 = sphi 0, %s36
    %s56 = sphi 0, %s56
    %s58 = sphi 0, %s56
    %s59 = sphi 0, %s58
    %s73 = sphi 0, %s59
    %s81 = sphi 0, %s83
    %s84 = sphi 0, %s81
    %s85 = sphi 0, %s84
    %s101 = sphi 0, %s85
    %s107 = sphi 0, %s109
    %s110 = sphi 0, %s107
    %s111 = sphi 0, %s110
    %s127 = sphi 0, %s111
  $region4: #{makeup_distillation_forward.24} parent=0 // loop_header_branch
    %13 = sbr.rel (%p11) target = $region8
  $region5: #{makeup_distillation_forward.24} parent=0 // loop_body
    %s15 = ssub.s32 %s10, 1
    %s16 = ssub.s32 %s10, 2
    %s23 = sadd.s32 1, %s18
    %p24 = scmp.ge.s32.totalorder %s23, 2
    %s25 = scalar_select %p24, 0, %s23
    %s26 = sadd.s32 1, %s17
    %s27 = scalar_select %p24, %s26, %s17
    %p28 = scmp.ge.s32.totalorder %s27, 2
    %s29 = scalar_select %p28, 0, %s27
    %s30 = ssub.s32 %s17, %s29
    %p31 = scmp.eq.s32.totalorder %s30, 0
    %s33 = sadd.s32 %s32, 1
    %s34 = scalar_select %p31, %s32, %s33
    %p37 = pneg %p31
    %p38 = scmp.eq.s32.totalorder %s10, 3
    %p39 = por %p37, %p38
    %p40 = scmp.ne.s32.totalorder %s32, %s35
    %p41 = scmp.eq.s32.totalorder %s10, 0
    %p42 = por %p40, %p41
    %p43 = scmp.ne.s32.totalorder %s32, %s35
    %p44 = scmp.eq.s32.totalorder %s15, 3
    %p45 = por %p43, %p44
    %p46 = scmp.ne.s32.totalorder %s35, %s36
    %p47 = scmp.eq.s32.totalorder %s15, 0
    %p48 = por %p46, %p47
    %p49 = scmp.ne.s32.totalorder %s35, %s36
    %p50 = scmp.eq.s32.totalorder %s16, 3
    %p51 = por %p49, %p50
    %p53 = scmp.ne.s32.totalorder %s36, %s52
    %p54 = scmp.eq.s32.totalorder %s16, 0
    %p55 = por %p53, %p54
    %s57 = sadd.s32 %s56, 1
    %p60 = scmp.eq.s32.totalorder %s10, 3
    %p61 = scmp.ne.s32.totalorder %s56, %s58
    %p62 = scmp.eq.s32.totalorder %s10, 0
    %p63 = por %p61, %p62
    %p64 = scmp.ne.s32.totalorder %s56, %s58
    %p65 = scmp.eq.s32.totalorder %s15, 3
    %p66 = por %p64, %p65
    %p67 = scmp.ne.s32.totalorder %s58, %s59
    %p68 = scmp.eq.s32.totalorder %s15, 0
    %p69 = por %p67, %p68
    %p70 = scmp.ne.s32.totalorder %s58, %s59
    %p71 = scmp.eq.s32.totalorder %s16, 3
    %p72 = por %p70, %p71
    %p74 = scmp.ne.s32.totalorder %s59, %s73
    %p75 = scmp.eq.s32.totalorder %s16, 0
    %p76 = por %p74, %p75
    %s77 = ssub.s32 %s17, %s29
    %s78 = ssub.s32 %s18, %s25
    %s79 = sor.u32 %s77, %s78
    %p80 = scmp.eq.s32.totalorder %s79, 0
    %s82 = sadd.s32 %s81, 1
    %s83 = scalar_select %p80, %s81, %s82
    %p86 = pneg %p80
    %p87 = scmp.eq.s32.totalorder %s10, 3
    %p88 = por %p86, %p87
    %p89 = scmp.ne.s32.totalorder %s81, %s84
    %p90 = scmp.eq.s32.totalorder %s10, 0
    %p91 = por %p89, %p90
    %p92 = scmp.ne.s32.totalorder %s81, %s84
    %p93 = scmp.eq.s32.totalorder %s15, 3
    %p94 = por %p92, %p93
    %p95 = scmp.ne.s32.totalorder %s84, %s85
    %p96 = scmp.eq.s32.totalorder %s15, 0
    %p97 = por %p95, %p96
    %p98 = scmp.ne.s32.totalorder %s84, %s85
    %p99 = scmp.eq.s32.totalorder %s16, 3
    %p100 = por %p98, %p99
    %p102 = scmp.ne.s32.totalorder %s85, %s101
    %p103 = scmp.eq.s32.totalorder %s16, 0
    %p104 = por %p102, %p103
    %s105 = ssub.s32 %s17, %s29
    %p106 = scmp.eq.s32.totalorder %s105, 0
    %s108 = sadd.s32 %s107, 1
    %s109 = scalar_select %p106, %s107, %s108
    %p112 = pneg %p106
    %p113 = scmp.eq.s32.totalorder %s10, 3
    %p114 = por %p112, %p113
    %p115 = scmp.ne.s32.totalorder %s107, %s110
    %p116 = scmp.eq.s32.totalorder %s10, 0
    %p117 = por %p115, %p116
    %p118 = scmp.ne.s32.totalorder %s107, %s110
    %p119 = scmp.eq.s32.totalorder %s15, 3
    %p120 = por %p118, %p119
    %p121 = scmp.ne.s32.totalorder %s110, %s111
    %p122 = scmp.eq.s32.totalorder %s15, 0
    %p123 = por %p121, %p122
    %p124 = scmp.ne.s32.totalorder %s110, %s111
    %p125 = scmp.eq.s32.totalorder %s16, 3
    %p126 = por %p124, %p125
    %p128 = scmp.ne.s32.totalorder %s111, %s127
    %p129 = scmp.eq.s32.totalorder %s16, 0
    %p130 = por %p128, %p129
    %p131 = scmp.le.s32.totalorder 1, %s10
    %p132 = scmp.lt.s32.totalorder %s10, 5
    %p133 = pnand %p131, %p132
    %p134 = pneg %p133
    // Predicated region
    $region9: #{makeup_distillation_forward.24} parent=5 // pred_check
      _
    $region10: #{makeup_distillation_forward.24} parent=5 // pred_check_branch
      %136 = sbr.rel (%p133) target = $region12
    $region11: #{makeup_distillation_forward.24} parent=5 // pred_region
      %s137 = ssub.s32 %s10, 1
      // Predicated region
      $region13: #{makeup_distillation_forward.24} parent=11 // pred_check
        %p138 = pneg %p69
      $region14: #{makeup_distillation_forward.24} parent=11 // pred_check_branch
        %140 = sbr.rel (%p138) target = $region16
      $region15: #{makeup_distillation_forward.24} parent=11 // pred_region
        _
      $region16: #{makeup_distillation_forward.24} parent=11 // pred_fallthru
        _
    $region12: #{makeup_distillation_forward.24} parent=5 // pred_fallthru
      _
    %p141 = scmp.lt.s32.totalorder %s10, 4
    // Predicated region
    $region17: #{makeup_distillation_forward.24} parent=5 // pred_check
      %p142 = pneg %p141
    $region18: #{makeup_distillation_forward.24} parent=5 // pred_check_branch
      %144 = sbr.rel (%p142) target = $region20
    $region19: #{makeup_distillation_forward.24} parent=5 // pred_region
      // Predicated region
      $region21: #{makeup_distillation_forward.24} parent=19 // pred_check
        %p145 = pneg %p42
      $region22: #{makeup_distillation_forward.24} parent=19 // pred_check_branch
        %147 = sbr.rel (%p145) target = $region24
      $region23: #{makeup_distillation_forward.24} parent=19 // pred_region
        %p148 = scmp.lt.s32.totalorder %s17, 1
        %s149 = scalar_select %p148, %s17, 1
        %s150 = smul.addr %s149, 6
        %s151 = smul.addr %s150, 4
        %s152 = scalar_lea.vmem %s0, %s151
      $region24: #{makeup_distillation_forward.24} parent=19 // pred_fallthru
        _
    $region20: #{makeup_distillation_forward.24} parent=5 // pred_fallthru
      _
    %p153 = scmp.le.s32.totalorder 1, %s10
    %p154 = scmp.lt.s32.totalorder %s10, 5
    %p155 = pnand %p153, %p154
    %p156 = pneg %p155
    // Predicated region
    $region25: #{makeup_distillation_forward.24} parent=5 // pred_check
      _
    $region26: #{makeup_distillation_forward.24} parent=5 // pred_check_branch
      %158 = sbr.rel (%p155) target = $region28
    $region27: #{makeup_distillation_forward.24} parent=5 // pred_region
      %s159 = ssub.s32 %s10, 1
      %p160 = scmp.lt.s32.totalorder %s19, 1
      %s161 = scalar_select %p160, %s19, 1
      %s162 = smul.addr %s161, 6
      %s163 = smul.addr %s162, 4
      %s164 = scalar_lea.vmem %s0, %s163
      %p165 = pneg %p48
      %p166 = pneg %p45
      %p167 = pneg %p69
      %p168 = pneg %p66
      %p169 = pneg %p97
      %p170 = pneg %p94
      %s171 = smul.u32 2, %s20
      %p172 = scmp.lt.s32.totalorder %s19, 1
      %s173 = scalar_select %p172, %s19, 1
      %p174 = scmp.lt.s32.totalorder %s171, 3
      %s175 = scalar_select %p174, %s171, 3
      %s176 = smul.addr %s173, 4
      %s177 = sadd.s32 %s175, %s176
      %s178 = smul.addr %s177, 4
      %s179 = scalar_lea.vmem %s2, %s178
      %p180 = pneg %p123
      %p181 = pneg %p120
      %p182 = scmp.lt.s32.totalorder %s19, 1
      %s183 = scalar_select %p182, %s19, 1
      %s184 = smul.addr %s183, 2
      %s185 = scalar_lea.vmem %s3, %s184
      %p186 = scmp.lt.s32.totalorder %s19, 1
      %s187 = scalar_select %p186, %s19, 1
      %s188 = smul.addr %s187, 6
      %s189 = smul.addr %s188, 4
      %s190 = scalar_lea.vmem %s0, %s189
      %s191 = smul.u32 2, %s20
      %p192 = scmp.lt.s32.totalorder %s19, 1
      %s193 = scalar_select %p192, %s19, 1
      %p194 = scmp.lt.s32.totalorder %s191, 3
      %s195 = scalar_select %p194, %s191, 3
      %s196 = smul.addr %s193, 4
      %s197 = sadd.s32 %s195, %s196
      %s198 = smul.addr %s197, 4
      %s199 = scalar_lea.vmem %s2, %s198
      %s200 = smul.u32 2, %s20
      %p201 = scmp.lt.s32.totalorder %s19, 1
      %s202 = scalar_select %p201, %s19, 1
      %s203 = smul.addr %s202, 2
      %s204 = scalar_lea.vmem %s3, %s203
      %p206 = scmp.eq.s32.totalorder %s20, 0
      // Predicated region
      $region29: #{makeup_distillation_forward.24} parent=27 // pred_check
        %p207 = pneg %p206
      $region30: #{makeup_distillation_forward.24} parent=27 // pred_check_branch
        %209 = sbr.rel (%p207) target = $region32
      $region31: #{makeup_distillation_forward.24} parent=27 // pred_region
        %210 = vst [vmem:[#allocation2] sm:$0x1] 0.0
        %211 = vst [vmem:[#allocation3] sm:$0x1] 0.0
      $region32: #{makeup_distillation_forward.24} parent=27 // pred_fallthru
        _
      %s212 = smul.u32 %s20, 2
      loop: start=0, step=1, limit=2
      $region33: #{makeup_distillation_forward.24} parent=27 // loop_pre_header
        _
      $region34: #{makeup_distillation_forward.24} parent=27 // loop_header
        %s214 = sphi 0, %s218
        %p215 = scmp.ge.s32.totalorder %s214, 2
      $region35: #{makeup_distillation_forward.24} parent=27 // loop_header_branch
        %217 = sbr.rel (%p215) target = $region39
      $region36: #{makeup_distillation_forward.24} parent=27 // loop_body
        %s219 = sadd.s32 %s212, %s214
        %s220 = smul.addr %s219, 4
        %s221 = scalar_lea.vmem %s190, %s220
        %v222 = vld [vmem:[%s221] sm:$0x3]
        %v223 = vld [vmem:[%s1] sm:$0xf]
        %v224 = vld [vmem:[%s1 + $0x4] sm:$0xf]
        %v225 = vld [vmem:[%s1 + $0x8] sm:$0xf]
        %v226 = vld [vmem:[%s1 + $0xc] sm:$0xf]
        %v227 = vld [vmem:[%s1 + $0x10] sm:$0xf]
        %v228 = vld [vmem:[%s1 + $0x14] sm:$0xf]
        %v229 = vld [vmem:[%s1 + $0x18] sm:$0xf]
        %v230 = vld [vmem:[%s1 + $0x1c] sm:$0xf]
        %v231 = vld [vmem:[%s221] sm:$0x7]
        %s232 = scalar_lea.vmem %s1, 32
        %v233 = vld [vmem:[%s232] sm:$0xf]
        %v234 = vld [vmem:[%s232 + $0x4] sm:$0xf]
        %v235 = vld [vmem:[%s232 + $0x8] sm:$0xf]
        %v236 = vld [vmem:[%s232 + $0xc] sm:$0xf]
        %v237 = vld [vmem:[%s232 + $0x10] sm:$0xf]
        %v238 = vld [vmem:[%s232 + $0x14] sm:$0xf]
        %v239 = vld [vmem:[%s232 + $0x18] sm:$0xf]
        %v240 = vld [vmem:[%s232 + $0x1c] sm:$0xf]
        %v242 = vunpack.c.l.b16 %v231
        %v243 = vpack.c.b16 %v242, %v242
        %v245 = vshrl.u32 %v243, 16
        %v247 = vshll.u32 %v243, 16
        %v249 = vrot.slane %v247, 1
        %v250 = vor.u32 %v245, %v249
        %v259 = vunpack.c.l.b16 %v233
        %v260 = vunpack.c.l.b16 %v234
        %v261 = vunpack.c.l.b16 %v235
        %v262 = vunpack.c.l.b16 %v236
        %v263 = vunpack.c.l.b16 %v237
        %v264 = vunpack.c.l.b16 %v238
        %v265 = vunpack.c.l.b16 %v239
        %v266 = vunpack.c.l.b16 %v240
        %v267 = vpack.c.b16 %v260, %v259
        %v268 = vpack.c.b16 %v262, %v261
        %v269 = vpack.c.b16 %v264, %v263
        %v270 = vpack.c.b16 %v266, %v265
        %vm275 = vcmask 523264
        %v277 = vsel %vm275, %v250, 0
        %279 = vmatpush.bf16.msra.mxu0 0
        %280 = vmatpush.bf16.msra.mxu0 0
        %281 = vmatpush.bf16.msra.mxu0 0
        %282 = vmatpush.bf16.msra.mxu0 0
        %283 = vmatpush.bf16.msra.mxu0 %v270
        %284 = vmatpush.bf16.msra.mxu0 %v269
        %285 = vmatpush.bf16.msra.mxu0 %v268
        %286 = vmatpush.bf16.msra.mxu0 %v267
        %287 = vmatmul.bf16.gmra.mxu0 %v277
        %v288 = vpop.f32.mrf.mxu0
        %v289 = vadd.f32 0.0, %v288
        %v290 = vpop.f32.mrf.mxu0
        %291 = vdwg.mxu0
        %v300 = vunpack.c.l.b16 %v223
        %v301 = vunpack.c.l.b16 %v224
        %v302 = vunpack.c.l.b16 %v225
        %v303 = vunpack.c.l.b16 %v226
        %v304 = vunpack.c.l.b16 %v227
        %v305 = vunpack.c.l.b16 %v228
        %v306 = vunpack.c.l.b16 %v229
        %v307 = vunpack.c.l.b16 %v230
        %v308 = vpack.c.b16 %v301, %v300
        %v309 = vpack.c.b16 %v303, %v302
        %v310 = vpack.c.b16 %v305, %v304
        %v311 = vpack.c.b16 %v307, %v306
        %v317 = vsel %vm275, %v222, 0
        %319 = vmatpush.bf16.msra.mxu0 0
        %320 = vmatpush.bf16.msra.mxu0 0
        %321 = vmatpush.bf16.msra.mxu0 0
        %322 = vmatpush.bf16.msra.mxu0 0
        %323 = vmatpush.bf16.msra.mxu0 %v311
        %324 = vmatpush.bf16.msra.mxu0 %v310
        %325 = vmatpush.bf16.msra.mxu0 %v309
        %326 = vmatpush.bf16.msra.mxu0 %v308
        %327 = vmatmul.bf16.gmra.mxu0 %v317
        %v328 = vpop.f32.mrf.mxu0
        %v329 = vadd.f32 %v289, %v328
        %v330 = vpop.f32.mrf.mxu0
        %331 = vdwg.mxu0
        %v332 = vld [vmem:[%s221] sm:$0x6]
        %s333 = scalar_lea.vmem %s1, 64
        %v334 = vld [vmem:[%s333] sm:$0xf]
        %v335 = vld [vmem:[%s333 + $0x4] sm:$0xf]
        %v336 = vld [vmem:[%s333 + $0x8] sm:$0xf]
        %v337 = vld [vmem:[%s333 + $0xc] sm:$0xf]
        %v338 = vld [vmem:[%s333 + $0x10] sm:$0xf]
        %v339 = vld [vmem:[%s333 + $0x14] sm:$0xf]
        %v340 = vld [vmem:[%s333 + $0x18] sm:$0xf]
        %v341 = vld [vmem:[%s333 + $0x1c] sm:$0xf]
        %v343 = vunpack.c.l.b16 %v332
        %v344 = vpack.c.b16 %v343, %v343
        %v345 = vrot.slane %v344, 1
        %v354 = vunpack.c.l.b16 %v334
        %v355 = vunpack.c.l.b16 %v335
        %v356 = vunpack.c.l.b16 %v336
        %v357 = vunpack.c.l.b16 %v337
        %v358 = vunpack.c.l.b16 %v338
        %v359 = vunpack.c.l.b16 %v339
        %v360 = vunpack.c.l.b16 %v340
        %v361 = vunpack.c.l.b16 %v341
        %v362 = vpack.c.b16 %v355, %v354
        %v363 = vpack.c.b16 %v357, %v356
        %v364 = vpack.c.b16 %v359, %v358
        %v365 = vpack.c.b16 %v361, %v360
        %v371 = vsel %vm275, %v345, 0
        %373 = vmatpush.bf16.msra.mxu0 0
        %374 = vmatpush.bf16.msra.mxu0 0
        %375 = vmatpush.bf16.msra.mxu0 0
        %376 = vmatpush.bf16.msra.mxu0 0
        %377 = vmatpush.bf16.msra.mxu0 %v365
        %378 = vmatpush.bf16.msra.mxu0 %v364
        %379 = vmatpush.bf16.msra.mxu0 %v363
        %380 = vmatpush.bf16.msra.mxu0 %v362
        %381 = vmatmul.bf16.gmra.mxu0 %v371
        %v382 = vpop.f32.mrf.mxu0
        %v383 = vadd.f32 0.0, %v382
        %v384 = vpop.f32.mrf.mxu0
        %385 = vdwg.mxu0
        %v386 = vadd.f32 %v329, %v383
        %s387 = sadd.s32 %s219, 1
        %s388 = smul.addr %s387, 4
        %s389 = scalar_lea.vmem %s190, %s388
        %v390 = vld [vmem:[%s389] sm:$0x3]
        %s391 = scalar_lea.vmem %s1, 96
        %v392 = vld [vmem:[%s391] sm:$0xf]
        %v393 = vld [vmem:[%s391 + $0x4] sm:$0xf]
        %v394 = vld [vmem:[%s391 + $0x8] sm:$0xf]
        %v395 = vld [vmem:[%s391 + $0xc] sm:$0xf]
        %v396 = vld [vmem:[%s391 + $0x10] sm:$0xf]
        %v397 = vld [vmem:[%s391 + $0x14] sm:$0xf]
        %v398 = vld [vmem:[%s391 + $0x18] sm:$0xf]
        %v399 = vld [vmem:[%s391 + $0x1c] sm:$0xf]
        %v408 = vunpack.c.l.b16 %v392
        %v409 = vunpack.c.l.b16 %v393
        %v410 = vunpack.c.l.b16 %v394
        %v411 = vunpack.c.l.b16 %v395
        %v412 = vunpack.c.l.b16 %v396
        %v413 = vunpack.c.l.b16 %v397
        %v414 = vunpack.c.l.b16 %v398
        %v415 = vunpack.c.l.b16 %v399
        %v416 = vpack.c.b16 %v409, %v408
        %v417 = vpack.c.b16 %v411, %v410
        %v418 = vpack.c.b16 %v413, %v412
        %v419 = vpack.c.b16 %v415, %v414
        %v425 = vsel %vm275, %v390, 0
        %427 = vmatpush.bf16.msra.mxu0 0
        %428 = vmatpush.bf16.msra.mxu0 0
        %429 = vmatpush.bf16.msra.mxu0 0
        %430 = vmatpush.bf16.msra.mxu0 0
        %431 = vmatpush.bf16.msra.mxu0 %v419
        %432 = vmatpush.bf16.msra.mxu0 %v418
        %433 = vmatpush.bf16.msra.mxu0 %v417
        %434 = vmatpush.bf16.msra.mxu0 %v416
        %435 = vmatmul.bf16.gmra.mxu0 %v425
        %v436 = vpop.f32.mrf.mxu0
        %v437 = vadd.f32 0.0, %v436
        %v438 = vpop.f32.mrf.mxu0
        %439 = vdwg.mxu0
        %v440 = vadd.f32 %v386, %v437
        %v441 = vld [vmem:[%s389] sm:$0x7]
        %s442 = scalar_lea.vmem %s1, 128
        %v443 = vld [vmem:[%s442] sm:$0xf]
        %v444 = vld [vmem:[%s442 + $0x4] sm:$0xf]
        %v445 = vld [vmem:[%s442 + $0x8] sm:$0xf]
        %v446 = vld [vmem:[%s442 + $0xc] sm:$0xf]
        %v447 = vld [vmem:[%s442 + $0x10] sm:$0xf]
        %v448 = vld [vmem:[%s442 + $0x14] sm:$0xf]
        %v449 = vld [vmem:[%s442 + $0x18] sm:$0xf]
        %v450 = vld [vmem:[%s442 + $0x1c] sm:$0xf]
        %v452 = vunpack.c.l.b16 %v441
        %v453 = vpack.c.b16 %v452, %v452
        %v455 = vshrl.u32 %v453, 16
        %v457 = vshll.u32 %v453, 16
        %v459 = vrot.slane %v457, 1
        %v460 = vor.u32 %v455, %v459
        %v469 = vunpack.c.l.b16 %v443
        %v470 = vunpack.c.l.b16 %v444
        %v471 = vunpack.c.l.b16 %v445
        %v472 = vunpack.c.l.b16 %v446
        %v473 = vunpack.c.l.b16 %v447
        %v474 = vunpack.c.l.b16 %v448
        %v475 = vunpack.c.l.b16 %v449
        %v476 = vunpack.c.l.b16 %v450
        %v477 = vpack.c.b16 %v470, %v469
        %v478 = vpack.c.b16 %v472, %v471
        %v479 = vpack.c.b16 %v474, %v473
        %v480 = vpack.c.b16 %v476, %v475
        %v486 = vsel %vm275, %v460, 0
        %488 = vmatpush.bf16.msra.mxu0 0
        %489 = vmatpush.bf16.msra.mxu0 0
        %490 = vmatpush.bf16.msra.mxu0 0
        %491 = vmatpush.bf16.msra.mxu0 0
        %492 = vmatpush.bf16.msra.mxu0 %v480
        %493 = vmatpush.bf16.msra.mxu0 %v479
        %494 = vmatpush.bf16.msra.mxu0 %v478
        %495 = vmatpush.bf16.msra.mxu0 %v477
        %496 = vmatmul.bf16.gmra.mxu0 %v486
        %v497 = vpop.f32.mrf.mxu0
        %v498 = vadd.f32 0.0, %v497
        %v499 = vpop.f32.mrf.mxu0
        %500 = vdwg.mxu0
        %v501 = vadd.f32 %v440, %v498
        %v502 = vld [vmem:[%s389] sm:$0x6]
        %s503 = scalar_lea.vmem %s1, 160
        %v504 = vld [vmem:[%s503] sm:$0xf]
        %v505 = vld [vmem:[%s503 + $0x4] sm:$0xf]
        %v506 = vld [vmem:[%s503 + $0x8] sm:$0xf]
        %v507 = vld [vmem:[%s503 + $0xc] sm:$0xf]
        %v508 = vld [vmem:[%s503 + $0x10] sm:$0xf]
        %v509 = vld [vmem:[%s503 + $0x14] sm:$0xf]
        %v510 = vld [vmem:[%s503 + $0x18] sm:$0xf]
        %v511 = vld [vmem:[%s503 + $0x1c] sm:$0xf]
        %v513 = vunpack.c.l.b16 %v502
        %v514 = vpack.c.b16 %v513, %v513
        %v515 = vrot.slane %v514, 1
        %v524 = vunpack.c.l.b16 %v504
        %v525 = vunpack.c.l.b16 %v505
        %v526 = vunpack.c.l.b16 %v506
        %v527 = vunpack.c.l.b16 %v507
        %v528 = vunpack.c.l.b16 %v508
        %v529 = vunpack.c.l.b16 %v509
        %v530 = vunpack.c.l.b16 %v510
        %v531 = vunpack.c.l.b16 %v511
        %v532 = vpack.c.b16 %v525, %v524
        %v533 = vpack.c.b16 %v527, %v526
        %v534 = vpack.c.b16 %v529, %v528
        %v535 = vpack.c.b16 %v531, %v530
        %v541 = vsel %vm275, %v515, 0
        %543 = vmatpush.bf16.msra.mxu0 0
        %544 = vmatpush.bf16.msra.mxu0 0
        %545 = vmatpush.bf16.msra.mxu0 0
        %546 = vmatpush.bf16.msra.mxu0 0
        %547 = vmatpush.bf16.msra.mxu0 %v535
        %548 = vmatpush.bf16.msra.mxu0 %v534
        %549 = vmatpush.bf16.msra.mxu0 %v533
        %550 = vmatpush.bf16.msra.mxu0 %v532
        %551 = vmatmul.bf16.gmra.mxu0 %v541
        %v552 = vpop.f32.mrf.mxu0
        %v553 = vadd.f32 0.0, %v552
        %v554 = vpop.f32.mrf.mxu0
        %555 = vdwg.mxu0
        %v556 = vadd.f32 %v501, %v553
        %s557 = sadd.s32 %s219, 2
        %s558 = smul.addr %s557, 4
        %s559 = scalar_lea.vmem %s190, %s558
        %v560 = vld [vmem:[%s559] sm:$0x3]
        %s561 = scalar_lea.vmem %s1, 192
        %v562 = vld [vmem:[%s561] sm:$0xf]
        %v563 = vld [vmem:[%s561 + $0x4] sm:$0xf]
        %v564 = vld [vmem:[%s561 + $0x8] sm:$0xf]
        %v565 = vld [vmem:[%s561 + $0xc] sm:$0xf]
        %v566 = vld [vmem:[%s561 + $0x10] sm:$0xf]
        %v567 = vld [vmem:[%s561 + $0x14] sm:$0xf]
        %v568 = vld [vmem:[%s561 + $0x18] sm:$0xf]
        %v569 = vld [vmem:[%s561 + $0x1c] sm:$0xf]
        %v578 = vunpack.c.l.b16 %v562
        %v579 = vunpack.c.l.b16 %v563
        %v580 = vunpack.c.l.b16 %v564
        %v581 = vunpack.c.l.b16 %v565
        %v582 = vunpack.c.l.b16 %v566
        %v583 = vunpack.c.l.b16 %v567
        %v584 = vunpack.c.l.b16 %v568
        %v585 = vunpack.c.l.b16 %v569
        %v586 = vpack.c.b16 %v579, %v578
        %v587 = vpack.c.b16 %v581, %v580
        %v588 = vpack.c.b16 %v583, %v582
        %v589 = vpack.c.b16 %v585, %v584
        %v595 = vsel %vm275, %v560, 0
        %597 = vmatpush.bf16.msra.mxu0 0
        %598 = vmatpush.bf16.msra.mxu0 0
        %599 = vmatpush.bf16.msra.mxu0 0
        %600 = vmatpush.bf16.msra.mxu0 0
        %601 = vmatpush.bf16.msra.mxu0 %v589
        %602 = vmatpush.bf16.msra.mxu0 %v588
        %603 = vmatpush.bf16.msra.mxu0 %v587
        %604 = vmatpush.bf16.msra.mxu0 %v586
        %605 = vmatmul.bf16.gmra.mxu0 %v595
        %v606 = vpop.f32.mrf.mxu0
        %v607 = vadd.f32 0.0, %v606
        %v608 = vpop.f32.mrf.mxu0
        %609 = vdwg.mxu0
        %v610 = vadd.f32 %v556, %v607
        %v611 = vld [vmem:[%s559] sm:$0x7]
        %s612 = scalar_lea.vmem %s1, 224
        %v613 = vld [vmem:[%s612] sm:$0xf]
        %v614 = vld [vmem:[%s612 + $0x4] sm:$0xf]
        %v615 = vld [vmem:[%s612 + $0x8] sm:$0xf]
        %v616 = vld [vmem:[%s612 + $0xc] sm:$0xf]
        %v617 = vld [vmem:[%s612 + $0x10] sm:$0xf]
        %v618 = vld [vmem:[%s612 + $0x14] sm:$0xf]
        %v619 = vld [vmem:[%s612 + $0x18] sm:$0xf]
        %v620 = vld [vmem:[%s612 + $0x1c] sm:$0xf]
        %v622 = vunpack.c.l.b16 %v611
        %v623 = vpack.c.b16 %v622, %v622
        %v625 = vshrl.u32 %v623, 16
        %v627 = vshll.u32 %v623, 16
        %v629 = vrot.slane %v627, 1
        %v630 = vor.u32 %v625, %v629
        %v639 = vunpack.c.l.b16 %v613
        %v640 = vunpack.c.l.b16 %v614
        %v641 = vunpack.c.l.b16 %v615
        %v642 = vunpack.c.l.b16 %v616
        %v643 = vunpack.c.l.b16 %v617
        %v644 = vunpack.c.l.b16 %v618
        %v645 = vunpack.c.l.b16 %v619
        %v646 = vunpack.c.l.b16 %v620
        %v647 = vpack.c.b16 %v640, %v639
        %v648 = vpack.c.b16 %v642, %v641
        %v649 = vpack.c.b16 %v644, %v643
        %v650 = vpack.c.b16 %v646, %v645
        %v656 = vsel %vm275, %v630, 0
        %658 = vmatpush.bf16.msra.mxu0 0
        %659 = vmatpush.bf16.msra.mxu0 0
        %660 = vmatpush.bf16.msra.mxu0 0
        %661 = vmatpush.bf16.msra.mxu0 0
        %662 = vmatpush.bf16.msra.mxu0 %v650
        %663 = vmatpush.bf16.msra.mxu0 %v649
        %664 = vmatpush.bf16.msra.mxu0 %v648
        %665 = vmatpush.bf16.msra.mxu0 %v647
        %666 = vmatmul.bf16.gmra.mxu0 %v656
        %v667 = vpop.f32.mrf.mxu0
        %v668 = vadd.f32 0.0, %v667
        %v669 = vpop.f32.mrf.mxu0
        %670 = vdwg.mxu0
        %v671 = vadd.f32 %v610, %v668
        %v672 = vld [vmem:[%s559] sm:$0x6]
        %s673 = scalar_lea.vmem %s1, 256
        %v674 = vld [vmem:[%s673] sm:$0xf]
        %v675 = vld [vmem:[%s673 + $0x4] sm:$0xf]
        %v676 = vld [vmem:[%s673 + $0x8] sm:$0xf]
        %v677 = vld [vmem:[%s673 + $0xc] sm:$0xf]
        %v678 = vld [vmem:[%s673 + $0x10] sm:$0xf]
        %v679 = vld [vmem:[%s673 + $0x14] sm:$0xf]
        %v680 = vld [vmem:[%s673 + $0x18] sm:$0xf]
        %v681 = vld [vmem:[%s673 + $0x1c] sm:$0xf]
        %v683 = vunpack.c.l.b16 %v672
        %v684 = vpack.c.b16 %v683, %v683
        %v685 = vrot.slane %v684, 1
        %v694 = vunpack.c.l.b16 %v674
        %v695 = vunpack.c.l.b16 %v675
        %v696 = vunpack.c.l.b16 %v676
        %v697 = vunpack.c.l.b16 %v677
        %v698 = vunpack.c.l.b16 %v678
        %v699 = vunpack.c.l.b16 %v679
        %v700 = vunpack.c.l.b16 %v680
        %v701 = vunpack.c.l.b16 %v681
        %v702 = vpack.c.b16 %v695, %v694
        %v703 = vpack.c.b16 %v697, %v696
        %v704 = vpack.c.b16 %v699, %v698
        %v705 = vpack.c.b16 %v701, %v700
        %v711 = vsel %vm275, %v685, 0
        %713 = vmatpush.bf16.msra.mxu0 0
        %714 = vmatpush.bf16.msra.mxu0 0
        %715 = vmatpush.bf16.msra.mxu0 0
        %716 = vmatpush.bf16.msra.mxu0 0
        %717 = vmatpush.bf16.msra.mxu0 %v705
        %718 = vmatpush.bf16.msra.mxu0 %v704
        %719 = vmatpush.bf16.msra.mxu0 %v703
        %720 = vmatpush.bf16.msra.mxu0 %v702
        %721 = vmatmul.bf16.gmra.mxu0 %v711
        %v722 = vpop.f32.mrf.mxu0
        %v723 = vadd.f32 0.0, %v722
        %v724 = vpop.f32.mrf.mxu0
        %725 = vdwg.mxu0
        %v726 = vadd.f32 %v671, %v723
        %s727 = smul.u32 %s214, 4
        %s728 = scalar_lea.vmem %s199, %s727
        %729 = vst [vmem:[%s728] sm:$0xf] %v726
        %v730 = vld [vmem:[#allocation2] sm:$0x1]
        %vm731 = vcmask 1043456
        %v732 = vsel %vm731, %v726, 0.0
        %v733 = vrot.slane %v732, 4
        %v734 = vadd.f32 %v732, %v733
        %v735 = vrot.slane %v734, 2
        %v736 = vadd.f32 %v734, %v735
        %v737 = vrot.slane %v736, 1
        %v738 = vadd.f32 %v736, %v737
        %v739 = vadd.f32 %v730, %v738
        %740 = vst [vmem:[#allocation2] sm:$0x1] %v739
        %v741 = vld [vmem:[#allocation3] sm:$0x1]
        %v742 = vmul.f32 %v726, %v726
        %v743 = vsel %vm731, %v742, 0.0
        %v744 = vrot.slane %v743, 4
        %v745 = vadd.f32 %v743, %v744
        %v746 = vrot.slane %v745, 2
        %v747 = vadd.f32 %v745, %v746
        %v748 = vrot.slane %v747, 1
        %v749 = vadd.f32 %v747, %v748
        %v750 = vadd.f32 %v741, %v749
        %751 = vst [vmem:[#allocation3] sm:$0x1] %v750
      $region37: #{makeup_distillation_forward.24} parent=27 // loop_footer
        %s218 = sadd.s32 1, %s214
      $region38: #{makeup_distillation_forward.24} parent=27 // loop_footer_branch
        %213 = sbr.rel target = $region34
      $region39: #{makeup_distillation_forward.24} parent=27 // loop_exit
        _
      %p752 = scmp.eq.s32.totalorder %s20, 1
      // Predicated region
      $region40: #{makeup_distillation_forward.24} parent=27 // pred_check
        %p753 = pneg %p752
      $region41: #{makeup_distillation_forward.24} parent=27 // pred_check_branch
        %755 = sbr.rel (%p753) target = $region43
      $region42: #{makeup_distillation_forward.24} parent=27 // pred_region
        %v756 = vld [vmem:[#allocation2] sm:$0x1]
        %v757 = vmul.f32 %v756, 0.0625
        %v758 = vld [vmem:[#allocation3] sm:$0x1]
        %v759 = vmul.f32 %v758, 0.0625
        %v760 = vmul.f32 %v757, %v757
        %v761 = vsub.f32 %v759, %v760
        %v762 = vmax.f32 %v761, 0.0
        %v763 = vadd.f32 %v762, 1e-05
        %v764 = vrsqrt.pop %v763
        %v765 = vmul.f32 %v764, %v763
        %v766 = vmul.f32 %v765, %v764
        %v767 = vmul.f32 0.5, %v766
        %v768 = vsub.f32 1.5, %v767
        %v769 = vmul.f32 %v764, %v768
        %vm770 = vweird.f32 %v763
        %vm771 = vweird.f32 %v764
        %vm772 = vmor %vm770, %vm771
        %v773 = vsel %vm772, %v764, %v769
        %v775 = vperm.slane %v773, 0
        %vm777 = vcmask 1040384
        %v778 = vsel %vm777, %v757, %v775
        %779 = vst [vmem:[%s204] sm:$0x3] %v778
      $region43: #{makeup_distillation_forward.24} parent=27 // pred_fallthru
        _
      %s780 = smul.u32 2, %s20
      %p781 = scmp.lt.s32.totalorder %s19, 1
      %s782 = scalar_select %p781, %s19, 1
      %p783 = scmp.lt.s32.totalorder %s780, 3
      %s784 = scalar_select %p783, %s780, 3
      %s785 = smul.addr %s782, 4
      %s786 = sadd.s32 %s784, %s785
      %s787 = smul.addr %s786, 4
      %s788 = scalar_lea.vmem %s2, %s787
      %p789 = scmp.lt.s32.totalorder %s19, 1
      %s790 = scalar_select %p789, %s19, 1
      %s791 = smul.addr %s790, 2
      %s792 = scalar_lea.vmem %s3, %s791
      // Predicated region
      $region44: #{makeup_distillation_forward.24} parent=27 // pred_check
        %p793 = pneg %p94
      $region45: #{makeup_distillation_forward.24} parent=27 // pred_check_branch
        %795 = sbr.rel (%p793) target = $region47
      $region46: #{makeup_distillation_forward.24} parent=27 // pred_region
        %s796 = smul.u32 2, %s20
      $region47: #{makeup_distillation_forward.24} parent=27 // pred_fallthru
        _
      // Predicated region
      $region48: #{makeup_distillation_forward.24} parent=27 // pred_check
        %p797 = pneg %p120
      $region49: #{makeup_distillation_forward.24} parent=27 // pred_check_branch
        %799 = sbr.rel (%p797) target = $region51
      $region50: #{makeup_distillation_forward.24} parent=27 // pred_region
        _
      $region51: #{makeup_distillation_forward.24} parent=27 // pred_fallthru
        _
    $region28: #{makeup_distillation_forward.24} parent=5 // pred_fallthru
      _
    %p800 = scmp.le.s32.totalorder 2, %s10
    // Predicated region
    $region52: #{makeup_distillation_forward.24} parent=5 // pred_check
      %p801 = pneg %p800
    $region53: #{makeup_distillation_forward.24} parent=5 // pred_check_branch
      %803 = sbr.rel (%p801) target = $region55
    $region54: #{makeup_distillation_forward.24} parent=5 // pred_region
      %s804 = ssub.s32 %s10, 2
      // Predicated region
      $region56: #{makeup_distillation_forward.24} parent=54 // pred_check
        %p805 = pneg %p100
      $region57: #{makeup_distillation_forward.24} parent=54 // pred_check_branch
        %807 = sbr.rel (%p805) target = $region59
      $region58: #{makeup_distillation_forward.24} parent=54 // pred_region
        %s808 = smul.u32 2, %s22
        %p809 = scmp.lt.s32.totalorder %s21, 1
        %s810 = scalar_select %p809, %s21, 1
        %p811 = scmp.lt.s32.totalorder %s808, 3
        %s812 = scalar_select %p811, %s808, 3
        %s813 = smul.addr %s810, 4
        %s814 = sadd.s32 %s812, %s813
        %s815 = smul.addr %s814, 4
        %s816 = scalar_lea.vmem %s2, %s815
      $region59: #{makeup_distillation_forward.24} parent=54 // pred_fallthru
        _
      // Predicated region
      $region60: #{makeup_distillation_forward.24} parent=54 // pred_check
        %p817 = pneg %p126
      $region61: #{makeup_distillation_forward.24} parent=54 // pred_check_branch
        %819 = sbr.rel (%p817) target = $region63
      $region62: #{makeup_distillation_forward.24} parent=54 // pred_region
        %p820 = scmp.lt.s32.totalorder %s21, 1
        %s821 = scalar_select %p820, %s21, 1
        %s822 = smul.addr %s821, 2
        %s823 = scalar_lea.vmem %s3, %s822
      $region63: #{makeup_distillation_forward.24} parent=54 // pred_fallthru
        _
    $region55: #{makeup_distillation_forward.24} parent=5 // pred_fallthru
      _
  $region6: #{makeup_distillation_forward.24} parent=0 // loop_footer
    %s14 = sadd.s32 1, %s10
  $region7: #{makeup_distillation_forward.24} parent=0 // loop_footer_branch
    %9 = sbr.rel target = $region3
  $region8: #{makeup_distillation_forward.24} parent=0 // loop_exit
    _

</llo_original>
